<compile_context>
chip_gen: v7x
topology: tpu7x:2x2x1
jax: 0.10.0
libtpu: 0.0.40
codegen_flags: <defaults>
</compile_context>

<pallas_src>
import functools
import math

import jax
import jax.numpy as jnp
from jax.experimental import pallas as pl
from jax.experimental.pallas import tpu as pltpu


# --------------------------- tiling configuration ---------------------------

TM_ROWS = 256      # row tile for dense/layernorm kernels (fits v7x 64 MiB VMEM budget)
TN_MAX = 512       # max output-feature / vocab tile (keeps double-buffered blocks small)


def _round_up(x, m):
    return ((x + m - 1) // m) * m


def _pick_tile(dim, max_tile=TN_MAX):
    """Largest tile in {max_tile,256,128} dividing `dim`; else the full dim."""
    for c in (max_tile, 256, 128):
        if c <= max_tile and dim >= c and dim % c == 0:
            return c
    return dim  # e.g. a non-128-multiple vocab; at real scale pad the vocab instead


def _gelu_new(x):
    # GPT-2 "gelu_new" (tanh approximation), kept in f32 (v5e has no bf16 VPU/EUP)
    return 0.5 * x * (1.0 + jnp.tanh(
        math.sqrt(2.0 / math.pi) * (x + 0.044715 * x ** 3)))


# ----------------------------- Pallas kernels ------------------------------

def _ln_dense_kernel(x_ref, g_ref, b_ref, w_ref, wb_ref, o_ref, *, activation):
    """Fused LayerNorm -> dense (-> optional gelu).  x:(tm,K) f32, w:(K,tn) bf16."""
    x = x_ref[...]
    mu = jnp.mean(x, axis=-1, keepdims=True)
    var = jnp.mean(jnp.square(x - mu), axis=-1, keepdims=True)
    xn = (x - mu) * jax.lax.rsqrt(var + 1e-5) * g_ref[...] + b_ref[...]
    y = jnp.dot(xn.astype(jnp.bfloat16), w_ref[...],
                preferred_element_type=jnp.float32) + wb_ref[...]
    if activation == "gelu":
        y = _gelu_new(y)
    o_ref[...] = y


def ln_dense(x2d, gamma, beta, w_bf16, wb, activation=None, tm=TM_ROWS, tn_max=TN_MAX):
    """y = act(LN(x) @ w + wb).  Tiled (rows, features), full-K blocks."""
    n0, k = x2d.shape
    f = w_bf16.shape[1]
    tm_eff = min(tm, _round_up(n0, 8))
    n = _round_up(n0, tm_eff)
    if n != n0:
        x2d = jnp.pad(x2d, ((0, n - n0), (0, 0)))
    tn = _pick_tile(f, tn_max)
    kernel = functools.partial(_ln_dense_kernel, activation=activation)
    out = pl.pallas_call(
        kernel,
        out_shape=jax.ShapeDtypeStruct((n, f), jnp.float32),
        grid=(n // tm_eff, f // tn),
        in_specs=[pl.BlockSpec((tm_eff, k), lambda i, j: (i, 0)),
                  pl.BlockSpec((1, k), lambda i, j: (0, 0)),
                  pl.BlockSpec((1, k), lambda i, j: (0, 0)),
                  pl.BlockSpec((k, tn), lambda i, j: (0, j)),
                  pl.BlockSpec((1, tn), lambda i, j: (0, j))],
        out_specs=pl.BlockSpec((tm_eff, tn), lambda i, j: (i, j)),
        compiler_params=pltpu.CompilerParams(
            dimension_semantics=("parallel", "parallel")),
    )(x2d.astype(jnp.float32),
      gamma.reshape(1, k).astype(jnp.float32),
      beta.reshape(1, k).astype(jnp.float32),
      w_bf16,
      wb.reshape(1, f).astype(jnp.float32))
    return out[:n0]


def _dense_res_kernel(x_ref, w_ref, wb_ref, r_ref, o_ref):
    """y = x @ w + wb + residual (residual add fused into the projection)."""
    y = jnp.dot(x_ref[...].astype(jnp.bfloat16), w_ref[...],
                preferred_element_type=jnp.float32)
    o_ref[...] = y + wb_ref[...] + r_ref[...]


def dense_res(x2d, w_bf16, wb, resid2d, tm=TM_ROWS, tn_max=TN_MAX):
    n0, k = x2d.shape
    f = w_bf16.shape[1]
    tm_eff = min(tm, _round_up(n0, 8))
    n = _round_up(n0, tm_eff)
    if n != n0:
        x2d = jnp.pad(x2d, ((0, n - n0), (0, 0)))
        resid2d = jnp.pad(resid2d, ((0, n - n0), (0, 0)))
    tn = _pick_tile(f, tn_max)
    out = pl.pallas_call(
        _dense_res_kernel,
        out_shape=jax.ShapeDtypeStruct((n, f), jnp.float32),
        grid=(n // tm_eff, f // tn),
        in_specs=[pl.BlockSpec((tm_eff, k), lambda i, j: (i, 0)),
                  pl.BlockSpec((k, tn), lambda i, j: (0, j)),
                  pl.BlockSpec((1, tn), lambda i, j: (0, j)),
                  pl.BlockSpec((tm_eff, tn), lambda i, j: (i, j))],
        out_specs=pl.BlockSpec((tm_eff, tn), lambda i, j: (i, j)),
        compiler_params=pltpu.CompilerParams(
            dimension_semantics=("parallel", "parallel")),
    )(x2d.astype(jnp.float32), w_bf16,
      wb.reshape(1, f).astype(jnp.float32), resid2d.astype(jnp.float32))
    return out[:n0]


def _ln_lmhead_kernel(x_ref, g_ref, b_ref, wte_ref, o_ref):
    """Fused final-LayerNorm + lm_head; contracts D against (V, D) tied embedding."""
    x = x_ref[...]
    mu = jnp.mean(x, axis=-1, keepdims=True)
    var = jnp.mean(jnp.square(x - mu), axis=-1, keepdims=True)
    xn = (x - mu) * jax.lax.rsqrt(var + 1e-5) * g_ref[...] + b_ref[...]
    o_ref[...] = jax.lax.dot_general(
        xn.astype(jnp.bfloat16), wte_ref[...],
        (((1,), (1,)), ((), ())), preferred_element_type=jnp.float32)


def ln_lmhead(x2d, gamma, beta, wte_bf16, tm=TM_ROWS, tv_max=TN_MAX):
    n0, d = x2d.shape
    v = wte_bf16.shape[0]
    tm_eff = min(tm, _round_up(n0, 8))
    n = _round_up(n0, tm_eff)
    if n != n0:
        x2d = jnp.pad(x2d, ((0, n - n0), (0, 0)))
    tv = _pick_tile(v, tv_max)
    out = pl.pallas_call(
        _ln_lmhead_kernel,
        out_shape=jax.ShapeDtypeStruct((n, v), jnp.float32),
        grid=(n // tm_eff, v // tv),
        in_specs=[pl.BlockSpec((tm_eff, d), lambda i, j: (i, 0)),
                  pl.BlockSpec((1, d), lambda i, j: (0, 0)),
                  pl.BlockSpec((1, d), lambda i, j: (0, 0)),
                  pl.BlockSpec((tv, d), lambda i, j: (j, 0))],
        out_specs=pl.BlockSpec((tm_eff, tv), lambda i, j: (i, j)),
        compiler_params=pltpu.CompilerParams(
            dimension_semantics=("parallel", "parallel")),
    )(x2d.astype(jnp.float32),
      gamma.reshape(1, d).astype(jnp.float32),
      beta.reshape(1, d).astype(jnp.float32),
      wte_bf16)
    return out[:n0]


def _layernorm_kernel(x_ref, g_ref, b_ref, o_ref):
    x = x_ref[...]
    mu = jnp.mean(x, axis=-1, keepdims=True)
    var = jnp.mean(jnp.square(x - mu), axis=-1, keepdims=True)
    o_ref[...] = (x - mu) * jax.lax.rsqrt(var + 1e-5) * g_ref[...] + b_ref[...]


def layernorm(x2d, gamma, beta, tm=TM_ROWS):
    n0, d = x2d.shape
    tm_eff = min(tm, _round_up(n0, 8))
    n = _round_up(n0, tm_eff)
    if n != n0:
        x2d = jnp.pad(x2d, ((0, n - n0), (0, 0)))
    out = pl.pallas_call(
        _layernorm_kernel,
        out_shape=jax.ShapeDtypeStruct((n, d), jnp.float32),
        grid=(n // tm_eff,),
        in_specs=[pl.BlockSpec((tm_eff, d), lambda i: (i, 0)),
                  pl.BlockSpec((1, d), lambda i: (0, 0)),
                  pl.BlockSpec((1, d), lambda i: (0, 0))],
        out_specs=pl.BlockSpec((tm_eff, d), lambda i: (i, 0)),
        compiler_params=pltpu.CompilerParams(dimension_semantics=("parallel",)),
    )(x2d.astype(jnp.float32),
      gamma.reshape(1, d).astype(jnp.float32),
      beta.reshape(1, d).astype(jnp.float32))
    return out[:n0]


def _attention_kernel(q_ref, k_ref, v_ref, m_ref, o_ref, *, n_head, scale):
    """All heads of one batch element; causal+padding mask built in-kernel;
    lane-dense (S, H*hd) output store."""
    s = q_ref.shape[2]
    key_ok = m_ref[0] > 0.5                                     # (1, S)
    ri = jax.lax.broadcasted_iota(jnp.int32, (s, s), 0)
    ci = jax.lax.broadcasted_iota(jnp.int32, (s, s), 1)
    bias = jnp.where(jnp.logical_and(ri >= ci, key_ok), 0.0, -1e9)   # (S, S) f32
    outs = []
    for h in range(n_head):
        q = q_ref[0, h]                                         # (S, hd) bf16
        k = k_ref[0, h]
        v = v_ref[0, h]
        scores = jax.lax.dot_general(
            q, k, (((1,), (1,)), ((), ())),
            preferred_element_type=jnp.float32) * scale + bias
        mx = jnp.max(scores, axis=-1, keepdims=True)
        p = jnp.exp(scores - mx)
        p = p * pl.reciprocal(jnp.sum(p, axis=-1, keepdims=True), approx=True)
        outs.append(jnp.dot(p.astype(jnp.bfloat16), v,
                            preferred_element_type=jnp.float32))  # (S, hd) f32
    o_ref[0] = jnp.concatenate(outs, axis=-1)                    # (S, H*hd) lane-dense


def attention(q, k, v, attn_mask):
    """q,k,v: (B, H, S, hd) bf16; attn_mask: (B, S) -> (B, S, H*hd) f32."""
    b, h, s, hd = q.shape
    d = h * hd
    kernel = functools.partial(_attention_kernel, n_head=h, scale=1.0 / math.sqrt(hd))
    mask3 = attn_mask.reshape(b, 1, s).astype(jnp.float32)
    return pl.pallas_call(
        kernel,
        out_shape=jax.ShapeDtypeStruct((b, s, d), jnp.float32),
        grid=(b,),
        in_specs=[pl.BlockSpec((1, h, s, hd), lambda i: (i, 0, 0, 0)),
                  pl.BlockSpec((1, h, s, hd), lambda i: (i, 0, 0, 0)),
                  pl.BlockSpec((1, h, s, hd), lambda i: (i, 0, 0, 0)),
                  pl.BlockSpec((1, 1, s), lambda i: (i, 0, 0))],
        out_specs=pl.BlockSpec((1, s, d), lambda i: (i, 0, 0)),
        compiler_params=pltpu.CompilerParams(dimension_semantics=("parallel",)),
    )(q, k, v, mask3)


def _ce_kernel(logits_ref, tgt_ref, m_ref, loss_ref, lsum_ref, csum_ref):
    i = pl.program_id(0)

    @pl.when(i == 0)
    def _():
        lsum_ref[...] = jnp.zeros_like(lsum_ref)
        csum_ref[...] = jnp.zeros_like(csum_ref)

    logits = logits_ref[...]                    # (tr, V) f32
    tgt = tgt_ref[...]                          # (tr, 1) int32
    m = m_ref[...]                              # (tr, 1) f32, 1 = selected
    mx = jnp.max(logits, axis=-1, keepdims=True)
    lse = mx + jnp.log(jnp.sum(jnp.exp(logits - mx), axis=-1, keepdims=True))
    lane = jax.lax.broadcasted_iota(jnp.int32, logits.shape, 1)
    tgt_logit = jnp.sum(jnp.where(lane == tgt, logits, 0.0), axis=-1, keepdims=True)
    per = (lse - tgt_logit) * m                 # (tr, 1)
    lsum_ref[...] += jnp.sum(per, axis=0, keepdims=True)
    csum_ref[...] += jnp.sum(m, axis=0, keepdims=True)

    @pl.when(i == pl.num_programs(0) - 1)
    def _():
        loss_ref[...] = lsum_ref[...] / jnp.maximum(csum_ref[...], 1.0)


def masked_cross_entropy(logits2d, targets, sel_mask, tr=8):
    """Mean CE over positions where sel_mask==1 (matches filtering + nn.CrossEntropyLoss).
    Row-tiled with running (loss, count) accumulators; count clamped to >=1."""
    n0, v = logits2d.shape
    n = _round_up(n0, tr)
    targets = targets.reshape(-1).astype(jnp.int32)
    sel_mask = sel_mask.reshape(-1).astype(jnp.float32)
    if n != n0:
        logits2d = jnp.pad(logits2d, ((0, n - n0), (0, 0)))
        targets = jnp.pad(targets, (0, n - n0))
        sel_mask = jnp.pad(sel_mask, (0, n - n0))
    out = pl.pallas_call(
        _ce_kernel,
        out_shape=jax.ShapeDtypeStruct((1, 1), jnp.float32),
        grid=(n // tr,),
        in_specs=[pl.BlockSpec((tr, v), lambda i: (i, 0)),
                  pl.BlockSpec((tr, 1), lambda i: (i, 0)),
                  pl.BlockSpec((tr, 1), lambda i: (i, 0))],
        out_specs=pl.BlockSpec((1, 1), lambda i: (0, 0)),
        scratch_shapes=[pltpu.VMEM((1, 1), jnp.float32),
                        pltpu.VMEM((1, 1), jnp.float32)],
        compiler_params=pltpu.CompilerParams(dimension_semantics=("arbitrary",)),
    )(logits2d.astype(jnp.float32), targets.reshape(n, 1), sel_mask.reshape(n, 1))
    return out[0, 0]


# ------------------------------- model glue ---------------------------------

def init_gpt2_params(key, *, vocab, d_model, n_head, n_layer, d_ff, max_pos):
    del n_head  # shape-independent
    std = 0.02
    keys = jax.random.split(key, 2 + n_layer)
    params = {
        "wte": std * jax.random.normal(keys[0], (vocab, d_model), jnp.float32),
        "wpe": std * jax.random.normal(keys[1], (max_pos, d_model), jnp.float32),
        "ln_f_g": jnp.ones((d_model,), jnp.float32),
        "ln_f_b": jnp.zeros((d_model,), jnp.float32),
        "blocks": [],
    }
    for l in range(n_layer):
        bk = jax.random.split(keys[2 + l], 4)
        params["blocks"].append({
            "ln1_g": jnp.ones((d_model,), jnp.float32),
            "ln1_b": jnp.zeros((d_model,), jnp.float32),
            "ln2_g": jnp.ones((d_model,), jnp.float32),
            "ln2_b": jnp.zeros((d_model,), jnp.float32),
            "attn_w": std * jax.random.normal(bk[0], (d_model, 3 * d_model), jnp.float32),
            "attn_b": jnp.zeros((3 * d_model,), jnp.float32),
            "attn_proj_w": std * jax.random.normal(bk[1], (d_model, d_model), jnp.float32),
            "attn_proj_b": jnp.zeros((d_model,), jnp.float32),
            "fc_w": std * jax.random.normal(bk[2], (d_model, d_ff), jnp.float32),
            "fc_b": jnp.zeros((d_ff,), jnp.float32),
            "fc_proj_w": std * jax.random.normal(bk[3], (d_ff, d_model), jnp.float32),
            "fc_proj_b": jnp.zeros((d_model,), jnp.float32),
        })
    return params


def gpt2_blocks(params, hidden, attn_mask, n_head):
    """Transformer blocks (no final LN); hidden already contains token+position embeds."""
    b, s, d = hidden.shape
    hd = d // n_head
    x2d = hidden.reshape(b * s, d)
    for blk in params["blocks"]:
        # fused LN1 -> QKV
        qkv = ln_dense(x2d, blk["ln1_g"], blk["ln1_b"],
                       blk["attn_w"].astype(jnp.bfloat16), blk["attn_b"])
        qkv = qkv.reshape(b, s, 3, n_head, hd).astype(jnp.bfloat16)
        q = jnp.transpose(qkv[:, :, 0], (0, 2, 1, 3))            # (B, H, S, hd)
        k = jnp.transpose(qkv[:, :, 1], (0, 2, 1, 3))
        v = jnp.transpose(qkv[:, :, 2], (0, 2, 1, 3))
        # heads-fused attention, in-kernel mask, lane-dense output
        a = attention(q, k, v, attn_mask)                        # (B, S, D) f32
        # attn projection with fused residual add
        x2d = dense_res(a.reshape(b * s, d),
                        blk["attn_proj_w"].astype(jnp.bfloat16),
                        blk["attn_proj_b"], x2d)
        # fused LN2 -> FC -> gelu
        ff = ln_dense(x2d, blk["ln2_g"], blk["ln2_b"],
                      blk["fc_w"].astype(jnp.bfloat16), blk["fc_b"],
                      activation="gelu")
        # MLP projection with fused residual add
        x2d = dense_res(ff, blk["fc_proj_w"].astype(jnp.bfloat16),
                        blk["fc_proj_b"], x2d)
    return x2d.reshape(b, s, d)


@functools.partial(jax.jit, static_argnames=("pad_token_id", "n_head"))
def autoencoder_forward(enc_params, dec_params,
                        encoder_input_ids, encoder_attention_mask,
                        decoder_input_ids, decoder_attention_mask,
                        *, pad_token_id, n_head):
    b, s_enc = encoder_input_ids.shape
    d = enc_params["wte"].shape[1]

    # ---- encoder transformer ----
    enc_in = (jnp.take(enc_params["wte"], encoder_input_ids, axis=0)
              + enc_params["wpe"][:s_enc][None])
    enc_blocks = gpt2_blocks(enc_params, enc_in, encoder_attention_mask, n_head)
    enc_hidden = layernorm(enc_blocks.reshape(b * s_enc, d),
                           enc_params["ln_f_g"], enc_params["ln_f_b"]).reshape(b, s_enc, d)

    # ---- last-token prefix gather (glue) ----
    last_idx = jnp.sum(encoder_attention_mask, axis=1).astype(jnp.int32) - 1
    prefix = enc_hidden[jnp.arange(b), last_idx][:, None, :]           # (B, 1, D)

    # ---- decoder with prefix-concatenated input embeddings ----
    dec_embeds = jnp.take(dec_params["wte"], decoder_input_ids, axis=0)
    dec_embeds = jnp.concatenate([prefix, dec_embeds], axis=1)         # (B, Sd+1, D)
    s_dec1 = dec_embeds.shape[1]
    dec_mask_full = jnp.concatenate(
        [jnp.ones((b, 1), decoder_attention_mask.dtype), decoder_attention_mask], axis=1)
    dec_in = dec_embeds + dec_params["wpe"][:s_dec1][None]
    dec_blocks = gpt2_blocks(dec_params, dec_in, dec_mask_full, n_head)

    # ---- fused final-LN + lm_head (weight tied to decoder wte, no .T materialization) ----
    vocab = dec_params["wte"].shape[0]
    logits = ln_lmhead(dec_blocks.reshape(b * s_dec1, d),
                       dec_params["ln_f_g"], dec_params["ln_f_b"],
                       dec_params["wte"].astype(jnp.bfloat16))
    logits = logits.reshape(b, s_dec1, vocab)

    # ---- shifted, pad-cumsum-masked cross-entropy ----
    shift_logits = logits[:, :-1, :]                                   # (B, Sd, V)
    shift_labels = decoder_input_ids                                   # (B, Sd)
    keep = jnp.cumsum((shift_labels == pad_token_id).astype(jnp.int32), axis=1) <= 1
    loss = masked_cross_entropy(shift_logits.reshape(-1, vocab),
                                shift_labels.reshape(-1),
                                keep.reshape(-1))
    return loss, logits


# TODO(synk): tokenizer / .generate() / BLEU evaluation in `test()` and loading pretrained
# HF checkpoints have no Pallas equivalent; parameters here are synthetic.

if __name__ == "__main__":
    B, S_ENC, S_DEC = 2, 8, 8
    D_MODEL, N_HEAD, N_LAYER, VOCAB = 128, 4, 2, 256
    D_FF = 4 * D_MODEL
    PAD_ID = VOCAB - 1

    root = jax.random.PRNGKey(0)
    k_enc, k_dec, k_ids_e, k_ids_d = jax.random.split(root, 4)
    enc_params = init_gpt2_params(k_enc, vocab=VOCAB, d_model=D_MODEL, n_head=N_HEAD,
                                  n_layer=N_LAYER, d_ff=D_FF, max_pos=32)
    dec_params = init_gpt2_params(k_dec, vocab=VOCAB, d_model=D_MODEL, n_head=N_HEAD,
                                  n_layer=N_LAYER, d_ff=D_FF, max_pos=32)

    encoder_input_ids = jax.random.randint(k_ids_e, (B, S_ENC), 0, VOCAB - 1).astype(jnp.int32)
    encoder_attention_mask = jnp.array([[1, 1, 1, 1, 1, 1, 1, 1],
                                        [1, 1, 1, 1, 1, 0, 0, 0]], dtype=jnp.int32)

    decoder_input_ids = jax.random.randint(k_ids_d, (B, S_DEC), 0, VOCAB - 1).astype(jnp.int32)
    decoder_input_ids = decoder_input_ids.at[1, 5:].set(PAD_ID)        # pad tail of sample 1
    decoder_attention_mask = (decoder_input_ids != PAD_ID).astype(jnp.int32)

    loss, logits = autoencoder_forward(enc_params, dec_params,
                                       encoder_input_ids, encoder_attention_mask,
                                       decoder_input_ids, decoder_attention_mask,
                                       pad_token_id=PAD_ID, n_head=N_HEAD)
    loss, logits = jax.block_until_ready((loss, logits))

    assert logits.shape == (B, S_DEC + 1, VOCAB)
    assert bool(jnp.isfinite(loss))
    print("KERNEL_OK")
</pallas_src>

<mosaic_0001>
module attributes {stable_mosaic.version = 11 : i64} {
  func.func @_ln_dense_kernel(%arg0: i32, %arg1: i32, %arg2: memref<16x128xf32, #tpu.memory_space<vmem>>, %arg3: memref<1x128xf32, #tpu.memory_space<vmem>>, %arg4: memref<1x128xf32, #tpu.memory_space<vmem>>, %arg5: memref<128x128xbf16, #tpu.memory_space<vmem>>, %arg6: memref<1x128xf32, #tpu.memory_space<vmem>>, %arg7: memref<16x128xf32, #tpu.memory_space<vmem>>) attributes {dimension_semantics = [#tpu.dimension_semantics<parallel>, #tpu.dimension_semantics<parallel>], iteration_bounds = array<i64: 1, 3>, scalar_prefetch = 0 : i64, scratch_operands = 0 : i64, tpu.core_type = #tpu.core_type<tc>, window_params = [{transform_indices = @transform_0, window_bounds = array<i64: 16, 128>}, {pipeline_mode = #tpu.pipeline_mode<synchronous>, transform_indices = @transform_1, window_bounds = array<i64: 1, 128>}, {pipeline_mode = #tpu.pipeline_mode<synchronous>, transform_indices = @transform_2, window_bounds = array<i64: 1, 128>}, {transform_indices = @transform_3, window_bounds = array<i64: 128, 128>}, {transform_indices = @transform_4, window_bounds = array<i64: 1, 128>}, {transform_indices = @transform_5, window_bounds = array<i64: 16, 128>}]} {
    %c0 = arith.constant 0 : index
    %c0_0 = arith.constant 0 : index
    %0 = vector.load %arg2[%c0, %c0_0] : memref<16x128xf32, #tpu.memory_space<vmem>>, vector<16x128xf32>
    %cst = arith.constant dense<0.000000e+00> : vector<16xf32>
    %1 = vector.multi_reduction <add>, %0, %cst [1] : vector<16x128xf32> to vector<16xf32>
    %2 = vector.shape_cast %1 : vector<16xf32> to vector<16x1xf32>
    %cst_1 = arith.constant 1.280000e+02 : f32
    %3 = vector.broadcast %cst_1 : f32 to vector<16x1xf32>
    %4 = arith.divf %2, %3 : vector<16x1xf32>
    %5 = vector.broadcast %4 : vector<16x1xf32> to vector<16x128xf32>
    %6 = arith.subf %0, %5 : vector<16x128xf32>
    %7 = arith.mulf %6, %6 : vector<16x128xf32>
    %cst_2 = arith.constant dense<0.000000e+00> : vector<16xf32>
    %8 = vector.multi_reduction <add>, %7, %cst_2 [1] : vector<16x128xf32> to vector<16xf32>
    %9 = vector.shape_cast %8 : vector<16xf32> to vector<16x1xf32>
    %cst_3 = arith.constant 1.280000e+02 : f32
    %10 = vector.broadcast %cst_3 : f32 to vector<16x1xf32>
    %11 = arith.divf %9, %10 : vector<16x1xf32>
    %12 = vector.broadcast %4 : vector<16x1xf32> to vector<16x128xf32>
    %13 = arith.subf %0, %12 : vector<16x128xf32>
    %cst_4 = arith.constant 9.99999974E-6 : f32
    %14 = vector.broadcast %cst_4 : f32 to vector<16x1xf32>
    %15 = arith.addf %11, %14 : vector<16x1xf32>
    %16 = math.rsqrt %15 : vector<16x1xf32>
    %17 = vector.broadcast %16 : vector<16x1xf32> to vector<16x128xf32>
    %18 = arith.mulf %13, %17 : vector<16x128xf32>
    %c0_5 = arith.constant 0 : index
    %c0_6 = arith.constant 0 : index
    %19 = vector.load %arg3[%c0_5, %c0_6] : memref<1x128xf32, #tpu.memory_space<vmem>>, vector<1x128xf32>
    %20 = vector.broadcast %19 : vector<1x128xf32> to vector<16x128xf32>
    %21 = arith.mulf %18, %20 : vector<16x128xf32>
    %c0_7 = arith.constant 0 : index
    %c0_8 = arith.constant 0 : index
    %22 = vector.load %arg4[%c0_7, %c0_8] : memref<1x128xf32, #tpu.memory_space<vmem>>, vector<1x128xf32>
    %23 = vector.broadcast %22 : vector<1x128xf32> to vector<16x128xf32>
    %24 = arith.addf %21, %23 : vector<16x128xf32>
    %25 = arith.truncf %24 : vector<16x128xf32> to vector<16x128xbf16>
    %c0_9 = arith.constant 0 : index
    %c0_10 = arith.constant 0 : index
    %26 = vector.load %arg5[%c0_9, %c0_10] : memref<128x128xbf16, #tpu.memory_space<vmem>>, vector<128x128xbf16>
    %cst_11 = arith.constant dense<0.000000e+00> : vector<16x128xf32>
    %27 = tpu.matmul %25, %26, %cst_11 {dimension_numbers = #tpu.dot_dimension_numbers<[1], [0], [0], [1], [0, 0, 1, 1], [], []>} : vector<16x128xbf16>, vector<128x128xbf16>, vector<16x128xf32> -> vector<16x128xf32>
    %c0_12 = arith.constant 0 : index
    %c0_13 = arith.constant 0 : index
    %28 = vector.load %arg6[%c0_12, %c0_13] : memref<1x128xf32, #tpu.memory_space<vmem>>, vector<1x128xf32>
    %29 = vector.broadcast %28 : vector<1x128xf32> to vector<16x128xf32>
    %30 = arith.addf %27, %29 : vector<16x128xf32>
    %c0_14 = arith.constant 0 : index
    %c0_15 = arith.constant 0 : index
    %31 = vector.load %arg7[%c0_14, %c0_15] : memref<16x128xf32, #tpu.memory_space<vmem>>, vector<16x128xf32>
    tpu.vector_store %arg7[%c0_14, %c0_15], %30 {strides = array<i32>} : memref<16x128xf32, #tpu.memory_space<vmem>>, vector<16x128xf32>,
    return
  }
  func.func @transform_0(%arg0: i32, %arg1: i32) -> (i32, i32) {
    %c0_i32 = arith.constant 0 : i32
    %c0_i32_0 = arith.constant 0 : i32
    return %arg0, %c0_i32 : i32, i32
  }
  func.func @transform_1(%arg0: i32, %arg1: i32) -> (i32, i32) {
    %c0_i32 = arith.constant 0 : i32
    %c0_i32_0 = arith.constant 0 : i32
    %c0_i32_1 = arith.constant 0 : i32
    return %c0_i32, %c0_i32_0 : i32, i32
  }
  func.func @transform_2(%arg0: i32, %arg1: i32) -> (i32, i32) {
    %c0_i32 = arith.constant 0 : i32
    %c0_i32_0 = arith.constant 0 : i32
    %c0_i32_1 = arith.constant 0 : i32
    return %c0_i32, %c0_i32_0 : i32, i32
  }
  func.func @transform_3(%arg0: i32, %arg1: i32) -> (i32, i32) {
    %c0_i32 = arith.constant 0 : i32
    %c0_i32_0 = arith.constant 0 : i32
    return %c0_i32, %arg1 : i32, i32
  }
  func.func @transform_4(%arg0: i32, %arg1: i32) -> (i32, i32) {
    %c0_i32 = arith.constant 0 : i32
    %c0_i32_0 = arith.constant 0 : i32
    return %c0_i32, %arg1 : i32, i32
  }
  func.func @transform_5(%arg0: i32, %arg1: i32) -> (i32, i32) {
    %c0_i32 = arith.constant 0 : i32
    return %arg0, %arg1 : i32, i32
  }
}

module attributes {stable_mosaic.version = 11 : i64} {
  func.func @_dense_res_kernel(%arg0: i32, %arg1: i32, %arg2: memref<16x128xf32, #tpu.memory_space<vmem>>, %arg3: memref<128x128xbf16, #tpu.memory_space<vmem>>, %arg4: memref<1x128xf32, #tpu.memory_space<vmem>>, %arg5: memref<16x128xf32, #tpu.memory_space<vmem>>, %arg6: memref<16x128xf32, #tpu.memory_space<vmem>>) attributes {dimension_semantics = [#tpu.dimension_semantics<parallel>, #tpu.dimension_semantics<parallel>], iteration_bounds = array<i64: 1, 1>, scalar_prefetch = 0 : i64, scratch_operands = 0 : i64, tpu.core_type = #tpu.core_type<tc>, window_params = [{transform_indices = @transform_0, window_bounds = array<i64: 16, 128>}, {transform_indices = @transform_1, window_bounds = array<i64: 128, 128>}, {transform_indices = @transform_2, window_bounds = array<i64: 1, 128>}, {transform_indices = @transform_3, window_bounds = array<i64: 16, 128>}, {transform_indices = @transform_4, window_bounds = array<i64: 16, 128>}]} {
    %c0 = arith.constant 0 : index
    %c0_0 = arith.constant 0 : index
    %0 = vector.load %arg2[%c0, %c0_0] : memref<16x128xf32, #tpu.memory_space<vmem>>, vector<16x128xf32>
    %1 = arith.truncf %0 : vector<16x128xf32> to vector<16x128xbf16>
    %c0_1 = arith.constant 0 : index
    %c0_2 = arith.constant 0 : index
    %2 = vector.load %arg3[%c0_1, %c0_2] : memref<128x128xbf16, #tpu.memory_space<vmem>>, vector<128x128xbf16>
    %cst = arith.constant dense<0.000000e+00> : vector<16x128xf32>
    %3 = tpu.matmul %1, %2, %cst {dimension_numbers = #tpu.dot_dimension_numbers<[1], [0], [0], [1], [0, 0, 1, 1], [], []>} : vector<16x128xbf16>, vector<128x128xbf16>, vector<16x128xf32> -> vector<16x128xf32>
    %c0_3 = arith.constant 0 : index
    %c0_4 = arith.constant 0 : index
    %4 = vector.load %arg4[%c0_3, %c0_4] : memref<1x128xf32, #tpu.memory_space<vmem>>, vector<1x128xf32>
    %5 = vector.broadcast %4 : vector<1x128xf32> to vector<16x128xf32>
    %6 = arith.addf %3, %5 : vector<16x128xf32>
    %c0_5 = arith.constant 0 : index
    %c0_6 = arith.constant 0 : index
    %7 = vector.load %arg5[%c0_5, %c0_6] : memref<16x128xf32, #tpu.memory_space<vmem>>, vector<16x128xf32>
    %8 = arith.addf %6, %7 : vector<16x128xf32>
    %c0_7 = arith.constant 0 : index
    %c0_8 = arith.constant 0 : index
    %9 = vector.load %arg6[%c0_7, %c0_8] : memref<16x128xf32, #tpu.memory_space<vmem>>, vector<16x128xf32>
    tpu.vector_store %arg6[%c0_7, %c0_8], %8 {strides = array<i32>} : memref<16x128xf32, #tpu.memory_space<vmem>>, vector<16x128xf32>,
    return
  }
  func.func @transform_0(%arg0: i32, %arg1: i32) -> (i32, i32) {
    %c0_i32 = arith.constant 0 : i32
    %c0_i32_0 = arith.constant 0 : i32
    return %arg0, %c0_i32 : i32, i32
  }
  func.func @transform_1(%arg0: i32, %arg1: i32) -> (i32, i32) {
    %c0_i32 = arith.constant 0 : i32
    %c0_i32_0 = arith.constant 0 : i32
    return %c0_i32, %arg1 : i32, i32
  }
  func.func @transform_2(%arg0: i32, %arg1: i32) -> (i32, i32) {
    %c0_i32 = arith.constant 0 : i32
    %c0_i32_0 = arith.constant 0 : i32
    return %c0_i32, %arg1 : i32, i32
  }
  func.func @transform_3(%arg0: i32, %arg1: i32) -> (i32, i32) {
    %c0_i32 = arith.constant 0 : i32
    return %arg0, %arg1 : i32, i32
  }
  func.func @transform_4(%arg0: i32, %arg1: i32) -> (i32, i32) {
    %c0_i32 = arith.constant 0 : i32
    return %arg0, %arg1 : i32, i32
  }
}

module attributes {stable_mosaic.version = 11 : i64} {
  func.func @_attention_kernel(%arg0: i32, %arg1: memref<1x4x8x32xbf16, #tpu.memory_space<vmem>>, %arg2: memref<1x4x8x32xbf16, #tpu.memory_space<vmem>>, %arg3: memref<1x4x8x32xbf16, #tpu.memory_space<vmem>>, %arg4: memref<1x1x8xf32, #tpu.memory_space<vmem>>, %arg5: memref<1x8x128xf32, #tpu.memory_space<vmem>>) attributes {dimension_semantics = [#tpu.dimension_semantics<parallel>], iteration_bounds = array<i64: 2>, scalar_prefetch = 0 : i64, scratch_operands = 0 : i64, tpu.core_type = #tpu.core_type<tc>, window_params = [{transform_indices = @transform_0, window_bounds = array<i64: 1, 4, 8, 32>}, {transform_indices = @transform_1, window_bounds = array<i64: 1, 4, 8, 32>}, {transform_indices = @transform_2, window_bounds = array<i64: 1, 4, 8, 32>}, {transform_indices = @transform_3, window_bounds = array<i64: 1, 1, 8>}, {transform_indices = @transform_4, window_bounds = array<i64: 1, 8, 128>}]} {
    %c0 = arith.constant 0 : index
    %c0_0 = arith.constant 0 : index
    %c0_1 = arith.constant 0 : index
    %0 = vector.load %arg4[%c0, %c0_0, %c0_1] : memref<1x1x8xf32, #tpu.memory_space<vmem>>, vector<1x1x8xf32>
    %1 = vector.shape_cast %0 : vector<1x1x8xf32> to vector<1x8xf32>
    %cst = arith.constant 5.000000e-01 : f32
    %2 = vector.broadcast %cst : f32 to vector<1x8xf32>
    %3 = arith.cmpf ogt, %1, %2 : vector<1x8xf32>
    %4 = tpu.iota {dimensions = array<i32: 0>} : vector<8x8xi32>
    %5 = tpu.iota {dimensions = array<i32: 1>} : vector<8x8xi32>
    %6 = arith.cmpi sge, %4, %5 : vector<8x8xi32>
    %7 = vector.broadcast %3 : vector<1x8xi1> to vector<8x8xi1>
    %8 = arith.andi %6, %7 : vector<8x8xi1>
    %cst_2 = arith.constant 0.000000e+00 : f32
    %cst_3 = arith.constant -1.000000e+09 : f32
    %9 = vector.broadcast %cst_2 : f32 to vector<8x8xf32>
    %10 = vector.broadcast %cst_3 : f32 to vector<8x8xf32>
    %11 = arith.select %8, %9, %10 : vector<8x8xi1>, vector<8x8xf32>
    %c0_4 = arith.constant 0 : index
    %c0_5 = arith.constant 0 : index
    %c0_6 = arith.constant 0 : index
    %c0_7 = arith.constant 0 : index
    %12 = vector.load %arg1[%c0_4, %c0_5, %c0_6, %c0_7] : memref<1x4x8x32xbf16, #tpu.memory_space<vmem>>, vector<1x1x8x32xbf16>
    %13 = vector.shape_cast %12 : vector<1x1x8x32xbf16> to vector<8x32xbf16>
    %c0_8 = arith.constant 0 : index
    %c0_9 = arith.constant 0 : index
    %c0_10 = arith.constant 0 : index
    %c0_11 = arith.constant 0 : index
    %14 = vector.load %arg2[%c0_8, %c0_9, %c0_10, %c0_11] : memref<1x4x8x32xbf16, #tpu.memory_space<vmem>>, vector<1x1x8x32xbf16>
    %15 = vector.shape_cast %14 : vector<1x1x8x32xbf16> to vector<8x32xbf16>
    %c0_12 = arith.constant 0 : index
    %c0_13 = arith.constant 0 : index
    %c0_14 = arith.constant 0 : index
    %c0_15 = arith.constant 0 : index
    %16 = vector.load %arg3[%c0_12, %c0_13, %c0_14, %c0_15] : memref<1x4x8x32xbf16, #tpu.memory_space<vmem>>, vector<1x1x8x32xbf16>
    %17 = vector.shape_cast %16 : vector<1x1x8x32xbf16> to vector<8x32xbf16>
    %cst_16 = arith.constant dense<0.000000e+00> : vector<8x8xf32>
    %18 = tpu.matmul %13, %15, %cst_16 {dimension_numbers = #tpu.dot_dimension_numbers<[1], [1], [0], [0], [0, 0, 1, 0], [], []>} : vector<8x32xbf16>, vector<8x32xbf16>, vector<8x8xf32> -> vector<8x8xf32>
    %cst_17 = arith.constant 0.176776692 : f32
    %19 = vector.broadcast %cst_17 : f32 to vector<8x8xf32>
    %20 = arith.mulf %18, %19 : vector<8x8xf32>
    %21 = arith.addf %20, %11 : vector<8x8xf32>
    %cst_18 = arith.constant dense<0xFF800000> : vector<8xf32>
    %22 = vector.multi_reduction <maximumf>, %21, %cst_18 [1] : vector<8x8xf32> to vector<8xf32>
    %23 = vector.shape_cast %22 : vector<8xf32> to vector<8x1xf32>
    %24 = vector.broadcast %23 : vector<8x1xf32> to vector<8x8xf32>
    %25 = arith.subf %21, %24 : vector<8x8xf32>
    %26 = math.exp %25 : vector<8x8xf32>
    %cst_19 = arith.constant dense<0.000000e+00> : vector<8xf32>
    %27 = vector.multi_reduction <add>, %26, %cst_19 [1] : vector<8x8xf32> to vector<8xf32>
    %28 = vector.shape_cast %27 : vector<8xf32> to vector<8x1xf32>
    %29 = tpu.reciprocal %28 {approx = true} : vector<8x1xf32> -> vector<8x1xf32>
    %30 = vector.broadcast %29 : vector<8x1xf32> to vector<8x8xf32>
    %31 = arith.mulf %26, %30 : vector<8x8xf32>
    %32 = arith.truncf %31 : vector<8x8xf32> to vector<8x8xbf16>
    %cst_20 = arith.constant dense<0.000000e+00> : vector<8x32xf32>
    %33 = tpu.matmul %32, %17, %cst_20 {dimension_numbers = #tpu.dot_dimension_numbers<[1], [0], [0], [1], [0, 0, 1, 1], [], []>} : vector<8x8xbf16>, vector<8x32xbf16>, vector<8x32xf32> -> vector<8x32xf32>
    %c0_21 = arith.constant 0 : index
    %c1 = arith.constant 1 : index
    %c0_22 = arith.constant 0 : index
    %c0_23 = arith.constant 0 : index
    %34 = vector.load %arg1[%c0_21, %c1, %c0_22, %c0_23] : memref<1x4x8x32xbf16, #tpu.memory_space<vmem>>, vector<1x1x8x32xbf16>
    %35 = vector.shape_cast %34 : vector<1x1x8x32xbf16> to vector<8x32xbf16>
    %c0_24 = arith.constant 0 : index
    %c1_25 = arith.constant 1 : index
    %c0_26 = arith.constant 0 : index
    %c0_27 = arith.constant 0 : index
    %36 = vector.load %arg2[%c0_24, %c1_25, %c0_26, %c0_27] : memref<1x4x8x32xbf16, #tpu.memory_space<vmem>>, vector<1x1x8x32xbf16>
    %37 = vector.shape_cast %36 : vector<1x1x8x32xbf16> to vector<8x32xbf16>
    %c0_28 = arith.constant 0 : index
    %c1_29 = arith.constant 1 : index
    %c0_30 = arith.constant 0 : index
    %c0_31 = arith.constant 0 : index
    %38 = vector.load %arg3[%c0_28, %c1_29, %c0_30, %c0_31] : memref<1x4x8x32xbf16, #tpu.memory_space<vmem>>, vector<1x1x8x32xbf16>
    %39 = vector.shape_cast %38 : vector<1x1x8x32xbf16> to vector<8x32xbf16>
    %cst_32 = arith.constant dense<0.000000e+00> : vector<8x8xf32>
    %40 = tpu.matmul %35, %37, %cst_32 {dimension_numbers = #tpu.dot_dimension_numbers<[1], [1], [0], [0], [0, 0, 1, 0], [], []>} : vector<8x32xbf16>, vector<8x32xbf16>, vector<8x8xf32> -> vector<8x8xf32>
    %cst_33 = arith.constant 0.176776692 : f32
    %41 = vector.broadcast %cst_33 : f32 to vector<8x8xf32>
    %42 = arith.mulf %40, %41 : vector<8x8xf32>
    %43 = arith.addf %42, %11 : vector<8x8xf32>
    %cst_34 = arith.constant dense<0xFF800000> : vector<8xf32>
    %44 = vector.multi_reduction <maximumf>, %43, %cst_34 [1] : vector<8x8xf32> to vector<8xf32>
    %45 = vector.shape_cast %44 : vector<8xf32> to vector<8x1xf32>
    %46 = vector.broadcast %45 : vector<8x1xf32> to vector<8x8xf32>
    %47 = arith.subf %43, %46 : vector<8x8xf32>
    %48 = math.exp %47 : vector<8x8xf32>
    %cst_35 = arith.constant dense<0.000000e+00> : vector<8xf32>
    %49 = vector.multi_reduction <add>, %48, %cst_35 [1] : vector<8x8xf32> to vector<8xf32>
    %50 = vector.shape_cast %49 : vector<8xf32> to vector<8x1xf32>
    %51 = tpu.reciprocal %50 {approx = true} : vector<8x1xf32> -> vector<8x1xf32>
    %52 = vector.broadcast %51 : vector<8x1xf32> to vector<8x8xf32>
    %53 = arith.mulf %48, %52 : vector<8x8xf32>
    %54 = arith.truncf %53 : vector<8x8xf32> to vector<8x8xbf16>
    %cst_36 = arith.constant dense<0.000000e+00> : vector<8x32xf32>
    %55 = tpu.matmul %54, %39, %cst_36 {dimension_numbers = #tpu.dot_dimension_numbers<[1], [0], [0], [1], [0, 0, 1, 1], [], []>} : vector<8x8xbf16>, vector<8x32xbf16>, vector<8x32xf32> -> vector<8x32xf32>
    %c0_37 = arith.constant 0 : index
    %c2 = arith.constant 2 : index
    %c0_38 = arith.constant 0 : index
    %c0_39 = arith.constant 0 : index
    %56 = vector.load %arg1[%c0_37, %c2, %c0_38, %c0_39] : memref<1x4x8x32xbf16, #tpu.memory_space<vmem>>, vector<1x1x8x32xbf16>
    %57 = vector.shape_cast %56 : vector<1x1x8x32xbf16> to vector<8x32xbf16>
    %c0_40 = arith.constant 0 : index
    %c2_41 = arith.constant 2 : index
    %c0_42 = arith.constant 0 : index
    %c0_43 = arith.constant 0 : index
    %58 = vector.load %arg2[%c0_40, %c2_41, %c0_42, %c0_43] : memref<1x4x8x32xbf16, #tpu.memory_space<vmem>>, vector<1x1x8x32xbf16>
    %59 = vector.shape_cast %58 : vector<1x1x8x32xbf16> to vector<8x32xbf16>
    %c0_44 = arith.constant 0 : index
    %c2_45 = arith.constant 2 : index
    %c0_46 = arith.constant 0 : index
    %c0_47 = arith.constant 0 : index
    %60 = vector.load %arg3[%c0_44, %c2_45, %c0_46, %c0_47] : memref<1x4x8x32xbf16, #tpu.memory_space<vmem>>, vector<1x1x8x32xbf16>
    %61 = vector.shape_cast %60 : vector<1x1x8x32xbf16> to vector<8x32xbf16>
    %cst_48 = arith.constant dense<0.000000e+00> : vector<8x8xf32>
    %62 = tpu.matmul %57, %59, %cst_48 {dimension_numbers = #tpu.dot_dimension_numbers<[1], [1], [0], [0], [0, 0, 1, 0], [], []>} : vector<8x32xbf16>, vector<8x32xbf16>, vector<8x8xf32> -> vector<8x8xf32>
    %cst_49 = arith.constant 0.176776692 : f32
    %63 = vector.broadcast %cst_49 : f32 to vector<8x8xf32>
    %64 = arith.mulf %62, %63 : vector<8x8xf32>
    %65 = arith.addf %64, %11 : vector<8x8xf32>
    %cst_50 = arith.constant dense<0xFF800000> : vector<8xf32>
    %66 = vector.multi_reduction <maximumf>, %65, %cst_50 [1] : vector<8x8xf32> to vector<8xf32>
    %67 = vector.shape_cast %66 : vector<8xf32> to vector<8x1xf32>
    %68 = vector.broadcast %67 : vector<8x1xf32> to vector<8x8xf32>
    %69 = arith.subf %65, %68 : vector<8x8xf32>
    %70 = math.exp %69 : vector<8x8xf32>
    %cst_51 = arith.constant dense<0.000000e+00> : vector<8xf32>
    %71 = vector.multi_reduction <add>, %70, %cst_51 [1] : vector<8x8xf32> to vector<8xf32>
    %72 = vector.shape_cast %71 : vector<8xf32> to vector<8x1xf32>
    %73 = tpu.reciprocal %72 {approx = true} : vector<8x1xf32> -> vector<8x1xf32>
    %74 = vector.broadcast %73 : vector<8x1xf32> to vector<8x8xf32>
    %75 = arith.mulf %70, %74 : vector<8x8xf32>
    %76 = arith.truncf %75 : vector<8x8xf32> to vector<8x8xbf16>
    %cst_52 = arith.constant dense<0.000000e+00> : vector<8x32xf32>
    %77 = tpu.matmul %76, %61, %cst_52 {dimension_numbers = #tpu.dot_dimension_numbers<[1], [0], [0], [1], [0, 0, 1, 1], [], []>} : vector<8x8xbf16>, vector<8x32xbf16>, vector<8x32xf32> -> vector<8x32xf32>
    %c0_53 = arith.constant 0 : index
    %c3 = arith.constant 3 : index
    %c0_54 = arith.constant 0 : index
    %c0_55 = arith.constant 0 : index
    %78 = vector.load %arg1[%c0_53, %c3, %c0_54, %c0_55] : memref<1x4x8x32xbf16, #tpu.memory_space<vmem>>, vector<1x1x8x32xbf16>
    %79 = vector.shape_cast %78 : vector<1x1x8x32xbf16> to vector<8x32xbf16>
    %c0_56 = arith.constant 0 : index
    %c3_57 = arith.constant 3 : index
    %c0_58 = arith.constant 0 : index
    %c0_59 = arith.constant 0 : index
    %80 = vector.load %arg2[%c0_56, %c3_57, %c0_58, %c0_59] : memref<1x4x8x32xbf16, #tpu.memory_space<vmem>>, vector<1x1x8x32xbf16>
    %81 = vector.shape_cast %80 : vector<1x1x8x32xbf16> to vector<8x32xbf16>
    %c0_60 = arith.constant 0 : index
    %c3_61 = arith.constant 3 : index
    %c0_62 = arith.constant 0 : index
    %c0_63 = arith.constant 0 : index
    %82 = vector.load %arg3[%c0_60, %c3_61, %c0_62, %c0_63] : memref<1x4x8x32xbf16, #tpu.memory_space<vmem>>, vector<1x1x8x32xbf16>
    %83 = vector.shape_cast %82 : vector<1x1x8x32xbf16> to vector<8x32xbf16>
    %cst_64 = arith.constant dense<0.000000e+00> : vector<8x8xf32>
    %84 = tpu.matmul %79, %81, %cst_64 {dimension_numbers = #tpu.dot_dimension_numbers<[1], [1], [0], [0], [0, 0, 1, 0], [], []>} : vector<8x32xbf16>, vector<8x32xbf16>, vector<8x8xf32> -> vector<8x8xf32>
    %cst_65 = arith.constant 0.176776692 : f32
    %85 = vector.broadcast %cst_65 : f32 to vector<8x8xf32>
    %86 = arith.mulf %84, %85 : vector<8x8xf32>
    %87 = arith.addf %86, %11 : vector<8x8xf32>
    %cst_66 = arith.constant dense<0xFF800000> : vector<8xf32>
    %88 = vector.multi_reduction <maximumf>, %87, %cst_66 [1] : vector<8x8xf32> to vector<8xf32>
    %89 = vector.shape_cast %88 : vector<8xf32> to vector<8x1xf32>
    %90 = vector.broadcast %89 : vector<8x1xf32> to vector<8x8xf32>
    %91 = arith.subf %87, %90 : vector<8x8xf32>
    %92 = math.exp %91 : vector<8x8xf32>
    %cst_67 = arith.constant dense<0.000000e+00> : vector<8xf32>
    %93 = vector.multi_reduction <add>, %92, %cst_67 [1] : vector<8x8xf32> to vector<8xf32>
    %94 = vector.shape_cast %93 : vector<8xf32> to vector<8x1xf32>
    %95 = tpu.reciprocal %94 {approx = true} : vector<8x1xf32> -> vector<8x1xf32>
    %96 = vector.broadcast %95 : vector<8x1xf32> to vector<8x8xf32>
    %97 = arith.mulf %92, %96 : vector<8x8xf32>
    %98 = arith.truncf %97 : vector<8x8xf32> to vector<8x8xbf16>
    %cst_68 = arith.constant dense<0.000000e+00> : vector<8x32xf32>
    %99 = tpu.matmul %98, %83, %cst_68 {dimension_numbers = #tpu.dot_dimension_numbers<[1], [0], [0], [1], [0, 0, 1, 1], [], []>} : vector<8x8xbf16>, vector<8x32xbf16>, vector<8x32xf32> -> vector<8x32xf32>
    %100 = tpu.concatenate %33, %55, %77, %99 in 1 : vector<8x32xf32>, vector<8x32xf32>, vector<8x32xf32>, vector<8x32xf32> -> vector<8x128xf32>
    %c0_69 = arith.constant 0 : index
    %c0_70 = arith.constant 0 : index
    %c0_71 = arith.constant 0 : index
    %101 = vector.load %arg5[%c0_69, %c0_70, %c0_71] : memref<1x8x128xf32, #tpu.memory_space<vmem>>, vector<1x8x128xf32>
    %102 = vector.shape_cast %101 : vector<1x8x128xf32> to vector<8x128xf32>
    %103 = vector.shape_cast %100 : vector<8x128xf32> to vector<1x8x128xf32>
    tpu.vector_store %arg5[%c0_69, %c0_70, %c0_71], %103 {strides = array<i32>} : memref<1x8x128xf32, #tpu.memory_space<vmem>>, vector<1x8x128xf32>,
    return
  }
  func.func @transform_0(%arg0: i32) -> (i32, i32, i32, i32) {
    %c0_i32 = arith.constant 0 : i32
    %c0_i32_0 = arith.constant 0 : i32
    %c0_i32_1 = arith.constant 0 : i32
    %c0_i32_2 = arith.constant 0 : i32
    return %arg0, %c0_i32, %c0_i32_0, %c0_i32_1 : i32, i32, i32, i32
  }
  func.func @transform_1(%arg0: i32) -> (i32, i32, i32, i32) {
    %c0_i32 = arith.constant 0 : i32
    %c0_i32_0 = arith.constant 0 : i32
    %c0_i32_1 = arith.constant 0 : i32
    %c0_i32_2 = arith.constant 0 : i32
    return %arg0, %c0_i32, %c0_i32_0, %c0_i32_1 : i32, i32, i32, i32
  }
  func.func @transform_2(%arg0: i32) -> (i32, i32, i32, i32) {
    %c0_i32 = arith.constant 0 : i32
    %c0_i32_0 = arith.constant 0 : i32
    %c0_i32_1 = arith.constant 0 : i32
    %c0_i32_2 = arith.constant 0 : i32
    return %arg0, %c0_i32, %c0_i32_0, %c0_i32_1 : i32, i32, i32, i32
  }
  func.func @transform_3(%arg0: i32) -> (i32, i32, i32) {
    %c0_i32 = arith.constant 0 : i32
    %c0_i32_0 = arith.constant 0 : i32
    %c0_i32_1 = arith.constant 0 : i32
    return %arg0, %c0_i32, %c0_i32_0 : i32, i32, i32
  }
  func.func @transform_4(%arg0: i32) -> (i32, i32, i32) {
    %c0_i32 = arith.constant 0 : i32
    %c0_i32_0 = arith.constant 0 : i32
    %c0_i32_1 = arith.constant 0 : i32
    return %arg0, %c0_i32, %c0_i32_0 : i32, i32, i32
  }
}

module attributes {stable_mosaic.version = 11 : i64} {
  func.func @_ln_dense_kernel(%arg0: i32, %arg1: i32, %arg2: memref<16x128xf32, #tpu.memory_space<vmem>>, %arg3: memref<1x128xf32, #tpu.memory_space<vmem>>, %arg4: memref<1x128xf32, #tpu.memory_space<vmem>>, %arg5: memref<128x512xbf16, #tpu.memory_space<vmem>>, %arg6: memref<1x512xf32, #tpu.memory_space<vmem>>, %arg7: memref<16x512xf32, #tpu.memory_space<vmem>>) attributes {dimension_semantics = [#tpu.dimension_semantics<parallel>, #tpu.dimension_semantics<parallel>], iteration_bounds = array<i64: 1, 1>, scalar_prefetch = 0 : i64, scratch_operands = 0 : i64, tpu.core_type = #tpu.core_type<tc>, window_params = [{transform_indices = @transform_0, window_bounds = array<i64: 16, 128>}, {pipeline_mode = #tpu.pipeline_mode<synchronous>, transform_indices = @transform_1, window_bounds = array<i64: 1, 128>}, {pipeline_mode = #tpu.pipeline_mode<synchronous>, transform_indices = @transform_2, window_bounds = array<i64: 1, 128>}, {transform_indices = @transform_3, window_bounds = array<i64: 128, 512>}, {transform_indices = @transform_4, window_bounds = array<i64: 1, 512>}, {transform_indices = @transform_5, window_bounds = array<i64: 16, 512>}]} {
    %c0 = arith.constant 0 : index
    %c0_0 = arith.constant 0 : index
    %0 = vector.load %arg2[%c0, %c0_0] : memref<16x128xf32, #tpu.memory_space<vmem>>, vector<16x128xf32>
    %cst = arith.constant dense<0.000000e+00> : vector<16xf32>
    %1 = vector.multi_reduction <add>, %0, %cst [1] : vector<16x128xf32> to vector<16xf32>
    %2 = vector.shape_cast %1 : vector<16xf32> to vector<16x1xf32>
    %cst_1 = arith.constant 1.280000e+02 : f32
    %3 = vector.broadcast %cst_1 : f32 to vector<16x1xf32>
    %4 = arith.divf %2, %3 : vector<16x1xf32>
    %5 = vector.broadcast %4 : vector<16x1xf32> to vector<16x128xf32>
    %6 = arith.subf %0, %5 : vector<16x128xf32>
    %7 = arith.mulf %6, %6 : vector<16x128xf32>
    %cst_2 = arith.constant dense<0.000000e+00> : vector<16xf32>
    %8 = vector.multi_reduction <add>, %7, %cst_2 [1] : vector<16x128xf32> to vector<16xf32>
    %9 = vector.shape_cast %8 : vector<16xf32> to vector<16x1xf32>
    %cst_3 = arith.constant 1.280000e+02 : f32
    %10 = vector.broadcast %cst_3 : f32 to vector<16x1xf32>
    %11 = arith.divf %9, %10 : vector<16x1xf32>
    %12 = vector.broadcast %4 : vector<16x1xf32> to vector<16x128xf32>
    %13 = arith.subf %0, %12 : vector<16x128xf32>
    %cst_4 = arith.constant 9.99999974E-6 : f32
    %14 = vector.broadcast %cst_4 : f32 to vector<16x1xf32>
    %15 = arith.addf %11, %14 : vector<16x1xf32>
    %16 = math.rsqrt %15 : vector<16x1xf32>
    %17 = vector.broadcast %16 : vector<16x1xf32> to vector<16x128xf32>
    %18 = arith.mulf %13, %17 : vector<16x128xf32>
    %c0_5 = arith.constant 0 : index
    %c0_6 = arith.constant 0 : index
    %19 = vector.load %arg3[%c0_5, %c0_6] : memref<1x128xf32, #tpu.memory_space<vmem>>, vector<1x128xf32>
    %20 = vector.broadcast %19 : vector<1x128xf32> to vector<16x128xf32>
    %21 = arith.mulf %18, %20 : vector<16x128xf32>
    %c0_7 = arith.constant 0 : index
    %c0_8 = arith.constant 0 : index
    %22 = vector.load %arg4[%c0_7, %c0_8] : memref<1x128xf32, #tpu.memory_space<vmem>>, vector<1x128xf32>
    %23 = vector.broadcast %22 : vector<1x128xf32> to vector<16x128xf32>
    %24 = arith.addf %21, %23 : vector<16x128xf32>
    %25 = arith.truncf %24 : vector<16x128xf32> to vector<16x128xbf16>
    %c0_9 = arith.constant 0 : index
    %c0_10 = arith.constant 0 : index
    %26 = vector.load %arg5[%c0_9, %c0_10] : memref<128x512xbf16, #tpu.memory_space<vmem>>, vector<128x512xbf16>
    %cst_11 = arith.constant dense<0.000000e+00> : vector<16x512xf32>
    %27 = tpu.matmul %25, %26, %cst_11 {dimension_numbers = #tpu.dot_dimension_numbers<[1], [0], [0], [1], [0, 0, 1, 1], [], []>} : vector<16x128xbf16>, vector<128x512xbf16>, vector<16x512xf32> -> vector<16x512xf32>
    %c0_12 = arith.constant 0 : index
    %c0_13 = arith.constant 0 : index
    %28 = vector.load %arg6[%c0_12, %c0_13] : memref<1x512xf32, #tpu.memory_space<vmem>>, vector<1x512xf32>
    %29 = vector.broadcast %28 : vector<1x512xf32> to vector<16x512xf32>
    %30 = arith.addf %27, %29 : vector<16x512xf32>
    %cst_14 = arith.constant 5.000000e-01 : f32
    %31 = vector.broadcast %cst_14 : f32 to vector<16x512xf32>
    %32 = arith.mulf %31, %30 : vector<16x512xf32>
    %33 = arith.mulf %30, %30 : vector<16x512xf32>
    %34 = arith.mulf %30, %33 : vector<16x512xf32>
    %cst_15 = arith.constant 4.471500e-02 : f32
    %35 = vector.broadcast %cst_15 : f32 to vector<16x512xf32>
    %36 = arith.mulf %35, %34 : vector<16x512xf32>
    %37 = arith.addf %30, %36 : vector<16x512xf32>
    %cst_16 = arith.constant 0.797884583 : f32
    %38 = vector.broadcast %cst_16 : f32 to vector<16x512xf32>
    %39 = arith.mulf %38, %37 : vector<16x512xf32>
    %40 = math.tanh %39 : vector<16x512xf32>
    %cst_17 = arith.constant 1.000000e+00 : f32
    %41 = vector.broadcast %cst_17 : f32 to vector<16x512xf32>
    %42 = arith.addf %41, %40 : vector<16x512xf32>
    %43 = arith.mulf %32, %42 : vector<16x512xf32>
    %c0_18 = arith.constant 0 : index
    %c0_19 = arith.constant 0 : index
    %44 = vector.load %arg7[%c0_18, %c0_19] : memref<16x512xf32, #tpu.memory_space<vmem>>, vector<16x512xf32>
    tpu.vector_store %arg7[%c0_18, %c0_19], %43 {strides = array<i32>} : memref<16x512xf32, #tpu.memory_space<vmem>>, vector<16x512xf32>,
    return
  }
  func.func @transform_0(%arg0: i32, %arg1: i32) -> (i32, i32) {
    %c0_i32 = arith.constant 0 : i32
    %c0_i32_0 = arith.constant 0 : i32
    return %arg0, %c0_i32 : i32, i32
  }
  func.func @transform_1(%arg0: i32, %arg1: i32) -> (i32, i32) {
    %c0_i32 = arith.constant 0 : i32
    %c0_i32_0 = arith.constant 0 : i32
    %c0_i32_1 = arith.constant 0 : i32
    return %c0_i32, %c0_i32_0 : i32, i32
  }
  func.func @transform_2(%arg0: i32, %arg1: i32) -> (i32, i32) {
    %c0_i32 = arith.constant 0 : i32
    %c0_i32_0 = arith.constant 0 : i32
    %c0_i32_1 = arith.constant 0 : i32
    return %c0_i32, %c0_i32_0 : i32, i32
  }
  func.func @transform_3(%arg0: i32, %arg1: i32) -> (i32, i32) {
    %c0_i32 = arith.constant 0 : i32
    %c0_i32_0 = arith.constant 0 : i32
    return %c0_i32, %arg1 : i32, i32
  }
  func.func @transform_4(%arg0: i32, %arg1: i32) -> (i32, i32) {
    %c0_i32 = arith.constant 0 : i32
    %c0_i32_0 = arith.constant 0 : i32
    return %c0_i32, %arg1 : i32, i32
  }
  func.func @transform_5(%arg0: i32, %arg1: i32) -> (i32, i32) {
    %c0_i32 = arith.constant 0 : i32
    return %arg0, %arg1 : i32, i32
  }
}

module attributes {stable_mosaic.version = 11 : i64} {
  func.func @_dense_res_kernel(%arg0: i32, %arg1: i32, %arg2: memref<16x512xf32, #tpu.memory_space<vmem>>, %arg3: memref<512x128xbf16, #tpu.memory_space<vmem>>, %arg4: memref<1x128xf32, #tpu.memory_space<vmem>>, %arg5: memref<16x128xf32, #tpu.memory_space<vmem>>, %arg6: memref<16x128xf32, #tpu.memory_space<vmem>>) attributes {dimension_semantics = [#tpu.dimension_semantics<parallel>, #tpu.dimension_semantics<parallel>], iteration_bounds = array<i64: 1, 1>, scalar_prefetch = 0 : i64, scratch_operands = 0 : i64, tpu.core_type = #tpu.core_type<tc>, window_params = [{transform_indices = @transform_0, window_bounds = array<i64: 16, 512>}, {transform_indices = @transform_1, window_bounds = array<i64: 512, 128>}, {transform_indices = @transform_2, window_bounds = array<i64: 1, 128>}, {transform_indices = @transform_3, window_bounds = array<i64: 16, 128>}, {transform_indices = @transform_4, window_bounds = array<i64: 16, 128>}]} {
    %c0 = arith.constant 0 : index
    %c0_0 = arith.constant 0 : index
    %0 = vector.load %arg2[%c0, %c0_0] : memref<16x512xf32, #tpu.memory_space<vmem>>, vector<16x512xf32>
    %1 = arith.truncf %0 : vector<16x512xf32> to vector<16x512xbf16>
    %c0_1 = arith.constant 0 : index
    %c0_2 = arith.constant 0 : index
    %2 = vector.load %arg3[%c0_1, %c0_2] : memref<512x128xbf16, #tpu.memory_space<vmem>>, vector<512x128xbf16>
    %cst = arith.constant dense<0.000000e+00> : vector<16x128xf32>
    %3 = tpu.matmul %1, %2, %cst {dimension_numbers = #tpu.dot_dimension_numbers<[1], [0], [0], [1], [0, 0, 1, 1], [], []>} : vector<16x512xbf16>, vector<512x128xbf16>, vector<16x128xf32> -> vector<16x128xf32>
    %c0_3 = arith.constant 0 : index
    %c0_4 = arith.constant 0 : index
    %4 = vector.load %arg4[%c0_3, %c0_4] : memref<1x128xf32, #tpu.memory_space<vmem>>, vector<1x128xf32>
    %5 = vector.broadcast %4 : vector<1x128xf32> to vector<16x128xf32>
    %6 = arith.addf %3, %5 : vector<16x128xf32>
    %c0_5 = arith.constant 0 : index
    %c0_6 = arith.constant 0 : index
    %7 = vector.load %arg5[%c0_5, %c0_6] : memref<16x128xf32, #tpu.memory_space<vmem>>, vector<16x128xf32>
    %8 = arith.addf %6, %7 : vector<16x128xf32>
    %c0_7 = arith.constant 0 : index
    %c0_8 = arith.constant 0 : index
    %9 = vector.load %arg6[%c0_7, %c0_8] : memref<16x128xf32, #tpu.memory_space<vmem>>, vector<16x128xf32>
    tpu.vector_store %arg6[%c0_7, %c0_8], %8 {strides = array<i32>} : memref<16x128xf32, #tpu.memory_space<vmem>>, vector<16x128xf32>,
    return
  }
  func.func @transform_0(%arg0: i32, %arg1: i32) -> (i32, i32) {
    %c0_i32 = arith.constant 0 : i32
    %c0_i32_0 = arith.constant 0 : i32
    return %arg0, %c0_i32 : i32, i32
  }
  func.func @transform_1(%arg0: i32, %arg1: i32) -> (i32, i32) {
    %c0_i32 = arith.constant 0 : i32
    %c0_i32_0 = arith.constant 0 : i32
    return %c0_i32, %arg1 : i32, i32
  }
  func.func @transform_2(%arg0: i32, %arg1: i32) -> (i32, i32) {
    %c0_i32 = arith.constant 0 : i32
    %c0_i32_0 = arith.constant 0 : i32
    return %c0_i32, %arg1 : i32, i32
  }
  func.func @transform_3(%arg0: i32, %arg1: i32) -> (i32, i32) {
    %c0_i32 = arith.constant 0 : i32
    return %arg0, %arg1 : i32, i32
  }
  func.func @transform_4(%arg0: i32, %arg1: i32) -> (i32, i32) {
    %c0_i32 = arith.constant 0 : i32
    return %arg0, %arg1 : i32, i32
  }
}

module attributes {stable_mosaic.version = 11 : i64} {
  func.func @_layernorm_kernel(%arg0: i32, %arg1: memref<16x128xf32, #tpu.memory_space<vmem>>, %arg2: memref<1x128xf32, #tpu.memory_space<vmem>>, %arg3: memref<1x128xf32, #tpu.memory_space<vmem>>, %arg4: memref<16x128xf32, #tpu.memory_space<vmem>>) attributes {dimension_semantics = [#tpu.dimension_semantics<parallel>], iteration_bounds = array<i64: 1>, scalar_prefetch = 0 : i64, scratch_operands = 0 : i64, tpu.core_type = #tpu.core_type<tc>, window_params = [{transform_indices = @transform_0, window_bounds = array<i64: 16, 128>}, {pipeline_mode = #tpu.pipeline_mode<synchronous>, transform_indices = @transform_1, window_bounds = array<i64: 1, 128>}, {pipeline_mode = #tpu.pipeline_mode<synchronous>, transform_indices = @transform_2, window_bounds = array<i64: 1, 128>}, {transform_indices = @transform_3, window_bounds = array<i64: 16, 128>}]} {
    %c0 = arith.constant 0 : index
    %c0_0 = arith.constant 0 : index
    %0 = vector.load %arg1[%c0, %c0_0] : memref<16x128xf32, #tpu.memory_space<vmem>>, vector<16x128xf32>
    %cst = arith.constant dense<0.000000e+00> : vector<16xf32>
    %1 = vector.multi_reduction <add>, %0, %cst [1] : vector<16x128xf32> to vector<16xf32>
    %2 = vector.shape_cast %1 : vector<16xf32> to vector<16x1xf32>
    %cst_1 = arith.constant 1.280000e+02 : f32
    %3 = vector.broadcast %cst_1 : f32 to vector<16x1xf32>
    %4 = arith.divf %2, %3 : vector<16x1xf32>
    %5 = vector.broadcast %4 : vector<16x1xf32> to vector<16x128xf32>
    %6 = arith.subf %0, %5 : vector<16x128xf32>
    %7 = arith.mulf %6, %6 : vector<16x128xf32>
    %cst_2 = arith.constant dense<0.000000e+00> : vector<16xf32>
    %8 = vector.multi_reduction <add>, %7, %cst_2 [1] : vector<16x128xf32> to vector<16xf32>
    %9 = vector.shape_cast %8 : vector<16xf32> to vector<16x1xf32>
    %cst_3 = arith.constant 1.280000e+02 : f32
    %10 = vector.broadcast %cst_3 : f32 to vector<16x1xf32>
    %11 = arith.divf %9, %10 : vector<16x1xf32>
    %12 = vector.broadcast %4 : vector<16x1xf32> to vector<16x128xf32>
    %13 = arith.subf %0, %12 : vector<16x128xf32>
    %cst_4 = arith.constant 9.99999974E-6 : f32
    %14 = vector.broadcast %cst_4 : f32 to vector<16x1xf32>
    %15 = arith.addf %11, %14 : vector<16x1xf32>
    %16 = math.rsqrt %15 : vector<16x1xf32>
    %17 = vector.broadcast %16 : vector<16x1xf32> to vector<16x128xf32>
    %18 = arith.mulf %13, %17 : vector<16x128xf32>
    %c0_5 = arith.constant 0 : index
    %c0_6 = arith.constant 0 : index
    %19 = vector.load %arg2[%c0_5, %c0_6] : memref<1x128xf32, #tpu.memory_space<vmem>>, vector<1x128xf32>
    %20 = vector.broadcast %19 : vector<1x128xf32> to vector<16x128xf32>
    %21 = arith.mulf %18, %20 : vector<16x128xf32>
    %c0_7 = arith.constant 0 : index
    %c0_8 = arith.constant 0 : index
    %22 = vector.load %arg3[%c0_7, %c0_8] : memref<1x128xf32, #tpu.memory_space<vmem>>, vector<1x128xf32>
    %23 = vector.broadcast %22 : vector<1x128xf32> to vector<16x128xf32>
    %24 = arith.addf %21, %23 : vector<16x128xf32>
    %c0_9 = arith.constant 0 : index
    %c0_10 = arith.constant 0 : index
    %25 = vector.load %arg4[%c0_9, %c0_10] : memref<16x128xf32, #tpu.memory_space<vmem>>, vector<16x128xf32>
    tpu.vector_store %arg4[%c0_9, %c0_10], %24 {strides = array<i32>} : memref<16x128xf32, #tpu.memory_space<vmem>>, vector<16x128xf32>,
    return
  }
  func.func @transform_0(%arg0: i32) -> (i32, i32) {
    %c0_i32 = arith.constant 0 : i32
    %c0_i32_0 = arith.constant 0 : i32
    return %arg0, %c0_i32 : i32, i32
  }
  func.func @transform_1(%arg0: i32) -> (i32, i32) {
    %c0_i32 = arith.constant 0 : i32
    %c0_i32_0 = arith.constant 0 : i32
    %c0_i32_1 = arith.constant 0 : i32
    return %c0_i32, %c0_i32_0 : i32, i32
  }
  func.func @transform_2(%arg0: i32) -> (i32, i32) {
    %c0_i32 = arith.constant 0 : i32
    %c0_i32_0 = arith.constant 0 : i32
    %c0_i32_1 = arith.constant 0 : i32
    return %c0_i32, %c0_i32_0 : i32, i32
  }
  func.func @transform_3(%arg0: i32) -> (i32, i32) {
    %c0_i32 = arith.constant 0 : i32
    %c0_i32_0 = arith.constant 0 : i32
    return %arg0, %c0_i32 : i32, i32
  }
}

module attributes {stable_mosaic.version = 11 : i64} {
  func.func @_ln_dense_kernel(%arg0: i32, %arg1: i32, %arg2: memref<24x128xf32, #tpu.memory_space<vmem>>, %arg3: memref<1x128xf32, #tpu.memory_space<vmem>>, %arg4: memref<1x128xf32, #tpu.memory_space<vmem>>, %arg5: memref<128x128xbf16, #tpu.memory_space<vmem>>, %arg6: memref<1x128xf32, #tpu.memory_space<vmem>>, %arg7: memref<24x128xf32, #tpu.memory_space<vmem>>) attributes {dimension_semantics = [#tpu.dimension_semantics<parallel>, #tpu.dimension_semantics<parallel>], iteration_bounds = array<i64: 1, 3>, scalar_prefetch = 0 : i64, scratch_operands = 0 : i64, tpu.core_type = #tpu.core_type<tc>, window_params = [{transform_indices = @transform_0, window_bounds = array<i64: 24, 128>}, {pipeline_mode = #tpu.pipeline_mode<synchronous>, transform_indices = @transform_1, window_bounds = array<i64: 1, 128>}, {pipeline_mode = #tpu.pipeline_mode<synchronous>, transform_indices = @transform_2, window_bounds = array<i64: 1, 128>}, {transform_indices = @transform_3, window_bounds = array<i64: 128, 128>}, {transform_indices = @transform_4, window_bounds = array<i64: 1, 128>}, {transform_indices = @transform_5, window_bounds = array<i64: 24, 128>}]} {
    %c0 = arith.constant 0 : index
    %c0_0 = arith.constant 0 : index
    %0 = vector.load %arg2[%c0, %c0_0] : memref<24x128xf32, #tpu.memory_space<vmem>>, vector<24x128xf32>
    %cst = arith.constant dense<0.000000e+00> : vector<24xf32>
    %1 = vector.multi_reduction <add>, %0, %cst [1] : vector<24x128xf32> to vector<24xf32>
    %2 = vector.shape_cast %1 : vector<24xf32> to vector<24x1xf32>
    %cst_1 = arith.constant 1.280000e+02 : f32
    %3 = vector.broadcast %cst_1 : f32 to vector<24x1xf32>
    %4 = arith.divf %2, %3 : vector<24x1xf32>
    %5 = vector.broadcast %4 : vector<24x1xf32> to vector<24x128xf32>
    %6 = arith.subf %0, %5 : vector<24x128xf32>
    %7 = arith.mulf %6, %6 : vector<24x128xf32>
    %cst_2 = arith.constant dense<0.000000e+00> : vector<24xf32>
    %8 = vector.multi_reduction <add>, %7, %cst_2 [1] : vector<24x128xf32> to vector<24xf32>
    %9 = vector.shape_cast %8 : vector<24xf32> to vector<24x1xf32>
    %cst_3 = arith.constant 1.280000e+02 : f32
    %10 = vector.broadcast %cst_3 : f32 to vector<24x1xf32>
    %11 = arith.divf %9, %10 : vector<24x1xf32>
    %12 = vector.broadcast %4 : vector<24x1xf32> to vector<24x128xf32>
    %13 = arith.subf %0, %12 : vector<24x128xf32>
    %cst_4 = arith.constant 9.99999974E-6 : f32
    %14 = vector.broadcast %cst_4 : f32 to vector<24x1xf32>
    %15 = arith.addf %11, %14 : vector<24x1xf32>
    %16 = math.rsqrt %15 : vector<24x1xf32>
    %17 = vector.broadcast %16 : vector<24x1xf32> to vector<24x128xf32>
    %18 = arith.mulf %13, %17 : vector<24x128xf32>
    %c0_5 = arith.constant 0 : index
    %c0_6 = arith.constant 0 : index
    %19 = vector.load %arg3[%c0_5, %c0_6] : memref<1x128xf32, #tpu.memory_space<vmem>>, vector<1x128xf32>
    %20 = vector.broadcast %19 : vector<1x128xf32> to vector<24x128xf32>
    %21 = arith.mulf %18, %20 : vector<24x128xf32>
    %c0_7 = arith.constant 0 : index
    %c0_8 = arith.constant 0 : index
    %22 = vector.load %arg4[%c0_7, %c0_8] : memref<1x128xf32, #tpu.memory_space<vmem>>, vector<1x128xf32>
    %23 = vector.broadcast %22 : vector<1x128xf32> to vector<24x128xf32>
    %24 = arith.addf %21, %23 : vector<24x128xf32>
    %25 = arith.truncf %24 : vector<24x128xf32> to vector<24x128xbf16>
    %c0_9 = arith.constant 0 : index
    %c0_10 = arith.constant 0 : index
    %26 = vector.load %arg5[%c0_9, %c0_10] : memref<128x128xbf16, #tpu.memory_space<vmem>>, vector<128x128xbf16>
    %cst_11 = arith.constant dense<0.000000e+00> : vector<24x128xf32>
    %27 = tpu.matmul %25, %26, %cst_11 {dimension_numbers = #tpu.dot_dimension_numbers<[1], [0], [0], [1], [0, 0, 1, 1], [], []>} : vector<24x128xbf16>, vector<128x128xbf16>, vector<24x128xf32> -> vector<24x128xf32>
    %c0_12 = arith.constant 0 : index
    %c0_13 = arith.constant 0 : index
    %28 = vector.load %arg6[%c0_12, %c0_13] : memref<1x128xf32, #tpu.memory_space<vmem>>, vector<1x128xf32>
    %29 = vector.broadcast %28 : vector<1x128xf32> to vector<24x128xf32>
    %30 = arith.addf %27, %29 : vector<24x128xf32>
    %c0_14 = arith.constant 0 : index
    %c0_15 = arith.constant 0 : index
    %31 = vector.load %arg7[%c0_14, %c0_15] : memref<24x128xf32, #tpu.memory_space<vmem>>, vector<24x128xf32>
    tpu.vector_store %arg7[%c0_14, %c0_15], %30 {strides = array<i32>} : memref<24x128xf32, #tpu.memory_space<vmem>>, vector<24x128xf32>,
    return
  }
  func.func @transform_0(%arg0: i32, %arg1: i32) -> (i32, i32) {
    %c0_i32 = arith.constant 0 : i32
    %c0_i32_0 = arith.constant 0 : i32
    return %arg0, %c0_i32 : i32, i32
  }
  func.func @transform_1(%arg0: i32, %arg1: i32) -> (i32, i32) {
    %c0_i32 = arith.constant 0 : i32
    %c0_i32_0 = arith.constant 0 : i32
    %c0_i32_1 = arith.constant 0 : i32
    return %c0_i32, %c0_i32_0 : i32, i32
  }
  func.func @transform_2(%arg0: i32, %arg1: i32) -> (i32, i32) {
    %c0_i32 = arith.constant 0 : i32
    %c0_i32_0 = arith.constant 0 : i32
    %c0_i32_1 = arith.constant 0 : i32
    return %c0_i32, %c0_i32_0 : i32, i32
  }
  func.func @transform_3(%arg0: i32, %arg1: i32) -> (i32, i32) {
    %c0_i32 = arith.constant 0 : i32
    %c0_i32_0 = arith.constant 0 : i32
    return %c0_i32, %arg1 : i32, i32
  }
  func.func @transform_4(%arg0: i32, %arg1: i32) -> (i32, i32) {
    %c0_i32 = arith.constant 0 : i32
    %c0_i32_0 = arith.constant 0 : i32
    return %c0_i32, %arg1 : i32, i32
  }
  func.func @transform_5(%arg0: i32, %arg1: i32) -> (i32, i32) {
    %c0_i32 = arith.constant 0 : i32
    return %arg0, %arg1 : i32, i32
  }
}

module attributes {stable_mosaic.version = 11 : i64} {
  func.func @_dense_res_kernel(%arg0: i32, %arg1: i32, %arg2: memref<24x128xf32, #tpu.memory_space<vmem>>, %arg3: memref<128x128xbf16, #tpu.memory_space<vmem>>, %arg4: memref<1x128xf32, #tpu.memory_space<vmem>>, %arg5: memref<24x128xf32, #tpu.memory_space<vmem>>, %arg6: memref<24x128xf32, #tpu.memory_space<vmem>>) attributes {dimension_semantics = [#tpu.dimension_semantics<parallel>, #tpu.dimension_semantics<parallel>], iteration_bounds = array<i64: 1, 1>, scalar_prefetch = 0 : i64, scratch_operands = 0 : i64, tpu.core_type = #tpu.core_type<tc>, window_params = [{transform_indices = @transform_0, window_bounds = array<i64: 24, 128>}, {transform_indices = @transform_1, window_bounds = array<i64: 128, 128>}, {transform_indices = @transform_2, window_bounds = array<i64: 1, 128>}, {transform_indices = @transform_3, window_bounds = array<i64: 24, 128>}, {transform_indices = @transform_4, window_bounds = array<i64: 24, 128>}]} {
    %c0 = arith.constant 0 : index
    %c0_0 = arith.constant 0 : index
    %0 = vector.load %arg2[%c0, %c0_0] : memref<24x128xf32, #tpu.memory_space<vmem>>, vector<24x128xf32>
    %1 = arith.truncf %0 : vector<24x128xf32> to vector<24x128xbf16>
    %c0_1 = arith.constant 0 : index
    %c0_2 = arith.constant 0 : index
    %2 = vector.load %arg3[%c0_1, %c0_2] : memref<128x128xbf16, #tpu.memory_space<vmem>>, vector<128x128xbf16>
    %cst = arith.constant dense<0.000000e+00> : vector<24x128xf32>
    %3 = tpu.matmul %1, %2, %cst {dimension_numbers = #tpu.dot_dimension_numbers<[1], [0], [0], [1], [0, 0, 1, 1], [], []>} : vector<24x128xbf16>, vector<128x128xbf16>, vector<24x128xf32> -> vector<24x128xf32>
    %c0_3 = arith.constant 0 : index
    %c0_4 = arith.constant 0 : index
    %4 = vector.load %arg4[%c0_3, %c0_4] : memref<1x128xf32, #tpu.memory_space<vmem>>, vector<1x128xf32>
    %5 = vector.broadcast %4 : vector<1x128xf32> to vector<24x128xf32>
    %6 = arith.addf %3, %5 : vector<24x128xf32>
    %c0_5 = arith.constant 0 : index
    %c0_6 = arith.constant 0 : index
    %7 = vector.load %arg5[%c0_5, %c0_6] : memref<24x128xf32, #tpu.memory_space<vmem>>, vector<24x128xf32>
    %8 = arith.addf %6, %7 : vector<24x128xf32>
    %c0_7 = arith.constant 0 : index
    %c0_8 = arith.constant 0 : index
    %9 = vector.load %arg6[%c0_7, %c0_8] : memref<24x128xf32, #tpu.memory_space<vmem>>, vector<24x128xf32>
    tpu.vector_store %arg6[%c0_7, %c0_8], %8 {strides = array<i32>} : memref<24x128xf32, #tpu.memory_space<vmem>>, vector<24x128xf32>,
    return
  }
  func.func @transform_0(%arg0: i32, %arg1: i32) -> (i32, i32) {
    %c0_i32 = arith.constant 0 : i32
    %c0_i32_0 = arith.constant 0 : i32
    return %arg0, %c0_i32 : i32, i32
  }
  func.func @transform_1(%arg0: i32, %arg1: i32) -> (i32, i32) {
    %c0_i32 = arith.constant 0 : i32
    %c0_i32_0 = arith.constant 0 : i32
    return %c0_i32, %arg1 : i32, i32
  }
  func.func @transform_2(%arg0: i32, %arg1: i32) -> (i32, i32) {
    %c0_i32 = arith.constant 0 : i32
    %c0_i32_0 = arith.constant 0 : i32
    return %c0_i32, %arg1 : i32, i32
  }
  func.func @transform_3(%arg0: i32, %arg1: i32) -> (i32, i32) {
    %c0_i32 = arith.constant 0 : i32
    return %arg0, %arg1 : i32, i32
  }
  func.func @transform_4(%arg0: i32, %arg1: i32) -> (i32, i32) {
    %c0_i32 = arith.constant 0 : i32
    return %arg0, %arg1 : i32, i32
  }
}

module attributes {stable_mosaic.version = 11 : i64} {
  func.func @_attention_kernel(%arg0: i32, %arg1: memref<1x4x9x32xbf16, #tpu.memory_space<vmem>>, %arg2: memref<1x4x9x32xbf16, #tpu.memory_space<vmem>>, %arg3: memref<1x4x9x32xbf16, #tpu.memory_space<vmem>>, %arg4: memref<1x1x9xf32, #tpu.memory_space<vmem>>, %arg5: memref<1x9x128xf32, #tpu.memory_space<vmem>>) attributes {dimension_semantics = [#tpu.dimension_semantics<parallel>], iteration_bounds = array<i64: 2>, scalar_prefetch = 0 : i64, scratch_operands = 0 : i64, tpu.core_type = #tpu.core_type<tc>, window_params = [{transform_indices = @transform_0, window_bounds = array<i64: 1, 4, 9, 32>}, {transform_indices = @transform_1, window_bounds = array<i64: 1, 4, 9, 32>}, {transform_indices = @transform_2, window_bounds = array<i64: 1, 4, 9, 32>}, {transform_indices = @transform_3, window_bounds = array<i64: 1, 1, 9>}, {transform_indices = @transform_4, window_bounds = array<i64: 1, 9, 128>}]} {
    %c0 = arith.constant 0 : index
    %c0_0 = arith.constant 0 : index
    %c0_1 = arith.constant 0 : index
    %0 = vector.load %arg4[%c0, %c0_0, %c0_1] : memref<1x1x9xf32, #tpu.memory_space<vmem>>, vector<1x1x9xf32>
    %1 = vector.shape_cast %0 : vector<1x1x9xf32> to vector<1x9xf32>
    %cst = arith.constant 5.000000e-01 : f32
    %2 = vector.broadcast %cst : f32 to vector<1x9xf32>
    %3 = arith.cmpf ogt, %1, %2 : vector<1x9xf32>
    %4 = tpu.iota {dimensions = array<i32: 0>} : vector<9x9xi32>
    %5 = tpu.iota {dimensions = array<i32: 1>} : vector<9x9xi32>
    %6 = arith.cmpi sge, %4, %5 : vector<9x9xi32>
    %7 = vector.broadcast %3 : vector<1x9xi1> to vector<9x9xi1>
    %8 = arith.andi %6, %7 : vector<9x9xi1>
    %cst_2 = arith.constant 0.000000e+00 : f32
    %cst_3 = arith.constant -1.000000e+09 : f32
    %9 = vector.broadcast %cst_2 : f32 to vector<9x9xf32>
    %10 = vector.broadcast %cst_3 : f32 to vector<9x9xf32>
    %11 = arith.select %8, %9, %10 : vector<9x9xi1>, vector<9x9xf32>
    %c0_4 = arith.constant 0 : index
    %c0_5 = arith.constant 0 : index
    %c0_6 = arith.constant 0 : index
    %c0_7 = arith.constant 0 : index
    %12 = vector.load %arg1[%c0_4, %c0_5, %c0_6, %c0_7] : memref<1x4x9x32xbf16, #tpu.memory_space<vmem>>, vector<1x1x9x32xbf16>
    %13 = vector.shape_cast %12 : vector<1x1x9x32xbf16> to vector<9x32xbf16>
    %c0_8 = arith.constant 0 : index
    %c0_9 = arith.constant 0 : index
    %c0_10 = arith.constant 0 : index
    %c0_11 = arith.constant 0 : index
    %14 = vector.load %arg2[%c0_8, %c0_9, %c0_10, %c0_11] : memref<1x4x9x32xbf16, #tpu.memory_space<vmem>>, vector<1x1x9x32xbf16>
    %15 = vector.shape_cast %14 : vector<1x1x9x32xbf16> to vector<9x32xbf16>
    %c0_12 = arith.constant 0 : index
    %c0_13 = arith.constant 0 : index
    %c0_14 = arith.constant 0 : index
    %c0_15 = arith.constant 0 : index
    %16 = vector.load %arg3[%c0_12, %c0_13, %c0_14, %c0_15] : memref<1x4x9x32xbf16, #tpu.memory_space<vmem>>, vector<1x1x9x32xbf16>
    %17 = vector.shape_cast %16 : vector<1x1x9x32xbf16> to vector<9x32xbf16>
    %cst_16 = arith.constant dense<0.000000e+00> : vector<9x9xf32>
    %18 = tpu.matmul %13, %15, %cst_16 {dimension_numbers = #tpu.dot_dimension_numbers<[1], [1], [0], [0], [0, 0, 1, 0], [], []>} : vector<9x32xbf16>, vector<9x32xbf16>, vector<9x9xf32> -> vector<9x9xf32>
    %cst_17 = arith.constant 0.176776692 : f32
    %19 = vector.broadcast %cst_17 : f32 to vector<9x9xf32>
    %20 = arith.mulf %18, %19 : vector<9x9xf32>
    %21 = arith.addf %20, %11 : vector<9x9xf32>
    %cst_18 = arith.constant dense<0xFF800000> : vector<9xf32>
    %22 = vector.multi_reduction <maximumf>, %21, %cst_18 [1] : vector<9x9xf32> to vector<9xf32>
    %23 = vector.shape_cast %22 : vector<9xf32> to vector<9x1xf32>
    %24 = vector.broadcast %23 : vector<9x1xf32> to vector<9x9xf32>
    %25 = arith.subf %21, %24 : vector<9x9xf32>
    %26 = math.exp %25 : vector<9x9xf32>
    %cst_19 = arith.constant dense<0.000000e+00> : vector<9xf32>
    %27 = vector.multi_reduction <add>, %26, %cst_19 [1] : vector<9x9xf32> to vector<9xf32>
    %28 = vector.shape_cast %27 : vector<9xf32> to vector<9x1xf32>
    %29 = tpu.reciprocal %28 {approx = true} : vector<9x1xf32> -> vector<9x1xf32>
    %30 = vector.broadcast %29 : vector<9x1xf32> to vector<9x9xf32>
    %31 = arith.mulf %26, %30 : vector<9x9xf32>
    %32 = arith.truncf %31 : vector<9x9xf32> to vector<9x9xbf16>
    %cst_20 = arith.constant dense<0.000000e+00> : vector<9x32xf32>
    %33 = tpu.matmul %32, %17, %cst_20 {dimension_numbers = #tpu.dot_dimension_numbers<[1], [0], [0], [1], [0, 0, 1, 1], [], []>} : vector<9x9xbf16>, vector<9x32xbf16>, vector<9x32xf32> -> vector<9x32xf32>
    %c0_21 = arith.constant 0 : index
    %c1 = arith.constant 1 : index
    %c0_22 = arith.constant 0 : index
    %c0_23 = arith.constant 0 : index
    %34 = vector.load %arg1[%c0_21, %c1, %c0_22, %c0_23] : memref<1x4x9x32xbf16, #tpu.memory_space<vmem>>, vector<1x1x9x32xbf16>
    %35 = vector.shape_cast %34 : vector<1x1x9x32xbf16> to vector<9x32xbf16>
    %c0_24 = arith.constant 0 : index
    %c1_25 = arith.constant 1 : index
    %c0_26 = arith.constant 0 : index
    %c0_27 = arith.constant 0 : index
    %36 = vector.load %arg2[%c0_24, %c1_25, %c0_26, %c0_27] : memref<1x4x9x32xbf16, #tpu.memory_space<vmem>>, vector<1x1x9x32xbf16>
    %37 = vector.shape_cast %36 : vector<1x1x9x32xbf16> to vector<9x32xbf16>
    %c0_28 = arith.constant 0 : index
    %c1_29 = arith.constant 1 : index
    %c0_30 = arith.constant 0 : index
    %c0_31 = arith.constant 0 : index
    %38 = vector.load %arg3[%c0_28, %c1_29, %c0_30, %c0_31] : memref<1x4x9x32xbf16, #tpu.memory_space<vmem>>, vector<1x1x9x32xbf16>
    %39 = vector.shape_cast %38 : vector<1x1x9x32xbf16> to vector<9x32xbf16>
    %cst_32 = arith.constant dense<0.000000e+00> : vector<9x9xf32>
    %40 = tpu.matmul %35, %37, %cst_32 {dimension_numbers = #tpu.dot_dimension_numbers<[1], [1], [0], [0], [0, 0, 1, 0], [], []>} : vector<9x32xbf16>, vector<9x32xbf16>, vector<9x9xf32> -> vector<9x9xf32>
    %cst_33 = arith.constant 0.176776692 : f32
    %41 = vector.broadcast %cst_33 : f32 to vector<9x9xf32>
    %42 = arith.mulf %40, %41 : vector<9x9xf32>
    %43 = arith.addf %42, %11 : vector<9x9xf32>
    %cst_34 = arith.constant dense<0xFF800000> : vector<9xf32>
    %44 = vector.multi_reduction <maximumf>, %43, %cst_34 [1] : vector<9x9xf32> to vector<9xf32>
    %45 = vector.shape_cast %44 : vector<9xf32> to vector<9x1xf32>
    %46 = vector.broadcast %45 : vector<9x1xf32> to vector<9x9xf32>
    %47 = arith.subf %43, %46 : vector<9x9xf32>
    %48 = math.exp %47 : vector<9x9xf32>
    %cst_35 = arith.constant dense<0.000000e+00> : vector<9xf32>
    %49 = vector.multi_reduction <add>, %48, %cst_35 [1] : vector<9x9xf32> to vector<9xf32>
    %50 = vector.shape_cast %49 : vector<9xf32> to vector<9x1xf32>
    %51 = tpu.reciprocal %50 {approx = true} : vector<9x1xf32> -> vector<9x1xf32>
    %52 = vector.broadcast %51 : vector<9x1xf32> to vector<9x9xf32>
    %53 = arith.mulf %48, %52 : vector<9x9xf32>
    %54 = arith.truncf %53 : vector<9x9xf32> to vector<9x9xbf16>
    %cst_36 = arith.constant dense<0.000000e+00> : vector<9x32xf32>
    %55 = tpu.matmul %54, %39, %cst_36 {dimension_numbers = #tpu.dot_dimension_numbers<[1], [0], [0], [1], [0, 0, 1, 1], [], []>} : vector<9x9xbf16>, vector<9x32xbf16>, vector<9x32xf32> -> vector<9x32xf32>
    %c0_37 = arith.constant 0 : index
    %c2 = arith.constant 2 : index
    %c0_38 = arith.constant 0 : index
    %c0_39 = arith.constant 0 : index
    %56 = vector.load %arg1[%c0_37, %c2, %c0_38, %c0_39] : memref<1x4x9x32xbf16, #tpu.memory_space<vmem>>, vector<1x1x9x32xbf16>
    %57 = vector.shape_cast %56 : vector<1x1x9x32xbf16> to vector<9x32xbf16>
    %c0_40 = arith.constant 0 : index
    %c2_41 = arith.constant 2 : index
    %c0_42 = arith.constant 0 : index
    %c0_43 = arith.constant 0 : index
    %58 = vector.load %arg2[%c0_40, %c2_41, %c0_42, %c0_43] : memref<1x4x9x32xbf16, #tpu.memory_space<vmem>>, vector<1x1x9x32xbf16>
    %59 = vector.shape_cast %58 : vector<1x1x9x32xbf16> to vector<9x32xbf16>
    %c0_44 = arith.constant 0 : index
    %c2_45 = arith.constant 2 : index
    %c0_46 = arith.constant 0 : index
    %c0_47 = arith.constant 0 : index
    %60 = vector.load %arg3[%c0_44, %c2_45, %c0_46, %c0_47] : memref<1x4x9x32xbf16, #tpu.memory_space<vmem>>, vector<1x1x9x32xbf16>
    %61 = vector.shape_cast %60 : vector<1x1x9x32xbf16> to vector<9x32xbf16>
    %cst_48 = arith.constant dense<0.000000e+00> : vector<9x9xf32>
    %62 = tpu.matmul %57, %59, %cst_48 {dimension_numbers = #tpu.dot_dimension_numbers<[1], [1], [0], [0], [0, 0, 1, 0], [], []>} : vector<9x32xbf16>, vector<9x32xbf16>, vector<9x9xf32> -> vector<9x9xf32>
    %cst_49 = arith.constant 0.176776692 : f32
    %63 = vector.broadcast %cst_49 : f32 to vector<9x9xf32>
    %64 = arith.mulf %62, %63 : vector<9x9xf32>
    %65 = arith.addf %64, %11 : vector<9x9xf32>
    %cst_50 = arith.constant dense<0xFF800000> : vector<9xf32>
    %66 = vector.multi_reduction <maximumf>, %65, %cst_50 [1] : vector<9x9xf32> to vector<9xf32>
    %67 = vector.shape_cast %66 : vector<9xf32> to vector<9x1xf32>
    %68 = vector.broadcast %67 : vector<9x1xf32> to vector<9x9xf32>
    %69 = arith.subf %65, %68 : vector<9x9xf32>
    %70 = math.exp %69 : vector<9x9xf32>
    %cst_51 = arith.constant dense<0.000000e+00> : vector<9xf32>
    %71 = vector.multi_reduction <add>, %70, %cst_51 [1] : vector<9x9xf32> to vector<9xf32>
    %72 = vector.shape_cast %71 : vector<9xf32> to vector<9x1xf32>
    %73 = tpu.reciprocal %72 {approx = true} : vector<9x1xf32> -> vector<9x1xf32>
    %74 = vector.broadcast %73 : vector<9x1xf32> to vector<9x9xf32>
    %75 = arith.mulf %70, %74 : vector<9x9xf32>
    %76 = arith.truncf %75 : vector<9x9xf32> to vector<9x9xbf16>
    %cst_52 = arith.constant dense<0.000000e+00> : vector<9x32xf32>
    %77 = tpu.matmul %76, %61, %cst_52 {dimension_numbers = #tpu.dot_dimension_numbers<[1], [0], [0], [1], [0, 0, 1, 1], [], []>} : vector<9x9xbf16>, vector<9x32xbf16>, vector<9x32xf32> -> vector<9x32xf32>
    %c0_53 = arith.constant 0 : index
    %c3 = arith.constant 3 : index
    %c0_54 = arith.constant 0 : index
    %c0_55 = arith.constant 0 : index
    %78 = vector.load %arg1[%c0_53, %c3, %c0_54, %c0_55] : memref<1x4x9x32xbf16, #tpu.memory_space<vmem>>, vector<1x1x9x32xbf16>
    %79 = vector.shape_cast %78 : vector<1x1x9x32xbf16> to vector<9x32xbf16>
    %c0_56 = arith.constant 0 : index
    %c3_57 = arith.constant 3 : index
    %c0_58 = arith.constant 0 : index
    %c0_59 = arith.constant 0 : index
    %80 = vector.load %arg2[%c0_56, %c3_57, %c0_58, %c0_59] : memref<1x4x9x32xbf16, #tpu.memory_space<vmem>>, vector<1x1x9x32xbf16>
    %81 = vector.shape_cast %80 : vector<1x1x9x32xbf16> to vector<9x32xbf16>
    %c0_60 = arith.constant 0 : index
    %c3_61 = arith.constant 3 : index
    %c0_62 = arith.constant 0 : index
    %c0_63 = arith.constant 0 : index
    %82 = vector.load %arg3[%c0_60, %c3_61, %c0_62, %c0_63] : memref<1x4x9x32xbf16, #tpu.memory_space<vmem>>, vector<1x1x9x32xbf16>
    %83 = vector.shape_cast %82 : vector<1x1x9x32xbf16> to vector<9x32xbf16>
    %cst_64 = arith.constant dense<0.000000e+00> : vector<9x9xf32>
    %84 = tpu.matmul %79, %81, %cst_64 {dimension_numbers = #tpu.dot_dimension_numbers<[1], [1], [0], [0], [0, 0, 1, 0], [], []>} : vector<9x32xbf16>, vector<9x32xbf16>, vector<9x9xf32> -> vector<9x9xf32>
    %cst_65 = arith.constant 0.176776692 : f32
    %85 = vector.broadcast %cst_65 : f32 to vector<9x9xf32>
    %86 = arith.mulf %84, %85 : vector<9x9xf32>
    %87 = arith.addf %86, %11 : vector<9x9xf32>
    %cst_66 = arith.constant dense<0xFF800000> : vector<9xf32>
    %88 = vector.multi_reduction <maximumf>, %87, %cst_66 [1] : vector<9x9xf32> to vector<9xf32>
    %89 = vector.shape_cast %88 : vector<9xf32> to vector<9x1xf32>
    %90 = vector.broadcast %89 : vector<9x1xf32> to vector<9x9xf32>
    %91 = arith.subf %87, %90 : vector<9x9xf32>
    %92 = math.exp %91 : vector<9x9xf32>
    %cst_67 = arith.constant dense<0.000000e+00> : vector<9xf32>
    %93 = vector.multi_reduction <add>, %92, %cst_67 [1] : vector<9x9xf32> to vector<9xf32>
    %94 = vector.shape_cast %93 : vector<9xf32> to vector<9x1xf32>
    %95 = tpu.reciprocal %94 {approx = true} : vector<9x1xf32> -> vector<9x1xf32>
    %96 = vector.broadcast %95 : vector<9x1xf32> to vector<9x9xf32>
    %97 = arith.mulf %92, %96 : vector<9x9xf32>
    %98 = arith.truncf %97 : vector<9x9xf32> to vector<9x9xbf16>
    %cst_68 = arith.constant dense<0.000000e+00> : vector<9x32xf32>
    %99 = tpu.matmul %98, %83, %cst_68 {dimension_numbers = #tpu.dot_dimension_numbers<[1], [0], [0], [1], [0, 0, 1, 1], [], []>} : vector<9x9xbf16>, vector<9x32xbf16>, vector<9x32xf32> -> vector<9x32xf32>
    %100 = tpu.concatenate %33, %55, %77, %99 in 1 : vector<9x32xf32>, vector<9x32xf32>, vector<9x32xf32>, vector<9x32xf32> -> vector<9x128xf32>
    %c0_69 = arith.constant 0 : index
    %c0_70 = arith.constant 0 : index
    %c0_71 = arith.constant 0 : index
    %101 = vector.load %arg5[%c0_69, %c0_70, %c0_71] : memref<1x9x128xf32, #tpu.memory_space<vmem>>, vector<1x9x128xf32>
    %102 = vector.shape_cast %101 : vector<1x9x128xf32> to vector<9x128xf32>
    %103 = vector.shape_cast %100 : vector<9x128xf32> to vector<1x9x128xf32>
    tpu.vector_store %arg5[%c0_69, %c0_70, %c0_71], %103 {strides = array<i32>} : memref<1x9x128xf32, #tpu.memory_space<vmem>>, vector<1x9x128xf32>,
    return
  }
  func.func @transform_0(%arg0: i32) -> (i32, i32, i32, i32) {
    %c0_i32 = arith.constant 0 : i32
    %c0_i32_0 = arith.constant 0 : i32
    %c0_i32_1 = arith.constant 0 : i32
    %c0_i32_2 = arith.constant 0 : i32
    return %arg0, %c0_i32, %c0_i32_0, %c0_i32_1 : i32, i32, i32, i32
  }
  func.func @transform_1(%arg0: i32) -> (i32, i32, i32, i32) {
    %c0_i32 = arith.constant 0 : i32
    %c0_i32_0 = arith.constant 0 : i32
    %c0_i32_1 = arith.constant 0 : i32
    %c0_i32_2 = arith.constant 0 : i32
    return %arg0, %c0_i32, %c0_i32_0, %c0_i32_1 : i32, i32, i32, i32
  }
  func.func @transform_2(%arg0: i32) -> (i32, i32, i32, i32) {
    %c0_i32 = arith.constant 0 : i32
    %c0_i32_0 = arith.constant 0 : i32
    %c0_i32_1 = arith.constant 0 : i32
    %c0_i32_2 = arith.constant 0 : i32
    return %arg0, %c0_i32, %c0_i32_0, %c0_i32_1 : i32, i32, i32, i32
  }
  func.func @transform_3(%arg0: i32) -> (i32, i32, i32) {
    %c0_i32 = arith.constant 0 : i32
    %c0_i32_0 = arith.constant 0 : i32
    %c0_i32_1 = arith.constant 0 : i32
    return %arg0, %c0_i32, %c0_i32_0 : i32, i32, i32
  }
  func.func @transform_4(%arg0: i32) -> (i32, i32, i32) {
    %c0_i32 = arith.constant 0 : i32
    %c0_i32_0 = arith.constant 0 : i32
    %c0_i32_1 = arith.constant 0 : i32
    return %arg0, %c0_i32, %c0_i32_0 : i32, i32, i32
  }
}

module attributes {stable_mosaic.version = 11 : i64} {
  func.func @_ln_dense_kernel(%arg0: i32, %arg1: i32, %arg2: memref<24x128xf32, #tpu.memory_space<vmem>>, %arg3: memref<1x128xf32, #tpu.memory_space<vmem>>, %arg4: memref<1x128xf32, #tpu.memory_space<vmem>>, %arg5: memref<128x512xbf16, #tpu.memory_space<vmem>>, %arg6: memref<1x512xf32, #tpu.memory_space<vmem>>, %arg7: memref<24x512xf32, #tpu.memory_space<vmem>>) attributes {dimension_semantics = [#tpu.dimension_semantics<parallel>, #tpu.dimension_semantics<parallel>], iteration_bounds = array<i64: 1, 1>, scalar_prefetch = 0 : i64, scratch_operands = 0 : i64, tpu.core_type = #tpu.core_type<tc>, window_params = [{transform_indices = @transform_0, window_bounds = array<i64: 24, 128>}, {pipeline_mode = #tpu.pipeline_mode<synchronous>, transform_indices = @transform_1, window_bounds = array<i64: 1, 128>}, {pipeline_mode = #tpu.pipeline_mode<synchronous>, transform_indices = @transform_2, window_bounds = array<i64: 1, 128>}, {transform_indices = @transform_3, window_bounds = array<i64: 128, 512>}, {transform_indices = @transform_4, window_bounds = array<i64: 1, 512>}, {transform_indices = @transform_5, window_bounds = array<i64: 24, 512>}]} {
    %c0 = arith.constant 0 : index
    %c0_0 = arith.constant 0 : index
    %0 = vector.load %arg2[%c0, %c0_0] : memref<24x128xf32, #tpu.memory_space<vmem>>, vector<24x128xf32>
    %cst = arith.constant dense<0.000000e+00> : vector<24xf32>
    %1 = vector.multi_reduction <add>, %0, %cst [1] : vector<24x128xf32> to vector<24xf32>
    %2 = vector.shape_cast %1 : vector<24xf32> to vector<24x1xf32>
    %cst_1 = arith.constant 1.280000e+02 : f32
    %3 = vector.broadcast %cst_1 : f32 to vector<24x1xf32>
    %4 = arith.divf %2, %3 : vector<24x1xf32>
    %5 = vector.broadcast %4 : vector<24x1xf32> to vector<24x128xf32>
    %6 = arith.subf %0, %5 : vector<24x128xf32>
    %7 = arith.mulf %6, %6 : vector<24x128xf32>
    %cst_2 = arith.constant dense<0.000000e+00> : vector<24xf32>
    %8 = vector.multi_reduction <add>, %7, %cst_2 [1] : vector<24x128xf32> to vector<24xf32>
    %9 = vector.shape_cast %8 : vector<24xf32> to vector<24x1xf32>
    %cst_3 = arith.constant 1.280000e+02 : f32
    %10 = vector.broadcast %cst_3 : f32 to vector<24x1xf32>
    %11 = arith.divf %9, %10 : vector<24x1xf32>
    %12 = vector.broadcast %4 : vector<24x1xf32> to vector<24x128xf32>
    %13 = arith.subf %0, %12 : vector<24x128xf32>
    %cst_4 = arith.constant 9.99999974E-6 : f32
    %14 = vector.broadcast %cst_4 : f32 to vector<24x1xf32>
    %15 = arith.addf %11, %14 : vector<24x1xf32>
    %16 = math.rsqrt %15 : vector<24x1xf32>
    %17 = vector.broadcast %16 : vector<24x1xf32> to vector<24x128xf32>
    %18 = arith.mulf %13, %17 : vector<24x128xf32>
    %c0_5 = arith.constant 0 : index
    %c0_6 = arith.constant 0 : index
    %19 = vector.load %arg3[%c0_5, %c0_6] : memref<1x128xf32, #tpu.memory_space<vmem>>, vector<1x128xf32>
    %20 = vector.broadcast %19 : vector<1x128xf32> to vector<24x128xf32>
    %21 = arith.mulf %18, %20 : vector<24x128xf32>
    %c0_7 = arith.constant 0 : index
    %c0_8 = arith.constant 0 : index
    %22 = vector.load %arg4[%c0_7, %c0_8] : memref<1x128xf32, #tpu.memory_space<vmem>>, vector<1x128xf32>
    %23 = vector.broadcast %22 : vector<1x128xf32> to vector<24x128xf32>
    %24 = arith.addf %21, %23 : vector<24x128xf32>
    %25 = arith.truncf %24 : vector<24x128xf32> to vector<24x128xbf16>
    %c0_9 = arith.constant 0 : index
    %c0_10 = arith.constant 0 : index
    %26 = vector.load %arg5[%c0_9, %c0_10] : memref<128x512xbf16, #tpu.memory_space<vmem>>, vector<128x512xbf16>
    %cst_11 = arith.constant dense<0.000000e+00> : vector<24x512xf32>
    %27 = tpu.matmul %25, %26, %cst_11 {dimension_numbers = #tpu.dot_dimension_numbers<[1], [0], [0], [1], [0, 0, 1, 1], [], []>} : vector<24x128xbf16>, vector<128x512xbf16>, vector<24x512xf32> -> vector<24x512xf32>
    %c0_12 = arith.constant 0 : index
    %c0_13 = arith.constant 0 : index
    %28 = vector.load %arg6[%c0_12, %c0_13] : memref<1x512xf32, #tpu.memory_space<vmem>>, vector<1x512xf32>
    %29 = vector.broadcast %28 : vector<1x512xf32> to vector<24x512xf32>
    %30 = arith.addf %27, %29 : vector<24x512xf32>
    %cst_14 = arith.constant 5.000000e-01 : f32
    %31 = vector.broadcast %cst_14 : f32 to vector<24x512xf32>
    %32 = arith.mulf %31, %30 : vector<24x512xf32>
    %33 = arith.mulf %30, %30 : vector<24x512xf32>
    %34 = arith.mulf %30, %33 : vector<24x512xf32>
    %cst_15 = arith.constant 4.471500e-02 : f32
    %35 = vector.broadcast %cst_15 : f32 to vector<24x512xf32>
    %36 = arith.mulf %35, %34 : vector<24x512xf32>
    %37 = arith.addf %30, %36 : vector<24x512xf32>
    %cst_16 = arith.constant 0.797884583 : f32
    %38 = vector.broadcast %cst_16 : f32 to vector<24x512xf32>
    %39 = arith.mulf %38, %37 : vector<24x512xf32>
    %40 = math.tanh %39 : vector<24x512xf32>
    %cst_17 = arith.constant 1.000000e+00 : f32
    %41 = vector.broadcast %cst_17 : f32 to vector<24x512xf32>
    %42 = arith.addf %41, %40 : vector<24x512xf32>
    %43 = arith.mulf %32, %42 : vector<24x512xf32>
    %c0_18 = arith.constant 0 : index
    %c0_19 = arith.constant 0 : index
    %44 = vector.load %arg7[%c0_18, %c0_19] : memref<24x512xf32, #tpu.memory_space<vmem>>, vector<24x512xf32>
    tpu.vector_store %arg7[%c0_18, %c0_19], %43 {strides = array<i32>} : memref<24x512xf32, #tpu.memory_space<vmem>>, vector<24x512xf32>,
    return
  }
  func.func @transform_0(%arg0: i32, %arg1: i32) -> (i32, i32) {
    %c0_i32 = arith.constant 0 : i32
    %c0_i32_0 = arith.constant 0 : i32
    return %arg0, %c0_i32 : i32, i32
  }
  func.func @transform_1(%arg0: i32, %arg1: i32) -> (i32, i32) {
    %c0_i32 = arith.constant 0 : i32
    %c0_i32_0 = arith.constant 0 : i32
    %c0_i32_1 = arith.constant 0 : i32
    return %c0_i32, %c0_i32_0 : i32, i32
  }
  func.func @transform_2(%arg0: i32, %arg1: i32) -> (i32, i32) {
    %c0_i32 = arith.constant 0 : i32
    %c0_i32_0 = arith.constant 0 : i32
    %c0_i32_1 = arith.constant 0 : i32
    return %c0_i32, %c0_i32_0 : i32, i32
  }
  func.func @transform_3(%arg0: i32, %arg1: i32) -> (i32, i32) {
    %c0_i32 = arith.constant 0 : i32
    %c0_i32_0 = arith.constant 0 : i32
    return %c0_i32, %arg1 : i32, i32
  }
  func.func @transform_4(%arg0: i32, %arg1: i32) -> (i32, i32) {
    %c0_i32 = arith.constant 0 : i32
    %c0_i32_0 = arith.constant 0 : i32
    return %c0_i32, %arg1 : i32, i32
  }
  func.func @transform_5(%arg0: i32, %arg1: i32) -> (i32, i32) {
    %c0_i32 = arith.constant 0 : i32
    return %arg0, %arg1 : i32, i32
  }
}

module attributes {stable_mosaic.version = 11 : i64} {
  func.func @_dense_res_kernel(%arg0: i32, %arg1: i32, %arg2: memref<24x512xf32, #tpu.memory_space<vmem>>, %arg3: memref<512x128xbf16, #tpu.memory_space<vmem>>, %arg4: memref<1x128xf32, #tpu.memory_space<vmem>>, %arg5: memref<24x128xf32, #tpu.memory_space<vmem>>, %arg6: memref<24x128xf32, #tpu.memory_space<vmem>>) attributes {dimension_semantics = [#tpu.dimension_semantics<parallel>, #tpu.dimension_semantics<parallel>], iteration_bounds = array<i64: 1, 1>, scalar_prefetch = 0 : i64, scratch_operands = 0 : i64, tpu.core_type = #tpu.core_type<tc>, window_params = [{transform_indices = @transform_0, window_bounds = array<i64: 24, 512>}, {transform_indices = @transform_1, window_bounds = array<i64: 512, 128>}, {transform_indices = @transform_2, window_bounds = array<i64: 1, 128>}, {transform_indices = @transform_3, window_bounds = array<i64: 24, 128>}, {transform_indices = @transform_4, window_bounds = array<i64: 24, 128>}]} {
    %c0 = arith.constant 0 : index
    %c0_0 = arith.constant 0 : index
    %0 = vector.load %arg2[%c0, %c0_0] : memref<24x512xf32, #tpu.memory_space<vmem>>, vector<24x512xf32>
    %1 = arith.truncf %0 : vector<24x512xf32> to vector<24x512xbf16>
    %c0_1 = arith.constant 0 : index
    %c0_2 = arith.constant 0 : index
    %2 = vector.load %arg3[%c0_1, %c0_2] : memref<512x128xbf16, #tpu.memory_space<vmem>>, vector<512x128xbf16>
    %cst = arith.constant dense<0.000000e+00> : vector<24x128xf32>
    %3 = tpu.matmul %1, %2, %cst {dimension_numbers = #tpu.dot_dimension_numbers<[1], [0], [0], [1], [0, 0, 1, 1], [], []>} : vector<24x512xbf16>, vector<512x128xbf16>, vector<24x128xf32> -> vector<24x128xf32>
    %c0_3 = arith.constant 0 : index
    %c0_4 = arith.constant 0 : index
    %4 = vector.load %arg4[%c0_3, %c0_4] : memref<1x128xf32, #tpu.memory_space<vmem>>, vector<1x128xf32>
    %5 = vector.broadcast %4 : vector<1x128xf32> to vector<24x128xf32>
    %6 = arith.addf %3, %5 : vector<24x128xf32>
    %c0_5 = arith.constant 0 : index
    %c0_6 = arith.constant 0 : index
    %7 = vector.load %arg5[%c0_5, %c0_6] : memref<24x128xf32, #tpu.memory_space<vmem>>, vector<24x128xf32>
    %8 = arith.addf %6, %7 : vector<24x128xf32>
    %c0_7 = arith.constant 0 : index
    %c0_8 = arith.constant 0 : index
    %9 = vector.load %arg6[%c0_7, %c0_8] : memref<24x128xf32, #tpu.memory_space<vmem>>, vector<24x128xf32>
    tpu.vector_store %arg6[%c0_7, %c0_8], %8 {strides = array<i32>} : memref<24x128xf32, #tpu.memory_space<vmem>>, vector<24x128xf32>,
    return
  }
  func.func @transform_0(%arg0: i32, %arg1: i32) -> (i32, i32) {
    %c0_i32 = arith.constant 0 : i32
    %c0_i32_0 = arith.constant 0 : i32
    return %arg0, %c0_i32 : i32, i32
  }
  func.func @transform_1(%arg0: i32, %arg1: i32) -> (i32, i32) {
    %c0_i32 = arith.constant 0 : i32
    %c0_i32_0 = arith.constant 0 : i32
    return %c0_i32, %arg1 : i32, i32
  }
  func.func @transform_2(%arg0: i32, %arg1: i32) -> (i32, i32) {
    %c0_i32 = arith.constant 0 : i32
    %c0_i32_0 = arith.constant 0 : i32
    return %c0_i32, %arg1 : i32, i32
  }
  func.func @transform_3(%arg0: i32, %arg1: i32) -> (i32, i32) {
    %c0_i32 = arith.constant 0 : i32
    return %arg0, %arg1 : i32, i32
  }
  func.func @transform_4(%arg0: i32, %arg1: i32) -> (i32, i32) {
    %c0_i32 = arith.constant 0 : i32
    return %arg0, %arg1 : i32, i32
  }
}

module attributes {stable_mosaic.version = 11 : i64} {
  func.func @_ln_lmhead_kernel(%arg0: i32, %arg1: i32, %arg2: memref<24x128xf32, #tpu.memory_space<vmem>>, %arg3: memref<1x128xf32, #tpu.memory_space<vmem>>, %arg4: memref<1x128xf32, #tpu.memory_space<vmem>>, %arg5: memref<256x128xbf16, #tpu.memory_space<vmem>>, %arg6: memref<24x256xf32, #tpu.memory_space<vmem>>) attributes {dimension_semantics = [#tpu.dimension_semantics<parallel>, #tpu.dimension_semantics<parallel>], iteration_bounds = array<i64: 1, 1>, scalar_prefetch = 0 : i64, scratch_operands = 0 : i64, tpu.core_type = #tpu.core_type<tc>, window_params = [{transform_indices = @transform_0, window_bounds = array<i64: 24, 128>}, {pipeline_mode = #tpu.pipeline_mode<synchronous>, transform_indices = @transform_1, window_bounds = array<i64: 1, 128>}, {pipeline_mode = #tpu.pipeline_mode<synchronous>, transform_indices = @transform_2, window_bounds = array<i64: 1, 128>}, {transform_indices = @transform_3, window_bounds = array<i64: 256, 128>}, {transform_indices = @transform_4, window_bounds = array<i64: 24, 256>}]} {
    %c0 = arith.constant 0 : index
    %c0_0 = arith.constant 0 : index
    %0 = vector.load %arg2[%c0, %c0_0] : memref<24x128xf32, #tpu.memory_space<vmem>>, vector<24x128xf32>
    %cst = arith.constant dense<0.000000e+00> : vector<24xf32>
    %1 = vector.multi_reduction <add>, %0, %cst [1] : vector<24x128xf32> to vector<24xf32>
    %2 = vector.shape_cast %1 : vector<24xf32> to vector<24x1xf32>
    %cst_1 = arith.constant 1.280000e+02 : f32
    %3 = vector.broadcast %cst_1 : f32 to vector<24x1xf32>
    %4 = arith.divf %2, %3 : vector<24x1xf32>
    %5 = vector.broadcast %4 : vector<24x1xf32> to vector<24x128xf32>
    %6 = arith.subf %0, %5 : vector<24x128xf32>
    %7 = arith.mulf %6, %6 : vector<24x128xf32>
    %cst_2 = arith.constant dense<0.000000e+00> : vector<24xf32>
    %8 = vector.multi_reduction <add>, %7, %cst_2 [1] : vector<24x128xf32> to vector<24xf32>
    %9 = vector.shape_cast %8 : vector<24xf32> to vector<24x1xf32>
    %cst_3 = arith.constant 1.280000e+02 : f32
    %10 = vector.broadcast %cst_3 : f32 to vector<24x1xf32>
    %11 = arith.divf %9, %10 : vector<24x1xf32>
    %12 = vector.broadcast %4 : vector<24x1xf32> to vector<24x128xf32>
    %13 = arith.subf %0, %12 : vector<24x128xf32>
    %cst_4 = arith.constant 9.99999974E-6 : f32
    %14 = vector.broadcast %cst_4 : f32 to vector<24x1xf32>
    %15 = arith.addf %11, %14 : vector<24x1xf32>
    %16 = math.rsqrt %15 : vector<24x1xf32>
    %17 = vector.broadcast %16 : vector<24x1xf32> to vector<24x128xf32>
    %18 = arith.mulf %13, %17 : vector<24x128xf32>
    %c0_5 = arith.constant 0 : index
    %c0_6 = arith.constant 0 : index
    %19 = vector.load %arg3[%c0_5, %c0_6] : memref<1x128xf32, #tpu.memory_space<vmem>>, vector<1x128xf32>
    %20 = vector.broadcast %19 : vector<1x128xf32> to vector<24x128xf32>
    %21 = arith.mulf %18, %20 : vector<24x128xf32>
    %c0_7 = arith.constant 0 : index
    %c0_8 = arith.constant 0 : index
    %22 = vector.load %arg4[%c0_7, %c0_8] : memref<1x128xf32, #tpu.memory_space<vmem>>, vector<1x128xf32>
    %23 = vector.broadcast %22 : vector<1x128xf32> to vector<24x128xf32>
    %24 = arith.addf %21, %23 : vector<24x128xf32>
    %25 = arith.truncf %24 : vector<24x128xf32> to vector<24x128xbf16>
    %c0_9 = arith.constant 0 : index
    %c0_10 = arith.constant 0 : index
    %26 = vector.load %arg5[%c0_9, %c0_10] : memref<256x128xbf16, #tpu.memory_space<vmem>>, vector<256x128xbf16>
    %cst_11 = arith.constant dense<0.000000e+00> : vector<24x256xf32>
    %27 = tpu.matmul %25, %26, %cst_11 {dimension_numbers = #tpu.dot_dimension_numbers<[1], [1], [0], [0], [0, 0, 1, 0], [], []>} : vector<24x128xbf16>, vector<256x128xbf16>, vector<24x256xf32> -> vector<24x256xf32>
    %c0_12 = arith.constant 0 : index
    %c0_13 = arith.constant 0 : index
    %28 = vector.load %arg6[%c0_12, %c0_13] : memref<24x256xf32, #tpu.memory_space<vmem>>, vector<24x256xf32>
    tpu.vector_store %arg6[%c0_12, %c0_13], %27 {strides = array<i32>} : memref<24x256xf32, #tpu.memory_space<vmem>>, vector<24x256xf32>,
    return
  }
  func.func @transform_0(%arg0: i32, %arg1: i32) -> (i32, i32) {
    %c0_i32 = arith.constant 0 : i32
    %c0_i32_0 = arith.constant 0 : i32
    return %arg0, %c0_i32 : i32, i32
  }
  func.func @transform_1(%arg0: i32, %arg1: i32) -> (i32, i32) {
    %c0_i32 = arith.constant 0 : i32
    %c0_i32_0 = arith.constant 0 : i32
    %c0_i32_1 = arith.constant 0 : i32
    return %c0_i32, %c0_i32_0 : i32, i32
  }
  func.func @transform_2(%arg0: i32, %arg1: i32) -> (i32, i32) {
    %c0_i32 = arith.constant 0 : i32
    %c0_i32_0 = arith.constant 0 : i32
    %c0_i32_1 = arith.constant 0 : i32
    return %c0_i32, %c0_i32_0 : i32, i32
  }
  func.func @transform_3(%arg0: i32, %arg1: i32) -> (i32, i32) {
    %c0_i32 = arith.constant 0 : i32
    %c0_i32_0 = arith.constant 0 : i32
    return %arg1, %c0_i32 : i32, i32
  }
  func.func @transform_4(%arg0: i32, %arg1: i32) -> (i32, i32) {
    %c0_i32 = arith.constant 0 : i32
    return %arg0, %arg1 : i32, i32
  }
}

module attributes {stable_mosaic.version = 11 : i64} {
  func.func @_ce_kernel(%arg0: i32, %arg1: memref<8x256xf32, #tpu.memory_space<vmem>>, %arg2: memref<8x1xi32, #tpu.memory_space<vmem>>, %arg3: memref<8x1xf32, #tpu.memory_space<vmem>>, %arg4: memref<1x1xf32, #tpu.memory_space<vmem>>, %arg5: memref<1x1xf32, #tpu.memory_space<vmem>>, %arg6: memref<1x1xf32, #tpu.memory_space<vmem>>) attributes {dimension_semantics = [#tpu.dimension_semantics<arbitrary>], iteration_bounds = array<i64: 2>, scalar_prefetch = 0 : i64, scratch_operands = 2 : i64, tpu.core_type = #tpu.core_type<tc>, window_params = [{transform_indices = @transform_0, window_bounds = array<i64: 8, 256>}, {transform_indices = @transform_1, window_bounds = array<i64: 8, 1>}, {transform_indices = @transform_2, window_bounds = array<i64: 8, 1>}, {pipeline_mode = #tpu.pipeline_mode<synchronous>, transform_indices = @transform_3, window_bounds = array<i64: 1, 1>}]} {
    %c0_i32 = arith.constant 0 : i32
    %0 = arith.cmpi eq, %arg0, %c0_i32 : i32
    %1 = arith.extui %0 : i1 to i32
    %c0_i32_0 = arith.constant 0 : i32
    %2 = arith.cmpi ne, %1, %c0_i32_0 : i32
    scf.if %2 {
      %cst_20 = arith.constant 0.000000e+00 : f32
      %37 = vector.broadcast %cst_20 : f32 to vector<1x1xf32>
      %c0_21 = arith.constant 0 : index
      %c0_22 = arith.constant 0 : index
      %38 = vector.load %arg5[%c0_21, %c0_22] : memref<1x1xf32, #tpu.memory_space<vmem>>, vector<1x1xf32>
      tpu.vector_store %arg5[%c0_21, %c0_22], %37 {strides = array<i32>} : memref<1x1xf32, #tpu.memory_space<vmem>>, vector<1x1xf32>,
      %cst_23 = arith.constant 0.000000e+00 : f32
      %39 = vector.broadcast %cst_23 : f32 to vector<1x1xf32>
      %c0_24 = arith.constant 0 : index
      %c0_25 = arith.constant 0 : index
      %40 = vector.load %arg6[%c0_24, %c0_25] : memref<1x1xf32, #tpu.memory_space<vmem>>, vector<1x1xf32>
      tpu.vector_store %arg6[%c0_24, %c0_25], %39 {strides = array<i32>} : memref<1x1xf32, #tpu.memory_space<vmem>>, vector<1x1xf32>,
    } else {
    }
    %c0 = arith.constant 0 : index
    %c0_1 = arith.constant 0 : index
    %3 = vector.load %arg1[%c0, %c0_1] : memref<8x256xf32, #tpu.memory_space<vmem>>, vector<8x256xf32>
    %c0_2 = arith.constant 0 : index
    %c0_3 = arith.constant 0 : index
    %4 = vector.load %arg2[%c0_2, %c0_3] : memref<8x1xi32, #tpu.memory_space<vmem>>, vector<8x1xi32>
    %c0_4 = arith.constant 0 : index
    %c0_5 = arith.constant 0 : index
    %5 = vector.load %arg3[%c0_4, %c0_5] : memref<8x1xf32, #tpu.memory_space<vmem>>, vector<8x1xf32>
    %cst = arith.constant dense<0xFF800000> : vector<8xf32>
    %6 = vector.multi_reduction <maximumf>, %3, %cst [1] : vector<8x256xf32> to vector<8xf32>
    %7 = vector.shape_cast %6 : vector<8xf32> to vector<8x1xf32>
    %8 = vector.broadcast %7 : vector<8x1xf32> to vector<8x256xf32>
    %9 = arith.subf %3, %8 : vector<8x256xf32>
    %10 = math.exp %9 : vector<8x256xf32>
    %cst_6 = arith.constant dense<0.000000e+00> : vector<8xf32>
    %11 = vector.multi_reduction <add>, %10, %cst_6 [1] : vector<8x256xf32> to vector<8xf32>
    %12 = vector.shape_cast %11 : vector<8xf32> to vector<8x1xf32>
    %13 = math.log %12 : vector<8x1xf32>
    %14 = arith.addf %7, %13 : vector<8x1xf32>
    %15 = tpu.iota {dimensions = array<i32: 1>} : vector<8x256xi32>
    %16 = vector.broadcast %4 : vector<8x1xi32> to vector<8x256xi32>
    %17 = arith.cmpi eq, %15, %16 : vector<8x256xi32>
    %cst_7 = arith.constant 0.000000e+00 : f32
    %18 = vector.broadcast %cst_7 : f32 to vector<8x256xf32>
    %19 = arith.select %17, %3, %18 : vector<8x256xi1>, vector<8x256xf32>
    %cst_8 = arith.constant dense<0.000000e+00> : vector<8xf32>
    %20 = vector.multi_reduction <add>, %19, %cst_8 [1] : vector<8x256xf32> to vector<8xf32>
    %21 = vector.shape_cast %20 : vector<8xf32> to vector<8x1xf32>
    %22 = arith.subf %14, %21 : vector<8x1xf32>
    %23 = arith.mulf %22, %5 : vector<8x1xf32>
    %c0_9 = arith.constant 0 : index
    %c0_10 = arith.constant 0 : index
    %24 = vector.load %arg5[%c0_9, %c0_10] : memref<1x1xf32, #tpu.memory_space<vmem>>, vector<1x1xf32>
    %cst_11 = arith.constant dense<0.000000e+00> : vector<1xf32>
    %25 = vector.multi_reduction <add>, %23, %cst_11 [0] : vector<8x1xf32> to vector<1xf32>
    %26 = vector.shape_cast %25 : vector<1xf32> to vector<1x1xf32>
    %27 = arith.addf %24, %26 : vector<1x1xf32>
    %c0_12 = arith.constant 0 : index
    %c0_13 = arith.constant 0 : index
    %28 = vector.load %arg5[%c0_12, %c0_13] : memref<1x1xf32, #tpu.memory_space<vmem>>, vector<1x1xf32>
    tpu.vector_store %arg5[%c0_12, %c0_13], %27 {strides = array<i32>} : memref<1x1xf32, #tpu.memory_space<vmem>>, vector<1x1xf32>,
    %c0_14 = arith.constant 0 : index
    %c0_15 = arith.constant 0 : index
    %29 = vector.load %arg6[%c0_14, %c0_15] : memref<1x1xf32, #tpu.memory_space<vmem>>, vector<1x1xf32>
    %cst_16 = arith.constant dense<0.000000e+00> : vector<1xf32>
    %30 = vector.multi_reduction <add>, %5, %cst_16 [0] : vector<8x1xf32> to vector<1xf32>
    %31 = vector.shape_cast %30 : vector<1xf32> to vector<1x1xf32>
    %32 = arith.addf %29, %31 : vector<1x1xf32>
    %c0_17 = arith.constant 0 : index
    %c0_18 = arith.constant 0 : index
    %33 = vector.load %arg6[%c0_17, %c0_18] : memref<1x1xf32, #tpu.memory_space<vmem>>, vector<1x1xf32>
    tpu.vector_store %arg6[%c0_17, %c0_18], %32 {strides = array<i32>} : memref<1x1xf32, #tpu.memory_space<vmem>>, vector<1x1xf32>,
    %c1_i32 = arith.constant 1 : i32
    %34 = arith.cmpi eq, %arg0, %c1_i32 : i32
    %35 = arith.extui %34 : i1 to i32
    %c0_i32_19 = arith.constant 0 : i32
    %36 = arith.cmpi ne, %35, %c0_i32_19 : i32
    scf.if %36 {
      %c0_20 = arith.constant 0 : index
      %c0_21 = arith.constant 0 : index
      %37 = vector.load %arg5[%c0_20, %c0_21] : memref<1x1xf32, #tpu.memory_space<vmem>>, vector<1x1xf32>
      %c0_22 = arith.constant 0 : index
      %c0_23 = arith.constant 0 : index
      %38 = vector.load %arg6[%c0_22, %c0_23] : memref<1x1xf32, #tpu.memory_space<vmem>>, vector<1x1xf32>
      %cst_24 = arith.constant 1.000000e+00 : f32
      %39 = vector.broadcast %cst_24 : f32 to vector<1x1xf32>
      %40 = arith.maximumf %38, %39 : vector<1x1xf32>
      %41 = arith.divf %37, %40 : vector<1x1xf32>
      %c0_25 = arith.constant 0 : index
      %c0_26 = arith.constant 0 : index
      %42 = vector.load %arg4[%c0_25, %c0_26] : memref<1x1xf32, #tpu.memory_space<vmem>>, vector<1x1xf32>
      tpu.vector_store %arg4[%c0_25, %c0_26], %41 {strides = array<i32>} : memref<1x1xf32, #tpu.memory_space<vmem>>, vector<1x1xf32>,
    } else {
    }
    return
  }
  func.func @transform_0(%arg0: i32) -> (i32, i32) {
    %c0_i32 = arith.constant 0 : i32
    %c0_i32_0 = arith.constant 0 : i32
    return %arg0, %c0_i32 : i32, i32
  }
  func.func @transform_1(%arg0: i32) -> (i32, i32) {
    %c0_i32 = arith.constant 0 : i32
    %c0_i32_0 = arith.constant 0 : i32
    return %arg0, %c0_i32 : i32, i32
  }
  func.func @transform_2(%arg0: i32) -> (i32, i32) {
    %c0_i32 = arith.constant 0 : i32
    %c0_i32_0 = arith.constant 0 : i32
    return %arg0, %c0_i32 : i32, i32
  }
  func.func @transform_3(%arg0: i32) -> (i32, i32) {
    %c0_i32 = arith.constant 0 : i32
    %c0_i32_0 = arith.constant 0 : i32
    %c0_i32_1 = arith.constant 0 : i32
    return %c0_i32, %c0_i32_0 : i32, i32
  }
}

</mosaic_0001>

<llo_original>
// kernel: autoencoder_forward.23
$region0: #{autoencoder_forward.23}
  #allocation0 [shape = 'u32[]', space=smem, size = 0x4, offset = 0x4, fixed_abs, tag = 'smem constant byte address 0x4 - core index']
  #allocation1 [shape = 'u32[144,128]{1,0:T(1,128)}', space=vmem, size = 0x12000, scoped, tag = 'internal scratch']
  %s0 = inlined_call_operand.vmem [shape: f32[16,128], index: 0, kind: input, shape index: {}]
  %s1 = inlined_call_operand.vmem [shape: f32[1,128], index: 1, kind: input, shape index: {}]
  %s2 = inlined_call_operand.vmem [shape: f32[1,128], index: 2, kind: input, shape index: {}]
  %s3 = inlined_call_operand.vmem [shape: bf16[128,384], index: 3, kind: input, shape index: {}]
  %s4 = inlined_call_operand.vmem [shape: f32[1,384], index: 4, kind: input, shape index: {}]
  %s5 = inlined_call_operand.vmem [shape: f32[16,384], index: 5, kind: output, shape index: {}]
  %s6 = sld [smem:[#allocation0]]
  $region128: #{autoencoder_forward.23} parent=0
    _
  %s8 = ssub.s32 1, %s6
  %s9 = scalar_select 0, %s8, %s6
  $region1: #{autoencoder_forward.23} parent=0
    #allocation2 [shape = 'u8[65536]{0}', space=vmem, size = 0x10000, scoped, tag = 'input window, operand 3']
    #allocation3 [shape = 'u8[16384]{0}', space=vmem, size = 0x4000, scoped, tag = 'output window, operand 0']
    loop: start=0, step=1, limit=5
    $region2: #{autoencoder_forward.23} parent=1 // loop_pre_header
      _
    $region3: #{autoencoder_forward.23} parent=1 // loop_header
      %s11 = sphi 0, %s15
      %p12 = scmp.ge.s32.totalorder %s11, 5
      %s18 = sphi 0, %s30
      %s19 = sphi 0, %s26
      %s20 = sphi 0, %s18
      %s21 = sphi 0, %s19
      %s22 = sphi 0, %s20
      %s23 = sphi 0, %s21
      %s33 = sphi 0, %s35
      %s36 = sphi 0, %s33
      %s37 = sphi 0, %s36
      %s53 = sphi 0, %s37
      %s57 = sphi 0, %s57
      %s59 = sphi 0, %s57
      %s60 = sphi 0, %s59
      %s74 = sphi 0, %s60
      %s78 = sphi 0, %s78
      %s80 = sphi 0, %s78
      %s81 = sphi 0, %s80
      %s95 = sphi 0, %s81
      %s101 = sphi 0, %s103
      %s104 = sphi 0, %s101
      %s105 = sphi 0, %s104
      %s121 = sphi 0, %s105
      %s127 = sphi 0, %s129
      %s130 = sphi 0, %s127
      %s131 = sphi 0, %s130
      %s147 = sphi 0, %s131
      %s155 = sphi 0, %s157
      %s158 = sphi 0, %s155
      %s159 = sphi 0, %s158
      %s175 = sphi 0, %s159
    $region4: #{autoencoder_forward.23} parent=1 // loop_header_branch
      %14 = sbr.rel (%p12) target = $region8
    $region5: #{autoencoder_forward.23} parent=1 // loop_body
      %s16 = ssub.s32 %s11, 1
      %s17 = ssub.s32 %s11, 2
      %s24 = sadd.s32 1, %s19
      %p25 = scmp.ge.s32.totalorder %s24, 3
      %s26 = scalar_select %p25, 0, %s24
      %s27 = sadd.s32 1, %s18
      %s28 = scalar_select %p25, %s27, %s18
      %p29 = scmp.ge.s32.totalorder %s28, 1
      %s30 = scalar_select %p29, 0, %s28
      %s31 = ssub.s32 %s18, %s30
      %p32 = scmp.eq.s32.totalorder %s31, 0
      %s34 = sadd.s32 %s33, 1
      %s35 = scalar_select %p32, %s33, %s34
      %p38 = pneg %p32
      %p39 = scmp.eq.s32.totalorder %s11, 2
      %p40 = por %p38, %p39
      %p41 = scmp.ne.s32.totalorder %s33, %s36
      %p42 = scmp.eq.s32.totalorder %s11, 0
      %p43 = por %p41, %p42
      %p44 = scmp.ne.s32.totalorder %s33, %s36
      %p45 = scmp.eq.s32.totalorder %s16, 2
      %p46 = por %p44, %p45
      %p47 = scmp.ne.s32.totalorder %s36, %s37
      %p48 = scmp.eq.s32.totalorder %s16, 0
      %p49 = por %p47, %p48
      %p50 = scmp.ne.s32.totalorder %s36, %s37
      %p51 = scmp.eq.s32.totalorder %s17, 2
      %p52 = por %p50, %p51
      %p54 = scmp.ne.s32.totalorder %s37, %s53
      %p55 = scmp.eq.s32.totalorder %s17, 0
      %p56 = por %p54, %p55
      %s58 = sadd.s32 %s57, 1
      %p61 = scmp.eq.s32.totalorder %s11, 2
      %p62 = scmp.ne.s32.totalorder %s57, %s59
      %p63 = scmp.eq.s32.totalorder %s11, 0
      %p64 = por %p62, %p63
      %p65 = scmp.ne.s32.totalorder %s57, %s59
      %p66 = scmp.eq.s32.totalorder %s16, 2
      %p67 = por %p65, %p66
      %p68 = scmp.ne.s32.totalorder %s59, %s60
      %p69 = scmp.eq.s32.totalorder %s16, 0
      %p70 = por %p68, %p69
      %p71 = scmp.ne.s32.totalorder %s59, %s60
      %p72 = scmp.eq.s32.totalorder %s17, 2
      %p73 = por %p71, %p72
      %p75 = scmp.ne.s32.totalorder %s60, %s74
      %p76 = scmp.eq.s32.totalorder %s17, 0
      %p77 = por %p75, %p76
      %s79 = sadd.s32 %s78, 1
      %p82 = scmp.eq.s32.totalorder %s11, 2
      %p83 = scmp.ne.s32.totalorder %s78, %s80
      %p84 = scmp.eq.s32.totalorder %s11, 0
      %p85 = por %p83, %p84
      %p86 = scmp.ne.s32.totalorder %s78, %s80
      %p87 = scmp.eq.s32.totalorder %s16, 2
      %p88 = por %p86, %p87
      %p89 = scmp.ne.s32.totalorder %s80, %s81
      %p90 = scmp.eq.s32.totalorder %s16, 0
      %p91 = por %p89, %p90
      %p92 = scmp.ne.s32.totalorder %s80, %s81
      %p93 = scmp.eq.s32.totalorder %s17, 2
      %p94 = por %p92, %p93
      %p96 = scmp.ne.s32.totalorder %s81, %s95
      %p97 = scmp.eq.s32.totalorder %s17, 0
      %p98 = por %p96, %p97
      %s99 = ssub.s32 %s19, %s26
      %p100 = scmp.eq.s32.totalorder %s99, 0
      %s102 = sadd.s32 %s101, 1
      %s103 = scalar_select %p100, %s101, %s102
      %p106 = pneg %p100
      %p107 = scmp.eq.s32.totalorder %s11, 2
      %p108 = por %p106, %p107
      %p109 = scmp.ne.s32.totalorder %s101, %s104
      %p110 = scmp.eq.s32.totalorder %s11, 0
      %p111 = por %p109, %p110
      %p112 = scmp.ne.s32.totalorder %s101, %s104
      %p113 = scmp.eq.s32.totalorder %s16, 2
      %p114 = por %p112, %p113
      %p115 = scmp.ne.s32.totalorder %s104, %s105
      %p116 = scmp.eq.s32.totalorder %s16, 0
      %p117 = por %p115, %p116
      %p118 = scmp.ne.s32.totalorder %s104, %s105
      %p119 = scmp.eq.s32.totalorder %s17, 2
      %p120 = por %p118, %p119
      %p122 = scmp.ne.s32.totalorder %s105, %s121
      %p123 = scmp.eq.s32.totalorder %s17, 0
      %p124 = por %p122, %p123
      %s125 = ssub.s32 %s19, %s26
      %p126 = scmp.eq.s32.totalorder %s125, 0
      %s128 = sadd.s32 %s127, 1
      %s129 = scalar_select %p126, %s127, %s128
      %p132 = pneg %p126
      %p133 = scmp.eq.s32.totalorder %s11, 2
      %p134 = por %p132, %p133
      %p135 = scmp.ne.s32.totalorder %s127, %s130
      %p136 = scmp.eq.s32.totalorder %s11, 0
      %p137 = por %p135, %p136
      %p138 = scmp.ne.s32.totalorder %s127, %s130
      %p139 = scmp.eq.s32.totalorder %s16, 2
      %p140 = por %p138, %p139
      %p141 = scmp.ne.s32.totalorder %s130, %s131
      %p142 = scmp.eq.s32.totalorder %s16, 0
      %p143 = por %p141, %p142
      %p144 = scmp.ne.s32.totalorder %s130, %s131
      %p145 = scmp.eq.s32.totalorder %s17, 2
      %p146 = por %p144, %p145
      %p148 = scmp.ne.s32.totalorder %s131, %s147
      %p149 = scmp.eq.s32.totalorder %s17, 0
      %p150 = por %p148, %p149
      %s151 = ssub.s32 %s18, %s30
      %s152 = ssub.s32 %s19, %s26
      %s153 = sor.u32 %s151, %s152
      %p154 = scmp.eq.s32.totalorder %s153, 0
      %s156 = sadd.s32 %s155, 1
      %s157 = scalar_select %p154, %s155, %s156
      %p160 = pneg %p154
      %p161 = scmp.eq.s32.totalorder %s11, 2
      %p162 = por %p160, %p161
      %p163 = scmp.ne.s32.totalorder %s155, %s158
      %p164 = scmp.eq.s32.totalorder %s11, 0
      %p165 = por %p163, %p164
      %p166 = scmp.ne.s32.totalorder %s155, %s158
      %p167 = scmp.eq.s32.totalorder %s16, 2
      %p168 = por %p166, %p167
      %p169 = scmp.ne.s32.totalorder %s158, %s159
      %p170 = scmp.eq.s32.totalorder %s16, 0
      %p171 = por %p169, %p170
      %p172 = scmp.ne.s32.totalorder %s158, %s159
      %p173 = scmp.eq.s32.totalorder %s17, 2
      %p174 = por %p172, %p173
      %p176 = scmp.ne.s32.totalorder %s159, %s175
      %p177 = scmp.eq.s32.totalorder %s17, 0
      %p178 = por %p176, %p177
      %p179 = scmp.le.s32.totalorder 1, %s11
      %p180 = scmp.lt.s32.totalorder %s11, 4
      %p181 = pnand %p179, %p180
      %p182 = pneg %p181
      // Predicated region
      $region9: #{autoencoder_forward.23} parent=5 // pred_check
        _
      $region10: #{autoencoder_forward.23} parent=5 // pred_check_branch
        %184 = sbr.rel (%p181) target = $region12
      $region11: #{autoencoder_forward.23} parent=5 // pred_region
        %s185 = ssub.s32 %s11, 1
        // Predicated region
        $region13: #{autoencoder_forward.23} parent=11 // pred_check
          %p186 = pneg %p49
        $region14: #{autoencoder_forward.23} parent=11 // pred_check_branch
          %188 = sbr.rel (%p186) target = $region16
        $region15: #{autoencoder_forward.23} parent=11 // pred_region
          %s189 = smul.u32 2, %s20
          %p190 = scmp.lt.s32.totalorder %s189, 1
          %s191 = scalar_select %p190, %s189, 1
          %s192 = smul.addr %s191, 8
          %s193 = scalar_lea.vmem %s0, %s192
          %s194 = smul.u32 2, %s20
        $region16: #{autoencoder_forward.23} parent=11 // pred_fallthru
          _
        // Predicated region
        $region17: #{autoencoder_forward.23} parent=11 // pred_check
          %p195 = pneg %p70
        $region18: #{autoencoder_forward.23} parent=11 // pred_check_branch
          %197 = sbr.rel (%p195) target = $region20
        $region19: #{autoencoder_forward.23} parent=11 // pred_region
          _
        $region20: #{autoencoder_forward.23} parent=11 // pred_fallthru
          _
        // Predicated region
        $region21: #{autoencoder_forward.23} parent=11 // pred_check
          %p198 = pneg %p91
        $region22: #{autoencoder_forward.23} parent=11 // pred_check_branch
          %200 = sbr.rel (%p198) target = $region24
        $region23: #{autoencoder_forward.23} parent=11 // pred_region
          _
        $region24: #{autoencoder_forward.23} parent=11 // pred_fallthru
          _
      $region12: #{autoencoder_forward.23} parent=5 // pred_fallthru
        _
      %p201 = scmp.lt.s32.totalorder %s11, 3
      // Predicated region
      $region25: #{autoencoder_forward.23} parent=5 // pred_check
        %p202 = pneg %p201
      $region26: #{autoencoder_forward.23} parent=5 // pred_check_branch
        %204 = sbr.rel (%p202) target = $region28
      $region27: #{autoencoder_forward.23} parent=5 // pred_region
        // Predicated region
        $region29: #{autoencoder_forward.23} parent=27 // pred_check
          %p205 = pneg %p111
        $region30: #{autoencoder_forward.23} parent=27 // pred_check_branch
          %207 = sbr.rel (%p205) target = $region32
        $region31: #{autoencoder_forward.23} parent=27 // pred_region
          %s208 = sand.u32 %s101, 1
          %s209 = sand.u32 %s101, 1
          %s210 = smul.addr %s209, 64
          %s211 = scalar_lea.vmem [#allocation2], %s210
          %s212 = smul.addr %s19, 4
          %s213 = scalar_lea.vmem %s3, %s212
          // Predicated region
          $region33: #{autoencoder_forward.23} parent=31 // pred_check
            _
          $region34: #{autoencoder_forward.23} parent=31 // pred_check_branch
            %215 = sbr.rel (0) target = $region36
          $region35: #{autoencoder_forward.23} parent=31 // pred_region
            // Predicated region
            $region37: #{autoencoder_forward.23} parent=35 // pred_check
              _
            $region38: #{autoencoder_forward.23} parent=35 // pred_check_branch
              %217 = sbr.rel target = $region40
            $region39: #{autoencoder_forward.23} parent=35 // pred_region
              // Predicated region
              $region52: #{autoencoder_forward.23} parent=39 // pred_check
                _
              $region53: #{autoencoder_forward.23} parent=39 // pred_check_branch
                %262 = sbr.rel (0) target = $region55
              $region54: #{autoencoder_forward.23} parent=39 // pred_region
                loop: start=0, step=1, limit=1
                $region56: #{autoencoder_forward.23} parent=54 // loop_pre_header
                  _
                $region57: #{autoencoder_forward.23} parent=54 // loop_header
                  %s264 = sphi 0, %s268
                  %p265 = scmp.ge.s32.totalorder %s264, 1
                  %s269 = sphi %s213, %s213
                  %s270 = sphi %s211, %s211
                $region58: #{autoencoder_forward.23} parent=54 // loop_header_branch
                  %267 = sbr.rel (%p265) target = $region62
                $region59: #{autoencoder_forward.23} parent=54 // loop_body
                  _
                $region60: #{autoencoder_forward.23} parent=54 // loop_footer
                  %s268 = sadd.s32 1, %s264
                $region61: #{autoencoder_forward.23} parent=54 // loop_footer_branch
                  %263 = sbr.rel target = $region57
                $region62: #{autoencoder_forward.23} parent=54 // loop_exit
                  _
                loop: start=0, step=1, limit=1
                $region63: #{autoencoder_forward.23} parent=54 // loop_pre_header
                  _
                $region64: #{autoencoder_forward.23} parent=54 // loop_header
                  %s273 = sphi 0, %s277
                  %p274 = scmp.ge.s32.totalorder %s273, 1
                  %s278 = sphi %s213, %s213
                  %s279 = sphi %s211, %s211
                $region65: #{autoencoder_forward.23} parent=54 // loop_header_branch
                  %276 = sbr.rel (%p274) target = $region69
                $region66: #{autoencoder_forward.23} parent=54 // loop_body
                  %v280 = vld [vmem:[%s278] sm:$0xf]
                  %281 = vst [vmem:[%s279] sm:$0xf] %v280
                  %v282 = vld [vmem:[%s278 + $0xc] sm:$0xf]
                  %283 = vst [vmem:[%s279 + $0x4] sm:$0xf] %v282
                  %v284 = vld [vmem:[%s278 + $0x18] sm:$0xf]
                  %285 = vst [vmem:[%s279 + $0x8] sm:$0xf] %v284
                  %v286 = vld [vmem:[%s278 + $0x24] sm:$0xf]
                  %287 = vst [vmem:[%s279 + $0xc] sm:$0xf] %v286
                  %v288 = vld [vmem:[%s278 + $0x30] sm:$0xf]
                  %289 = vst [vmem:[%s279 + $0x10] sm:$0xf] %v288
                  %v290 = vld [vmem:[%s278 + $0x3c] sm:$0xf]
                  %291 = vst [vmem:[%s279 + $0x14] sm:$0xf] %v290
                  %v292 = vld [vmem:[%s278 + $0x48] sm:$0xf]
                  %293 = vst [vmem:[%s279 + $0x18] sm:$0xf] %v292
                  %v294 = vld [vmem:[%s278 + $0x54] sm:$0xf]
                  %295 = vst [vmem:[%s279 + $0x1c] sm:$0xf] %v294
                  %v296 = vld [vmem:[%s278 + $0x60] sm:$0xf]
                  %297 = vst [vmem:[%s279 + $0x20] sm:$0xf] %v296
                  %v298 = vld [vmem:[%s278 + $0x6c] sm:$0xf]
                  %299 = vst [vmem:[%s279 + $0x24] sm:$0xf] %v298
                  %v300 = vld [vmem:[%s278 + $0x78] sm:$0xf]
                  %301 = vst [vmem:[%s279 + $0x28] sm:$0xf] %v300
                  %v302 = vld [vmem:[%s278 + $0x84] sm:$0xf]
                  %303 = vst [vmem:[%s279 + $0x2c] sm:$0xf] %v302
                  %v304 = vld [vmem:[%s278 + $0x90] sm:$0xf]
                  %305 = vst [vmem:[%s279 + $0x30] sm:$0xf] %v304
                  %v306 = vld [vmem:[%s278 + $0x9c] sm:$0xf]
                  %307 = vst [vmem:[%s279 + $0x34] sm:$0xf] %v306
                  %v308 = vld [vmem:[%s278 + $0xa8] sm:$0xf]
                  %309 = vst [vmem:[%s279 + $0x38] sm:$0xf] %v308
                  %v310 = vld [vmem:[%s278 + $0xb4] sm:$0xf]
                  %311 = vst [vmem:[%s279 + $0x3c] sm:$0xf] %v310
                $region67: #{autoencoder_forward.23} parent=54 // loop_footer
                  %s277 = sadd.s32 1, %s273
                $region68: #{autoencoder_forward.23} parent=54 // loop_footer_branch
                  %272 = sbr.rel target = $region64
                $region69: #{autoencoder_forward.23} parent=54 // loop_exit
                  _
              $region55: #{autoencoder_forward.23} parent=39 // pred_fallthru
                _
            $region40: #{autoencoder_forward.23} parent=35 // pred_fallthru
              _
            // Predicated region
            $region41: #{autoencoder_forward.23} parent=35 // pred_check
              _
            $region42: #{autoencoder_forward.23} parent=35 // pred_check_branch
              %219 = sbr.rel (0) target = $region44
            $region43: #{autoencoder_forward.23} parent=35 // pred_region
              loop: start=0, step=1, limit=1
              $region45: #{autoencoder_forward.23} parent=43 // loop_pre_header
                _
              $region46: #{autoencoder_forward.23} parent=43 // loop_header
                %s222 = sphi 0, %s226
                %p223 = scmp.ge.s32.totalorder %s222, 1
                %s227 = sphi %s213, %s213
                %s228 = sphi %s211, %s211
              $region47: #{autoencoder_forward.23} parent=43 // loop_header_branch
                %225 = sbr.rel (%p223) target = $region51
              $region48: #{autoencoder_forward.23} parent=43 // loop_body
                %v229 = vld [vmem:[%s227] sm:$0xf]
                %230 = vst [vmem:[%s228] sm:$0xf] %v229
                %v231 = vld [vmem:[%s227 + $0xc] sm:$0xf]
                %232 = vst [vmem:[%s228 + $0x4] sm:$0xf] %v231
                %v233 = vld [vmem:[%s227 + $0x18] sm:$0xf]
                %234 = vst [vmem:[%s228 + $0x8] sm:$0xf] %v233
                %v235 = vld [vmem:[%s227 + $0x24] sm:$0xf]
                %236 = vst [vmem:[%s228 + $0xc] sm:$0xf] %v235
                %v237 = vld [vmem:[%s227 + $0x30] sm:$0xf]
                %238 = vst [vmem:[%s228 + $0x10] sm:$0xf] %v237
                %v239 = vld [vmem:[%s227 + $0x3c] sm:$0xf]
                %240 = vst [vmem:[%s228 + $0x14] sm:$0xf] %v239
                %v241 = vld [vmem:[%s227 + $0x48] sm:$0xf]
                %242 = vst [vmem:[%s228 + $0x18] sm:$0xf] %v241
                %v243 = vld [vmem:[%s227 + $0x54] sm:$0xf]
                %244 = vst [vmem:[%s228 + $0x1c] sm:$0xf] %v243
                %v245 = vld [vmem:[%s227 + $0x60] sm:$0xf]
                %246 = vst [vmem:[%s228 + $0x20] sm:$0xf] %v245
                %v247 = vld [vmem:[%s227 + $0x6c] sm:$0xf]
                %248 = vst [vmem:[%s228 + $0x24] sm:$0xf] %v247
                %v249 = vld [vmem:[%s227 + $0x78] sm:$0xf]
                %250 = vst [vmem:[%s228 + $0x28] sm:$0xf] %v249
                %v251 = vld [vmem:[%s227 + $0x84] sm:$0xf]
                %252 = vst [vmem:[%s228 + $0x2c] sm:$0xf] %v251
                %v253 = vld [vmem:[%s227 + $0x90] sm:$0xf]
                %254 = vst [vmem:[%s228 + $0x30] sm:$0xf] %v253
                %v255 = vld [vmem:[%s227 + $0x9c] sm:$0xf]
                %256 = vst [vmem:[%s228 + $0x34] sm:$0xf] %v255
                %v257 = vld [vmem:[%s227 + $0xa8] sm:$0xf]
                %258 = vst [vmem:[%s228 + $0x38] sm:$0xf] %v257
                %v259 = vld [vmem:[%s227 + $0xb4] sm:$0xf]
                %260 = vst [vmem:[%s228 + $0x3c] sm:$0xf] %v259
              $region49: #{autoencoder_forward.23} parent=43 // loop_footer
                %s226 = sadd.s32 1, %s222
              $region50: #{autoencoder_forward.23} parent=43 // loop_footer_branch
                %221 = sbr.rel target = $region46
              $region51: #{autoencoder_forward.23} parent=43 // loop_exit
                _
            $region44: #{autoencoder_forward.23} parent=35 // pred_fallthru
              _
          $region36: #{autoencoder_forward.23} parent=31 // pred_fallthru
            _
          %312 = vnop
        $region32: #{autoencoder_forward.23} parent=27 // pred_fallthru
          _
        // Predicated region
        $region70: #{autoencoder_forward.23} parent=27 // pred_check
          %p313 = pneg %p137
        $region71: #{autoencoder_forward.23} parent=27 // pred_check_branch
          %315 = sbr.rel (%p313) target = $region73
        $region72: #{autoencoder_forward.23} parent=27 // pred_region
          %p316 = scmp.lt.s32.totalorder %s19, 2
          %s317 = scalar_select %p316, %s19, 2
          %s318 = scalar_lea.vmem %s4, %s317
        $region73: #{autoencoder_forward.23} parent=27 // pred_fallthru
          _
      $region28: #{autoencoder_forward.23} parent=5 // pred_fallthru
        _
      %p319 = scmp.le.s32.totalorder 1, %s11
      %p320 = scmp.lt.s32.totalorder %s11, 4
      %p321 = pnand %p319, %p320
      %p322 = pneg %p321
      // Predicated region
      $region74: #{autoencoder_forward.23} parent=5 // pred_check
        _
      $region75: #{autoencoder_forward.23} parent=5 // pred_check_branch
        %324 = sbr.rel (%p321) target = $region77
      $region76: #{autoencoder_forward.23} parent=5 // pred_region
        %s325 = ssub.s32 %s11, 1
        %s326 = sand.u32 %s104, 1
        %s327 = sand.u32 %s104, 1
        %s328 = smul.addr %s327, 64
        %s329 = scalar_lea.vmem [#allocation2], %s328
        // Predicated region
        $region78: #{autoencoder_forward.23} parent=76 // pred_check
          %p330 = pneg %p117
        $region79: #{autoencoder_forward.23} parent=76 // pred_check_branch
          %332 = sbr.rel (%p330) target = $region81
        $region80: #{autoencoder_forward.23} parent=76 // pred_region
          _
        $region81: #{autoencoder_forward.23} parent=76 // pred_fallthru
          _
        %s333 = smul.u32 2, %s20
        %p334 = scmp.lt.s32.totalorder %s333, 1
        %s335 = scalar_select %p334, %s333, 1
        %s336 = smul.addr %s335, 8
        %s337 = scalar_lea.vmem %s0, %s336
        %p338 = pneg %p49
        %p339 = pneg %p46
        %p340 = pneg %p70
        %p341 = pneg %p67
        %p342 = pneg %p91
        %p343 = pneg %p88
        %s344 = sand.u32 %s104, 1
        %s345 = sand.u32 %s104, 1
        %s346 = smul.addr %s345, 64
        %s347 = scalar_lea.vmem [#allocation2], %s346
        %p348 = pneg %p117
        %p349 = pneg %p114
        %p350 = scmp.lt.s32.totalorder %s21, 2
        %s351 = scalar_select %p350, %s21, 2
        %s352 = scalar_lea.vmem %s4, %s351
        %p353 = pneg %p143
        %p354 = pneg %p140
        %p355 = pneg %p171
        %p356 = pneg %p168
        %s357 = sand.u32 %s158, 1
        %s358 = sand.u32 %s158, 1
        %s359 = smul.addr %s358, 16
        %s360 = scalar_lea.vmem [#allocation3], %s359
        %s361 = smul.u32 2, %s20
        %p362 = scmp.lt.s32.totalorder %s361, 1
        %s363 = scalar_select %p362, %s361, 1
        %s364 = smul.addr %s363, 8
        %s365 = scalar_lea.vmem %s0, %s364
        %s366 = smul.u32 2, %s20
        %p367 = scmp.lt.s32.totalorder %s21, 2
        %s368 = scalar_select %p367, %s21, 2
        %s369 = scalar_lea.vmem %s4, %s368
        %s370 = smul.u32 2, %s20
        %v372 = vld [vmem:[%s365] sm:$0xff]
        %v373 = vld [vmem:[%s365 + $0x8] sm:$0xff]
        %374 = vadd.xlane.f32.xlu0 %v372
        %v375 = vpop.xlane.xlu0 %374
        %376 = vadd.xlane.f32.xlu0 %v373
        %v377 = vpop.xlane.xlu0 %376
        %v378 = vrcp.pop 128.0
        %v379 = vmul.f32 %v375, %v378
        %v380 = vmul.f32 %v377, %v378
        %v381 = vsub.f32 %v372, %v379
        %v382 = vsub.f32 %v373, %v380
        %v383 = vmul.f32 %v381, %v381
        %v384 = vmul.f32 %v382, %v382
        %385 = vadd.xlane.f32.xlu0 %v383
        %v386 = vpop.xlane.xlu0 %385
        %387 = vadd.xlane.f32.xlu0 %v384
        %v388 = vpop.xlane.xlu0 %387
        %v389 = vmul.f32 %v386, %v378
        %v390 = vmul.f32 %v388, %v378
        %v391 = vadd.f32 %v389, 1e-05
        %v392 = vadd.f32 %v390, 1e-05
        %v393 = vrsqrt.pop %v391
        %v394 = vrsqrt.pop %v392
        %v395 = vmul.f32 %v381, %v393
        %v396 = vmul.f32 %v382, %v394
        %v397 = vld [vmem:[%s1] sm:$0x1]
        %v399 = vlaneseq
        %v400 = vshrl.u32 %v399, 7
        %v401 = vsub.s32 0, %v400
        %v402 = vrot.slane %v397, %v401
        %v404 = vmul.f32 %v395, %v402
        %v405 = vmul.f32 %v396, %v402
        %v406 = vld [vmem:[%s2] sm:$0x1]
        %v408 = vlaneseq
        %v409 = vshrl.u32 %v408, 7
        %v410 = vsub.s32 0, %v409
        %v411 = vrot.slane %v406, %v410
        %v413 = vadd.f32 %v404, %v411
        %v414 = vadd.f32 %v405, %v411
        %v415 = vpack.c.bf16 %v414, %v413
        %v416 = vld [vmem:[%s329] sm:$0xf]
        %v417 = vld [vmem:[%s329 + $0x4] sm:$0xf]
        %v418 = vld [vmem:[%s329 + $0x8] sm:$0xf]
        %v419 = vld [vmem:[%s329 + $0xc] sm:$0xf]
        %v420 = vld [vmem:[%s329 + $0x10] sm:$0xf]
        %v421 = vld [vmem:[%s329 + $0x14] sm:$0xf]
        %v422 = vld [vmem:[%s329 + $0x18] sm:$0xf]
        %v423 = vld [vmem:[%s329 + $0x1c] sm:$0xf]
        %v424 = vld [vmem:[%s329 + $0x20] sm:$0xf]
        %v425 = vld [vmem:[%s329 + $0x24] sm:$0xf]
        %v426 = vld [vmem:[%s329 + $0x28] sm:$0xf]
        %v427 = vld [vmem:[%s329 + $0x2c] sm:$0xf]
        %v428 = vld [vmem:[%s329 + $0x30] sm:$0xf]
        %v429 = vld [vmem:[%s329 + $0x34] sm:$0xf]
        %v430 = vld [vmem:[%s329 + $0x38] sm:$0xf]
        %v431 = vld [vmem:[%s329 + $0x3c] sm:$0xf]
        %v432 = vld [vmem:[%s369] sm:$0x1]
        %v434 = vlaneseq
        %v435 = vshrl.u32 %v434, 7
        %v436 = vsub.s32 0, %v435
        %v437 = vrot.slane %v432, %v436
        %v455 = vunpack.c.l.b16 %v416
        %v456 = vunpack.c.l.b16 %v417
        %v457 = vunpack.c.l.b16 %v418
        %v458 = vunpack.c.l.b16 %v419
        %v459 = vunpack.c.l.b16 %v420
        %v460 = vunpack.c.l.b16 %v421
        %v461 = vunpack.c.l.b16 %v422
        %v462 = vunpack.c.l.b16 %v423
        %v463 = vunpack.c.l.b16 %v424
        %v464 = vunpack.c.l.b16 %v425
        %v465 = vunpack.c.l.b16 %v426
        %v466 = vunpack.c.l.b16 %v427
        %v467 = vunpack.c.l.b16 %v428
        %v468 = vunpack.c.l.b16 %v429
        %v469 = vunpack.c.l.b16 %v430
        %v470 = vunpack.c.l.b16 %v431
        %v471 = vpack.c.b16 %v456, %v455
        %v472 = vpack.c.b16 %v458, %v457
        %v473 = vpack.c.b16 %v460, %v459
        %v474 = vpack.c.b16 %v462, %v461
        %v475 = vpack.c.b16 %v464, %v463
        %v476 = vpack.c.b16 %v466, %v465
        %v477 = vpack.c.b16 %v468, %v467
        %v478 = vpack.c.b16 %v470, %v469
        %487 = vmatprep.subr.bf16.mxu0 0
        %488 = vmatpush1.bf16.msra.mxu0 %v471
        %489 = vmatprep.subr.bf16.mxu0 0
        %490 = vmatpush1.bf16.msra.mxu0 %v472
        %491 = vmatprep.subr.bf16.mxu0 0
        %492 = vmatpush1.bf16.msra.mxu0 %v473
        %493 = vmatprep.subr.bf16.mxu0 0
        %494 = vmatpush1.bf16.msra.mxu0 %v474
        %495 = vmatprep.subr.bf16.mxu0 0
        %496 = vmatpush1.bf16.msra.mxu0 %v475
        %497 = vmatprep.subr.bf16.mxu0 0
        %498 = vmatpush1.bf16.msra.mxu0 %v476
        %499 = vmatprep.subr.bf16.mxu0 0
        %500 = vmatpush1.bf16.msra.mxu0 %v477
        %501 = vmatprep.subr.bf16.mxu0 0
        %502 = vmatpush1.bf16.msra.mxu0 %v478
        %503 = vmatprep.subr.bf16.mxu0 0
        %504 = vmatpush1.bf16.msra.mxu0 0
        %505 = vmatprep.subr.bf16.mxu0 0
        %506 = vmatpush1.bf16.msra.mxu0 0
        %507 = vmatprep.subr.bf16.mxu0 0
        %508 = vmatpush1.bf16.msra.mxu0 0
        %509 = vmatprep.subr.bf16.mxu0 0
        %510 = vmatpush1.bf16.msra.mxu0 0
        %511 = vmatprep.subr.bf16.mxu0 0
        %512 = vmatpush1.bf16.msra.mxu0 0
        %513 = vmatprep.subr.bf16.mxu0 0
        %514 = vmatpush1.bf16.msra.mxu0 0
        %515 = vmatprep.subr.bf16.mxu0 0
        %516 = vmatpush1.bf16.msra.mxu0 0
        %517 = vmatprep.subr.bf16.mxu0 0
        %518 = vmatpush1.bf16.msra.mxu0 0
        %519 = vmatprep.mubr.bf16.mxu0 0
        %520 = vmatmul.mubr.bf16.gmra.mrb[0].mxu0 %v415
        %v521 = vpop.f32.mrb[0].mxu0
        %v522 = vadd.f32 %v437, %v521
        %v523 = vpop.f32.mrb[0].mxu0
        %v524 = vpop.f32.mrb[0].mxu0
        %v525 = vadd.f32 %v437, %v524
        %v526 = vpop.f32.mrb[0].mxu0
        %527 = vdwg.mxu0
        %528 = vst [vmem:[%s360] sm:$0xff] %v522
        %529 = vst [vmem:[%s360 + $0x8] sm:$0xff] %v525
        %s530 = sand.u32 %s158, 1
        %s531 = sand.u32 %s158, 1
        %s532 = smul.addr %s531, 16
        %s533 = scalar_lea.vmem [#allocation3], %s532
        // Predicated region
        $region82: #{autoencoder_forward.23} parent=76 // pred_check
          %p534 = pneg %p168
        $region83: #{autoencoder_forward.23} parent=76 // pred_check_branch
          %536 = sbr.rel (%p534) target = $region85
        $region84: #{autoencoder_forward.23} parent=76 // pred_region
          %s537 = smul.u32 2, %s20
          %s538 = smul.addr %s537, 3
          %s539 = sadd.s32 %s21, %s538
          %s540 = smul.addr %s539, 8
          %s541 = scalar_lea.vmem %s5, %s540
          // Predicated region
          $region86: #{autoencoder_forward.23} parent=84 // pred_check
            _
          $region87: #{autoencoder_forward.23} parent=84 // pred_check_branch
            %543 = sbr.rel (0) target = $region89
          $region88: #{autoencoder_forward.23} parent=84 // pred_region
            // Predicated region
            $region90: #{autoencoder_forward.23} parent=88 // pred_check
              _
            $region91: #{autoencoder_forward.23} parent=88 // pred_check_branch
              %545 = sbr.rel (0) target = $region93
            $region92: #{autoencoder_forward.23} parent=88 // pred_region
              // Predicated region
              $region105: #{autoencoder_forward.23} parent=92 // pred_check
                _
              $region106: #{autoencoder_forward.23} parent=92 // pred_check_branch
                %562 = sbr.rel (0) target = $region108
              $region107: #{autoencoder_forward.23} parent=92 // pred_region
                loop: start=0, step=1, limit=1
                $region109: #{autoencoder_forward.23} parent=107 // loop_pre_header
                  _
                $region110: #{autoencoder_forward.23} parent=107 // loop_header
                  %s564 = sphi 0, %s568
                  %p565 = scmp.ge.s32.totalorder %s564, 1
                  %s569 = sphi %s533, %s533
                  %s570 = sphi %s541, %s541
                $region111: #{autoencoder_forward.23} parent=107 // loop_header_branch
                  %567 = sbr.rel (%p565) target = $region115
                $region112: #{autoencoder_forward.23} parent=107 // loop_body
                  %v571 = vld [vmem:[%s569] sm:$0xff]
                  %572 = vst [vmem:[%s570] sm:$0xff] %v571
                  %v573 = vld [vmem:[%s569 + $0x8] sm:$0xff]
                  %574 = vst [vmem:[%s570 + $0x18] sm:$0xff] %v573
                $region113: #{autoencoder_forward.23} parent=107 // loop_footer
                  %s568 = sadd.s32 1, %s564
                $region114: #{autoencoder_forward.23} parent=107 // loop_footer_branch
                  %563 = sbr.rel target = $region110
                $region115: #{autoencoder_forward.23} parent=107 // loop_exit
                  _
              $region108: #{autoencoder_forward.23} parent=92 // pred_fallthru
                _
              // Predicated region
              $region116: #{autoencoder_forward.23} parent=92 // pred_check
                _
              $region117: #{autoencoder_forward.23} parent=92 // pred_check_branch
                %576 = sbr.rel target = $region119
              $region118: #{autoencoder_forward.23} parent=92 // pred_region
                _
              $region119: #{autoencoder_forward.23} parent=92 // pred_fallthru
                _
            $region93: #{autoencoder_forward.23} parent=88 // pred_fallthru
              _
            // Predicated region
            $region94: #{autoencoder_forward.23} parent=88 // pred_check
              _
            $region95: #{autoencoder_forward.23} parent=88 // pred_check_branch
              %547 = sbr.rel target = $region97
            $region96: #{autoencoder_forward.23} parent=88 // pred_region
              loop: start=0, step=1, limit=1
              $region98: #{autoencoder_forward.23} parent=96 // loop_pre_header
                _
              $region99: #{autoencoder_forward.23} parent=96 // loop_header
                %s550 = sphi 0, %s554
                %p551 = scmp.ge.s32.totalorder %s550, 1
                %s555 = sphi %s533, %s533
                %s556 = sphi %s541, %s541
              $region100: #{autoencoder_forward.23} parent=96 // loop_header_branch
                %553 = sbr.rel (%p551) target = $region104
              $region101: #{autoencoder_forward.23} parent=96 // loop_body
                %v557 = vld [vmem:[%s555] sm:$0xff]
                %558 = vst [vmem:[%s556] sm:$0xff] %v557
                %v559 = vld [vmem:[%s555 + $0x8] sm:$0xff]
                %560 = vst [vmem:[%s556 + $0x18] sm:$0xff] %v559
              $region102: #{autoencoder_forward.23} parent=96 // loop_footer
                %s554 = sadd.s32 1, %s550
              $region103: #{autoencoder_forward.23} parent=96 // loop_footer_branch
                %549 = sbr.rel target = $region99
              $region104: #{autoencoder_forward.23} parent=96 // loop_exit
                _
            $region97: #{autoencoder_forward.23} parent=88 // pred_fallthru
              _
          $region89: #{autoencoder_forward.23} parent=84 // pred_fallthru
            _
          %577 = vnop
        $region85: #{autoencoder_forward.23} parent=76 // pred_fallthru
          _
      $region77: #{autoencoder_forward.23} parent=5 // pred_fallthru
        _
      %p578 = scmp.le.s32.totalorder 2, %s11
      // Predicated region
      $region120: #{autoencoder_forward.23} parent=5 // pred_check
        %p579 = pneg %p578
      $region121: #{autoencoder_forward.23} parent=5 // pred_check_branch
        %581 = sbr.rel (%p579) target = $region123
      $region122: #{autoencoder_forward.23} parent=5 // pred_region
        %s582 = ssub.s32 %s11, 2
        // Predicated region
        $region124: #{autoencoder_forward.23} parent=122 // pred_check
          %p583 = pneg %p174
        $region125: #{autoencoder_forward.23} parent=122 // pred_check_branch
          %585 = sbr.rel (%p583) target = $region127
        $region126: #{autoencoder_forward.23} parent=122 // pred_region
          %s586 = sand.u32 %s159, 1
          %s587 = sand.u32 %s159, 1
          %s588 = smul.addr %s587, 16
          %s589 = scalar_lea.vmem [#allocation3], %s588
        $region127: #{autoencoder_forward.23} parent=122 // pred_fallthru
          _
      $region123: #{autoencoder_forward.23} parent=5 // pred_fallthru
        _
    $region6: #{autoencoder_forward.23} parent=1 // loop_footer
      %s15 = sadd.s32 1, %s11
    $region7: #{autoencoder_forward.23} parent=1 // loop_footer_branch
      %10 = sbr.rel target = $region3
    $region8: #{autoencoder_forward.23} parent=1 // loop_exit
      _

// kernel: autoencoder_forward.25
$region0: #{autoencoder_forward.25}
  #allocation0 [shape = 'u32[]', space=smem, size = 0x4, offset = 0x4, fixed_abs, tag = 'smem constant byte address 0x4 - core index']
  #allocation1 [shape = 'u32[144,128]{1,0:T(1,128)}', space=vmem, size = 0x12000, scoped, tag = 'internal scratch']
  %s0 = inlined_call_operand.vmem [shape: f32[16,128], index: 0, kind: input, shape index: {}]
  %s1 = inlined_call_operand.vmem [shape: bf16[128,128], index: 1, kind: input, shape index: {}]
  %s2 = inlined_call_operand.vmem [shape: f32[1,128], index: 2, kind: input, shape index: {}]
  %s3 = inlined_call_operand.vmem [shape: f32[16,128], index: 3, kind: input, shape index: {}]
  %s4 = inlined_call_operand.vmem [shape: f32[16,128], index: 4, kind: output, shape index: {}]
  %s5 = sld [smem:[#allocation0]]
  $region26: #{autoencoder_forward.25} parent=0
    _
  %s7 = ssub.s32 1, %s5
  %s8 = scalar_select 0, %s7, %s5
  // Predicated region
  $region2: #{autoencoder_forward.25} parent=0 // pred_check
    _
  $region3: #{autoencoder_forward.25} parent=0 // pred_check_branch
    %10 = sbr.rel (0) target = $region5
  $region4: #{autoencoder_forward.25} parent=0 // pred_region
    _
  $region5: #{autoencoder_forward.25} parent=0 // pred_fallthru
    _
  // Predicated region
  $region6: #{autoencoder_forward.25} parent=0 // pred_check
    _
  $region7: #{autoencoder_forward.25} parent=0 // pred_check_branch
    %12 = sbr.rel (0) target = $region9
  $region8: #{autoencoder_forward.25} parent=0 // pred_region
    _
  $region9: #{autoencoder_forward.25} parent=0 // pred_fallthru
    _
  // Predicated region
  $region10: #{autoencoder_forward.25} parent=0 // pred_check
    _
  $region11: #{autoencoder_forward.25} parent=0 // pred_check_branch
    %14 = sbr.rel (0) target = $region13
  $region12: #{autoencoder_forward.25} parent=0 // pred_region
    _
  $region13: #{autoencoder_forward.25} parent=0 // pred_fallthru
    _
  // Predicated region
  $region14: #{autoencoder_forward.25} parent=0 // pred_check
    _
  $region15: #{autoencoder_forward.25} parent=0 // pred_check_branch
    %16 = sbr.rel (0) target = $region17
  $region16: #{autoencoder_forward.25} parent=0 // pred_region
    _
  $region17: #{autoencoder_forward.25} parent=0 // pred_fallthru
    _
  %v18 = vld [vmem:[%s0] sm:$0xff]
  %v19 = vld [vmem:[%s0 + $0x8] sm:$0xff]
  %v20 = vpack.c.bf16 %v19, %v18
  %v21 = vld [vmem:[%s1] sm:$0xf]
  %v22 = vld [vmem:[%s1 + $0x4] sm:$0xf]
  %v23 = vld [vmem:[%s1 + $0x8] sm:$0xf]
  %v24 = vld [vmem:[%s1 + $0xc] sm:$0xf]
  %v25 = vld [vmem:[%s1 + $0x10] sm:$0xf]
  %v26 = vld [vmem:[%s1 + $0x14] sm:$0xf]
  %v27 = vld [vmem:[%s1 + $0x18] sm:$0xf]
  %v28 = vld [vmem:[%s1 + $0x1c] sm:$0xf]
  %v29 = vld [vmem:[%s1 + $0x20] sm:$0xf]
  %v30 = vld [vmem:[%s1 + $0x24] sm:$0xf]
  %v31 = vld [vmem:[%s1 + $0x28] sm:$0xf]
  %v32 = vld [vmem:[%s1 + $0x2c] sm:$0xf]
  %v33 = vld [vmem:[%s1 + $0x30] sm:$0xf]
  %v34 = vld [vmem:[%s1 + $0x34] sm:$0xf]
  %v35 = vld [vmem:[%s1 + $0x38] sm:$0xf]
  %v36 = vld [vmem:[%s1 + $0x3c] sm:$0xf]
  %v37 = vld [vmem:[%s2] sm:$0x1]
  %v39 = vlaneseq
  %v40 = vshrl.u32 %v39, 7
  %v41 = vsub.s32 0, %v40
  %v42 = vrot.slane %v37, %v41
  %v60 = vunpack.c.l.b16 %v21
  %v61 = vunpack.c.l.b16 %v22
  %v62 = vunpack.c.l.b16 %v23
  %v63 = vunpack.c.l.b16 %v24
  %v64 = vunpack.c.l.b16 %v25
  %v65 = vunpack.c.l.b16 %v26
  %v66 = vunpack.c.l.b16 %v27
  %v67 = vunpack.c.l.b16 %v28
  %v68 = vunpack.c.l.b16 %v29
  %v69 = vunpack.c.l.b16 %v30
  %v70 = vunpack.c.l.b16 %v31
  %v71 = vunpack.c.l.b16 %v32
  %v72 = vunpack.c.l.b16 %v33
  %v73 = vunpack.c.l.b16 %v34
  %v74 = vunpack.c.l.b16 %v35
  %v75 = vunpack.c.l.b16 %v36
  %v76 = vpack.c.b16 %v61, %v60
  %v77 = vpack.c.b16 %v63, %v62
  %v78 = vpack.c.b16 %v65, %v64
  %v79 = vpack.c.b16 %v67, %v66
  %v80 = vpack.c.b16 %v69, %v68
  %v81 = vpack.c.b16 %v71, %v70
  %v82 = vpack.c.b16 %v73, %v72
  %v83 = vpack.c.b16 %v75, %v74
  %92 = vmatprep.subr.bf16.mxu0 0
  %93 = vmatpush1.bf16.msra.mxu0 %v76
  %94 = vmatprep.subr.bf16.mxu0 0
  %95 = vmatpush1.bf16.msra.mxu0 %v77
  %96 = vmatprep.subr.bf16.mxu0 0
  %97 = vmatpush1.bf16.msra.mxu0 %v78
  %98 = vmatprep.subr.bf16.mxu0 0
  %99 = vmatpush1.bf16.msra.mxu0 %v79
  %100 = vmatprep.subr.bf16.mxu0 0
  %101 = vmatpush1.bf16.msra.mxu0 %v80
  %102 = vmatprep.subr.bf16.mxu0 0
  %103 = vmatpush1.bf16.msra.mxu0 %v81
  %104 = vmatprep.subr.bf16.mxu0 0
  %105 = vmatpush1.bf16.msra.mxu0 %v82
  %106 = vmatprep.subr.bf16.mxu0 0
  %107 = vmatpush1.bf16.msra.mxu0 %v83
  %108 = vmatprep.subr.bf16.mxu0 0
  %109 = vmatpush1.bf16.msra.mxu0 0
  %110 = vmatprep.subr.bf16.mxu0 0
  %111 = vmatpush1.bf16.msra.mxu0 0
  %112 = vmatprep.subr.bf16.mxu0 0
  %113 = vmatpush1.bf16.msra.mxu0 0
  %114 = vmatprep.subr.bf16.mxu0 0
  %115 = vmatpush1.bf16.msra.mxu0 0
  %116 = vmatprep.subr.bf16.mxu0 0
  %117 = vmatpush1.bf16.msra.mxu0 0
  %118 = vmatprep.subr.bf16.mxu0 0
  %119 = vmatpush1.bf16.msra.mxu0 0
  %120 = vmatprep.subr.bf16.mxu0 0
  %121 = vmatpush1.bf16.msra.mxu0 0
  %122 = vmatprep.subr.bf16.mxu0 0
  %123 = vmatpush1.bf16.msra.mxu0 0
  %124 = vmatprep.mubr.bf16.mxu0 0
  %125 = vmatmul.mubr.bf16.gmra.mrb[0].mxu0 %v20
  %v126 = vpop.f32.mrb[0].mxu0
  %v127 = vadd.f32 %v42, %v126
  %v128 = vpop.f32.mrb[0].mxu0
  %v129 = vpop.f32.mrb[0].mxu0
  %v130 = vadd.f32 %v42, %v129
  %v131 = vpop.f32.mrb[0].mxu0
  %132 = vdwg.mxu0
  %v133 = vld [vmem:[%s3] sm:$0xff]
  %v134 = vld [vmem:[%s3 + $0x8] sm:$0xff]
  %v135 = vadd.f32 %v127, %v133
  %v136 = vadd.f32 %v130, %v134
  %137 = vst [vmem:[%s4] sm:$0xff] %v135
  %138 = vst [vmem:[%s4 + $0x8] sm:$0xff] %v136
  // Predicated region
  $region18: #{autoencoder_forward.25} parent=0 // pred_check
    _
  $region19: #{autoencoder_forward.25} parent=0 // pred_check_branch
    %140 = sbr.rel (0) target = $region21
  $region20: #{autoencoder_forward.25} parent=0 // pred_region
    _
  $region21: #{autoencoder_forward.25} parent=0 // pred_fallthru
    _
  // Predicated region
  $region22: #{autoencoder_forward.25} parent=0 // pred_check
    _
  $region23: #{autoencoder_forward.25} parent=0 // pred_check_branch
    %142 = sbr.rel (0) target = $region25
  $region24: #{autoencoder_forward.25} parent=0 // pred_region
    _
  $region25: #{autoencoder_forward.25} parent=0 // pred_fallthru
    _

// kernel: autoencoder_forward.24
$region0: #{autoencoder_forward.24}
  #allocation0 [shape = 'u32[]', space=smem, size = 0x4, offset = 0x4, fixed_abs, tag = 'smem constant byte address 0x4 - core index']
  #allocation1 [shape = 'u32[144,128]{1,0:T(1,128)}', space=vmem, size = 0x12000, scoped, tag = 'internal scratch']
  %s0 = inlined_call_operand.vmem [shape: bf16[2,4,8,32], index: 0, kind: input, shape index: {}]
  %s1 = inlined_call_operand.vmem [shape: bf16[2,4,8,32], index: 1, kind: input, shape index: {}]
  %s2 = inlined_call_operand.vmem [shape: bf16[2,4,8,32], index: 2, kind: input, shape index: {}]
  %s3 = inlined_call_operand.vmem [shape: f32[2,1,8], index: 3, kind: input, shape index: {}]
  %s4 = inlined_call_operand.vmem [shape: f32[2,8,128], index: 4, kind: output, shape index: {}]
  %s5 = sld [smem:[#allocation0]]
  $region49: #{autoencoder_forward.24} parent=0
    _
  %s7 = ssub.s32 1, %s5
  %s8 = scalar_select 0, %s7, %s5
  loop: start=0, step=1, limit=4
  $region2: #{autoencoder_forward.24} parent=0 // loop_pre_header
    _
  $region3: #{autoencoder_forward.24} parent=0 // loop_header
    %s10 = sphi 0, %s14
    %p11 = scmp.ge.s32.totalorder %s10, 4
    %s20 = sphi 0, %s22
    %s23 = sphi 0, %s20
    %s24 = sphi 0, %s23
    %s40 = sphi 0, %s24
    %s46 = sphi 0, %s48
    %s49 = sphi 0, %s46
    %s50 = sphi 0, %s49
    %s66 = sphi 0, %s50
    %s72 = sphi 0, %s74
    %s75 = sphi 0, %s72
    %s76 = sphi 0, %s75
    %s92 = sphi 0, %s76
    %s98 = sphi 0, %s100
    %s101 = sphi 0, %s98
    %s102 = sphi 0, %s101
    %s118 = sphi 0, %s102
    %s124 = sphi 0, %s126
    %s127 = sphi 0, %s124
    %s128 = sphi 0, %s127
    %s144 = sphi 0, %s128
  $region4: #{autoencoder_forward.24} parent=0 // loop_header_branch
    %13 = sbr.rel (%p11) target = $region8
  $region5: #{autoencoder_forward.24} parent=0 // loop_body
    %s15 = ssub.s32 %s10, 1
    %s16 = ssub.s32 %s10, 2
    %s17 = sadd.s32 %s10, 1
    %s18 = ssub.s32 %s10, %s17
    %p19 = scmp.eq.s32.totalorder %s18, 0
    %s21 = sadd.s32 %s20, 1
    %s22 = scalar_select %p19, %s20, %s21
    %p25 = pneg %p19
    %p26 = scmp.eq.s32.totalorder %s10, 1
    %p27 = por %p25, %p26
    %p28 = scmp.ne.s32.totalorder %s20, %s23
    %p29 = scmp.eq.s32.totalorder %s10, 0
    %p30 = por %p28, %p29
    %p31 = scmp.ne.s32.totalorder %s20, %s23
    %p32 = scmp.eq.s32.totalorder %s15, 1
    %p33 = por %p31, %p32
    %p34 = scmp.ne.s32.totalorder %s23, %s24
    %p35 = scmp.eq.s32.totalorder %s15, 0
    %p36 = por %p34, %p35
    %p37 = scmp.ne.s32.totalorder %s23, %s24
    %p38 = scmp.eq.s32.totalorder %s16, 1
    %p39 = por %p37, %p38
    %p41 = scmp.ne.s32.totalorder %s24, %s40
    %p42 = scmp.eq.s32.totalorder %s16, 0
    %p43 = por %p41, %p42
    %s44 = ssub.s32 %s10, %s17
    %p45 = scmp.eq.s32.totalorder %s44, 0
    %s47 = sadd.s32 %s46, 1
    %s48 = scalar_select %p45, %s46, %s47
    %p51 = pneg %p45
    %p52 = scmp.eq.s32.totalorder %s10, 1
    %p53 = por %p51, %p52
    %p54 = scmp.ne.s32.totalorder %s46, %s49
    %p55 = scmp.eq.s32.totalorder %s10, 0
    %p56 = por %p54, %p55
    %p57 = scmp.ne.s32.totalorder %s46, %s49
    %p58 = scmp.eq.s32.totalorder %s15, 1
    %p59 = por %p57, %p58
    %p60 = scmp.ne.s32.totalorder %s49, %s50
    %p61 = scmp.eq.s32.totalorder %s15, 0
    %p62 = por %p60, %p61
    %p63 = scmp.ne.s32.totalorder %s49, %s50
    %p64 = scmp.eq.s32.totalorder %s16, 1
    %p65 = por %p63, %p64
    %p67 = scmp.ne.s32.totalorder %s50, %s66
    %p68 = scmp.eq.s32.totalorder %s16, 0
    %p69 = por %p67, %p68
    %s70 = ssub.s32 %s10, %s17
    %p71 = scmp.eq.s32.totalorder %s70, 0
    %s73 = sadd.s32 %s72, 1
    %s74 = scalar_select %p71, %s72, %s73
    %p77 = pneg %p71
    %p78 = scmp.eq.s32.totalorder %s10, 1
    %p79 = por %p77, %p78
    %p80 = scmp.ne.s32.totalorder %s72, %s75
    %p81 = scmp.eq.s32.totalorder %s10, 0
    %p82 = por %p80, %p81
    %p83 = scmp.ne.s32.totalorder %s72, %s75
    %p84 = scmp.eq.s32.totalorder %s15, 1
    %p85 = por %p83, %p84
    %p86 = scmp.ne.s32.totalorder %s75, %s76
    %p87 = scmp.eq.s32.totalorder %s15, 0
    %p88 = por %p86, %p87
    %p89 = scmp.ne.s32.totalorder %s75, %s76
    %p90 = scmp.eq.s32.totalorder %s16, 1
    %p91 = por %p89, %p90
    %p93 = scmp.ne.s32.totalorder %s76, %s92
    %p94 = scmp.eq.s32.totalorder %s16, 0
    %p95 = por %p93, %p94
    %s96 = ssub.s32 %s10, %s17
    %p97 = scmp.eq.s32.totalorder %s96, 0
    %s99 = sadd.s32 %s98, 1
    %s100 = scalar_select %p97, %s98, %s99
    %p103 = pneg %p97
    %p104 = scmp.eq.s32.totalorder %s10, 1
    %p105 = por %p103, %p104
    %p106 = scmp.ne.s32.totalorder %s98, %s101
    %p107 = scmp.eq.s32.totalorder %s10, 0
    %p108 = por %p106, %p107
    %p109 = scmp.ne.s32.totalorder %s98, %s101
    %p110 = scmp.eq.s32.totalorder %s15, 1
    %p111 = por %p109, %p110
    %p112 = scmp.ne.s32.totalorder %s101, %s102
    %p113 = scmp.eq.s32.totalorder %s15, 0
    %p114 = por %p112, %p113
    %p115 = scmp.ne.s32.totalorder %s101, %s102
    %p116 = scmp.eq.s32.totalorder %s16, 1
    %p117 = por %p115, %p116
    %p119 = scmp.ne.s32.totalorder %s102, %s118
    %p120 = scmp.eq.s32.totalorder %s16, 0
    %p121 = por %p119, %p120
    %s122 = ssub.s32 %s10, %s17
    %p123 = scmp.eq.s32.totalorder %s122, 0
    %s125 = sadd.s32 %s124, 1
    %s126 = scalar_select %p123, %s124, %s125
    %p129 = pneg %p123
    %p130 = scmp.eq.s32.totalorder %s10, 1
    %p131 = por %p129, %p130
    %p132 = scmp.ne.s32.totalorder %s124, %s127
    %p133 = scmp.eq.s32.totalorder %s10, 0
    %p134 = por %p132, %p133
    %p135 = scmp.ne.s32.totalorder %s124, %s127
    %p136 = scmp.eq.s32.totalorder %s15, 1
    %p137 = por %p135, %p136
    %p138 = scmp.ne.s32.totalorder %s127, %s128
    %p139 = scmp.eq.s32.totalorder %s15, 0
    %p140 = por %p138, %p139
    %p141 = scmp.ne.s32.totalorder %s127, %s128
    %p142 = scmp.eq.s32.totalorder %s16, 1
    %p143 = por %p141, %p142
    %p145 = scmp.ne.s32.totalorder %s128, %s144
    %p146 = scmp.eq.s32.totalorder %s16, 0
    %p147 = por %p145, %p146
    %p148 = scmp.le.s32.totalorder 1, %s10
    %p149 = scmp.lt.s32.totalorder %s10, 3
    %p150 = pnand %p148, %p149
    %p151 = pneg %p150
    // Predicated region
    $region9: #{autoencoder_forward.24} parent=5 // pred_check
      _
    $region10: #{autoencoder_forward.24} parent=5 // pred_check_branch
      %153 = sbr.rel (%p150) target = $region12
    $region11: #{autoencoder_forward.24} parent=5 // pred_region
      %s154 = ssub.s32 %s10, 1
    $region12: #{autoencoder_forward.24} parent=5 // pred_fallthru
      _
    %p155 = scmp.lt.s32.totalorder %s10, 2
    // Predicated region
    $region13: #{autoencoder_forward.24} parent=5 // pred_check
      %p156 = pneg %p155
    $region14: #{autoencoder_forward.24} parent=5 // pred_check_branch
      %158 = sbr.rel (%p156) target = $region16
    $region15: #{autoencoder_forward.24} parent=5 // pred_region
      // Predicated region
      $region17: #{autoencoder_forward.24} parent=15 // pred_check
        %p159 = pneg %p30
      $region18: #{autoencoder_forward.24} parent=15 // pred_check_branch
        %161 = sbr.rel (%p159) target = $region20
      $region19: #{autoencoder_forward.24} parent=15 // pred_region
        %p162 = scmp.lt.s32.totalorder %s10, 1
        %s163 = scalar_select %p162, %s10, 1
        %s164 = smul.addr %s163, 4
        %s165 = smul.addr %s164, 4
        %s166 = scalar_lea.vmem %s0, %s165
      $region20: #{autoencoder_forward.24} parent=15 // pred_fallthru
        _
      // Predicated region
      $region21: #{autoencoder_forward.24} parent=15 // pred_check
        %p167 = pneg %p56
      $region22: #{autoencoder_forward.24} parent=15 // pred_check_branch
        %169 = sbr.rel (%p167) target = $region24
      $region23: #{autoencoder_forward.24} parent=15 // pred_region
        %p170 = scmp.lt.s32.totalorder %s10, 1
        %s171 = scalar_select %p170, %s10, 1
        %s172 = smul.addr %s171, 4
        %s173 = smul.addr %s172, 4
        %s174 = scalar_lea.vmem %s1, %s173
      $region24: #{autoencoder_forward.24} parent=15 // pred_fallthru
        _
      // Predicated region
      $region25: #{autoencoder_forward.24} parent=15 // pred_check
        %p175 = pneg %p82
      $region26: #{autoencoder_forward.24} parent=15 // pred_check_branch
        %177 = sbr.rel (%p175) target = $region28
      $region27: #{autoencoder_forward.24} parent=15 // pred_region
        %p178 = scmp.lt.s32.totalorder %s10, 1
        %s179 = scalar_select %p178, %s10, 1
        %s180 = smul.addr %s179, 4
        %s181 = smul.addr %s180, 4
        %s182 = scalar_lea.vmem %s2, %s181
      $region28: #{autoencoder_forward.24} parent=15 // pred_fallthru
        _
      // Predicated region
      $region29: #{autoencoder_forward.24} parent=15 // pred_check
        %p183 = pneg %p108
      $region30: #{autoencoder_forward.24} parent=15 // pred_check_branch
        %185 = sbr.rel (%p183) target = $region32
      $region31: #{autoencoder_forward.24} parent=15 // pred_region
        %p186 = scmp.lt.s32.totalorder %s10, 1
        %s187 = scalar_select %p186, %s10, 1
        %s188 = scalar_lea.vmem %s3, %s187
      $region32: #{autoencoder_forward.24} parent=15 // pred_fallthru
        _
    $region16: #{autoencoder_forward.24} parent=5 // pred_fallthru
      _
    %p189 = scmp.le.s32.totalorder 1, %s10
    %p190 = scmp.lt.s32.totalorder %s10, 3
    %p191 = pnand %p189, %p190
    %p192 = pneg %p191
    // Predicated region
    $region33: #{autoencoder_forward.24} parent=5 // pred_check
      _
    $region34: #{autoencoder_forward.24} parent=5 // pred_check_branch
      %194 = sbr.rel (%p191) target = $region36
    $region35: #{autoencoder_forward.24} parent=5 // pred_region
      %s195 = ssub.s32 %s10, 1
      %p196 = scmp.lt.s32.totalorder %s15, 1
      %s197 = scalar_select %p196, %s15, 1
      %s198 = smul.addr %s197, 4
      %s199 = smul.addr %s198, 4
      %s200 = scalar_lea.vmem %s0, %s199
      %p201 = pneg %p36
      %p202 = pneg %p33
      %p203 = scmp.lt.s32.totalorder %s15, 1
      %s204 = scalar_select %p203, %s15, 1
      %s205 = smul.addr %s204, 4
      %s206 = smul.addr %s205, 4
      %s207 = scalar_lea.vmem %s1, %s206
      %p208 = pneg %p62
      %p209 = pneg %p59
      %p210 = scmp.lt.s32.totalorder %s15, 1
      %s211 = scalar_select %p210, %s15, 1
      %s212 = smul.addr %s211, 4
      %s213 = smul.addr %s212, 4
      %s214 = scalar_lea.vmem %s2, %s213
      %p215 = pneg %p88
      %p216 = pneg %p85
      %p217 = scmp.lt.s32.totalorder %s15, 1
      %s218 = scalar_select %p217, %s15, 1
      %s219 = scalar_lea.vmem %s3, %s218
      %p220 = pneg %p114
      %p221 = pneg %p111
      %p222 = pneg %p140
      %p223 = pneg %p137
      %p224 = scmp.lt.s32.totalorder %s15, 1
      %s225 = scalar_select %p224, %s15, 1
      %s226 = smul.addr %s225, 8
      %s227 = scalar_lea.vmem %s4, %s226
      %p228 = scmp.lt.s32.totalorder %s15, 1
      %s229 = scalar_select %p228, %s15, 1
      %s230 = smul.addr %s229, 4
      %s231 = smul.addr %s230, 4
      %s232 = scalar_lea.vmem %s0, %s231
      %p233 = scmp.lt.s32.totalorder %s15, 1
      %s234 = scalar_select %p233, %s15, 1
      %s235 = smul.addr %s234, 4
      %s236 = smul.addr %s235, 4
      %s237 = scalar_lea.vmem %s1, %s236
      %p238 = scmp.lt.s32.totalorder %s15, 1
      %s239 = scalar_select %p238, %s15, 1
      %s240 = smul.addr %s239, 4
      %s241 = smul.addr %s240, 4
      %s242 = scalar_lea.vmem %s2, %s241
      %p243 = scmp.lt.s32.totalorder %s15, 1
      %s244 = scalar_select %p243, %s15, 1
      %s245 = scalar_lea.vmem %s3, %s244
      %p246 = scmp.lt.s32.totalorder %s15, 1
      %s247 = scalar_select %p246, %s15, 1
      %s248 = smul.addr %s247, 8
      %s249 = scalar_lea.vmem %s4, %s248
      %v251 = vld [vmem:[%s245] sm:$0x1]
      %vm252 = vcmp.gt.f32.partialorder %v251, 0.5
      %v253 = vlaneseq
      %v254 = vshrl.u32 %v253, 7
      %v255 = vlaneseq
      %v256 = vand.u32 %v255, 127
      %vm257 = vcmp.ge.s32.totalorder %v254, %v256
      %v258 = vsel %vm252, 1, 0
      %v259 = vlaneseq
      %v260 = vshrl.u32 %v259, 7
      %v261 = vsub.s32 0, %v260
      %v262 = vrot.slane %v258, %v261
      %vm263 = vcmp.eq.s32.totalorder %v262, 1
      %vm264 = vmand %vm257, %vm263
      %v265 = vsel %vm264, 0.0, -1e+09
      %v266 = vld [vmem:[%s232] sm:$0xf]
      %v267 = vld [vmem:[%s237] sm:$0xf]
      %v268 = vld [vmem:[%s242] sm:$0xf]
      %vm269 = vcmask 261120
      %v271 = vsel %vm269, %v266, 0
      %v274 = vsel %vm269, %v267, 0
      %276 = vmatprep.subr.bf16.mxu0 0
      %277 = vmatpush1.bf16.xpose.msra.mxu0 %v274
      %278 = vmatprep.subr.bf16.mxu0 0
      %279 = vmatpush1.bf16.xpose.msra.mxu0 0
      %280 = vmatprep.subr.bf16.mxu0 0
      %281 = vmatpush1.bf16.xpose.msra.mxu0 0
      %282 = vmatprep.subr.bf16.mxu0 0
      %283 = vmatpush1.bf16.xpose.msra.mxu0 0
      %284 = vmatprep.subr.bf16.mxu0 0
      %285 = vmatpush1.bf16.xpose.msra.mxu0 0
      %286 = vmatprep.subr.bf16.mxu0 0
      %287 = vmatpush1.bf16.xpose.msra.mxu0 0
      %288 = vmatprep.subr.bf16.mxu0 0
      %289 = vmatpush1.bf16.xpose.msra.mxu0 0
      %290 = vmatprep.subr.bf16.mxu0 0
      %291 = vmatpush1.bf16.xpose.msra.mxu0 0
      %292 = vmatprep.subr.bf16.mxu0 0
      %293 = vmatpush1.bf16.xpose.msra.mxu0 0
      %294 = vmatprep.subr.bf16.mxu0 0
      %295 = vmatpush1.bf16.xpose.msra.mxu0 0
      %296 = vmatprep.subr.bf16.mxu0 0
      %297 = vmatpush1.bf16.xpose.msra.mxu0 0
      %298 = vmatprep.subr.bf16.mxu0 0
      %299 = vmatpush1.bf16.xpose.msra.mxu0 0
      %300 = vmatprep.subr.bf16.mxu0 0
      %301 = vmatpush1.bf16.xpose.msra.mxu0 0
      %302 = vmatprep.subr.bf16.mxu0 0
      %303 = vmatpush1.bf16.xpose.msra.mxu0 0
      %304 = vmatprep.subr.bf16.mxu0 0
      %305 = vmatpush1.bf16.xpose.msra.mxu0 0
      %306 = vmatprep.subr.bf16.mxu0 0
      %307 = vmatpush1.bf16.xpose.msra.mxu0 0
      %308 = vmatprep.mubr.bf16.mxu0 0
      %309 = vmatmul.mubr.bf16.gmra.mrb[0].mxu0 %v271
      %v310 = vpop.f32.mrb[0].mxu0
      %v311 = vadd.f32 0.0, %v310
      %v312 = vpop.f32.mrb[0].mxu0
      %v313 = vpop.f32.mrb[0].mxu0
      %v314 = vpop.f32.mrb[0].mxu0
      %315 = vdwg.mxu0
      %v316 = vmul.f32 %v311, 0.17677669
      %v317 = vadd.f32 %v316, %v265
      %vm318 = vcmask 64512
      %v319 = vsel %vm318, %v317, -inf
      %320 = vmax.xlane.f32.xlu0 %v319
      %v321 = vpop.xlane.xlu0 %320
      %v322 = vsub.f32 %v317, %v321
      %v323 = vmul.f32 %v322, 1.442695
      %v324 = vpow.pop %v323
      %v325 = vsel %vm318, %v324, 0.0
      %326 = vadd.xlane.f32.xlu0 %v325
      %v327 = vpop.xlane.xlu0 %326
      %v328 = vrcp.pop %v327
      %v329 = vmul.f32 %v324, %v328
      %v330 = vpack.c.bf16 %v329, %v329
      %v332 = vsel %vm318, %v330, 0
      %vm334 = vcmask 1043456
      %v336 = vsel %vm334, %v268, 0
      %338 = vmatprep.subr.bf16.mxu0 0
      %339 = vmatpush1.bf16.msra.mxu0 %v336
      %340 = vmatprep.subr.bf16.mxu0 0
      %341 = vmatpush1.bf16.msra.mxu0 0
      %342 = vmatprep.subr.bf16.mxu0 0
      %343 = vmatpush1.bf16.msra.mxu0 0
      %344 = vmatprep.subr.bf16.mxu0 0
      %345 = vmatpush1.bf16.msra.mxu0 0
      %346 = vmatprep.subr.bf16.mxu0 0
      %347 = vmatpush1.bf16.msra.mxu0 0
      %348 = vmatprep.subr.bf16.mxu0 0
      %349 = vmatpush1.bf16.msra.mxu0 0
      %350 = vmatprep.subr.bf16.mxu0 0
      %351 = vmatpush1.bf16.msra.mxu0 0
      %352 = vmatprep.subr.bf16.mxu0 0
      %353 = vmatpush1.bf16.msra.mxu0 0
      %354 = vmatprep.subr.bf16.mxu0 0
      %355 = vmatpush1.bf16.msra.mxu0 0
      %356 = vmatprep.subr.bf16.mxu0 0
      %357 = vmatpush1.bf16.msra.mxu0 0
      %358 = vmatprep.subr.bf16.mxu0 0
      %359 = vmatpush1.bf16.msra.mxu0 0
      %360 = vmatprep.subr.bf16.mxu0 0
      %361 = vmatpush1.bf16.msra.mxu0 0
      %362 = vmatprep.subr.bf16.mxu0 0
      %363 = vmatpush1.bf16.msra.mxu0 0
      %364 = vmatprep.subr.bf16.mxu0 0
      %365 = vmatpush1.bf16.msra.mxu0 0
      %366 = vmatprep.subr.bf16.mxu0 0
      %367 = vmatpush1.bf16.msra.mxu0 0
      %368 = vmatprep.subr.bf16.mxu0 0
      %369 = vmatpush1.bf16.msra.mxu0 0
      %370 = vmatprep.mubr.bf16.mxu0 0
      %371 = vmatmul.mubr.bf16.gmra.mrb[0].mxu0 %v332
      %v372 = vpop.f32.mrb[0].mxu0
      %v373 = vadd.f32 0.0, %v372
      %v374 = vpop.f32.mrb[0].mxu0
      %v375 = vpop.f32.mrb[0].mxu0
      %v376 = vpop.f32.mrb[0].mxu0
      %377 = vdwg.mxu0
      %s378 = scalar_lea.vmem %s232, 4
      %v379 = vld [vmem:[%s378] sm:$0xf]
      %s380 = scalar_lea.vmem %s237, 4
      %v381 = vld [vmem:[%s380] sm:$0xf]
      %s382 = scalar_lea.vmem %s242, 4
      %v383 = vld [vmem:[%s382] sm:$0xf]
      %v385 = vsel %vm269, %v379, 0
      %v388 = vsel %vm269, %v381, 0
      %390 = vmatprep.subr.bf16.mxu0 0
      %391 = vmatpush1.bf16.xpose.msra.mxu0 %v388
      %392 = vmatprep.subr.bf16.mxu0 0
      %393 = vmatpush1.bf16.xpose.msra.mxu0 0
      %394 = vmatprep.subr.bf16.mxu0 0
      %395 = vmatpush1.bf16.xpose.msra.mxu0 0
      %396 = vmatprep.subr.bf16.mxu0 0
      %397 = vmatpush1.bf16.xpose.msra.mxu0 0
      %398 = vmatprep.subr.bf16.mxu0 0
      %399 = vmatpush1.bf16.xpose.msra.mxu0 0
      %400 = vmatprep.subr.bf16.mxu0 0
      %401 = vmatpush1.bf16.xpose.msra.mxu0 0
      %402 = vmatprep.subr.bf16.mxu0 0
      %403 = vmatpush1.bf16.xpose.msra.mxu0 0
      %404 = vmatprep.subr.bf16.mxu0 0
      %405 = vmatpush1.bf16.xpose.msra.mxu0 0
      %406 = vmatprep.subr.bf16.mxu0 0
      %407 = vmatpush1.bf16.xpose.msra.mxu0 0
      %408 = vmatprep.subr.bf16.mxu0 0
      %409 = vmatpush1.bf16.xpose.msra.mxu0 0
      %410 = vmatprep.subr.bf16.mxu0 0
      %411 = vmatpush1.bf16.xpose.msra.mxu0 0
      %412 = vmatprep.subr.bf16.mxu0 0
      %413 = vmatpush1.bf16.xpose.msra.mxu0 0
      %414 = vmatprep.subr.bf16.mxu0 0
      %415 = vmatpush1.bf16.xpose.msra.mxu0 0
      %416 = vmatprep.subr.bf16.mxu0 0
      %417 = vmatpush1.bf16.xpose.msra.mxu0 0
      %418 = vmatprep.subr.bf16.mxu0 0
      %419 = vmatpush1.bf16.xpose.msra.mxu0 0
      %420 = vmatprep.subr.bf16.mxu0 0
      %421 = vmatpush1.bf16.xpose.msra.mxu0 0
      %422 = vmatprep.mubr.bf16.mxu0 0
      %423 = vmatmul.mubr.bf16.gmra.mrb[0].mxu0 %v385
      %v424 = vpop.f32.mrb[0].mxu0
      %v425 = vadd.f32 0.0, %v424
      %v426 = vpop.f32.mrb[0].mxu0
      %v427 = vpop.f32.mrb[0].mxu0
      %v428 = vpop.f32.mrb[0].mxu0
      %429 = vdwg.mxu0
      %v430 = vmul.f32 %v425, 0.17677669
      %v431 = vadd.f32 %v430, %v265
      %v432 = vsel %vm318, %v431, -inf
      %433 = vmax.xlane.f32.xlu0 %v432
      %v434 = vpop.xlane.xlu0 %433
      %v435 = vsub.f32 %v431, %v434
      %v436 = vmul.f32 %v435, 1.442695
      %v437 = vpow.pop %v436
      %v438 = vsel %vm318, %v437, 0.0
      %439 = vadd.xlane.f32.xlu0 %v438
      %v440 = vpop.xlane.xlu0 %439
      %v441 = vrcp.pop %v440
      %v442 = vmul.f32 %v437, %v441
      %v443 = vpack.c.bf16 %v442, %v442
      %v445 = vsel %vm318, %v443, 0
      %v448 = vsel %vm334, %v383, 0
      %450 = vmatprep.subr.bf16.mxu0 0
      %451 = vmatpush1.bf16.msra.mxu0 %v448
      %452 = vmatprep.subr.bf16.mxu0 0
      %453 = vmatpush1.bf16.msra.mxu0 0
      %454 = vmatprep.subr.bf16.mxu0 0
      %455 = vmatpush1.bf16.msra.mxu0 0
      %456 = vmatprep.subr.bf16.mxu0 0
      %457 = vmatpush1.bf16.msra.mxu0 0
      %458 = vmatprep.subr.bf16.mxu0 0
      %459 = vmatpush1.bf16.msra.mxu0 0
      %460 = vmatprep.subr.bf16.mxu0 0
      %461 = vmatpush1.bf16.msra.mxu0 0
      %462 = vmatprep.subr.bf16.mxu0 0
      %463 = vmatpush1.bf16.msra.mxu0 0
      %464 = vmatprep.subr.bf16.mxu0 0
      %465 = vmatpush1.bf16.msra.mxu0 0
      %466 = vmatprep.subr.bf16.mxu0 0
      %467 = vmatpush1.bf16.msra.mxu0 0
      %468 = vmatprep.subr.bf16.mxu0 0
      %469 = vmatpush1.bf16.msra.mxu0 0
      %470 = vmatprep.subr.bf16.mxu0 0
      %471 = vmatpush1.bf16.msra.mxu0 0
      %472 = vmatprep.subr.bf16.mxu0 0
      %473 = vmatpush1.bf16.msra.mxu0 0
      %474 = vmatprep.subr.bf16.mxu0 0
      %475 = vmatpush1.bf16.msra.mxu0 0
      %476 = vmatprep.subr.bf16.mxu0 0
      %477 = vmatpush1.bf16.msra.mxu0 0
      %478 = vmatprep.subr.bf16.mxu0 0
      %479 = vmatpush1.bf16.msra.mxu0 0
      %480 = vmatprep.subr.bf16.mxu0 0
      %481 = vmatpush1.bf16.msra.mxu0 0
      %482 = vmatprep.mubr.bf16.mxu0 0
      %483 = vmatmul.mubr.bf16.gmra.mrb[0].mxu0 %v445
      %v484 = vpop.f32.mrb[0].mxu0
      %v485 = vadd.f32 0.0, %v484
      %v486 = vpop.f32.mrb[0].mxu0
      %v487 = vpop.f32.mrb[0].mxu0
      %v488 = vpop.f32.mrb[0].mxu0
      %489 = vdwg.mxu0
      %s490 = scalar_lea.vmem %s232, 8
      %v491 = vld [vmem:[%s490] sm:$0xf]
      %s492 = scalar_lea.vmem %s237, 8
      %v493 = vld [vmem:[%s492] sm:$0xf]
      %s494 = scalar_lea.vmem %s242, 8
      %v495 = vld [vmem:[%s494] sm:$0xf]
      %v497 = vsel %vm269, %v491, 0
      %v500 = vsel %vm269, %v493, 0
      %502 = vmatprep.subr.bf16.mxu0 0
      %503 = vmatpush1.bf16.xpose.msra.mxu0 %v500
      %504 = vmatprep.subr.bf16.mxu0 0
      %505 = vmatpush1.bf16.xpose.msra.mxu0 0
      %506 = vmatprep.subr.bf16.mxu0 0
      %507 = vmatpush1.bf16.xpose.msra.mxu0 0
      %508 = vmatprep.subr.bf16.mxu0 0
      %509 = vmatpush1.bf16.xpose.msra.mxu0 0
      %510 = vmatprep.subr.bf16.mxu0 0
      %511 = vmatpush1.bf16.xpose.msra.mxu0 0
      %512 = vmatprep.subr.bf16.mxu0 0
      %513 = vmatpush1.bf16.xpose.msra.mxu0 0
      %514 = vmatprep.subr.bf16.mxu0 0
      %515 = vmatpush1.bf16.xpose.msra.mxu0 0
      %516 = vmatprep.subr.bf16.mxu0 0
      %517 = vmatpush1.bf16.xpose.msra.mxu0 0
      %518 = vmatprep.subr.bf16.mxu0 0
      %519 = vmatpush1.bf16.xpose.msra.mxu0 0
      %520 = vmatprep.subr.bf16.mxu0 0
      %521 = vmatpush1.bf16.xpose.msra.mxu0 0
      %522 = vmatprep.subr.bf16.mxu0 0
      %523 = vmatpush1.bf16.xpose.msra.mxu0 0
      %524 = vmatprep.subr.bf16.mxu0 0
      %525 = vmatpush1.bf16.xpose.msra.mxu0 0
      %526 = vmatprep.subr.bf16.mxu0 0
      %527 = vmatpush1.bf16.xpose.msra.mxu0 0
      %528 = vmatprep.subr.bf16.mxu0 0
      %529 = vmatpush1.bf16.xpose.msra.mxu0 0
      %530 = vmatprep.subr.bf16.mxu0 0
      %531 = vmatpush1.bf16.xpose.msra.mxu0 0
      %532 = vmatprep.subr.bf16.mxu0 0
      %533 = vmatpush1.bf16.xpose.msra.mxu0 0
      %534 = vmatprep.mubr.bf16.mxu0 0
      %535 = vmatmul.mubr.bf16.gmra.mrb[0].mxu0 %v497
      %v536 = vpop.f32.mrb[0].mxu0
      %v537 = vadd.f32 0.0, %v536
      %v538 = vpop.f32.mrb[0].mxu0
      %v539 = vpop.f32.mrb[0].mxu0
      %v540 = vpop.f32.mrb[0].mxu0
      %541 = vdwg.mxu0
      %v542 = vmul.f32 %v537, 0.17677669
      %v543 = vadd.f32 %v542, %v265
      %v544 = vsel %vm318, %v543, -inf
      %545 = vmax.xlane.f32.xlu0 %v544
      %v546 = vpop.xlane.xlu0 %545
      %v547 = vsub.f32 %v543, %v546
      %v548 = vmul.f32 %v547, 1.442695
      %v549 = vpow.pop %v548
      %v550 = vsel %vm318, %v549, 0.0
      %551 = vadd.xlane.f32.xlu0 %v550
      %v552 = vpop.xlane.xlu0 %551
      %v553 = vrcp.pop %v552
      %v554 = vmul.f32 %v549, %v553
      %v555 = vpack.c.bf16 %v554, %v554
      %v557 = vsel %vm318, %v555, 0
      %v560 = vsel %vm334, %v495, 0
      %562 = vmatprep.subr.bf16.mxu0 0
      %563 = vmatpush1.bf16.msra.mxu0 %v560
      %564 = vmatprep.subr.bf16.mxu0 0
      %565 = vmatpush1.bf16.msra.mxu0 0
      %566 = vmatprep.subr.bf16.mxu0 0
      %567 = vmatpush1.bf16.msra.mxu0 0
      %568 = vmatprep.subr.bf16.mxu0 0
      %569 = vmatpush1.bf16.msra.mxu0 0
      %570 = vmatprep.subr.bf16.mxu0 0
      %571 = vmatpush1.bf16.msra.mxu0 0
      %572 = vmatprep.subr.bf16.mxu0 0
      %573 = vmatpush1.bf16.msra.mxu0 0
      %574 = vmatprep.subr.bf16.mxu0 0
      %575 = vmatpush1.bf16.msra.mxu0 0
      %576 = vmatprep.subr.bf16.mxu0 0
      %577 = vmatpush1.bf16.msra.mxu0 0
      %578 = vmatprep.subr.bf16.mxu0 0
      %579 = vmatpush1.bf16.msra.mxu0 0
      %580 = vmatprep.subr.bf16.mxu0 0
      %581 = vmatpush1.bf16.msra.mxu0 0
      %582 = vmatprep.subr.bf16.mxu0 0
      %583 = vmatpush1.bf16.msra.mxu0 0
      %584 = vmatprep.subr.bf16.mxu0 0
      %585 = vmatpush1.bf16.msra.mxu0 0
      %586 = vmatprep.subr.bf16.mxu0 0
      %587 = vmatpush1.bf16.msra.mxu0 0
      %588 = vmatprep.subr.bf16.mxu0 0
      %589 = vmatpush1.bf16.msra.mxu0 0
      %590 = vmatprep.subr.bf16.mxu0 0
      %591 = vmatpush1.bf16.msra.mxu0 0
      %592 = vmatprep.subr.bf16.mxu0 0
      %593 = vmatpush1.bf16.msra.mxu0 0
      %594 = vmatprep.mubr.bf16.mxu0 0
      %595 = vmatmul.mubr.bf16.gmra.mrb[0].mxu0 %v557
      %v596 = vpop.f32.mrb[0].mxu0
      %v597 = vadd.f32 0.0, %v596
      %v598 = vpop.f32.mrb[0].mxu0
      %v599 = vpop.f32.mrb[0].mxu0
      %v600 = vpop.f32.mrb[0].mxu0
      %601 = vdwg.mxu0
      %s602 = scalar_lea.vmem %s232, 12
      %v603 = vld [vmem:[%s602] sm:$0xf]
      %s604 = scalar_lea.vmem %s237, 12
      %v605 = vld [vmem:[%s604] sm:$0xf]
      %s606 = scalar_lea.vmem %s242, 12
      %v607 = vld [vmem:[%s606] sm:$0xf]
      %v609 = vsel %vm269, %v603, 0
      %v612 = vsel %vm269, %v605, 0
      %614 = vmatprep.subr.bf16.mxu0 0
      %615 = vmatpush1.bf16.xpose.msra.mxu0 %v612
      %616 = vmatprep.subr.bf16.mxu0 0
      %617 = vmatpush1.bf16.xpose.msra.mxu0 0
      %618 = vmatprep.subr.bf16.mxu0 0
      %619 = vmatpush1.bf16.xpose.msra.mxu0 0
      %620 = vmatprep.subr.bf16.mxu0 0
      %621 = vmatpush1.bf16.xpose.msra.mxu0 0
      %622 = vmatprep.subr.bf16.mxu0 0
      %623 = vmatpush1.bf16.xpose.msra.mxu0 0
      %624 = vmatprep.subr.bf16.mxu0 0
      %625 = vmatpush1.bf16.xpose.msra.mxu0 0
      %626 = vmatprep.subr.bf16.mxu0 0
      %627 = vmatpush1.bf16.xpose.msra.mxu0 0
      %628 = vmatprep.subr.bf16.mxu0 0
      %629 = vmatpush1.bf16.xpose.msra.mxu0 0
      %630 = vmatprep.subr.bf16.mxu0 0
      %631 = vmatpush1.bf16.xpose.msra.mxu0 0
      %632 = vmatprep.subr.bf16.mxu0 0
      %633 = vmatpush1.bf16.xpose.msra.mxu0 0
      %634 = vmatprep.subr.bf16.mxu0 0
      %635 = vmatpush1.bf16.xpose.msra.mxu0 0
      %636 = vmatprep.subr.bf16.mxu0 0
      %637 = vmatpush1.bf16.xpose.msra.mxu0 0
      %638 = vmatprep.subr.bf16.mxu0 0
      %639 = vmatpush1.bf16.xpose.msra.mxu0 0
      %640 = vmatprep.subr.bf16.mxu0 0
      %641 = vmatpush1.bf16.xpose.msra.mxu0 0
      %642 = vmatprep.subr.bf16.mxu0 0
      %643 = vmatpush1.bf16.xpose.msra.mxu0 0
      %644 = vmatprep.subr.bf16.mxu0 0
      %645 = vmatpush1.bf16.xpose.msra.mxu0 0
      %646 = vmatprep.mubr.bf16.mxu0 0
      %647 = vmatmul.mubr.bf16.gmra.mrb[0].mxu0 %v609
      %v648 = vpop.f32.mrb[0].mxu0
      %v649 = vadd.f32 0.0, %v648
      %v650 = vpop.f32.mrb[0].mxu0
      %v651 = vpop.f32.mrb[0].mxu0
      %v652 = vpop.f32.mrb[0].mxu0
      %653 = vdwg.mxu0
      %v654 = vmul.f32 %v649, 0.17677669
      %v655 = vadd.f32 %v654, %v265
      %v656 = vsel %vm318, %v655, -inf
      %657 = vmax.xlane.f32.xlu0 %v656
      %v658 = vpop.xlane.xlu0 %657
      %v659 = vsub.f32 %v655, %v658
      %v660 = vmul.f32 %v659, 1.442695
      %v661 = vpow.pop %v660
      %v662 = vsel %vm318, %v661, 0.0
      %663 = vadd.xlane.f32.xlu0 %v662
      %v664 = vpop.xlane.xlu0 %663
      %v665 = vrcp.pop %v664
      %v666 = vmul.f32 %v661, %v665
      %v667 = vpack.c.bf16 %v666, %v666
      %v669 = vsel %vm318, %v667, 0
      %v672 = vsel %vm334, %v607, 0
      %674 = vmatprep.subr.bf16.mxu0 0
      %675 = vmatpush1.bf16.msra.mxu0 %v672
      %676 = vmatprep.subr.bf16.mxu0 0
      %677 = vmatpush1.bf16.msra.mxu0 0
      %678 = vmatprep.subr.bf16.mxu0 0
      %679 = vmatpush1.bf16.msra.mxu0 0
      %680 = vmatprep.subr.bf16.mxu0 0
      %681 = vmatpush1.bf16.msra.mxu0 0
      %682 = vmatprep.subr.bf16.mxu0 0
      %683 = vmatpush1.bf16.msra.mxu0 0
      %684 = vmatprep.subr.bf16.mxu0 0
      %685 = vmatpush1.bf16.msra.mxu0 0
      %686 = vmatprep.subr.bf16.mxu0 0
      %687 = vmatpush1.bf16.msra.mxu0 0
      %688 = vmatprep.subr.bf16.mxu0 0
      %689 = vmatpush1.bf16.msra.mxu0 0
      %690 = vmatprep.subr.bf16.mxu0 0
      %691 = vmatpush1.bf16.msra.mxu0 0
      %692 = vmatprep.subr.bf16.mxu0 0
      %693 = vmatpush1.bf16.msra.mxu0 0
      %694 = vmatprep.subr.bf16.mxu0 0
      %695 = vmatpush1.bf16.msra.mxu0 0
      %696 = vmatprep.subr.bf16.mxu0 0
      %697 = vmatpush1.bf16.msra.mxu0 0
      %698 = vmatprep.subr.bf16.mxu0 0
      %699 = vmatpush1.bf16.msra.mxu0 0
      %700 = vmatprep.subr.bf16.mxu0 0
      %701 = vmatpush1.bf16.msra.mxu0 0
      %702 = vmatprep.subr.bf16.mxu0 0
      %703 = vmatpush1.bf16.msra.mxu0 0
      %704 = vmatprep.subr.bf16.mxu0 0
      %705 = vmatpush1.bf16.msra.mxu0 0
      %706 = vmatprep.mubr.bf16.mxu0 0
      %707 = vmatmul.mubr.bf16.gmra.mrb[0].mxu0 %v669
      %v708 = vpop.f32.mrb[0].mxu0
      %v709 = vadd.f32 0.0, %v708
      %v710 = vpop.f32.mrb[0].mxu0
      %v711 = vpop.f32.mrb[0].mxu0
      %v712 = vpop.f32.mrb[0].mxu0
      %713 = vdwg.mxu0
      %715 = vrot.lane.b32.xlu0 %v485, 32
      %v716 = vpop.permute.xlu0 %715
      %719 = vrot.lane.b32.xlu0 %v597, 64
      %v720 = vpop.permute.xlu0 %719
      %723 = vrot.lane.b32.xlu0 %v709, 96
      %v724 = vpop.permute.xlu0 %723
      %v726 = vsel %vm269, %v373, %v716
      %vm727 = vcmask 523264
      %v728 = vsel %vm727, %v726, %v720
      %vm729 = vcmask 785408
      %v730 = vsel %vm729, %v728, %v724
      %731 = vst [vmem:[%s249] sm:$0xff] %v730
      %p732 = scmp.lt.s32.totalorder %s15, 1
      %s733 = scalar_select %p732, %s15, 1
      %s734 = smul.addr %s733, 8
      %s735 = scalar_lea.vmem %s4, %s734
      // Predicated region
      $region37: #{autoencoder_forward.24} parent=35 // pred_check
        %p736 = pneg %p137
      $region38: #{autoencoder_forward.24} parent=35 // pred_check_branch
        %738 = sbr.rel (%p736) target = $region40
      $region39: #{autoencoder_forward.24} parent=35 // pred_region
        _
      $region40: #{autoencoder_forward.24} parent=35 // pred_fallthru
        _
    $region36: #{autoencoder_forward.24} parent=5 // pred_fallthru
      _
    %p739 = scmp.le.s32.totalorder 2, %s10
    // Predicated region
    $region41: #{autoencoder_forward.24} parent=5 // pred_check
      %p740 = pneg %p739
    $region42: #{autoencoder_forward.24} parent=5 // pred_check_branch
      %742 = sbr.rel (%p740) target = $region44
    $region43: #{autoencoder_forward.24} parent=5 // pred_region
      %s743 = ssub.s32 %s10, 2
      // Predicated region
      $region45: #{autoencoder_forward.24} parent=43 // pred_check
        %p744 = pneg %p143
      $region46: #{autoencoder_forward.24} parent=43 // pred_check_branch
        %746 = sbr.rel (%p744) target = $region48
      $region47: #{autoencoder_forward.24} parent=43 // pred_region
        %p747 = scmp.lt.s32.totalorder %s16, 1
        %s748 = scalar_select %p747, %s16, 1
        %s749 = smul.addr %s748, 8
        %s750 = scalar_lea.vmem %s4, %s749
      $region48: #{autoencoder_forward.24} parent=43 // pred_fallthru
        _
    $region44: #{autoencoder_forward.24} parent=5 // pred_fallthru
      _
  $region6: #{autoencoder_forward.24} parent=0 // loop_footer
    %s14 = sadd.s32 1, %s10
  $region7: #{autoencoder_forward.24} parent=0 // loop_footer_branch
    %9 = sbr.rel target = $region3
  $region8: #{autoencoder_forward.24} parent=0 // loop_exit
    _

// kernel: autoencoder_forward.26
$region0: #{autoencoder_forward.26}
  #allocation0 [shape = 'u32[]', space=smem, size = 0x4, offset = 0x4, fixed_abs, tag = 'smem constant byte address 0x4 - core index']
  #allocation1 [shape = 'u32[144,128]{1,0:T(1,128)}', space=vmem, size = 0x12000, scoped, tag = 'internal scratch']
  %s0 = inlined_call_operand.vmem [shape: f32[16,128], index: 0, kind: input, shape index: {}]
  %s1 = inlined_call_operand.vmem [shape: f32[1,128], index: 1, kind: input, shape index: {}]
  %s2 = inlined_call_operand.vmem [shape: f32[1,128], index: 2, kind: input, shape index: {}]
  %s3 = inlined_call_operand.vmem [shape: bf16[128,512], index: 3, kind: input, shape index: {}]
  %s4 = inlined_call_operand.vmem [shape: f32[1,512], index: 4, kind: input, shape index: {}]
  %s5 = inlined_call_operand.vmem [shape: f32[16,512], index: 5, kind: output, shape index: {}]
  %s6 = sld [smem:[#allocation0]]
  $region30: #{autoencoder_forward.26} parent=0
    _
  %s8 = ssub.s32 1, %s6
  %s9 = scalar_select 0, %s8, %s6
  // Predicated region
  $region2: #{autoencoder_forward.26} parent=0 // pred_check
    _
  $region3: #{autoencoder_forward.26} parent=0 // pred_check_branch
    %11 = sbr.rel (0) target = $region5
  $region4: #{autoencoder_forward.26} parent=0 // pred_region
    _
  $region5: #{autoencoder_forward.26} parent=0 // pred_fallthru
    _
  // Predicated region
  $region6: #{autoencoder_forward.26} parent=0 // pred_check
    _
  $region7: #{autoencoder_forward.26} parent=0 // pred_check_branch
    %13 = sbr.rel (0) target = $region9
  $region8: #{autoencoder_forward.26} parent=0 // pred_region
    _
  $region9: #{autoencoder_forward.26} parent=0 // pred_fallthru
    _
  // Predicated region
  $region10: #{autoencoder_forward.26} parent=0 // pred_check
    _
  $region11: #{autoencoder_forward.26} parent=0 // pred_check_branch
    %15 = sbr.rel (0) target = $region13
  $region12: #{autoencoder_forward.26} parent=0 // pred_region
    _
  $region13: #{autoencoder_forward.26} parent=0 // pred_fallthru
    _
  // Predicated region
  $region14: #{autoencoder_forward.26} parent=0 // pred_check
    _
  $region15: #{autoencoder_forward.26} parent=0 // pred_check_branch
    %17 = sbr.rel (0) target = $region17
  $region16: #{autoencoder_forward.26} parent=0 // pred_region
    _
  $region17: #{autoencoder_forward.26} parent=0 // pred_fallthru
    _
  // Predicated region
  $region18: #{autoencoder_forward.26} parent=0 // pred_check
    _
  $region19: #{autoencoder_forward.26} parent=0 // pred_check_branch
    %19 = sbr.rel (0) target = $region21
  $region20: #{autoencoder_forward.26} parent=0 // pred_region
    _
  $region21: #{autoencoder_forward.26} parent=0 // pred_fallthru
    _
  %v21 = vld [vmem:[%s0] sm:$0xff]
  %v22 = vld [vmem:[%s0 + $0x8] sm:$0xff]
  %23 = vadd.xlane.f32.xlu0 %v21
  %v24 = vpop.xlane.xlu0 %23
  %25 = vadd.xlane.f32.xlu0 %v22
  %v26 = vpop.xlane.xlu0 %25
  %v27 = vrcp.pop 128.0
  %v28 = vmul.f32 %v24, %v27
  %v29 = vmul.f32 %v26, %v27
  %v30 = vsub.f32 %v21, %v28
  %v31 = vsub.f32 %v22, %v29
  %v32 = vmul.f32 %v30, %v30
  %v33 = vmul.f32 %v31, %v31
  %34 = vadd.xlane.f32.xlu0 %v32
  %v35 = vpop.xlane.xlu0 %34
  %36 = vadd.xlane.f32.xlu0 %v33
  %v37 = vpop.xlane.xlu0 %36
  %v38 = vmul.f32 %v35, %v27
  %v39 = vmul.f32 %v37, %v27
  %v40 = vadd.f32 %v38, 1e-05
  %v41 = vadd.f32 %v39, 1e-05
  %v42 = vrsqrt.pop %v40
  %v43 = vrsqrt.pop %v41
  %v44 = vmul.f32 %v30, %v42
  %v45 = vmul.f32 %v31, %v43
  %v46 = vld [vmem:[%s1] sm:$0x1]
  %v48 = vlaneseq
  %v49 = vshrl.u32 %v48, 7
  %v50 = vsub.s32 0, %v49
  %v51 = vrot.slane %v46, %v50
  %v53 = vmul.f32 %v44, %v51
  %v54 = vmul.f32 %v45, %v51
  %v55 = vld [vmem:[%s2] sm:$0x1]
  %v57 = vlaneseq
  %v58 = vshrl.u32 %v57, 7
  %v59 = vsub.s32 0, %v58
  %v60 = vrot.slane %v55, %v59
  %v62 = vadd.f32 %v53, %v60
  %v63 = vadd.f32 %v54, %v60
  %v64 = vpack.c.bf16 %v63, %v62
  %v65 = vld [vmem:[%s3] sm:$0xff]
  %v66 = vld [vmem:[%s3 + $0x8] sm:$0xff]
  %v67 = vld [vmem:[%s3 + $0x10] sm:$0xff]
  %v68 = vld [vmem:[%s3 + $0x18] sm:$0xff]
  %v69 = vld [vmem:[%s3 + $0x20] sm:$0xff]
  %v70 = vld [vmem:[%s3 + $0x28] sm:$0xff]
  %v71 = vld [vmem:[%s3 + $0x30] sm:$0xff]
  %v72 = vld [vmem:[%s3 + $0x38] sm:$0xff]
  %v73 = vld [vmem:[%s3 + $0x40] sm:$0xff]
  %v74 = vld [vmem:[%s3 + $0x48] sm:$0xff]
  %v75 = vld [vmem:[%s3 + $0x50] sm:$0xff]
  %v76 = vld [vmem:[%s3 + $0x58] sm:$0xff]
  %v77 = vld [vmem:[%s3 + $0x60] sm:$0xff]
  %v78 = vld [vmem:[%s3 + $0x68] sm:$0xff]
  %v79 = vld [vmem:[%s3 + $0x70] sm:$0xff]
  %v80 = vld [vmem:[%s3 + $0x78] sm:$0xff]
  %v81 = vld [vmem:[%s3 + $0x80] sm:$0xff]
  %v82 = vld [vmem:[%s3 + $0x88] sm:$0xff]
  %v83 = vld [vmem:[%s3 + $0x90] sm:$0xff]
  %v84 = vld [vmem:[%s3 + $0x98] sm:$0xff]
  %v85 = vld [vmem:[%s3 + $0xa0] sm:$0xff]
  %v86 = vld [vmem:[%s3 + $0xa8] sm:$0xff]
  %v87 = vld [vmem:[%s3 + $0xb0] sm:$0xff]
  %v88 = vld [vmem:[%s3 + $0xb8] sm:$0xff]
  %v89 = vld [vmem:[%s3 + $0xc0] sm:$0xff]
  %v90 = vld [vmem:[%s3 + $0xc8] sm:$0xff]
  %v91 = vld [vmem:[%s3 + $0xd0] sm:$0xff]
  %v92 = vld [vmem:[%s3 + $0xd8] sm:$0xff]
  %v93 = vld [vmem:[%s3 + $0xe0] sm:$0xff]
  %v94 = vld [vmem:[%s3 + $0xe8] sm:$0xff]
  %v95 = vld [vmem:[%s3 + $0xf0] sm:$0xff]
  %v96 = vld [vmem:[%s3 + $0xf8] sm:$0xff]
  %v97 = vld [vmem:[%s4] sm:$0xf]
  %v99 = vlaneseq
  %v100 = vshrl.u32 %v99, 7
  %v101 = vsub.s32 0, %v100
  %v102 = vrot.slane %v97, %v101
  %v103 = vlaneseq
  %v104 = vshrl.u32 %v103, 7
  %v105 = vsub.s32 1, %v104
  %v106 = vrot.slane %v97, %v105
  %v107 = vlaneseq
  %v108 = vshrl.u32 %v107, 7
  %v109 = vsub.s32 2, %v108
  %v110 = vrot.slane %v97, %v109
  %v111 = vlaneseq
  %v112 = vshrl.u32 %v111, 7
  %v113 = vsub.s32 3, %v112
  %v114 = vrot.slane %v97, %v113
  %v151 = vunpack.c.l.b16 %v65
  %v152 = vunpack.c.h.b16 %v65
  %v153 = vunpack.c.l.b16 %v66
  %v154 = vunpack.c.h.b16 %v66
  %v155 = vunpack.c.l.b16 %v67
  %v156 = vunpack.c.h.b16 %v67
  %v157 = vunpack.c.l.b16 %v68
  %v158 = vunpack.c.h.b16 %v68
  %v159 = vunpack.c.l.b16 %v69
  %v160 = vunpack.c.h.b16 %v69
  %v161 = vunpack.c.l.b16 %v70
  %v162 = vunpack.c.h.b16 %v70
  %v163 = vunpack.c.l.b16 %v71
  %v164 = vunpack.c.h.b16 %v71
  %v165 = vunpack.c.l.b16 %v72
  %v166 = vunpack.c.h.b16 %v72
  %v167 = vunpack.c.l.b16 %v73
  %v168 = vunpack.c.h.b16 %v73
  %v169 = vunpack.c.l.b16 %v74
  %v170 = vunpack.c.h.b16 %v74
  %v171 = vunpack.c.l.b16 %v75
  %v172 = vunpack.c.h.b16 %v75
  %v173 = vunpack.c.l.b16 %v76
  %v174 = vunpack.c.h.b16 %v76
  %v175 = vunpack.c.l.b16 %v77
  %v176 = vunpack.c.h.b16 %v77
  %v177 = vunpack.c.l.b16 %v78
  %v178 = vunpack.c.h.b16 %v78
  %v179 = vunpack.c.l.b16 %v79
  %v180 = vunpack.c.h.b16 %v79
  %v181 = vunpack.c.l.b16 %v80
  %v182 = vunpack.c.h.b16 %v80
  %v183 = vunpack.c.l.b16 %v81
  %v184 = vunpack.c.h.b16 %v81
  %v185 = vunpack.c.l.b16 %v82
  %v186 = vunpack.c.h.b16 %v82
  %v187 = vunpack.c.l.b16 %v83
  %v188 = vunpack.c.h.b16 %v83
  %v189 = vunpack.c.l.b16 %v84
  %v190 = vunpack.c.h.b16 %v84
  %v191 = vunpack.c.l.b16 %v85
  %v192 = vunpack.c.h.b16 %v85
  %v193 = vunpack.c.l.b16 %v86
  %v194 = vunpack.c.h.b16 %v86
  %v195 = vunpack.c.l.b16 %v87
  %v196 = vunpack.c.h.b16 %v87
  %v197 = vunpack.c.l.b16 %v88
  %v198 = vunpack.c.h.b16 %v88
  %v199 = vunpack.c.l.b16 %v89
  %v200 = vunpack.c.h.b16 %v89
  %v201 = vunpack.c.l.b16 %v90
  %v202 = vunpack.c.h.b16 %v90
  %v203 = vunpack.c.l.b16 %v91
  %v204 = vunpack.c.h.b16 %v91
  %v205 = vunpack.c.l.b16 %v92
  %v206 = vunpack.c.h.b16 %v92
  %v207 = vunpack.c.l.b16 %v93
  %v208 = vunpack.c.h.b16 %v93
  %v209 = vunpack.c.l.b16 %v94
  %v210 = vunpack.c.h.b16 %v94
  %v211 = vunpack.c.l.b16 %v95
  %v212 = vunpack.c.h.b16 %v95
  %v213 = vunpack.c.l.b16 %v96
  %v214 = vunpack.c.h.b16 %v96
  %v215 = vpack.c.b16 %v155, %v151
  %v216 = vpack.c.b16 %v156, %v152
  %v217 = vpack.c.b16 %v157, %v153
  %v218 = vpack.c.b16 %v158, %v154
  %v219 = vpack.c.b16 %v163, %v159
  %v220 = vpack.c.b16 %v164, %v160
  %v221 = vpack.c.b16 %v165, %v161
  %v222 = vpack.c.b16 %v166, %v162
  %v223 = vpack.c.b16 %v171, %v167
  %v224 = vpack.c.b16 %v172, %v168
  %v225 = vpack.c.b16 %v173, %v169
  %v226 = vpack.c.b16 %v174, %v170
  %v227 = vpack.c.b16 %v179, %v175
  %v228 = vpack.c.b16 %v180, %v176
  %v229 = vpack.c.b16 %v181, %v177
  %v230 = vpack.c.b16 %v182, %v178
  %v231 = vpack.c.b16 %v187, %v183
  %v232 = vpack.c.b16 %v188, %v184
  %v233 = vpack.c.b16 %v189, %v185
  %v234 = vpack.c.b16 %v190, %v186
  %v235 = vpack.c.b16 %v195, %v191
  %v236 = vpack.c.b16 %v196, %v192
  %v237 = vpack.c.b16 %v197, %v193
  %v238 = vpack.c.b16 %v198, %v194
  %v239 = vpack.c.b16 %v203, %v199
  %v240 = vpack.c.b16 %v204, %v200
  %v241 = vpack.c.b16 %v205, %v201
  %v242 = vpack.c.b16 %v206, %v202
  %v243 = vpack.c.b16 %v211, %v207
  %v244 = vpack.c.b16 %v212, %v208
  %v245 = vpack.c.b16 %v213, %v209
  %v246 = vpack.c.b16 %v214, %v210
  %279 = vmatprep.subr.bf16.mxu0 %v216
  %280 = vmatpush1.bf16.msra.mxu0 %v215
  %281 = vmatprep.subr.bf16.mxu0 %v220
  %282 = vmatpush1.bf16.msra.mxu0 %v219
  %283 = vmatprep.subr.bf16.mxu0 %v224
  %284 = vmatpush1.bf16.msra.mxu0 %v223
  %285 = vmatprep.subr.bf16.mxu0 %v228
  %286 = vmatpush1.bf16.msra.mxu0 %v227
  %287 = vmatprep.subr.bf16.mxu0 %v232
  %288 = vmatpush1.bf16.msra.mxu0 %v231
  %289 = vmatprep.subr.bf16.mxu0 %v236
  %290 = vmatpush1.bf16.msra.mxu0 %v235
  %291 = vmatprep.subr.bf16.mxu0 %v240
  %292 = vmatpush1.bf16.msra.mxu0 %v239
  %293 = vmatprep.subr.bf16.mxu0 %v244
  %294 = vmatpush1.bf16.msra.mxu0 %v243
  %295 = vmatprep.subr.bf16.mxu0 0
  %296 = vmatpush1.bf16.msra.mxu0 0
  %297 = vmatprep.subr.bf16.mxu0 0
  %298 = vmatpush1.bf16.msra.mxu0 0
  %299 = vmatprep.subr.bf16.mxu0 0
  %300 = vmatpush1.bf16.msra.mxu0 0
  %301 = vmatprep.subr.bf16.mxu0 0
  %302 = vmatpush1.bf16.msra.mxu0 0
  %303 = vmatprep.subr.bf16.mxu0 0
  %304 = vmatpush1.bf16.msra.mxu0 0
  %305 = vmatprep.subr.bf16.mxu0 0
  %306 = vmatpush1.bf16.msra.mxu0 0
  %307 = vmatprep.subr.bf16.mxu0 0
  %308 = vmatpush1.bf16.msra.mxu0 0
  %309 = vmatprep.subr.bf16.mxu0 0
  %310 = vmatpush1.bf16.msra.mxu0 0
  %311 = vmatprep.mubr.bf16.mxu0 0
  %312 = vmatmul.mubr.bf16.gmra.mrb[0].mxu0 %v64
  %v313 = vpop.f32.mrb[0].mxu0
  %v314 = vadd.f32 %v102, %v313
  %v315 = vpop.f32.mrb[0].mxu0
  %v316 = vadd.f32 %v106, %v315
  %v317 = vpop.f32.mrb[0].mxu0
  %v318 = vadd.f32 %v102, %v317
  %v319 = vpop.f32.mrb[0].mxu0
  %v320 = vadd.f32 %v106, %v319
  %321 = vdwg.mxu0
  %322 = vmatprep.subr.bf16.mxu0 %v218
  %323 = vmatpush1.bf16.msra.mxu0 %v217
  %324 = vmatprep.subr.bf16.mxu0 %v222
  %325 = vmatpush1.bf16.msra.mxu0 %v221
  %326 = vmatprep.subr.bf16.mxu0 %v226
  %327 = vmatpush1.bf16.msra.mxu0 %v225
  %328 = vmatprep.subr.bf16.mxu0 %v230
  %329 = vmatpush1.bf16.msra.mxu0 %v229
  %330 = vmatprep.subr.bf16.mxu0 %v234
  %331 = vmatpush1.bf16.msra.mxu0 %v233
  %332 = vmatprep.subr.bf16.mxu0 %v238
  %333 = vmatpush1.bf16.msra.mxu0 %v237
  %334 = vmatprep.subr.bf16.mxu0 %v242
  %335 = vmatpush1.bf16.msra.mxu0 %v241
  %336 = vmatprep.subr.bf16.mxu0 %v246
  %337 = vmatpush1.bf16.msra.mxu0 %v245
  %338 = vmatprep.subr.bf16.mxu0 0
  %339 = vmatpush1.bf16.msra.mxu0 0
  %340 = vmatprep.subr.bf16.mxu0 0
  %341 = vmatpush1.bf16.msra.mxu0 0
  %342 = vmatprep.subr.bf16.mxu0 0
  %343 = vmatpush1.bf16.msra.mxu0 0
  %344 = vmatprep.subr.bf16.mxu0 0
  %345 = vmatpush1.bf16.msra.mxu0 0
  %346 = vmatprep.subr.bf16.mxu0 0
  %347 = vmatpush1.bf16.msra.mxu0 0
  %348 = vmatprep.subr.bf16.mxu0 0
  %349 = vmatpush1.bf16.msra.mxu0 0
  %350 = vmatprep.subr.bf16.mxu0 0
  %351 = vmatpush1.bf16.msra.mxu0 0
  %352 = vmatprep.subr.bf16.mxu0 0
  %353 = vmatpush1.bf16.msra.mxu0 0
  %354 = vmatprep.mubr.bf16.mxu0 0
  %355 = vmatmul.mubr.bf16.gmra.mrb[0].mxu0 %v64
  %v356 = vpop.f32.mrb[0].mxu0
  %v357 = vadd.f32 %v110, %v356
  %v358 = vpop.f32.mrb[0].mxu0
  %v359 = vadd.f32 %v114, %v358
  %v360 = vpop.f32.mrb[0].mxu0
  %v361 = vadd.f32 %v110, %v360
  %v362 = vpop.f32.mrb[0].mxu0
  %v363 = vadd.f32 %v114, %v362
  %364 = vdwg.mxu0
  %v365 = vmul.f32 %v314, 0.5
  %v366 = vmul.f32 %v316, 0.5
  %v367 = vmul.f32 %v357, 0.5
  %v368 = vmul.f32 %v359, 0.5
  %v369 = vmul.f32 %v318, 0.5
  %v370 = vmul.f32 %v320, 0.5
  %v371 = vmul.f32 %v361, 0.5
  %v372 = vmul.f32 %v363, 0.5
  %v373 = vmul.f32 %v314, %v314
  %v374 = vmul.f32 %v316, %v316
  %v375 = vmul.f32 %v357, %v357
  %v376 = vmul.f32 %v359, %v359
  %v377 = vmul.f32 %v318, %v318
  %v378 = vmul.f32 %v320, %v320
  %v379 = vmul.f32 %v361, %v361
  %v380 = vmul.f32 %v363, %v363
  %v381 = vmul.f32 %v314, %v373
  %v382 = vmul.f32 %v316, %v374
  %v383 = vmul.f32 %v357, %v375
  %v384 = vmul.f32 %v359, %v376
  %v385 = vmul.f32 %v318, %v377
  %v386 = vmul.f32 %v320, %v378
  %v387 = vmul.f32 %v361, %v379
  %v388 = vmul.f32 %v363, %v380
  %v389 = vmul.f32 %v381, 0.044715
  %v390 = vmul.f32 %v382, 0.044715
  %v391 = vmul.f32 %v383, 0.044715
  %v392 = vmul.f32 %v384, 0.044715
  %v393 = vmul.f32 %v385, 0.044715
  %v394 = vmul.f32 %v386, 0.044715
  %v395 = vmul.f32 %v387, 0.044715
  %v396 = vmul.f32 %v388, 0.044715
  %v397 = vadd.f32 %v314, %v389
  %v398 = vadd.f32 %v316, %v390
  %v399 = vadd.f32 %v357, %v391
  %v400 = vadd.f32 %v359, %v392
  %v401 = vadd.f32 %v318, %v393
  %v402 = vadd.f32 %v320, %v394
  %v403 = vadd.f32 %v361, %v395
  %v404 = vadd.f32 %v363, %v396
  %v405 = vmul.f32 %v397, 0.7978846
  %v406 = vmul.f32 %v398, 0.7978846
  %v407 = vmul.f32 %v399, 0.7978846
  %v408 = vmul.f32 %v400, 0.7978846
  %v409 = vmul.f32 %v401, 0.7978846
  %v410 = vmul.f32 %v402, 0.7978846
  %v411 = vmul.f32 %v403, 0.7978846
  %v412 = vmul.f32 %v404, 0.7978846
  %v413 = vtanh.pop %v405
  %v414 = vtanh.pop %v406
  %v415 = vtanh.pop %v407
  %v416 = vtanh.pop %v408
  %v417 = vtanh.pop %v409
  %v418 = vtanh.pop %v410
  %v419 = vtanh.pop %v411
  %v420 = vtanh.pop %v412
  %v421 = vadd.f32 %v413, 1.0
  %v422 = vadd.f32 %v414, 1.0
  %v423 = vadd.f32 %v415, 1.0
  %v424 = vadd.f32 %v416, 1.0
  %v425 = vadd.f32 %v417, 1.0
  %v426 = vadd.f32 %v418, 1.0
  %v427 = vadd.f32 %v419, 1.0
  %v428 = vadd.f32 %v420, 1.0
  %v429 = vmul.f32 %v365, %v421
  %v430 = vmul.f32 %v366, %v422
  %v431 = vmul.f32 %v367, %v423
  %v432 = vmul.f32 %v368, %v424
  %v433 = vmul.f32 %v369, %v425
  %v434 = vmul.f32 %v370, %v426
  %v435 = vmul.f32 %v371, %v427
  %v436 = vmul.f32 %v372, %v428
  %437 = vst [vmem:[%s5] sm:$0xff] %v429
  %438 = vst [vmem:[%s5 + $0x8] sm:$0xff] %v430
  %439 = vst [vmem:[%s5 + $0x10] sm:$0xff] %v431
  %440 = vst [vmem:[%s5 + $0x18] sm:$0xff] %v432
  %441 = vst [vmem:[%s5 + $0x20] sm:$0xff] %v433
  %442 = vst [vmem:[%s5 + $0x28] sm:$0xff] %v434
  %443 = vst [vmem:[%s5 + $0x30] sm:$0xff] %v435
  %444 = vst [vmem:[%s5 + $0x38] sm:$0xff] %v436
  // Predicated region
  $region22: #{autoencoder_forward.26} parent=0 // pred_check
    _
  $region23: #{autoencoder_forward.26} parent=0 // pred_check_branch
    %446 = sbr.rel (0) target = $region25
  $region24: #{autoencoder_forward.26} parent=0 // pred_region
    _
  $region25: #{autoencoder_forward.26} parent=0 // pred_fallthru
    _
  // Predicated region
  $region26: #{autoencoder_forward.26} parent=0 // pred_check
    _
  $region27: #{autoencoder_forward.26} parent=0 // pred_check_branch
    %448 = sbr.rel (0) target = $region29
  $region28: #{autoencoder_forward.26} parent=0 // pred_region
    _
  $region29: #{autoencoder_forward.26} parent=0 // pred_fallthru
    _

// kernel: autoencoder_forward.33
$region0: #{autoencoder_forward.33}
  #allocation0 [shape = 'u32[]', space=smem, size = 0x4, offset = 0x4, fixed_abs, tag = 'smem constant byte address 0x4 - core index']
  #allocation1 [shape = 'u32[144,128]{1,0:T(1,128)}', space=vmem, size = 0x12000, scoped, tag = 'internal scratch']
  %s0 = inlined_call_operand.vmem [shape: f32[16,128], index: 0, kind: input, shape index: {}]
  %s1 = inlined_call_operand.vmem [shape: f32[1,128], index: 1, kind: input, shape index: {}]
  %s2 = inlined_call_operand.vmem [shape: f32[1,128], index: 2, kind: input, shape index: {}]
  %s3 = inlined_call_operand.vmem [shape: f32[16,128], index: 3, kind: output, shape index: {}]
  %s4 = sld [smem:[#allocation0]]
  $region22: #{autoencoder_forward.33} parent=0
    _
  %s6 = ssub.s32 1, %s4
  %s7 = scalar_select 0, %s6, %s4
  // Predicated region
  $region2: #{autoencoder_forward.33} parent=0 // pred_check
    _
  $region3: #{autoencoder_forward.33} parent=0 // pred_check_branch
    %9 = sbr.rel (0) target = $region5
  $region4: #{autoencoder_forward.33} parent=0 // pred_region
    _
  $region5: #{autoencoder_forward.33} parent=0 // pred_fallthru
    _
  // Predicated region
  $region6: #{autoencoder_forward.33} parent=0 // pred_check
    _
  $region7: #{autoencoder_forward.33} parent=0 // pred_check_branch
    %11 = sbr.rel (0) target = $region9
  $region8: #{autoencoder_forward.33} parent=0 // pred_region
    _
  $region9: #{autoencoder_forward.33} parent=0 // pred_fallthru
    _
  // Predicated region
  $region10: #{autoencoder_forward.33} parent=0 // pred_check
    _
  $region11: #{autoencoder_forward.33} parent=0 // pred_check_branch
    %13 = sbr.rel (0) target = $region13
  $region12: #{autoencoder_forward.33} parent=0 // pred_region
    _
  $region13: #{autoencoder_forward.33} parent=0 // pred_fallthru
    _
  %v14 = vld [vmem:[%s0] sm:$0xff]
  %v15 = vld [vmem:[%s0 + $0x8] sm:$0xff]
  %16 = vadd.xlane.f32.xlu0 %v14
  %v17 = vpop.xlane.xlu0 %16
  %18 = vadd.xlane.f32.xlu0 %v15
  %v19 = vpop.xlane.xlu0 %18
  %v20 = vrcp.pop 128.0
  %v21 = vmul.f32 %v17, %v20
  %v22 = vmul.f32 %v19, %v20
  %v23 = vsub.f32 %v14, %v21
  %v24 = vsub.f32 %v15, %v22
  %v25 = vmul.f32 %v23, %v23
  %v26 = vmul.f32 %v24, %v24
  %27 = vadd.xlane.f32.xlu0 %v25
  %v28 = vpop.xlane.xlu0 %27
  %29 = vadd.xlane.f32.xlu0 %v26
  %v30 = vpop.xlane.xlu0 %29
  %v31 = vmul.f32 %v28, %v20
  %v32 = vmul.f32 %v30, %v20
  %v33 = vadd.f32 %v31, 1e-05
  %v34 = vadd.f32 %v32, 1e-05
  %v35 = vrsqrt.pop %v33
  %v36 = vrsqrt.pop %v34
  %v37 = vmul.f32 %v23, %v35
  %v38 = vmul.f32 %v24, %v36
  %v39 = vld [vmem:[%s1] sm:$0x1]
  %v41 = vlaneseq
  %v42 = vshrl.u32 %v41, 7
  %v43 = vsub.s32 0, %v42
  %v44 = vrot.slane %v39, %v43
  %v46 = vmul.f32 %v37, %v44
  %v47 = vmul.f32 %v38, %v44
  %v48 = vld [vmem:[%s2] sm:$0x1]
  %v50 = vlaneseq
  %v51 = vshrl.u32 %v50, 7
  %v52 = vsub.s32 0, %v51
  %v53 = vrot.slane %v48, %v52
  %v55 = vadd.f32 %v46, %v53
  %v56 = vadd.f32 %v47, %v53
  %57 = vst [vmem:[%s3] sm:$0xff] %v55
  %58 = vst [vmem:[%s3 + $0x8] sm:$0xff] %v56
  // Predicated region
  $region14: #{autoencoder_forward.33} parent=0 // pred_check
    _
  $region15: #{autoencoder_forward.33} parent=0 // pred_check_branch
    %60 = sbr.rel (0) target = $region17
  $region16: #{autoencoder_forward.33} parent=0 // pred_region
    _
  $region17: #{autoencoder_forward.33} parent=0 // pred_fallthru
    _
  // Predicated region
  $region18: #{autoencoder_forward.33} parent=0 // pred_check
    _
  $region19: #{autoencoder_forward.33} parent=0 // pred_check_branch
    %62 = sbr.rel (0) target = $region21
  $region20: #{autoencoder_forward.33} parent=0 // pred_region
    _
  $region21: #{autoencoder_forward.33} parent=0 // pred_fallthru
    _

// kernel: autoencoder_forward.27
$region0: #{autoencoder_forward.27}
  #allocation0 [shape = 'u32[]', space=smem, size = 0x4, offset = 0x4, fixed_abs, tag = 'smem constant byte address 0x4 - core index']
  #allocation1 [shape = 'u32[144,128]{1,0:T(1,128)}', space=vmem, size = 0x12000, scoped, tag = 'internal scratch']
  %s0 = inlined_call_operand.vmem [shape: f32[16,512], index: 0, kind: input, shape index: {}]
  %s1 = inlined_call_operand.vmem [shape: bf16[512,128], index: 1, kind: input, shape index: {}]
  %s2 = inlined_call_operand.vmem [shape: f32[1,128], index: 2, kind: input, shape index: {}]
  %s3 = inlined_call_operand.vmem [shape: f32[16,128], index: 3, kind: input, shape index: {}]
  %s4 = inlined_call_operand.vmem [shape: f32[16,128], index: 4, kind: output, shape index: {}]
  %s5 = sld [smem:[#allocation0]]
  $region26: #{autoencoder_forward.27} parent=0
    _
  %s7 = ssub.s32 1, %s5
  %s8 = scalar_select 0, %s7, %s5
  // Predicated region
  $region2: #{autoencoder_forward.27} parent=0 // pred_check
    _
  $region3: #{autoencoder_forward.27} parent=0 // pred_check_branch
    %10 = sbr.rel (0) target = $region5
  $region4: #{autoencoder_forward.27} parent=0 // pred_region
    _
  $region5: #{autoencoder_forward.27} parent=0 // pred_fallthru
    _
  // Predicated region
  $region6: #{autoencoder_forward.27} parent=0 // pred_check
    _
  $region7: #{autoencoder_forward.27} parent=0 // pred_check_branch
    %12 = sbr.rel (0) target = $region9
  $region8: #{autoencoder_forward.27} parent=0 // pred_region
    _
  $region9: #{autoencoder_forward.27} parent=0 // pred_fallthru
    _
  // Predicated region
  $region10: #{autoencoder_forward.27} parent=0 // pred_check
    _
  $region11: #{autoencoder_forward.27} parent=0 // pred_check_branch
    %14 = sbr.rel (0) target = $region13
  $region12: #{autoencoder_forward.27} parent=0 // pred_region
    _
  $region13: #{autoencoder_forward.27} parent=0 // pred_fallthru
    _
  // Predicated region
  $region14: #{autoencoder_forward.27} parent=0 // pred_check
    _
  $region15: #{autoencoder_forward.27} parent=0 // pred_check_branch
    %16 = sbr.rel (0) target = $region17
  $region16: #{autoencoder_forward.27} parent=0 // pred_region
    _
  $region17: #{autoencoder_forward.27} parent=0 // pred_fallthru
    _
  %v18 = vld [vmem:[%s0] sm:$0xff]
  %v19 = vld [vmem:[%s0 + $0x8] sm:$0xff]
  %v20 = vld [vmem:[%s0 + $0x10] sm:$0xff]
  %v21 = vld [vmem:[%s0 + $0x18] sm:$0xff]
  %v22 = vld [vmem:[%s0 + $0x20] sm:$0xff]
  %v23 = vld [vmem:[%s0 + $0x28] sm:$0xff]
  %v24 = vld [vmem:[%s0 + $0x30] sm:$0xff]
  %v25 = vld [vmem:[%s0 + $0x38] sm:$0xff]
  %v26 = vpack.c.bf16 %v22, %v18
  %v27 = vpack.c.bf16 %v23, %v19
  %v28 = vpack.c.bf16 %v24, %v20
  %v29 = vpack.c.bf16 %v25, %v21
  %v30 = vld [vmem:[%s1] sm:$0xf]
  %v31 = vld [vmem:[%s1 + $0x4] sm:$0xf]
  %v32 = vld [vmem:[%s1 + $0x8] sm:$0xf]
  %v33 = vld [vmem:[%s1 + $0xc] sm:$0xf]
  %v34 = vld [vmem:[%s1 + $0x10] sm:$0xf]
  %v35 = vld [vmem:[%s1 + $0x14] sm:$0xf]
  %v36 = vld [vmem:[%s1 + $0x18] sm:$0xf]
  %v37 = vld [vmem:[%s1 + $0x1c] sm:$0xf]
  %v38 = vld [vmem:[%s1 + $0x20] sm:$0xf]
  %v39 = vld [vmem:[%s1 + $0x24] sm:$0xf]
  %v40 = vld [vmem:[%s1 + $0x28] sm:$0xf]
  %v41 = vld [vmem:[%s1 + $0x2c] sm:$0xf]
  %v42 = vld [vmem:[%s1 + $0x30] sm:$0xf]
  %v43 = vld [vmem:[%s1 + $0x34] sm:$0xf]
  %v44 = vld [vmem:[%s1 + $0x38] sm:$0xf]
  %v45 = vld [vmem:[%s1 + $0x3c] sm:$0xf]
  %v46 = vld [vmem:[%s1 + $0x40] sm:$0xf]
  %v47 = vld [vmem:[%s1 + $0x44] sm:$0xf]
  %v48 = vld [vmem:[%s1 + $0x48] sm:$0xf]
  %v49 = vld [vmem:[%s1 + $0x4c] sm:$0xf]
  %v50 = vld [vmem:[%s1 + $0x50] sm:$0xf]
  %v51 = vld [vmem:[%s1 + $0x54] sm:$0xf]
  %v52 = vld [vmem:[%s1 + $0x58] sm:$0xf]
  %v53 = vld [vmem:[%s1 + $0x5c] sm:$0xf]
  %v54 = vld [vmem:[%s1 + $0x60] sm:$0xf]
  %v55 = vld [vmem:[%s1 + $0x64] sm:$0xf]
  %v56 = vld [vmem:[%s1 + $0x68] sm:$0xf]
  %v57 = vld [vmem:[%s1 + $0x6c] sm:$0xf]
  %v58 = vld [vmem:[%s1 + $0x70] sm:$0xf]
  %v59 = vld [vmem:[%s1 + $0x74] sm:$0xf]
  %v60 = vld [vmem:[%s1 + $0x78] sm:$0xf]
  %v61 = vld [vmem:[%s1 + $0x7c] sm:$0xf]
  %v62 = vld [vmem:[%s1 + $0x80] sm:$0xf]
  %v63 = vld [vmem:[%s1 + $0x84] sm:$0xf]
  %v64 = vld [vmem:[%s1 + $0x88] sm:$0xf]
  %v65 = vld [vmem:[%s1 + $0x8c] sm:$0xf]
  %v66 = vld [vmem:[%s1 + $0x90] sm:$0xf]
  %v67 = vld [vmem:[%s1 + $0x94] sm:$0xf]
  %v68 = vld [vmem:[%s1 + $0x98] sm:$0xf]
  %v69 = vld [vmem:[%s1 + $0x9c] sm:$0xf]
  %v70 = vld [vmem:[%s1 + $0xa0] sm:$0xf]
  %v71 = vld [vmem:[%s1 + $0xa4] sm:$0xf]
  %v72 = vld [vmem:[%s1 + $0xa8] sm:$0xf]
  %v73 = vld [vmem:[%s1 + $0xac] sm:$0xf]
  %v74 = vld [vmem:[%s1 + $0xb0] sm:$0xf]
  %v75 = vld [vmem:[%s1 + $0xb4] sm:$0xf]
  %v76 = vld [vmem:[%s1 + $0xb8] sm:$0xf]
  %v77 = vld [vmem:[%s1 + $0xbc] sm:$0xf]
  %v78 = vld [vmem:[%s1 + $0xc0] sm:$0xf]
  %v79 = vld [vmem:[%s1 + $0xc4] sm:$0xf]
  %v80 = vld [vmem:[%s1 + $0xc8] sm:$0xf]
  %v81 = vld [vmem:[%s1 + $0xcc] sm:$0xf]
  %v82 = vld [vmem:[%s1 + $0xd0] sm:$0xf]
  %v83 = vld [vmem:[%s1 + $0xd4] sm:$0xf]
  %v84 = vld [vmem:[%s1 + $0xd8] sm:$0xf]
  %v85 = vld [vmem:[%s1 + $0xdc] sm:$0xf]
  %v86 = vld [vmem:[%s1 + $0xe0] sm:$0xf]
  %v87 = vld [vmem:[%s1 + $0xe4] sm:$0xf]
  %v88 = vld [vmem:[%s1 + $0xe8] sm:$0xf]
  %v89 = vld [vmem:[%s1 + $0xec] sm:$0xf]
  %v90 = vld [vmem:[%s1 + $0xf0] sm:$0xf]
  %v91 = vld [vmem:[%s1 + $0xf4] sm:$0xf]
  %v92 = vld [vmem:[%s1 + $0xf8] sm:$0xf]
  %v93 = vld [vmem:[%s1 + $0xfc] sm:$0xf]
  %v94 = vld [vmem:[%s2] sm:$0x1]
  %v96 = vlaneseq
  %v97 = vshrl.u32 %v96, 7
  %v98 = vsub.s32 0, %v97
  %v99 = vrot.slane %v94, %v98
  %v165 = vunpack.c.l.b16 %v30
  %v166 = vunpack.c.l.b16 %v31
  %v167 = vunpack.c.l.b16 %v32
  %v168 = vunpack.c.l.b16 %v33
  %v169 = vunpack.c.l.b16 %v34
  %v170 = vunpack.c.l.b16 %v35
  %v171 = vunpack.c.l.b16 %v36
  %v172 = vunpack.c.l.b16 %v37
  %v173 = vunpack.c.l.b16 %v38
  %v174 = vunpack.c.l.b16 %v39
  %v175 = vunpack.c.l.b16 %v40
  %v176 = vunpack.c.l.b16 %v41
  %v177 = vunpack.c.l.b16 %v42
  %v178 = vunpack.c.l.b16 %v43
  %v179 = vunpack.c.l.b16 %v44
  %v180 = vunpack.c.l.b16 %v45
  %v181 = vunpack.c.l.b16 %v46
  %v182 = vunpack.c.l.b16 %v47
  %v183 = vunpack.c.l.b16 %v48
  %v184 = vunpack.c.l.b16 %v49
  %v185 = vunpack.c.l.b16 %v50
  %v186 = vunpack.c.l.b16 %v51
  %v187 = vunpack.c.l.b16 %v52
  %v188 = vunpack.c.l.b16 %v53
  %v189 = vunpack.c.l.b16 %v54
  %v190 = vunpack.c.l.b16 %v55
  %v191 = vunpack.c.l.b16 %v56
  %v192 = vunpack.c.l.b16 %v57
  %v193 = vunpack.c.l.b16 %v58
  %v194 = vunpack.c.l.b16 %v59
  %v195 = vunpack.c.l.b16 %v60
  %v196 = vunpack.c.l.b16 %v61
  %v197 = vunpack.c.l.b16 %v62
  %v198 = vunpack.c.l.b16 %v63
  %v199 = vunpack.c.l.b16 %v64
  %v200 = vunpack.c.l.b16 %v65
  %v201 = vunpack.c.l.b16 %v66
  %v202 = vunpack.c.l.b16 %v67
  %v203 = vunpack.c.l.b16 %v68
  %v204 = vunpack.c.l.b16 %v69
  %v205 = vunpack.c.l.b16 %v70
  %v206 = vunpack.c.l.b16 %v71
  %v207 = vunpack.c.l.b16 %v72
  %v208 = vunpack.c.l.b16 %v73
  %v209 = vunpack.c.l.b16 %v74
  %v210 = vunpack.c.l.b16 %v75
  %v211 = vunpack.c.l.b16 %v76
  %v212 = vunpack.c.l.b16 %v77
  %v213 = vunpack.c.l.b16 %v78
  %v214 = vunpack.c.l.b16 %v79
  %v215 = vunpack.c.l.b16 %v80
  %v216 = vunpack.c.l.b16 %v81
  %v217 = vunpack.c.l.b16 %v82
  %v218 = vunpack.c.l.b16 %v83
  %v219 = vunpack.c.l.b16 %v84
  %v220 = vunpack.c.l.b16 %v85
  %v221 = vunpack.c.l.b16 %v86
  %v222 = vunpack.c.l.b16 %v87
  %v223 = vunpack.c.l.b16 %v88
  %v224 = vunpack.c.l.b16 %v89
  %v225 = vunpack.c.l.b16 %v90
  %v226 = vunpack.c.l.b16 %v91
  %v227 = vunpack.c.l.b16 %v92
  %v228 = vunpack.c.l.b16 %v93
  %v229 = vpack.c.b16 %v166, %v165
  %v230 = vpack.c.b16 %v168, %v167
  %v231 = vpack.c.b16 %v170, %v169
  %v232 = vpack.c.b16 %v172, %v171
  %v233 = vpack.c.b16 %v174, %v173
  %v234 = vpack.c.b16 %v176, %v175
  %v235 = vpack.c.b16 %v178, %v177
  %v236 = vpack.c.b16 %v180, %v179
  %v237 = vpack.c.b16 %v182, %v181
  %v238 = vpack.c.b16 %v184, %v183
  %v239 = vpack.c.b16 %v186, %v185
  %v240 = vpack.c.b16 %v188, %v187
  %v241 = vpack.c.b16 %v190, %v189
  %v242 = vpack.c.b16 %v192, %v191
  %v243 = vpack.c.b16 %v194, %v193
  %v244 = vpack.c.b16 %v196, %v195
  %v245 = vpack.c.b16 %v198, %v197
  %v246 = vpack.c.b16 %v200, %v199
  %v247 = vpack.c.b16 %v202, %v201
  %v248 = vpack.c.b16 %v204, %v203
  %v249 = vpack.c.b16 %v206, %v205
  %v250 = vpack.c.b16 %v208, %v207
  %v251 = vpack.c.b16 %v210, %v209
  %v252 = vpack.c.b16 %v212, %v211
  %v253 = vpack.c.b16 %v214, %v213
  %v254 = vpack.c.b16 %v216, %v215
  %v255 = vpack.c.b16 %v218, %v217
  %v256 = vpack.c.b16 %v220, %v219
  %v257 = vpack.c.b16 %v222, %v221
  %v258 = vpack.c.b16 %v224, %v223
  %v259 = vpack.c.b16 %v226, %v225
  %v260 = vpack.c.b16 %v228, %v227
  %293 = vmatprep.subr.bf16.mxu0 0
  %294 = vmatpush1.bf16.msra.mxu0 %v229
  %295 = vmatprep.subr.bf16.mxu0 0
  %296 = vmatpush1.bf16.msra.mxu0 %v230
  %297 = vmatprep.subr.bf16.mxu0 0
  %298 = vmatpush1.bf16.msra.mxu0 %v231
  %299 = vmatprep.subr.bf16.mxu0 0
  %300 = vmatpush1.bf16.msra.mxu0 %v232
  %301 = vmatprep.subr.bf16.mxu0 0
  %302 = vmatpush1.bf16.msra.mxu0 %v233
  %303 = vmatprep.subr.bf16.mxu0 0
  %304 = vmatpush1.bf16.msra.mxu0 %v234
  %305 = vmatprep.subr.bf16.mxu0 0
  %306 = vmatpush1.bf16.msra.mxu0 %v235
  %307 = vmatprep.subr.bf16.mxu0 0
  %308 = vmatpush1.bf16.msra.mxu0 %v236
  %309 = vmatprep.subr.bf16.mxu0 0
  %310 = vmatpush1.bf16.msra.mxu0 %v237
  %311 = vmatprep.subr.bf16.mxu0 0
  %312 = vmatpush1.bf16.msra.mxu0 %v238
  %313 = vmatprep.subr.bf16.mxu0 0
  %314 = vmatpush1.bf16.msra.mxu0 %v239
  %315 = vmatprep.subr.bf16.mxu0 0
  %316 = vmatpush1.bf16.msra.mxu0 %v240
  %317 = vmatprep.subr.bf16.mxu0 0
  %318 = vmatpush1.bf16.msra.mxu0 %v241
  %319 = vmatprep.subr.bf16.mxu0 0
  %320 = vmatpush1.bf16.msra.mxu0 %v242
  %321 = vmatprep.subr.bf16.mxu0 0
  %322 = vmatpush1.bf16.msra.mxu0 %v243
  %323 = vmatprep.subr.bf16.mxu0 0
  %324 = vmatpush1.bf16.msra.mxu0 %v244
  %325 = vmatprep.mubr.bf16.mxu0 %v27
  %326 = vmatmul.mubr.bf16.gmra.mrb[0].mxu0 %v26
  %v327 = vpop.f32.mrb[0].mxu0
  %v328 = vadd.f32 %v99, %v327
  %v329 = vpop.f32.mrb[0].mxu0
  %v330 = vpop.f32.mrb[0].mxu0
  %v331 = vadd.f32 %v99, %v330
  %v332 = vpop.f32.mrb[0].mxu0
  %333 = vdwg.mxu0
  %334 = vmatprep.subr.bf16.mxu0 0
  %335 = vmatpush1.bf16.msra.mxu0 %v245
  %336 = vmatprep.subr.bf16.mxu0 0
  %337 = vmatpush1.bf16.msra.mxu0 %v246
  %338 = vmatprep.subr.bf16.mxu0 0
  %339 = vmatpush1.bf16.msra.mxu0 %v247
  %340 = vmatprep.subr.bf16.mxu0 0
  %341 = vmatpush1.bf16.msra.mxu0 %v248
  %342 = vmatprep.subr.bf16.mxu0 0
  %343 = vmatpush1.bf16.msra.mxu0 %v249
  %344 = vmatprep.subr.bf16.mxu0 0
  %345 = vmatpush1.bf16.msra.mxu0 %v250
  %346 = vmatprep.subr.bf16.mxu0 0
  %347 = vmatpush1.bf16.msra.mxu0 %v251
  %348 = vmatprep.subr.bf16.mxu0 0
  %349 = vmatpush1.bf16.msra.mxu0 %v252
  %350 = vmatprep.subr.bf16.mxu0 0
  %351 = vmatpush1.bf16.msra.mxu0 %v253
  %352 = vmatprep.subr.bf16.mxu0 0
  %353 = vmatpush1.bf16.msra.mxu0 %v254
  %354 = vmatprep.subr.bf16.mxu0 0
  %355 = vmatpush1.bf16.msra.mxu0 %v255
  %356 = vmatprep.subr.bf16.mxu0 0
  %357 = vmatpush1.bf16.msra.mxu0 %v256
  %358 = vmatprep.subr.bf16.mxu0 0
  %359 = vmatpush1.bf16.msra.mxu0 %v257
  %360 = vmatprep.subr.bf16.mxu0 0
  %361 = vmatpush1.bf16.msra.mxu0 %v258
  %362 = vmatprep.subr.bf16.mxu0 0
  %363 = vmatpush1.bf16.msra.mxu0 %v259
  %364 = vmatprep.subr.bf16.mxu0 0
  %365 = vmatpush1.bf16.msra.mxu0 %v260
  %366 = vmatprep.mubr.bf16.mxu0 %v29
  %367 = vmatmul.mubr.bf16.gmra.mrb[0].mxu0 %v28
  %v368 = vpop.f32.mrb[0].mxu0
  %v369 = vadd.f32 %v328, %v368
  %v370 = vpop.f32.mrb[0].mxu0
  %v371 = vpop.f32.mrb[0].mxu0
  %v372 = vadd.f32 %v331, %v371
  %v373 = vpop.f32.mrb[0].mxu0
  %374 = vdwg.mxu0
  %v375 = vld [vmem:[%s3] sm:$0xff]
  %v376 = vld [vmem:[%s3 + $0x8] sm:$0xff]
  %v377 = vadd.f32 %v369, %v375
  %v378 = vadd.f32 %v372, %v376
  %379 = vst [vmem:[%s4] sm:$0xff] %v377
  %380 = vst [vmem:[%s4 + $0x8] sm:$0xff] %v378
  // Predicated region
  $region18: #{autoencoder_forward.27} parent=0 // pred_check
    _
  $region19: #{autoencoder_forward.27} parent=0 // pred_check_branch
    %382 = sbr.rel (0) target = $region21
  $region20: #{autoencoder_forward.27} parent=0 // pred_region
    _
  $region21: #{autoencoder_forward.27} parent=0 // pred_fallthru
    _
  // Predicated region
  $region22: #{autoencoder_forward.27} parent=0 // pred_check
    _
  $region23: #{autoencoder_forward.27} parent=0 // pred_check_branch
    %384 = sbr.rel (0) target = $region25
  $region24: #{autoencoder_forward.27} parent=0 // pred_region
    _
  $region25: #{autoencoder_forward.27} parent=0 // pred_fallthru
    _

// kernel: autoencoder_forward.34
$region0: #{autoencoder_forward.34}
  #allocation0 [shape = 'u32[]', space=smem, size = 0x4, offset = 0x4, fixed_abs, tag = 'smem constant byte address 0x4 - core index']
  #allocation1 [shape = 'u32[144,128]{1,0:T(1,128)}', space=vmem, size = 0x12000, scoped, tag = 'internal scratch']
  %s0 = inlined_call_operand.vmem [shape: f32[24,128], index: 0, kind: input, shape index: {}]
  %s1 = inlined_call_operand.vmem [shape: f32[1,128], index: 1, kind: input, shape index: {}]
  %s2 = inlined_call_operand.vmem [shape: f32[1,128], index: 2, kind: input, shape index: {}]
  %s3 = inlined_call_operand.vmem [shape: bf16[128,384], index: 3, kind: input, shape index: {}]
  %s4 = inlined_call_operand.vmem [shape: f32[1,384], index: 4, kind: input, shape index: {}]
  %s5 = inlined_call_operand.vmem [shape: f32[24,384], index: 5, kind: output, shape index: {}]
  %s6 = sld [smem:[#allocation0]]
  $region128: #{autoencoder_forward.34} parent=0
    _
  %s8 = ssub.s32 1, %s6
  %s9 = scalar_select 0, %s8, %s6
  $region1: #{autoencoder_forward.34} parent=0
    #allocation2 [shape = 'u8[65536]{0}', space=vmem, size = 0x10000, scoped, tag = 'input window, operand 3']
    #allocation3 [shape = 'u8[24576]{0}', space=vmem, size = 0x6000, scoped, tag = 'output window, operand 0']
    loop: start=0, step=1, limit=5
    $region2: #{autoencoder_forward.34} parent=1 // loop_pre_header
      _
    $region3: #{autoencoder_forward.34} parent=1 // loop_header
      %s11 = sphi 0, %s15
      %p12 = scmp.ge.s32.totalorder %s11, 5
      %s18 = sphi 0, %s30
      %s19 = sphi 0, %s26
      %s20 = sphi 0, %s18
      %s21 = sphi 0, %s19
      %s22 = sphi 0, %s20
      %s23 = sphi 0, %s21
      %s33 = sphi 0, %s35
      %s36 = sphi 0, %s33
      %s37 = sphi 0, %s36
      %s53 = sphi 0, %s37
      %s57 = sphi 0, %s57
      %s59 = sphi 0, %s57
      %s60 = sphi 0, %s59
      %s74 = sphi 0, %s60
      %s78 = sphi 0, %s78
      %s80 = sphi 0, %s78
      %s81 = sphi 0, %s80
      %s95 = sphi 0, %s81
      %s101 = sphi 0, %s103
      %s104 = sphi 0, %s101
      %s105 = sphi 0, %s104
      %s121 = sphi 0, %s105
      %s127 = sphi 0, %s129
      %s130 = sphi 0, %s127
      %s131 = sphi 0, %s130
      %s147 = sphi 0, %s131
      %s155 = sphi 0, %s157
      %s158 = sphi 0, %s155
      %s159 = sphi 0, %s158
      %s175 = sphi 0, %s159
    $region4: #{autoencoder_forward.34} parent=1 // loop_header_branch
      %14 = sbr.rel (%p12) target = $region8
    $region5: #{autoencoder_forward.34} parent=1 // loop_body
      %s16 = ssub.s32 %s11, 1
      %s17 = ssub.s32 %s11, 2
      %s24 = sadd.s32 1, %s19
      %p25 = scmp.ge.s32.totalorder %s24, 3
      %s26 = scalar_select %p25, 0, %s24
      %s27 = sadd.s32 1, %s18
      %s28 = scalar_select %p25, %s27, %s18
      %p29 = scmp.ge.s32.totalorder %s28, 1
      %s30 = scalar_select %p29, 0, %s28
      %s31 = ssub.s32 %s18, %s30
      %p32 = scmp.eq.s32.totalorder %s31, 0
      %s34 = sadd.s32 %s33, 1
      %s35 = scalar_select %p32, %s33, %s34
      %p38 = pneg %p32
      %p39 = scmp.eq.s32.totalorder %s11, 2
      %p40 = por %p38, %p39
      %p41 = scmp.ne.s32.totalorder %s33, %s36
      %p42 = scmp.eq.s32.totalorder %s11, 0
      %p43 = por %p41, %p42
      %p44 = scmp.ne.s32.totalorder %s33, %s36
      %p45 = scmp.eq.s32.totalorder %s16, 2
      %p46 = por %p44, %p45
      %p47 = scmp.ne.s32.totalorder %s36, %s37
      %p48 = scmp.eq.s32.totalorder %s16, 0
      %p49 = por %p47, %p48
      %p50 = scmp.ne.s32.totalorder %s36, %s37
      %p51 = scmp.eq.s32.totalorder %s17, 2
      %p52 = por %p50, %p51
      %p54 = scmp.ne.s32.totalorder %s37, %s53
      %p55 = scmp.eq.s32.totalorder %s17, 0
      %p56 = por %p54, %p55
      %s58 = sadd.s32 %s57, 1
      %p61 = scmp.eq.s32.totalorder %s11, 2
      %p62 = scmp.ne.s32.totalorder %s57, %s59
      %p63 = scmp.eq.s32.totalorder %s11, 0
      %p64 = por %p62, %p63
      %p65 = scmp.ne.s32.totalorder %s57, %s59
      %p66 = scmp.eq.s32.totalorder %s16, 2
      %p67 = por %p65, %p66
      %p68 = scmp.ne.s32.totalorder %s59, %s60
      %p69 = scmp.eq.s32.totalorder %s16, 0
      %p70 = por %p68, %p69
      %p71 = scmp.ne.s32.totalorder %s59, %s60
      %p72 = scmp.eq.s32.totalorder %s17, 2
      %p73 = por %p71, %p72
      %p75 = scmp.ne.s32.totalorder %s60, %s74
      %p76 = scmp.eq.s32.totalorder %s17, 0
      %p77 = por %p75, %p76
      %s79 = sadd.s32 %s78, 1
      %p82 = scmp.eq.s32.totalorder %s11, 2
      %p83 = scmp.ne.s32.totalorder %s78, %s80
      %p84 = scmp.eq.s32.totalorder %s11, 0
      %p85 = por %p83, %p84
      %p86 = scmp.ne.s32.totalorder %s78, %s80
      %p87 = scmp.eq.s32.totalorder %s16, 2
      %p88 = por %p86, %p87
      %p89 = scmp.ne.s32.totalorder %s80, %s81
      %p90 = scmp.eq.s32.totalorder %s16, 0
      %p91 = por %p89, %p90
      %p92 = scmp.ne.s32.totalorder %s80, %s81
      %p93 = scmp.eq.s32.totalorder %s17, 2
      %p94 = por %p92, %p93
      %p96 = scmp.ne.s32.totalorder %s81, %s95
      %p97 = scmp.eq.s32.totalorder %s17, 0
      %p98 = por %p96, %p97
      %s99 = ssub.s32 %s19, %s26
      %p100 = scmp.eq.s32.totalorder %s99, 0
      %s102 = sadd.s32 %s101, 1
      %s103 = scalar_select %p100, %s101, %s102
      %p106 = pneg %p100
      %p107 = scmp.eq.s32.totalorder %s11, 2
      %p108 = por %p106, %p107
      %p109 = scmp.ne.s32.totalorder %s101, %s104
      %p110 = scmp.eq.s32.totalorder %s11, 0
      %p111 = por %p109, %p110
      %p112 = scmp.ne.s32.totalorder %s101, %s104
      %p113 = scmp.eq.s32.totalorder %s16, 2
      %p114 = por %p112, %p113
      %p115 = scmp.ne.s32.totalorder %s104, %s105
      %p116 = scmp.eq.s32.totalorder %s16, 0
      %p117 = por %p115, %p116
      %p118 = scmp.ne.s32.totalorder %s104, %s105
      %p119 = scmp.eq.s32.totalorder %s17, 2
      %p120 = por %p118, %p119
      %p122 = scmp.ne.s32.totalorder %s105, %s121
      %p123 = scmp.eq.s32.totalorder %s17, 0
      %p124 = por %p122, %p123
      %s125 = ssub.s32 %s19, %s26
      %p126 = scmp.eq.s32.totalorder %s125, 0
      %s128 = sadd.s32 %s127, 1
      %s129 = scalar_select %p126, %s127, %s128
      %p132 = pneg %p126
      %p133 = scmp.eq.s32.totalorder %s11, 2
      %p134 = por %p132, %p133
      %p135 = scmp.ne.s32.totalorder %s127, %s130
      %p136 = scmp.eq.s32.totalorder %s11, 0
      %p137 = por %p135, %p136
      %p138 = scmp.ne.s32.totalorder %s127, %s130
      %p139 = scmp.eq.s32.totalorder %s16, 2
      %p140 = por %p138, %p139
      %p141 = scmp.ne.s32.totalorder %s130, %s131
      %p142 = scmp.eq.s32.totalorder %s16, 0
      %p143 = por %p141, %p142
      %p144 = scmp.ne.s32.totalorder %s130, %s131
      %p145 = scmp.eq.s32.totalorder %s17, 2
      %p146 = por %p144, %p145
      %p148 = scmp.ne.s32.totalorder %s131, %s147
      %p149 = scmp.eq.s32.totalorder %s17, 0
      %p150 = por %p148, %p149
      %s151 = ssub.s32 %s18, %s30
      %s152 = ssub.s32 %s19, %s26
      %s153 = sor.u32 %s151, %s152
      %p154 = scmp.eq.s32.totalorder %s153, 0
      %s156 = sadd.s32 %s155, 1
      %s157 = scalar_select %p154, %s155, %s156
      %p160 = pneg %p154
      %p161 = scmp.eq.s32.totalorder %s11, 2
      %p162 = por %p160, %p161
      %p163 = scmp.ne.s32.totalorder %s155, %s158
      %p164 = scmp.eq.s32.totalorder %s11, 0
      %p165 = por %p163, %p164
      %p166 = scmp.ne.s32.totalorder %s155, %s158
      %p167 = scmp.eq.s32.totalorder %s16, 2
      %p168 = por %p166, %p167
      %p169 = scmp.ne.s32.totalorder %s158, %s159
      %p170 = scmp.eq.s32.totalorder %s16, 0
      %p171 = por %p169, %p170
      %p172 = scmp.ne.s32.totalorder %s158, %s159
      %p173 = scmp.eq.s32.totalorder %s17, 2
      %p174 = por %p172, %p173
      %p176 = scmp.ne.s32.totalorder %s159, %s175
      %p177 = scmp.eq.s32.totalorder %s17, 0
      %p178 = por %p176, %p177
      %p179 = scmp.le.s32.totalorder 1, %s11
      %p180 = scmp.lt.s32.totalorder %s11, 4
      %p181 = pnand %p179, %p180
      %p182 = pneg %p181
      // Predicated region
      $region9: #{autoencoder_forward.34} parent=5 // pred_check
        _
      $region10: #{autoencoder_forward.34} parent=5 // pred_check_branch
        %184 = sbr.rel (%p181) target = $region12
      $region11: #{autoencoder_forward.34} parent=5 // pred_region
        %s185 = ssub.s32 %s11, 1
        // Predicated region
        $region13: #{autoencoder_forward.34} parent=11 // pred_check
          %p186 = pneg %p49
        $region14: #{autoencoder_forward.34} parent=11 // pred_check_branch
          %188 = sbr.rel (%p186) target = $region16
        $region15: #{autoencoder_forward.34} parent=11 // pred_region
          %s189 = smul.u32 3, %s20
          %p190 = scmp.lt.s32.totalorder %s189, 2
          %s191 = scalar_select %p190, %s189, 2
          %s192 = smul.addr %s191, 8
          %s193 = scalar_lea.vmem %s0, %s192
          %s194 = smul.u32 3, %s20
        $region16: #{autoencoder_forward.34} parent=11 // pred_fallthru
          _
        // Predicated region
        $region17: #{autoencoder_forward.34} parent=11 // pred_check
          %p195 = pneg %p70
        $region18: #{autoencoder_forward.34} parent=11 // pred_check_branch
          %197 = sbr.rel (%p195) target = $region20
        $region19: #{autoencoder_forward.34} parent=11 // pred_region
          _
        $region20: #{autoencoder_forward.34} parent=11 // pred_fallthru
          _
        // Predicated region
        $region21: #{autoencoder_forward.34} parent=11 // pred_check
          %p198 = pneg %p91
        $region22: #{autoencoder_forward.34} parent=11 // pred_check_branch
          %200 = sbr.rel (%p198) target = $region24
        $region23: #{autoencoder_forward.34} parent=11 // pred_region
          _
        $region24: #{autoencoder_forward.34} parent=11 // pred_fallthru
          _
      $region12: #{autoencoder_forward.34} parent=5 // pred_fallthru
        _
      %p201 = scmp.lt.s32.totalorder %s11, 3
      // Predicated region
      $region25: #{autoencoder_forward.34} parent=5 // pred_check
        %p202 = pneg %p201
      $region26: #{autoencoder_forward.34} parent=5 // pred_check_branch
        %204 = sbr.rel (%p202) target = $region28
      $region27: #{autoencoder_forward.34} parent=5 // pred_region
        // Predicated region
        $region29: #{autoencoder_forward.34} parent=27 // pred_check
          %p205 = pneg %p111
        $region30: #{autoencoder_forward.34} parent=27 // pred_check_branch
          %207 = sbr.rel (%p205) target = $region32
        $region31: #{autoencoder_forward.34} parent=27 // pred_region
          %s208 = sand.u32 %s101, 1
          %s209 = sand.u32 %s101, 1
          %s210 = smul.addr %s209, 64
          %s211 = scalar_lea.vmem [#allocation2], %s210
          %s212 = smul.addr %s19, 4
          %s213 = scalar_lea.vmem %s3, %s212
          // Predicated region
          $region33: #{autoencoder_forward.34} parent=31 // pred_check
            _
          $region34: #{autoencoder_forward.34} parent=31 // pred_check_branch
            %215 = sbr.rel (0) target = $region36
          $region35: #{autoencoder_forward.34} parent=31 // pred_region
            // Predicated region
            $region37: #{autoencoder_forward.34} parent=35 // pred_check
              _
            $region38: #{autoencoder_forward.34} parent=35 // pred_check_branch
              %217 = sbr.rel target = $region40
            $region39: #{autoencoder_forward.34} parent=35 // pred_region
              // Predicated region
              $region52: #{autoencoder_forward.34} parent=39 // pred_check
                _
              $region53: #{autoencoder_forward.34} parent=39 // pred_check_branch
                %262 = sbr.rel (0) target = $region55
              $region54: #{autoencoder_forward.34} parent=39 // pred_region
                loop: start=0, step=1, limit=1
                $region56: #{autoencoder_forward.34} parent=54 // loop_pre_header
                  _
                $region57: #{autoencoder_forward.34} parent=54 // loop_header
                  %s264 = sphi 0, %s268
                  %p265 = scmp.ge.s32.totalorder %s264, 1
                  %s269 = sphi %s213, %s213
                  %s270 = sphi %s211, %s211
                $region58: #{autoencoder_forward.34} parent=54 // loop_header_branch
                  %267 = sbr.rel (%p265) target = $region62
                $region59: #{autoencoder_forward.34} parent=54 // loop_body
                  _
                $region60: #{autoencoder_forward.34} parent=54 // loop_footer
                  %s268 = sadd.s32 1, %s264
                $region61: #{autoencoder_forward.34} parent=54 // loop_footer_branch
                  %263 = sbr.rel target = $region57
                $region62: #{autoencoder_forward.34} parent=54 // loop_exit
                  _
                loop: start=0, step=1, limit=1
                $region63: #{autoencoder_forward.34} parent=54 // loop_pre_header
                  _
                $region64: #{autoencoder_forward.34} parent=54 // loop_header
                  %s273 = sphi 0, %s277
                  %p274 = scmp.ge.s32.totalorder %s273, 1
                  %s278 = sphi %s213, %s213
                  %s279 = sphi %s211, %s211
                $region65: #{autoencoder_forward.34} parent=54 // loop_header_branch
                  %276 = sbr.rel (%p274) target = $region69
                $region66: #{autoencoder_forward.34} parent=54 // loop_body
                  %v280 = vld [vmem:[%s278] sm:$0xf]
                  %281 = vst [vmem:[%s279] sm:$0xf] %v280
                  %v282 = vld [vmem:[%s278 + $0xc] sm:$0xf]
                  %283 = vst [vmem:[%s279 + $0x4] sm:$0xf] %v282
                  %v284 = vld [vmem:[%s278 + $0x18] sm:$0xf]
                  %285 = vst [vmem:[%s279 + $0x8] sm:$0xf] %v284
                  %v286 = vld [vmem:[%s278 + $0x24] sm:$0xf]
                  %287 = vst [vmem:[%s279 + $0xc] sm:$0xf] %v286
                  %v288 = vld [vmem:[%s278 + $0x30] sm:$0xf]
                  %289 = vst [vmem:[%s279 + $0x10] sm:$0xf] %v288
                  %v290 = vld [vmem:[%s278 + $0x3c] sm:$0xf]
                  %291 = vst [vmem:[%s279 + $0x14] sm:$0xf] %v290
                  %v292 = vld [vmem:[%s278 + $0x48] sm:$0xf]
                  %293 = vst [vmem:[%s279 + $0x18] sm:$0xf] %v292
                  %v294 = vld [vmem:[%s278 + $0x54] sm:$0xf]
                  %295 = vst [vmem:[%s279 + $0x1c] sm:$0xf] %v294
                  %v296 = vld [vmem:[%s278 + $0x60] sm:$0xf]
                  %297 = vst [vmem:[%s279 + $0x20] sm:$0xf] %v296
                  %v298 = vld [vmem:[%s278 + $0x6c] sm:$0xf]
                  %299 = vst [vmem:[%s279 + $0x24] sm:$0xf] %v298
                  %v300 = vld [vmem:[%s278 + $0x78] sm:$0xf]
                  %301 = vst [vmem:[%s279 + $0x28] sm:$0xf] %v300
                  %v302 = vld [vmem:[%s278 + $0x84] sm:$0xf]
                  %303 = vst [vmem:[%s279 + $0x2c] sm:$0xf] %v302
                  %v304 = vld [vmem:[%s278 + $0x90] sm:$0xf]
                  %305 = vst [vmem:[%s279 + $0x30] sm:$0xf] %v304
                  %v306 = vld [vmem:[%s278 + $0x9c] sm:$0xf]
                  %307 = vst [vmem:[%s279 + $0x34] sm:$0xf] %v306
                  %v308 = vld [vmem:[%s278 + $0xa8] sm:$0xf]
                  %309 = vst [vmem:[%s279 + $0x38] sm:$0xf] %v308
                  %v310 = vld [vmem:[%s278 + $0xb4] sm:$0xf]
                  %311 = vst [vmem:[%s279 + $0x3c] sm:$0xf] %v310
                $region67: #{autoencoder_forward.34} parent=54 // loop_footer
                  %s277 = sadd.s32 1, %s273
                $region68: #{autoencoder_forward.34} parent=54 // loop_footer_branch
                  %272 = sbr.rel target = $region64
                $region69: #{autoencoder_forward.34} parent=54 // loop_exit
                  _
              $region55: #{autoencoder_forward.34} parent=39 // pred_fallthru
                _
            $region40: #{autoencoder_forward.34} parent=35 // pred_fallthru
              _
            // Predicated region
            $region41: #{autoencoder_forward.34} parent=35 // pred_check
              _
            $region42: #{autoencoder_forward.34} parent=35 // pred_check_branch
              %219 = sbr.rel (0) target = $region44
            $region43: #{autoencoder_forward.34} parent=35 // pred_region
              loop: start=0, step=1, limit=1
              $region45: #{autoencoder_forward.34} parent=43 // loop_pre_header
                _
              $region46: #{autoencoder_forward.34} parent=43 // loop_header
                %s222 = sphi 0, %s226
                %p223 = scmp.ge.s32.totalorder %s222, 1
                %s227 = sphi %s213, %s213
                %s228 = sphi %s211, %s211
              $region47: #{autoencoder_forward.34} parent=43 // loop_header_branch
                %225 = sbr.rel (%p223) target = $region51
              $region48: #{autoencoder_forward.34} parent=43 // loop_body
                %v229 = vld [vmem:[%s227] sm:$0xf]
                %230 = vst [vmem:[%s228] sm:$0xf] %v229
                %v231 = vld [vmem:[%s227 + $0xc] sm:$0xf]
                %232 = vst [vmem:[%s228 + $0x4] sm:$0xf] %v231
                %v233 = vld [vmem:[%s227 + $0x18] sm:$0xf]
                %234 = vst [vmem:[%s228 + $0x8] sm:$0xf] %v233
                %v235 = vld [vmem:[%s227 + $0x24] sm:$0xf]
                %236 = vst [vmem:[%s228 + $0xc] sm:$0xf] %v235
                %v237 = vld [vmem:[%s227 + $0x30] sm:$0xf]
                %238 = vst [vmem:[%s228 + $0x10] sm:$0xf] %v237
                %v239 = vld [vmem:[%s227 + $0x3c] sm:$0xf]
                %240 = vst [vmem:[%s228 + $0x14] sm:$0xf] %v239
                %v241 = vld [vmem:[%s227 + $0x48] sm:$0xf]
                %242 = vst [vmem:[%s228 + $0x18] sm:$0xf] %v241
                %v243 = vld [vmem:[%s227 + $0x54] sm:$0xf]
                %244 = vst [vmem:[%s228 + $0x1c] sm:$0xf] %v243
                %v245 = vld [vmem:[%s227 + $0x60] sm:$0xf]
                %246 = vst [vmem:[%s228 + $0x20] sm:$0xf] %v245
                %v247 = vld [vmem:[%s227 + $0x6c] sm:$0xf]
                %248 = vst [vmem:[%s228 + $0x24] sm:$0xf] %v247
                %v249 = vld [vmem:[%s227 + $0x78] sm:$0xf]
                %250 = vst [vmem:[%s228 + $0x28] sm:$0xf] %v249
                %v251 = vld [vmem:[%s227 + $0x84] sm:$0xf]
                %252 = vst [vmem:[%s228 + $0x2c] sm:$0xf] %v251
                %v253 = vld [vmem:[%s227 + $0x90] sm:$0xf]
                %254 = vst [vmem:[%s228 + $0x30] sm:$0xf] %v253
                %v255 = vld [vmem:[%s227 + $0x9c] sm:$0xf]
                %256 = vst [vmem:[%s228 + $0x34] sm:$0xf] %v255
                %v257 = vld [vmem:[%s227 + $0xa8] sm:$0xf]
                %258 = vst [vmem:[%s228 + $0x38] sm:$0xf] %v257
                %v259 = vld [vmem:[%s227 + $0xb4] sm:$0xf]
                %260 = vst [vmem:[%s228 + $0x3c] sm:$0xf] %v259
              $region49: #{autoencoder_forward.34} parent=43 // loop_footer
                %s226 = sadd.s32 1, %s222
              $region50: #{autoencoder_forward.34} parent=43 // loop_footer_branch
                %221 = sbr.rel target = $region46
              $region51: #{autoencoder_forward.34} parent=43 // loop_exit
                _
            $region44: #{autoencoder_forward.34} parent=35 // pred_fallthru
              _
          $region36: #{autoencoder_forward.34} parent=31 // pred_fallthru
            _
          %312 = vnop
        $region32: #{autoencoder_forward.34} parent=27 // pred_fallthru
          _
        // Predicated region
        $region70: #{autoencoder_forward.34} parent=27 // pred_check
          %p313 = pneg %p137
        $region71: #{autoencoder_forward.34} parent=27 // pred_check_branch
          %315 = sbr.rel (%p313) target = $region73
        $region72: #{autoencoder_forward.34} parent=27 // pred_region
          %p316 = scmp.lt.s32.totalorder %s19, 2
          %s317 = scalar_select %p316, %s19, 2
          %s318 = scalar_lea.vmem %s4, %s317
        $region73: #{autoencoder_forward.34} parent=27 // pred_fallthru
          _
      $region28: #{autoencoder_forward.34} parent=5 // pred_fallthru
        _
      %p319 = scmp.le.s32.totalorder 1, %s11
      %p320 = scmp.lt.s32.totalorder %s11, 4
      %p321 = pnand %p319, %p320
      %p322 = pneg %p321
      // Predicated region
      $region74: #{autoencoder_forward.34} parent=5 // pred_check
        _
      $region75: #{autoencoder_forward.34} parent=5 // pred_check_branch
        %324 = sbr.rel (%p321) target = $region77
      $region76: #{autoencoder_forward.34} parent=5 // pred_region
        %s325 = ssub.s32 %s11, 1
        %s326 = sand.u32 %s104, 1
        %s327 = sand.u32 %s104, 1
        %s328 = smul.addr %s327, 64
        %s329 = scalar_lea.vmem [#allocation2], %s328
        // Predicated region
        $region78: #{autoencoder_forward.34} parent=76 // pred_check
          %p330 = pneg %p117
        $region79: #{autoencoder_forward.34} parent=76 // pred_check_branch
          %332 = sbr.rel (%p330) target = $region81
        $region80: #{autoencoder_forward.34} parent=76 // pred_region
          _
        $region81: #{autoencoder_forward.34} parent=76 // pred_fallthru
          _
        %s333 = smul.u32 3, %s20
        %p334 = scmp.lt.s32.totalorder %s333, 2
        %s335 = scalar_select %p334, %s333, 2
        %s336 = smul.addr %s335, 8
        %s337 = scalar_lea.vmem %s0, %s336
        %p338 = pneg %p49
        %p339 = pneg %p46
        %p340 = pneg %p70
        %p341 = pneg %p67
        %p342 = pneg %p91
        %p343 = pneg %p88
        %s344 = sand.u32 %s104, 1
        %s345 = sand.u32 %s104, 1
        %s346 = smul.addr %s345, 64
        %s347 = scalar_lea.vmem [#allocation2], %s346
        %p348 = pneg %p117
        %p349 = pneg %p114
        %p350 = scmp.lt.s32.totalorder %s21, 2
        %s351 = scalar_select %p350, %s21, 2
        %s352 = scalar_lea.vmem %s4, %s351
        %p353 = pneg %p143
        %p354 = pneg %p140
        %p355 = pneg %p171
        %p356 = pneg %p168
        %s357 = sand.u32 %s158, 1
        %s358 = sand.u32 %s158, 1
        %s359 = smul.addr %s358, 24
        %s360 = scalar_lea.vmem [#allocation3], %s359
        %s361 = smul.u32 3, %s20
        %p362 = scmp.lt.s32.totalorder %s361, 2
        %s363 = scalar_select %p362, %s361, 2
        %s364 = smul.addr %s363, 8
        %s365 = scalar_lea.vmem %s0, %s364
        %s366 = smul.u32 3, %s20
        %p367 = scmp.lt.s32.totalorder %s21, 2
        %s368 = scalar_select %p367, %s21, 2
        %s369 = scalar_lea.vmem %s4, %s368
        %s370 = smul.u32 3, %s20
        %v372 = vld [vmem:[%s365] sm:$0xff]
        %v373 = vld [vmem:[%s365 + $0x8] sm:$0xff]
        %v374 = vld [vmem:[%s365 + $0x10] sm:$0xff]
        %375 = vadd.xlane.f32.xlu0 %v372
        %v376 = vpop.xlane.xlu0 %375
        %377 = vadd.xlane.f32.xlu0 %v373
        %v378 = vpop.xlane.xlu0 %377
        %379 = vadd.xlane.f32.xlu0 %v374
        %v380 = vpop.xlane.xlu0 %379
        %v381 = vrcp.pop 128.0
        %v382 = vmul.f32 %v376, %v381
        %v383 = vmul.f32 %v378, %v381
        %v384 = vmul.f32 %v380, %v381
        %v385 = vsub.f32 %v372, %v382
        %v386 = vsub.f32 %v373, %v383
        %v387 = vsub.f32 %v374, %v384
        %v388 = vmul.f32 %v385, %v385
        %v389 = vmul.f32 %v386, %v386
        %v390 = vmul.f32 %v387, %v387
        %391 = vadd.xlane.f32.xlu0 %v388
        %v392 = vpop.xlane.xlu0 %391
        %393 = vadd.xlane.f32.xlu0 %v389
        %v394 = vpop.xlane.xlu0 %393
        %395 = vadd.xlane.f32.xlu0 %v390
        %v396 = vpop.xlane.xlu0 %395
        %v397 = vmul.f32 %v392, %v381
        %v398 = vmul.f32 %v394, %v381
        %v399 = vmul.f32 %v396, %v381
        %v400 = vadd.f32 %v397, 1e-05
        %v401 = vadd.f32 %v398, 1e-05
        %v402 = vadd.f32 %v399, 1e-05
        %v403 = vrsqrt.pop %v400
        %v404 = vrsqrt.pop %v401
        %v405 = vrsqrt.pop %v402
        %v406 = vmul.f32 %v385, %v403
        %v407 = vmul.f32 %v386, %v404
        %v408 = vmul.f32 %v387, %v405
        %v409 = vld [vmem:[%s1] sm:$0x1]
        %v411 = vlaneseq
        %v412 = vshrl.u32 %v411, 7
        %v413 = vsub.s32 0, %v412
        %v414 = vrot.slane %v409, %v413
        %v416 = vmul.f32 %v406, %v414
        %v417 = vmul.f32 %v407, %v414
        %v418 = vmul.f32 %v408, %v414
        %v419 = vld [vmem:[%s2] sm:$0x1]
        %v421 = vlaneseq
        %v422 = vshrl.u32 %v421, 7
        %v423 = vsub.s32 0, %v422
        %v424 = vrot.slane %v419, %v423
        %v426 = vadd.f32 %v416, %v424
        %v427 = vadd.f32 %v417, %v424
        %v428 = vadd.f32 %v418, %v424
        %v429 = vpack.c.bf16 %v427, %v426
        %v430 = vpack.c.bf16 %v428, %v428
        %v431 = vld [vmem:[%s329] sm:$0xf]
        %v432 = vld [vmem:[%s329 + $0x4] sm:$0xf]
        %v433 = vld [vmem:[%s329 + $0x8] sm:$0xf]
        %v434 = vld [vmem:[%s329 + $0xc] sm:$0xf]
        %v435 = vld [vmem:[%s329 + $0x10] sm:$0xf]
        %v436 = vld [vmem:[%s329 + $0x14] sm:$0xf]
        %v437 = vld [vmem:[%s329 + $0x18] sm:$0xf]
        %v438 = vld [vmem:[%s329 + $0x1c] sm:$0xf]
        %v439 = vld [vmem:[%s329 + $0x20] sm:$0xf]
        %v440 = vld [vmem:[%s329 + $0x24] sm:$0xf]
        %v441 = vld [vmem:[%s329 + $0x28] sm:$0xf]
        %v442 = vld [vmem:[%s329 + $0x2c] sm:$0xf]
        %v443 = vld [vmem:[%s329 + $0x30] sm:$0xf]
        %v444 = vld [vmem:[%s329 + $0x34] sm:$0xf]
        %v445 = vld [vmem:[%s329 + $0x38] sm:$0xf]
        %v446 = vld [vmem:[%s329 + $0x3c] sm:$0xf]
        %v447 = vld [vmem:[%s369] sm:$0x1]
        %v449 = vlaneseq
        %v450 = vshrl.u32 %v449, 7
        %v451 = vsub.s32 0, %v450
        %v452 = vrot.slane %v447, %v451
        %v470 = vunpack.c.l.b16 %v431
        %v471 = vunpack.c.l.b16 %v432
        %v472 = vunpack.c.l.b16 %v433
        %v473 = vunpack.c.l.b16 %v434
        %v474 = vunpack.c.l.b16 %v435
        %v475 = vunpack.c.l.b16 %v436
        %v476 = vunpack.c.l.b16 %v437
        %v477 = vunpack.c.l.b16 %v438
        %v478 = vunpack.c.l.b16 %v439
        %v479 = vunpack.c.l.b16 %v440
        %v480 = vunpack.c.l.b16 %v441
        %v481 = vunpack.c.l.b16 %v442
        %v482 = vunpack.c.l.b16 %v443
        %v483 = vunpack.c.l.b16 %v444
        %v484 = vunpack.c.l.b16 %v445
        %v485 = vunpack.c.l.b16 %v446
        %v486 = vpack.c.b16 %v471, %v470
        %v487 = vpack.c.b16 %v473, %v472
        %v488 = vpack.c.b16 %v475, %v474
        %v489 = vpack.c.b16 %v477, %v476
        %v490 = vpack.c.b16 %v479, %v478
        %v491 = vpack.c.b16 %v481, %v480
        %v492 = vpack.c.b16 %v483, %v482
        %v493 = vpack.c.b16 %v485, %v484
        %502 = vmatprep.subr.bf16.mxu0 0
        %503 = vmatpush1.bf16.msra.mxu0 %v486
        %504 = vmatprep.subr.bf16.mxu0 0
        %505 = vmatpush1.bf16.msra.mxu0 %v487
        %506 = vmatprep.subr.bf16.mxu0 0
        %507 = vmatpush1.bf16.msra.mxu0 %v488
        %508 = vmatprep.subr.bf16.mxu0 0
        %509 = vmatpush1.bf16.msra.mxu0 %v489
        %510 = vmatprep.subr.bf16.mxu0 0
        %511 = vmatpush1.bf16.msra.mxu0 %v490
        %512 = vmatprep.subr.bf16.mxu0 0
        %513 = vmatpush1.bf16.msra.mxu0 %v491
        %514 = vmatprep.subr.bf16.mxu0 0
        %515 = vmatpush1.bf16.msra.mxu0 %v492
        %516 = vmatprep.subr.bf16.mxu0 0
        %517 = vmatpush1.bf16.msra.mxu0 %v493
        %518 = vmatprep.subr.bf16.mxu0 0
        %519 = vmatpush1.bf16.msra.mxu0 0
        %520 = vmatprep.subr.bf16.mxu0 0
        %521 = vmatpush1.bf16.msra.mxu0 0
        %522 = vmatprep.subr.bf16.mxu0 0
        %523 = vmatpush1.bf16.msra.mxu0 0
        %524 = vmatprep.subr.bf16.mxu0 0
        %525 = vmatpush1.bf16.msra.mxu0 0
        %526 = vmatprep.subr.bf16.mxu0 0
        %527 = vmatpush1.bf16.msra.mxu0 0
        %528 = vmatprep.subr.bf16.mxu0 0
        %529 = vmatpush1.bf16.msra.mxu0 0
        %530 = vmatprep.subr.bf16.mxu0 0
        %531 = vmatpush1.bf16.msra.mxu0 0
        %532 = vmatprep.subr.bf16.mxu0 0
        %533 = vmatpush1.bf16.msra.mxu0 0
        %534 = vmatprep.mubr.bf16.mxu0 0
        %535 = vmatmul.mubr.bf16.gmra.mrb[0].mxu0 %v429
        %v536 = vpop.f32.mrb[0].mxu0
        %v537 = vadd.f32 %v452, %v536
        %v538 = vpop.f32.mrb[0].mxu0
        %v539 = vpop.f32.mrb[0].mxu0
        %v540 = vadd.f32 %v452, %v539
        %v541 = vpop.f32.mrb[0].mxu0
        %542 = vmatprep.mubr.bf16.mxu0 0
        %543 = vmatmul.mubr.bf16.gmra.mrb[0].mxu0 %v430
        %v544 = vpop.f32.mrb[0].mxu0
        %v545 = vadd.f32 %v452, %v544
        %v546 = vpop.f32.mrb[0].mxu0
        %v547 = vpop.f32.mrb[0].mxu0
        %v548 = vpop.f32.mrb[0].mxu0
        %549 = vdwg.mxu0
        %550 = vst [vmem:[%s360] sm:$0xff] %v537
        %551 = vst [vmem:[%s360 + $0x8] sm:$0xff] %v540
        %552 = vst [vmem:[%s360 + $0x10] sm:$0xff] %v545
        %s553 = sand.u32 %s158, 1
        %s554 = sand.u32 %s158, 1
        %s555 = smul.addr %s554, 24
        %s556 = scalar_lea.vmem [#allocation3], %s555
        // Predicated region
        $region82: #{autoencoder_forward.34} parent=76 // pred_check
          %p557 = pneg %p168
        $region83: #{autoencoder_forward.34} parent=76 // pred_check_branch
          %559 = sbr.rel (%p557) target = $region85
        $region84: #{autoencoder_forward.34} parent=76 // pred_region
          %s560 = smul.u32 3, %s20
          %s561 = smul.addr %s560, 3
          %s562 = sadd.s32 %s21, %s561
          %s563 = smul.addr %s562, 8
          %s564 = scalar_lea.vmem %s5, %s563
          // Predicated region
          $region86: #{autoencoder_forward.34} parent=84 // pred_check
            _
          $region87: #{autoencoder_forward.34} parent=84 // pred_check_branch
            %566 = sbr.rel (0) target = $region89
          $region88: #{autoencoder_forward.34} parent=84 // pred_region
            // Predicated region
            $region90: #{autoencoder_forward.34} parent=88 // pred_check
              _
            $region91: #{autoencoder_forward.34} parent=88 // pred_check_branch
              %568 = sbr.rel (0) target = $region93
            $region92: #{autoencoder_forward.34} parent=88 // pred_region
              // Predicated region
              $region105: #{autoencoder_forward.34} parent=92 // pred_check
                _
              $region106: #{autoencoder_forward.34} parent=92 // pred_check_branch
                %587 = sbr.rel (0) target = $region108
              $region107: #{autoencoder_forward.34} parent=92 // pred_region
                loop: start=0, step=1, limit=1
                $region109: #{autoencoder_forward.34} parent=107 // loop_pre_header
                  _
                $region110: #{autoencoder_forward.34} parent=107 // loop_header
                  %s589 = sphi 0, %s593
                  %p590 = scmp.ge.s32.totalorder %s589, 1
                  %s594 = sphi %s556, %s556
                  %s595 = sphi %s564, %s564
                $region111: #{autoencoder_forward.34} parent=107 // loop_header_branch
                  %592 = sbr.rel (%p590) target = $region115
                $region112: #{autoencoder_forward.34} parent=107 // loop_body
                  %v596 = vld [vmem:[%s594] sm:$0xff]
                  %597 = vst [vmem:[%s595] sm:$0xff] %v596
                  %v598 = vld [vmem:[%s594 + $0x8] sm:$0xff]
                  %599 = vst [vmem:[%s595 + $0x18] sm:$0xff] %v598
                  %v600 = vld [vmem:[%s594 + $0x10] sm:$0xff]
                  %601 = vst [vmem:[%s595 + $0x30] sm:$0xff] %v600
                $region113: #{autoencoder_forward.34} parent=107 // loop_footer
                  %s593 = sadd.s32 1, %s589
                $region114: #{autoencoder_forward.34} parent=107 // loop_footer_branch
                  %588 = sbr.rel target = $region110
                $region115: #{autoencoder_forward.34} parent=107 // loop_exit
                  _
              $region108: #{autoencoder_forward.34} parent=92 // pred_fallthru
                _
              // Predicated region
              $region116: #{autoencoder_forward.34} parent=92 // pred_check
                _
              $region117: #{autoencoder_forward.34} parent=92 // pred_check_branch
                %603 = sbr.rel target = $region119
              $region118: #{autoencoder_forward.34} parent=92 // pred_region
                _
              $region119: #{autoencoder_forward.34} parent=92 // pred_fallthru
                _
            $region93: #{autoencoder_forward.34} parent=88 // pred_fallthru
              _
            // Predicated region
            $region94: #{autoencoder_forward.34} parent=88 // pred_check
              _
            $region95: #{autoencoder_forward.34} parent=88 // pred_check_branch
              %570 = sbr.rel target = $region97
            $region96: #{autoencoder_forward.34} parent=88 // pred_region
              loop: start=0, step=1, limit=1
              $region98: #{autoencoder_forward.34} parent=96 // loop_pre_header
                _
              $region99: #{autoencoder_forward.34} parent=96 // loop_header
                %s573 = sphi 0, %s577
                %p574 = scmp.ge.s32.totalorder %s573, 1
                %s578 = sphi %s556, %s556
                %s579 = sphi %s564, %s564
              $region100: #{autoencoder_forward.34} parent=96 // loop_header_branch
                %576 = sbr.rel (%p574) target = $region104
              $region101: #{autoencoder_forward.34} parent=96 // loop_body
                %v580 = vld [vmem:[%s578] sm:$0xff]
                %581 = vst [vmem:[%s579] sm:$0xff] %v580
                %v582 = vld [vmem:[%s578 + $0x8] sm:$0xff]
                %583 = vst [vmem:[%s579 + $0x18] sm:$0xff] %v582
                %v584 = vld [vmem:[%s578 + $0x10] sm:$0xff]
                %585 = vst [vmem:[%s579 + $0x30] sm:$0xff] %v584
              $region102: #{autoencoder_forward.34} parent=96 // loop_footer
                %s577 = sadd.s32 1, %s573
              $region103: #{autoencoder_forward.34} parent=96 // loop_footer_branch
                %572 = sbr.rel target = $region99
              $region104: #{autoencoder_forward.34} parent=96 // loop_exit
                _
            $region97: #{autoencoder_forward.34} parent=88 // pred_fallthru
              _
          $region89: #{autoencoder_forward.34} parent=84 // pred_fallthru
            _
          %604 = vnop
        $region85: #{autoencoder_forward.34} parent=76 // pred_fallthru
          _
      $region77: #{autoencoder_forward.34} parent=5 // pred_fallthru
        _
      %p605 = scmp.le.s32.totalorder 2, %s11
      // Predicated region
      $region120: #{autoencoder_forward.34} parent=5 // pred_check
        %p606 = pneg %p605
      $region121: #{autoencoder_forward.34} parent=5 // pred_check_branch
        %608 = sbr.rel (%p606) target = $region123
      $region122: #{autoencoder_forward.34} parent=5 // pred_region
        %s609 = ssub.s32 %s11, 2
        // Predicated region
        $region124: #{autoencoder_forward.34} parent=122 // pred_check
          %p610 = pneg %p174
        $region125: #{autoencoder_forward.34} parent=122 // pred_check_branch
          %612 = sbr.rel (%p610) target = $region127
        $region126: #{autoencoder_forward.34} parent=122 // pred_region
          %s613 = sand.u32 %s159, 1
          %s614 = sand.u32 %s159, 1
          %s615 = smul.addr %s614, 24
          %s616 = scalar_lea.vmem [#allocation3], %s615
        $region127: #{autoencoder_forward.34} parent=122 // pred_fallthru
          _
      $region123: #{autoencoder_forward.34} parent=5 // pred_fallthru
        _
    $region6: #{autoencoder_forward.34} parent=1 // loop_footer
      %s15 = sadd.s32 1, %s11
    $region7: #{autoencoder_forward.34} parent=1 // loop_footer_branch
      %10 = sbr.rel target = $region3
    $region8: #{autoencoder_forward.34} parent=1 // loop_exit
      _

// kernel: autoencoder_forward.36
$region0: #{autoencoder_forward.36}
  #allocation0 [shape = 'u32[]', space=smem, size = 0x4, offset = 0x4, fixed_abs, tag = 'smem constant byte address 0x4 - core index']
  #allocation1 [shape = 'u32[144,128]{1,0:T(1,128)}', space=vmem, size = 0x12000, scoped, tag = 'internal scratch']
  %s0 = inlined_call_operand.vmem [shape: f32[24,128], index: 0, kind: input, shape index: {}]
  %s1 = inlined_call_operand.vmem [shape: bf16[128,128], index: 1, kind: input, shape index: {}]
  %s2 = inlined_call_operand.vmem [shape: f32[1,128], index: 2, kind: input, shape index: {}]
  %s3 = inlined_call_operand.vmem [shape: f32[24,128], index: 3, kind: input, shape index: {}]
  %s4 = inlined_call_operand.vmem [shape: f32[24,128], index: 4, kind: output, shape index: {}]
  %s5 = sld [smem:[#allocation0]]
  $region26: #{autoencoder_forward.36} parent=0
    _
  %s7 = ssub.s32 1, %s5
  %s8 = scalar_select 0, %s7, %s5
  // Predicated region
  $region2: #{autoencoder_forward.36} parent=0 // pred_check
    _
  $region3: #{autoencoder_forward.36} parent=0 // pred_check_branch
    %10 = sbr.rel (0) target = $region5
  $region4: #{autoencoder_forward.36} parent=0 // pred_region
    _
  $region5: #{autoencoder_forward.36} parent=0 // pred_fallthru
    _
  // Predicated region
  $region6: #{autoencoder_forward.36} parent=0 // pred_check
    _
  $region7: #{autoencoder_forward.36} parent=0 // pred_check_branch
    %12 = sbr.rel (0) target = $region9
  $region8: #{autoencoder_forward.36} parent=0 // pred_region
    _
  $region9: #{autoencoder_forward.36} parent=0 // pred_fallthru
    _
  // Predicated region
  $region10: #{autoencoder_forward.36} parent=0 // pred_check
    _
  $region11: #{autoencoder_forward.36} parent=0 // pred_check_branch
    %14 = sbr.rel (0) target = $region13
  $region12: #{autoencoder_forward.36} parent=0 // pred_region
    _
  $region13: #{autoencoder_forward.36} parent=0 // pred_fallthru
    _
  // Predicated region
  $region14: #{autoencoder_forward.36} parent=0 // pred_check
    _
  $region15: #{autoencoder_forward.36} parent=0 // pred_check_branch
    %16 = sbr.rel (0) target = $region17
  $region16: #{autoencoder_forward.36} parent=0 // pred_region
    _
  $region17: #{autoencoder_forward.36} parent=0 // pred_fallthru
    _
  %v18 = vld [vmem:[%s0] sm:$0xff]
  %v19 = vld [vmem:[%s0 + $0x8] sm:$0xff]
  %v20 = vld [vmem:[%s0 + $0x10] sm:$0xff]
  %v21 = vpack.c.bf16 %v19, %v18
  %v22 = vpack.c.bf16 %v20, %v20
  %v23 = vld [vmem:[%s1] sm:$0xf]
  %v24 = vld [vmem:[%s1 + $0x4] sm:$0xf]
  %v25 = vld [vmem:[%s1 + $0x8] sm:$0xf]
  %v26 = vld [vmem:[%s1 + $0xc] sm:$0xf]
  %v27 = vld [vmem:[%s1 + $0x10] sm:$0xf]
  %v28 = vld [vmem:[%s1 + $0x14] sm:$0xf]
  %v29 = vld [vmem:[%s1 + $0x18] sm:$0xf]
  %v30 = vld [vmem:[%s1 + $0x1c] sm:$0xf]
  %v31 = vld [vmem:[%s1 + $0x20] sm:$0xf]
  %v32 = vld [vmem:[%s1 + $0x24] sm:$0xf]
  %v33 = vld [vmem:[%s1 + $0x28] sm:$0xf]
  %v34 = vld [vmem:[%s1 + $0x2c] sm:$0xf]
  %v35 = vld [vmem:[%s1 + $0x30] sm:$0xf]
  %v36 = vld [vmem:[%s1 + $0x34] sm:$0xf]
  %v37 = vld [vmem:[%s1 + $0x38] sm:$0xf]
  %v38 = vld [vmem:[%s1 + $0x3c] sm:$0xf]
  %v39 = vld [vmem:[%s2] sm:$0x1]
  %v41 = vlaneseq
  %v42 = vshrl.u32 %v41, 7
  %v43 = vsub.s32 0, %v42
  %v44 = vrot.slane %v39, %v43
  %v62 = vunpack.c.l.b16 %v23
  %v63 = vunpack.c.l.b16 %v24
  %v64 = vunpack.c.l.b16 %v25
  %v65 = vunpack.c.l.b16 %v26
  %v66 = vunpack.c.l.b16 %v27
  %v67 = vunpack.c.l.b16 %v28
  %v68 = vunpack.c.l.b16 %v29
  %v69 = vunpack.c.l.b16 %v30
  %v70 = vunpack.c.l.b16 %v31
  %v71 = vunpack.c.l.b16 %v32
  %v72 = vunpack.c.l.b16 %v33
  %v73 = vunpack.c.l.b16 %v34
  %v74 = vunpack.c.l.b16 %v35
  %v75 = vunpack.c.l.b16 %v36
  %v76 = vunpack.c.l.b16 %v37
  %v77 = vunpack.c.l.b16 %v38
  %v78 = vpack.c.b16 %v63, %v62
  %v79 = vpack.c.b16 %v65, %v64
  %v80 = vpack.c.b16 %v67, %v66
  %v81 = vpack.c.b16 %v69, %v68
  %v82 = vpack.c.b16 %v71, %v70
  %v83 = vpack.c.b16 %v73, %v72
  %v84 = vpack.c.b16 %v75, %v74
  %v85 = vpack.c.b16 %v77, %v76
  %94 = vmatprep.subr.bf16.mxu0 0
  %95 = vmatpush1.bf16.msra.mxu0 %v78
  %96 = vmatprep.subr.bf16.mxu0 0
  %97 = vmatpush1.bf16.msra.mxu0 %v79
  %98 = vmatprep.subr.bf16.mxu0 0
  %99 = vmatpush1.bf16.msra.mxu0 %v80
  %100 = vmatprep.subr.bf16.mxu0 0
  %101 = vmatpush1.bf16.msra.mxu0 %v81
  %102 = vmatprep.subr.bf16.mxu0 0
  %103 = vmatpush1.bf16.msra.mxu0 %v82
  %104 = vmatprep.subr.bf16.mxu0 0
  %105 = vmatpush1.bf16.msra.mxu0 %v83
  %106 = vmatprep.subr.bf16.mxu0 0
  %107 = vmatpush1.bf16.msra.mxu0 %v84
  %108 = vmatprep.subr.bf16.mxu0 0
  %109 = vmatpush1.bf16.msra.mxu0 %v85
  %110 = vmatprep.subr.bf16.mxu0 0
  %111 = vmatpush1.bf16.msra.mxu0 0
  %112 = vmatprep.subr.bf16.mxu0 0
  %113 = vmatpush1.bf16.msra.mxu0 0
  %114 = vmatprep.subr.bf16.mxu0 0
  %115 = vmatpush1.bf16.msra.mxu0 0
  %116 = vmatprep.subr.bf16.mxu0 0
  %117 = vmatpush1.bf16.msra.mxu0 0
  %118 = vmatprep.subr.bf16.mxu0 0
  %119 = vmatpush1.bf16.msra.mxu0 0
  %120 = vmatprep.subr.bf16.mxu0 0
  %121 = vmatpush1.bf16.msra.mxu0 0
  %122 = vmatprep.subr.bf16.mxu0 0
  %123 = vmatpush1.bf16.msra.mxu0 0
  %124 = vmatprep.subr.bf16.mxu0 0
  %125 = vmatpush1.bf16.msra.mxu0 0
  %126 = vmatprep.mubr.bf16.mxu0 0
  %127 = vmatmul.mubr.bf16.gmra.mrb[0].mxu0 %v21
  %v128 = vpop.f32.mrb[0].mxu0
  %v129 = vadd.f32 %v44, %v128
  %v130 = vpop.f32.mrb[0].mxu0
  %v131 = vpop.f32.mrb[0].mxu0
  %v132 = vadd.f32 %v44, %v131
  %v133 = vpop.f32.mrb[0].mxu0
  %134 = vmatprep.mubr.bf16.mxu0 0
  %135 = vmatmul.mubr.bf16.gmra.mrb[0].mxu0 %v22
  %v136 = vpop.f32.mrb[0].mxu0
  %v137 = vadd.f32 %v44, %v136
  %v138 = vpop.f32.mrb[0].mxu0
  %v139 = vpop.f32.mrb[0].mxu0
  %v140 = vpop.f32.mrb[0].mxu0
  %141 = vdwg.mxu0
  %v142 = vld [vmem:[%s3] sm:$0xff]
  %v143 = vld [vmem:[%s3 + $0x8] sm:$0xff]
  %v144 = vld [vmem:[%s3 + $0x10] sm:$0xff]
  %v145 = vadd.f32 %v129, %v142
  %v146 = vadd.f32 %v132, %v143
  %v147 = vadd.f32 %v137, %v144
  %148 = vst [vmem:[%s4] sm:$0xff] %v145
  %149 = vst [vmem:[%s4 + $0x8] sm:$0xff] %v146
  %150 = vst [vmem:[%s4 + $0x10] sm:$0xff] %v147
  // Predicated region
  $region18: #{autoencoder_forward.36} parent=0 // pred_check
    _
  $region19: #{autoencoder_forward.36} parent=0 // pred_check_branch
    %152 = sbr.rel (0) target = $region21
  $region20: #{autoencoder_forward.36} parent=0 // pred_region
    _
  $region21: #{autoencoder_forward.36} parent=0 // pred_fallthru
    _
  // Predicated region
  $region22: #{autoencoder_forward.36} parent=0 // pred_check
    _
  $region23: #{autoencoder_forward.36} parent=0 // pred_check_branch
    %154 = sbr.rel (0) target = $region25
  $region24: #{autoencoder_forward.36} parent=0 // pred_region
    _
  $region25: #{autoencoder_forward.36} parent=0 // pred_fallthru
    _

// kernel: autoencoder_forward.37
$region0: #{autoencoder_forward.37}
  #allocation0 [shape = 'u32[]', space=smem, size = 0x4, offset = 0x4, fixed_abs, tag = 'smem constant byte address 0x4 - core index']
  #allocation1 [shape = 'u32[144,128]{1,0:T(1,128)}', space=vmem, size = 0x12000, scoped, tag = 'internal scratch']
  %s0 = inlined_call_operand.vmem [shape: f32[24,128], index: 0, kind: input, shape index: {}]
  %s1 = inlined_call_operand.vmem [shape: f32[1,128], index: 1, kind: input, shape index: {}]
  %s2 = inlined_call_operand.vmem [shape: f32[1,128], index: 2, kind: input, shape index: {}]
  %s3 = inlined_call_operand.vmem [shape: bf16[128,512], index: 3, kind: input, shape index: {}]
  %s4 = inlined_call_operand.vmem [shape: f32[1,512], index: 4, kind: input, shape index: {}]
  %s5 = inlined_call_operand.vmem [shape: f32[24,512], index: 5, kind: output, shape index: {}]
  %s6 = sld [smem:[#allocation0]]
  $region30: #{autoencoder_forward.37} parent=0
    _
  %s8 = ssub.s32 1, %s6
  %s9 = scalar_select 0, %s8, %s6
  // Predicated region
  $region2: #{autoencoder_forward.37} parent=0 // pred_check
    _
  $region3: #{autoencoder_forward.37} parent=0 // pred_check_branch
    %11 = sbr.rel (0) target = $region5
  $region4: #{autoencoder_forward.37} parent=0 // pred_region
    _
  $region5: #{autoencoder_forward.37} parent=0 // pred_fallthru
    _
  // Predicated region
  $region6: #{autoencoder_forward.37} parent=0 // pred_check
    _
  $region7: #{autoencoder_forward.37} parent=0 // pred_check_branch
    %13 = sbr.rel (0) target = $region9
  $region8: #{autoencoder_forward.37} parent=0 // pred_region
    _
  $region9: #{autoencoder_forward.37} parent=0 // pred_fallthru
    _
  // Predicated region
  $region10: #{autoencoder_forward.37} parent=0 // pred_check
    _
  $region11: #{autoencoder_forward.37} parent=0 // pred_check_branch
    %15 = sbr.rel (0) target = $region13
  $region12: #{autoencoder_forward.37} parent=0 // pred_region
    _
  $region13: #{autoencoder_forward.37} parent=0 // pred_fallthru
    _
  // Predicated region
  $region14: #{autoencoder_forward.37} parent=0 // pred_check
    _
  $region15: #{autoencoder_forward.37} parent=0 // pred_check_branch
    %17 = sbr.rel (0) target = $region17
  $region16: #{autoencoder_forward.37} parent=0 // pred_region
    _
  $region17: #{autoencoder_forward.37} parent=0 // pred_fallthru
    _
  // Predicated region
  $region18: #{autoencoder_forward.37} parent=0 // pred_check
    _
  $region19: #{autoencoder_forward.37} parent=0 // pred_check_branch
    %19 = sbr.rel (0) target = $region21
  $region20: #{autoencoder_forward.37} parent=0 // pred_region
    _
  $region21: #{autoencoder_forward.37} parent=0 // pred_fallthru
    _
  %v21 = vld [vmem:[%s0] sm:$0xff]
  %v22 = vld [vmem:[%s0 + $0x8] sm:$0xff]
  %v23 = vld [vmem:[%s0 + $0x10] sm:$0xff]
  %24 = vadd.xlane.f32.xlu0 %v21
  %v25 = vpop.xlane.xlu0 %24
  %26 = vadd.xlane.f32.xlu0 %v22
  %v27 = vpop.xlane.xlu0 %26
  %28 = vadd.xlane.f32.xlu0 %v23
  %v29 = vpop.xlane.xlu0 %28
  %v30 = vrcp.pop 128.0
  %v31 = vmul.f32 %v25, %v30
  %v32 = vmul.f32 %v27, %v30
  %v33 = vmul.f32 %v29, %v30
  %v34 = vsub.f32 %v21, %v31
  %v35 = vsub.f32 %v22, %v32
  %v36 = vsub.f32 %v23, %v33
  %v37 = vmul.f32 %v34, %v34
  %v38 = vmul.f32 %v35, %v35
  %v39 = vmul.f32 %v36, %v36
  %40 = vadd.xlane.f32.xlu0 %v37
  %v41 = vpop.xlane.xlu0 %40
  %42 = vadd.xlane.f32.xlu0 %v38
  %v43 = vpop.xlane.xlu0 %42
  %44 = vadd.xlane.f32.xlu0 %v39
  %v45 = vpop.xlane.xlu0 %44
  %v46 = vmul.f32 %v41, %v30
  %v47 = vmul.f32 %v43, %v30
  %v48 = vmul.f32 %v45, %v30
  %v49 = vadd.f32 %v46, 1e-05
  %v50 = vadd.f32 %v47, 1e-05
  %v51 = vadd.f32 %v48, 1e-05
  %v52 = vrsqrt.pop %v49
  %v53 = vrsqrt.pop %v50
  %v54 = vrsqrt.pop %v51
  %v55 = vmul.f32 %v34, %v52
  %v56 = vmul.f32 %v35, %v53
  %v57 = vmul.f32 %v36, %v54
  %v58 = vld [vmem:[%s1] sm:$0x1]
  %v60 = vlaneseq
  %v61 = vshrl.u32 %v60, 7
  %v62 = vsub.s32 0, %v61
  %v63 = vrot.slane %v58, %v62
  %v65 = vmul.f32 %v55, %v63
  %v66 = vmul.f32 %v56, %v63
  %v67 = vmul.f32 %v57, %v63
  %v68 = vld [vmem:[%s2] sm:$0x1]
  %v70 = vlaneseq
  %v71 = vshrl.u32 %v70, 7
  %v72 = vsub.s32 0, %v71
  %v73 = vrot.slane %v68, %v72
  %v75 = vadd.f32 %v65, %v73
  %v76 = vadd.f32 %v66, %v73
  %v77 = vadd.f32 %v67, %v73
  %v78 = vpack.c.bf16 %v76, %v75
  %v79 = vpack.c.bf16 %v77, %v77
  %v80 = vld [vmem:[%s3] sm:$0xff]
  %v81 = vld [vmem:[%s3 + $0x8] sm:$0xff]
  %v82 = vld [vmem:[%s3 + $0x10] sm:$0xff]
  %v83 = vld [vmem:[%s3 + $0x18] sm:$0xff]
  %v84 = vld [vmem:[%s3 + $0x20] sm:$0xff]
  %v85 = vld [vmem:[%s3 + $0x28] sm:$0xff]
  %v86 = vld [vmem:[%s3 + $0x30] sm:$0xff]
  %v87 = vld [vmem:[%s3 + $0x38] sm:$0xff]
  %v88 = vld [vmem:[%s3 + $0x40] sm:$0xff]
  %v89 = vld [vmem:[%s3 + $0x48] sm:$0xff]
  %v90 = vld [vmem:[%s3 + $0x50] sm:$0xff]
  %v91 = vld [vmem:[%s3 + $0x58] sm:$0xff]
  %v92 = vld [vmem:[%s3 + $0x60] sm:$0xff]
  %v93 = vld [vmem:[%s3 + $0x68] sm:$0xff]
  %v94 = vld [vmem:[%s3 + $0x70] sm:$0xff]
  %v95 = vld [vmem:[%s3 + $0x78] sm:$0xff]
  %v96 = vld [vmem:[%s3 + $0x80] sm:$0xff]
  %v97 = vld [vmem:[%s3 + $0x88] sm:$0xff]
  %v98 = vld [vmem:[%s3 + $0x90] sm:$0xff]
  %v99 = vld [vmem:[%s3 + $0x98] sm:$0xff]
  %v100 = vld [vmem:[%s3 + $0xa0] sm:$0xff]
  %v101 = vld [vmem:[%s3 + $0xa8] sm:$0xff]
  %v102 = vld [vmem:[%s3 + $0xb0] sm:$0xff]
  %v103 = vld [vmem:[%s3 + $0xb8] sm:$0xff]
  %v104 = vld [vmem:[%s3 + $0xc0] sm:$0xff]
  %v105 = vld [vmem:[%s3 + $0xc8] sm:$0xff]
  %v106 = vld [vmem:[%s3 + $0xd0] sm:$0xff]
  %v107 = vld [vmem:[%s3 + $0xd8] sm:$0xff]
  %v108 = vld [vmem:[%s3 + $0xe0] sm:$0xff]
  %v109 = vld [vmem:[%s3 + $0xe8] sm:$0xff]
  %v110 = vld [vmem:[%s3 + $0xf0] sm:$0xff]
  %v111 = vld [vmem:[%s3 + $0xf8] sm:$0xff]
  %v112 = vld [vmem:[%s4] sm:$0xf]
  %v114 = vlaneseq
  %v115 = vshrl.u32 %v114, 7
  %v116 = vsub.s32 0, %v115
  %v117 = vrot.slane %v112, %v116
  %v118 = vlaneseq
  %v119 = vshrl.u32 %v118, 7
  %v120 = vsub.s32 1, %v119
  %v121 = vrot.slane %v112, %v120
  %v122 = vlaneseq
  %v123 = vshrl.u32 %v122, 7
  %v124 = vsub.s32 2, %v123
  %v125 = vrot.slane %v112, %v124
  %v126 = vlaneseq
  %v127 = vshrl.u32 %v126, 7
  %v128 = vsub.s32 3, %v127
  %v129 = vrot.slane %v112, %v128
  %v166 = vunpack.c.l.b16 %v80
  %v167 = vunpack.c.h.b16 %v80
  %v168 = vunpack.c.l.b16 %v81
  %v169 = vunpack.c.h.b16 %v81
  %v170 = vunpack.c.l.b16 %v82
  %v171 = vunpack.c.h.b16 %v82
  %v172 = vunpack.c.l.b16 %v83
  %v173 = vunpack.c.h.b16 %v83
  %v174 = vunpack.c.l.b16 %v84
  %v175 = vunpack.c.h.b16 %v84
  %v176 = vunpack.c.l.b16 %v85
  %v177 = vunpack.c.h.b16 %v85
  %v178 = vunpack.c.l.b16 %v86
  %v179 = vunpack.c.h.b16 %v86
  %v180 = vunpack.c.l.b16 %v87
  %v181 = vunpack.c.h.b16 %v87
  %v182 = vunpack.c.l.b16 %v88
  %v183 = vunpack.c.h.b16 %v88
  %v184 = vunpack.c.l.b16 %v89
  %v185 = vunpack.c.h.b16 %v89
  %v186 = vunpack.c.l.b16 %v90
  %v187 = vunpack.c.h.b16 %v90
  %v188 = vunpack.c.l.b16 %v91
  %v189 = vunpack.c.h.b16 %v91
  %v190 = vunpack.c.l.b16 %v92
  %v191 = vunpack.c.h.b16 %v92
  %v192 = vunpack.c.l.b16 %v93
  %v193 = vunpack.c.h.b16 %v93
  %v194 = vunpack.c.l.b16 %v94
  %v195 = vunpack.c.h.b16 %v94
  %v196 = vunpack.c.l.b16 %v95
  %v197 = vunpack.c.h.b16 %v95
  %v198 = vunpack.c.l.b16 %v96
  %v199 = vunpack.c.h.b16 %v96
  %v200 = vunpack.c.l.b16 %v97
  %v201 = vunpack.c.h.b16 %v97
  %v202 = vunpack.c.l.b16 %v98
  %v203 = vunpack.c.h.b16 %v98
  %v204 = vunpack.c.l.b16 %v99
  %v205 = vunpack.c.h.b16 %v99
  %v206 = vunpack.c.l.b16 %v100
  %v207 = vunpack.c.h.b16 %v100
  %v208 = vunpack.c.l.b16 %v101
  %v209 = vunpack.c.h.b16 %v101
  %v210 = vunpack.c.l.b16 %v102
  %v211 = vunpack.c.h.b16 %v102
  %v212 = vunpack.c.l.b16 %v103
  %v213 = vunpack.c.h.b16 %v103
  %v214 = vunpack.c.l.b16 %v104
  %v215 = vunpack.c.h.b16 %v104
  %v216 = vunpack.c.l.b16 %v105
  %v217 = vunpack.c.h.b16 %v105
  %v218 = vunpack.c.l.b16 %v106
  %v219 = vunpack.c.h.b16 %v106
  %v220 = vunpack.c.l.b16 %v107
  %v221 = vunpack.c.h.b16 %v107
  %v222 = vunpack.c.l.b16 %v108
  %v223 = vunpack.c.h.b16 %v108
  %v224 = vunpack.c.l.b16 %v109
  %v225 = vunpack.c.h.b16 %v109
  %v226 = vunpack.c.l.b16 %v110
  %v227 = vunpack.c.h.b16 %v110
  %v228 = vunpack.c.l.b16 %v111
  %v229 = vunpack.c.h.b16 %v111
  %v230 = vpack.c.b16 %v170, %v166
  %v231 = vpack.c.b16 %v171, %v167
  %v232 = vpack.c.b16 %v172, %v168
  %v233 = vpack.c.b16 %v173, %v169
  %v234 = vpack.c.b16 %v178, %v174
  %v235 = vpack.c.b16 %v179, %v175
  %v236 = vpack.c.b16 %v180, %v176
  %v237 = vpack.c.b16 %v181, %v177
  %v238 = vpack.c.b16 %v186, %v182
  %v239 = vpack.c.b16 %v187, %v183
  %v240 = vpack.c.b16 %v188, %v184
  %v241 = vpack.c.b16 %v189, %v185
  %v242 = vpack.c.b16 %v194, %v190
  %v243 = vpack.c.b16 %v195, %v191
  %v244 = vpack.c.b16 %v196, %v192
  %v245 = vpack.c.b16 %v197, %v193
  %v246 = vpack.c.b16 %v202, %v198
  %v247 = vpack.c.b16 %v203, %v199
  %v248 = vpack.c.b16 %v204, %v200
  %v249 = vpack.c.b16 %v205, %v201
  %v250 = vpack.c.b16 %v210, %v206
  %v251 = vpack.c.b16 %v211, %v207
  %v252 = vpack.c.b16 %v212, %v208
  %v253 = vpack.c.b16 %v213, %v209
  %v254 = vpack.c.b16 %v218, %v214
  %v255 = vpack.c.b16 %v219, %v215
  %v256 = vpack.c.b16 %v220, %v216
  %v257 = vpack.c.b16 %v221, %v217
  %v258 = vpack.c.b16 %v226, %v222
  %v259 = vpack.c.b16 %v227, %v223
  %v260 = vpack.c.b16 %v228, %v224
  %v261 = vpack.c.b16 %v229, %v225
  %294 = vmatprep.subr.bf16.mxu0 %v231
  %295 = vmatpush1.bf16.msra.mxu0 %v230
  %296 = vmatprep.subr.bf16.mxu0 %v235
  %297 = vmatpush1.bf16.msra.mxu0 %v234
  %298 = vmatprep.subr.bf16.mxu0 %v239
  %299 = vmatpush1.bf16.msra.mxu0 %v238
  %300 = vmatprep.subr.bf16.mxu0 %v243
  %301 = vmatpush1.bf16.msra.mxu0 %v242
  %302 = vmatprep.subr.bf16.mxu0 %v247
  %303 = vmatpush1.bf16.msra.mxu0 %v246
  %304 = vmatprep.subr.bf16.mxu0 %v251
  %305 = vmatpush1.bf16.msra.mxu0 %v250
  %306 = vmatprep.subr.bf16.mxu0 %v255
  %307 = vmatpush1.bf16.msra.mxu0 %v254
  %308 = vmatprep.subr.bf16.mxu0 %v259
  %309 = vmatpush1.bf16.msra.mxu0 %v258
  %310 = vmatprep.subr.bf16.mxu0 0
  %311 = vmatpush1.bf16.msra.mxu0 0
  %312 = vmatprep.subr.bf16.mxu0 0
  %313 = vmatpush1.bf16.msra.mxu0 0
  %314 = vmatprep.subr.bf16.mxu0 0
  %315 = vmatpush1.bf16.msra.mxu0 0
  %316 = vmatprep.subr.bf16.mxu0 0
  %317 = vmatpush1.bf16.msra.mxu0 0
  %318 = vmatprep.subr.bf16.mxu0 0
  %319 = vmatpush1.bf16.msra.mxu0 0
  %320 = vmatprep.subr.bf16.mxu0 0
  %321 = vmatpush1.bf16.msra.mxu0 0
  %322 = vmatprep.subr.bf16.mxu0 0
  %323 = vmatpush1.bf16.msra.mxu0 0
  %324 = vmatprep.subr.bf16.mxu0 0
  %325 = vmatpush1.bf16.msra.mxu0 0
  %326 = vmatprep.mubr.bf16.mxu0 0
  %327 = vmatmul.mubr.bf16.gmra.mrb[0].mxu0 %v78
  %v328 = vpop.f32.mrb[0].mxu0
  %v329 = vadd.f32 %v117, %v328
  %v330 = vpop.f32.mrb[0].mxu0
  %v331 = vadd.f32 %v121, %v330
  %v332 = vpop.f32.mrb[0].mxu0
  %v333 = vadd.f32 %v117, %v332
  %v334 = vpop.f32.mrb[0].mxu0
  %v335 = vadd.f32 %v121, %v334
  %336 = vmatprep.mubr.bf16.mxu0 0
  %337 = vmatmul.mubr.bf16.gmra.mrb[0].mxu0 %v79
  %v338 = vpop.f32.mrb[0].mxu0
  %v339 = vadd.f32 %v117, %v338
  %v340 = vpop.f32.mrb[0].mxu0
  %v341 = vadd.f32 %v121, %v340
  %v342 = vpop.f32.mrb[0].mxu0
  %v343 = vpop.f32.mrb[0].mxu0
  %344 = vdwg.mxu0
  %345 = vmatprep.subr.bf16.mxu0 %v233
  %346 = vmatpush1.bf16.msra.mxu0 %v232
  %347 = vmatprep.subr.bf16.mxu0 %v237
  %348 = vmatpush1.bf16.msra.mxu0 %v236
  %349 = vmatprep.subr.bf16.mxu0 %v241
  %350 = vmatpush1.bf16.msra.mxu0 %v240
  %351 = vmatprep.subr.bf16.mxu0 %v245
  %352 = vmatpush1.bf16.msra.mxu0 %v244
  %353 = vmatprep.subr.bf16.mxu0 %v249
  %354 = vmatpush1.bf16.msra.mxu0 %v248
  %355 = vmatprep.subr.bf16.mxu0 %v253
  %356 = vmatpush1.bf16.msra.mxu0 %v252
  %357 = vmatprep.subr.bf16.mxu0 %v257
  %358 = vmatpush1.bf16.msra.mxu0 %v256
  %359 = vmatprep.subr.bf16.mxu0 %v261
  %360 = vmatpush1.bf16.msra.mxu0 %v260
  %361 = vmatprep.subr.bf16.mxu0 0
  %362 = vmatpush1.bf16.msra.mxu0 0
  %363 = vmatprep.subr.bf16.mxu0 0
  %364 = vmatpush1.bf16.msra.mxu0 0
  %365 = vmatprep.subr.bf16.mxu0 0
  %366 = vmatpush1.bf16.msra.mxu0 0
  %367 = vmatprep.subr.bf16.mxu0 0
  %368 = vmatpush1.bf16.msra.mxu0 0
  %369 = vmatprep.subr.bf16.mxu0 0
  %370 = vmatpush1.bf16.msra.mxu0 0
  %371 = vmatprep.subr.bf16.mxu0 0
  %372 = vmatpush1.bf16.msra.mxu0 0
  %373 = vmatprep.subr.bf16.mxu0 0
  %374 = vmatpush1.bf16.msra.mxu0 0
  %375 = vmatprep.subr.bf16.mxu0 0
  %376 = vmatpush1.bf16.msra.mxu0 0
  %377 = vmatprep.mubr.bf16.mxu0 0
  %378 = vmatmul.mubr.bf16.gmra.mrb[0].mxu0 %v78
  %v379 = vpop.f32.mrb[0].mxu0
  %v380 = vadd.f32 %v125, %v379
  %v381 = vpop.f32.mrb[0].mxu0
  %v382 = vadd.f32 %v129, %v381
  %v383 = vpop.f32.mrb[0].mxu0
  %v384 = vadd.f32 %v125, %v383
  %v385 = vpop.f32.mrb[0].mxu0
  %v386 = vadd.f32 %v129, %v385
  %387 = vmatprep.mubr.bf16.mxu0 0
  %388 = vmatmul.mubr.bf16.gmra.mrb[0].mxu0 %v79
  %v389 = vpop.f32.mrb[0].mxu0
  %v390 = vadd.f32 %v125, %v389
  %v391 = vpop.f32.mrb[0].mxu0
  %v392 = vadd.f32 %v129, %v391
  %v393 = vpop.f32.mrb[0].mxu0
  %v394 = vpop.f32.mrb[0].mxu0
  %395 = vdwg.mxu0
  %v396 = vmul.f32 %v329, 0.5
  %v397 = vmul.f32 %v331, 0.5
  %v398 = vmul.f32 %v380, 0.5
  %v399 = vmul.f32 %v382, 0.5
  %v400 = vmul.f32 %v333, 0.5
  %v401 = vmul.f32 %v335, 0.5
  %v402 = vmul.f32 %v384, 0.5
  %v403 = vmul.f32 %v386, 0.5
  %v404 = vmul.f32 %v339, 0.5
  %v405 = vmul.f32 %v341, 0.5
  %v406 = vmul.f32 %v390, 0.5
  %v407 = vmul.f32 %v392, 0.5
  %v408 = vmul.f32 %v329, %v329
  %v409 = vmul.f32 %v331, %v331
  %v410 = vmul.f32 %v380, %v380
  %v411 = vmul.f32 %v382, %v382
  %v412 = vmul.f32 %v333, %v333
  %v413 = vmul.f32 %v335, %v335
  %v414 = vmul.f32 %v384, %v384
  %v415 = vmul.f32 %v386, %v386
  %v416 = vmul.f32 %v339, %v339
  %v417 = vmul.f32 %v341, %v341
  %v418 = vmul.f32 %v390, %v390
  %v419 = vmul.f32 %v392, %v392
  %v420 = vmul.f32 %v329, %v408
  %v421 = vmul.f32 %v331, %v409
  %v422 = vmul.f32 %v380, %v410
  %v423 = vmul.f32 %v382, %v411
  %v424 = vmul.f32 %v333, %v412
  %v425 = vmul.f32 %v335, %v413
  %v426 = vmul.f32 %v384, %v414
  %v427 = vmul.f32 %v386, %v415
  %v428 = vmul.f32 %v339, %v416
  %v429 = vmul.f32 %v341, %v417
  %v430 = vmul.f32 %v390, %v418
  %v431 = vmul.f32 %v392, %v419
  %v432 = vmul.f32 %v420, 0.044715
  %v433 = vmul.f32 %v421, 0.044715
  %v434 = vmul.f32 %v422, 0.044715
  %v435 = vmul.f32 %v423, 0.044715
  %v436 = vmul.f32 %v424, 0.044715
  %v437 = vmul.f32 %v425, 0.044715
  %v438 = vmul.f32 %v426, 0.044715
  %v439 = vmul.f32 %v427, 0.044715
  %v440 = vmul.f32 %v428, 0.044715
  %v441 = vmul.f32 %v429, 0.044715
  %v442 = vmul.f32 %v430, 0.044715
  %v443 = vmul.f32 %v431, 0.044715
  %v444 = vadd.f32 %v329, %v432
  %v445 = vadd.f32 %v331, %v433
  %v446 = vadd.f32 %v380, %v434
  %v447 = vadd.f32 %v382, %v435
  %v448 = vadd.f32 %v333, %v436
  %v449 = vadd.f32 %v335, %v437
  %v450 = vadd.f32 %v384, %v438
  %v451 = vadd.f32 %v386, %v439
  %v452 = vadd.f32 %v339, %v440
  %v453 = vadd.f32 %v341, %v441
  %v454 = vadd.f32 %v390, %v442
  %v455 = vadd.f32 %v392, %v443
  %v456 = vmul.f32 %v444, 0.7978846
  %v457 = vmul.f32 %v445, 0.7978846
  %v458 = vmul.f32 %v446, 0.7978846
  %v459 = vmul.f32 %v447, 0.7978846
  %v460 = vmul.f32 %v448, 0.7978846
  %v461 = vmul.f32 %v449, 0.7978846
  %v462 = vmul.f32 %v450, 0.7978846
  %v463 = vmul.f32 %v451, 0.7978846
  %v464 = vmul.f32 %v452, 0.7978846
  %v465 = vmul.f32 %v453, 0.7978846
  %v466 = vmul.f32 %v454, 0.7978846
  %v467 = vmul.f32 %v455, 0.7978846
  %v468 = vtanh.pop %v456
  %v469 = vtanh.pop %v457
  %v470 = vtanh.pop %v458
  %v471 = vtanh.pop %v459
  %v472 = vtanh.pop %v460
  %v473 = vtanh.pop %v461
  %v474 = vtanh.pop %v462
  %v475 = vtanh.pop %v463
  %v476 = vtanh.pop %v464
  %v477 = vtanh.pop %v465
  %v478 = vtanh.pop %v466
  %v479 = vtanh.pop %v467
  %v480 = vadd.f32 %v468, 1.0
  %v481 = vadd.f32 %v469, 1.0
  %v482 = vadd.f32 %v470, 1.0
  %v483 = vadd.f32 %v471, 1.0
  %v484 = vadd.f32 %v472, 1.0
  %v485 = vadd.f32 %v473, 1.0
  %v486 = vadd.f32 %v474, 1.0
  %v487 = vadd.f32 %v475, 1.0
  %v488 = vadd.f32 %v476, 1.0
  %v489 = vadd.f32 %v477, 1.0
  %v490 = vadd.f32 %v478, 1.0
  %v491 = vadd.f32 %v479, 1.0
  %v492 = vmul.f32 %v396, %v480
  %v493 = vmul.f32 %v397, %v481
  %v494 = vmul.f32 %v398, %v482
  %v495 = vmul.f32 %v399, %v483
  %v496 = vmul.f32 %v400, %v484
  %v497 = vmul.f32 %v401, %v485
  %v498 = vmul.f32 %v402, %v486
  %v499 = vmul.f32 %v403, %v487
  %v500 = vmul.f32 %v404, %v488
  %v501 = vmul.f32 %v405, %v489
  %v502 = vmul.f32 %v406, %v490
  %v503 = vmul.f32 %v407, %v491
  %504 = vst [vmem:[%s5] sm:$0xff] %v492
  %505 = vst [vmem:[%s5 + $0x8] sm:$0xff] %v493
  %506 = vst [vmem:[%s5 + $0x10] sm:$0xff] %v494
  %507 = vst [vmem:[%s5 + $0x18] sm:$0xff] %v495
  %508 = vst [vmem:[%s5 + $0x20] sm:$0xff] %v496
  %509 = vst [vmem:[%s5 + $0x28] sm:$0xff] %v497
  %510 = vst [vmem:[%s5 + $0x30] sm:$0xff] %v498
  %511 = vst [vmem:[%s5 + $0x38] sm:$0xff] %v499
  %512 = vst [vmem:[%s5 + $0x40] sm:$0xff] %v500
  %513 = vst [vmem:[%s5 + $0x48] sm:$0xff] %v501
  %514 = vst [vmem:[%s5 + $0x50] sm:$0xff] %v502
  %515 = vst [vmem:[%s5 + $0x58] sm:$0xff] %v503
  // Predicated region
  $region22: #{autoencoder_forward.37} parent=0 // pred_check
    _
  $region23: #{autoencoder_forward.37} parent=0 // pred_check_branch
    %517 = sbr.rel (0) target = $region25
  $region24: #{autoencoder_forward.37} parent=0 // pred_region
    _
  $region25: #{autoencoder_forward.37} parent=0 // pred_fallthru
    _
  // Predicated region
  $region26: #{autoencoder_forward.37} parent=0 // pred_check
    _
  $region27: #{autoencoder_forward.37} parent=0 // pred_check_branch
    %519 = sbr.rel (0) target = $region29
  $region28: #{autoencoder_forward.37} parent=0 // pred_region
    _
  $region29: #{autoencoder_forward.37} parent=0 // pred_fallthru
    _

// kernel: autoencoder_forward.35
$region0: #{autoencoder_forward.35}
  #allocation0 [shape = 'u32[]', space=smem, size = 0x4, offset = 0x4, fixed_abs, tag = 'smem constant byte address 0x4 - core index']
  #allocation1 [shape = 'u32[144,128]{1,0:T(1,128)}', space=vmem, size = 0x12000, scoped, tag = 'internal scratch']
  %s0 = inlined_call_operand.vmem [shape: bf16[2,4,9,32], index: 0, kind: input, shape index: {}]
  %s1 = inlined_call_operand.vmem [shape: bf16[2,4,9,32], index: 1, kind: input, shape index: {}]
  %s2 = inlined_call_operand.vmem [shape: bf16[2,4,9,32], index: 2, kind: input, shape index: {}]
  %s3 = inlined_call_operand.vmem [shape: f32[2,1,9], index: 3, kind: input, shape index: {}]
  %s4 = inlined_call_operand.vmem [shape: f32[2,9,128], index: 4, kind: output, shape index: {}]
  %s5 = sld [smem:[#allocation0]]
  $region49: #{autoencoder_forward.35} parent=0
    _
  %s7 = ssub.s32 1, %s5
  %s8 = scalar_select 0, %s7, %s5
  loop: start=0, step=1, limit=4
  $region2: #{autoencoder_forward.35} parent=0 // loop_pre_header
    _
  $region3: #{autoencoder_forward.35} parent=0 // loop_header
    %s10 = sphi 0, %s14
    %p11 = scmp.ge.s32.totalorder %s10, 4
    %s20 = sphi 0, %s22
    %s23 = sphi 0, %s20
    %s24 = sphi 0, %s23
    %s40 = sphi 0, %s24
    %s46 = sphi 0, %s48
    %s49 = sphi 0, %s46
    %s50 = sphi 0, %s49
    %s66 = sphi 0, %s50
    %s72 = sphi 0, %s74
    %s75 = sphi 0, %s72
    %s76 = sphi 0, %s75
    %s92 = sphi 0, %s76
    %s98 = sphi 0, %s100
    %s101 = sphi 0, %s98
    %s102 = sphi 0, %s101
    %s118 = sphi 0, %s102
    %s124 = sphi 0, %s126
    %s127 = sphi 0, %s124
    %s128 = sphi 0, %s127
    %s144 = sphi 0, %s128
  $region4: #{autoencoder_forward.35} parent=0 // loop_header_branch
    %13 = sbr.rel (%p11) target = $region8
  $region5: #{autoencoder_forward.35} parent=0 // loop_body
    %s15 = ssub.s32 %s10, 1
    %s16 = ssub.s32 %s10, 2
    %s17 = sadd.s32 %s10, 1
    %s18 = ssub.s32 %s10, %s17
    %p19 = scmp.eq.s32.totalorder %s18, 0
    %s21 = sadd.s32 %s20, 1
    %s22 = scalar_select %p19, %s20, %s21
    %p25 = pneg %p19
    %p26 = scmp.eq.s32.totalorder %s10, 1
    %p27 = por %p25, %p26
    %p28 = scmp.ne.s32.totalorder %s20, %s23
    %p29 = scmp.eq.s32.totalorder %s10, 0
    %p30 = por %p28, %p29
    %p31 = scmp.ne.s32.totalorder %s20, %s23
    %p32 = scmp.eq.s32.totalorder %s15, 1
    %p33 = por %p31, %p32
    %p34 = scmp.ne.s32.totalorder %s23, %s24
    %p35 = scmp.eq.s32.totalorder %s15, 0
    %p36 = por %p34, %p35
    %p37 = scmp.ne.s32.totalorder %s23, %s24
    %p38 = scmp.eq.s32.totalorder %s16, 1
    %p39 = por %p37, %p38
    %p41 = scmp.ne.s32.totalorder %s24, %s40
    %p42 = scmp.eq.s32.totalorder %s16, 0
    %p43 = por %p41, %p42
    %s44 = ssub.s32 %s10, %s17
    %p45 = scmp.eq.s32.totalorder %s44, 0
    %s47 = sadd.s32 %s46, 1
    %s48 = scalar_select %p45, %s46, %s47
    %p51 = pneg %p45
    %p52 = scmp.eq.s32.totalorder %s10, 1
    %p53 = por %p51, %p52
    %p54 = scmp.ne.s32.totalorder %s46, %s49
    %p55 = scmp.eq.s32.totalorder %s10, 0
    %p56 = por %p54, %p55
    %p57 = scmp.ne.s32.totalorder %s46, %s49
    %p58 = scmp.eq.s32.totalorder %s15, 1
    %p59 = por %p57, %p58
    %p60 = scmp.ne.s32.totalorder %s49, %s50
    %p61 = scmp.eq.s32.totalorder %s15, 0
    %p62 = por %p60, %p61
    %p63 = scmp.ne.s32.totalorder %s49, %s50
    %p64 = scmp.eq.s32.totalorder %s16, 1
    %p65 = por %p63, %p64
    %p67 = scmp.ne.s32.totalorder %s50, %s66
    %p68 = scmp.eq.s32.totalorder %s16, 0
    %p69 = por %p67, %p68
    %s70 = ssub.s32 %s10, %s17
    %p71 = scmp.eq.s32.totalorder %s70, 0
    %s73 = sadd.s32 %s72, 1
    %s74 = scalar_select %p71, %s72, %s73
    %p77 = pneg %p71
    %p78 = scmp.eq.s32.totalorder %s10, 1
    %p79 = por %p77, %p78
    %p80 = scmp.ne.s32.totalorder %s72, %s75
    %p81 = scmp.eq.s32.totalorder %s10, 0
    %p82 = por %p80, %p81
    %p83 = scmp.ne.s32.totalorder %s72, %s75
    %p84 = scmp.eq.s32.totalorder %s15, 1
    %p85 = por %p83, %p84
    %p86 = scmp.ne.s32.totalorder %s75, %s76
    %p87 = scmp.eq.s32.totalorder %s15, 0
    %p88 = por %p86, %p87
    %p89 = scmp.ne.s32.totalorder %s75, %s76
    %p90 = scmp.eq.s32.totalorder %s16, 1
    %p91 = por %p89, %p90
    %p93 = scmp.ne.s32.totalorder %s76, %s92
    %p94 = scmp.eq.s32.totalorder %s16, 0
    %p95 = por %p93, %p94
    %s96 = ssub.s32 %s10, %s17
    %p97 = scmp.eq.s32.totalorder %s96, 0
    %s99 = sadd.s32 %s98, 1
    %s100 = scalar_select %p97, %s98, %s99
    %p103 = pneg %p97
    %p104 = scmp.eq.s32.totalorder %s10, 1
    %p105 = por %p103, %p104
    %p106 = scmp.ne.s32.totalorder %s98, %s101
    %p107 = scmp.eq.s32.totalorder %s10, 0
    %p108 = por %p106, %p107
    %p109 = scmp.ne.s32.totalorder %s98, %s101
    %p110 = scmp.eq.s32.totalorder %s15, 1
    %p111 = por %p109, %p110
    %p112 = scmp.ne.s32.totalorder %s101, %s102
    %p113 = scmp.eq.s32.totalorder %s15, 0
    %p114 = por %p112, %p113
    %p115 = scmp.ne.s32.totalorder %s101, %s102
    %p116 = scmp.eq.s32.totalorder %s16, 1
    %p117 = por %p115, %p116
    %p119 = scmp.ne.s32.totalorder %s102, %s118
    %p120 = scmp.eq.s32.totalorder %s16, 0
    %p121 = por %p119, %p120
    %s122 = ssub.s32 %s10, %s17
    %p123 = scmp.eq.s32.totalorder %s122, 0
    %s125 = sadd.s32 %s124, 1
    %s126 = scalar_select %p123, %s124, %s125
    %p129 = pneg %p123
    %p130 = scmp.eq.s32.totalorder %s10, 1
    %p131 = por %p129, %p130
    %p132 = scmp.ne.s32.totalorder %s124, %s127
    %p133 = scmp.eq.s32.totalorder %s10, 0
    %p134 = por %p132, %p133
    %p135 = scmp.ne.s32.totalorder %s124, %s127
    %p136 = scmp.eq.s32.totalorder %s15, 1
    %p137 = por %p135, %p136
    %p138 = scmp.ne.s32.totalorder %s127, %s128
    %p139 = scmp.eq.s32.totalorder %s15, 0
    %p140 = por %p138, %p139
    %p141 = scmp.ne.s32.totalorder %s127, %s128
    %p142 = scmp.eq.s32.totalorder %s16, 1
    %p143 = por %p141, %p142
    %p145 = scmp.ne.s32.totalorder %s128, %s144
    %p146 = scmp.eq.s32.totalorder %s16, 0
    %p147 = por %p145, %p146
    %p148 = scmp.le.s32.totalorder 1, %s10
    %p149 = scmp.lt.s32.totalorder %s10, 3
    %p150 = pnand %p148, %p149
    %p151 = pneg %p150
    // Predicated region
    $region9: #{autoencoder_forward.35} parent=5 // pred_check
      _
    $region10: #{autoencoder_forward.35} parent=5 // pred_check_branch
      %153 = sbr.rel (%p150) target = $region12
    $region11: #{autoencoder_forward.35} parent=5 // pred_region
      %s154 = ssub.s32 %s10, 1
    $region12: #{autoencoder_forward.35} parent=5 // pred_fallthru
      _
    %p155 = scmp.lt.s32.totalorder %s10, 2
    // Predicated region
    $region13: #{autoencoder_forward.35} parent=5 // pred_check
      %p156 = pneg %p155
    $region14: #{autoencoder_forward.35} parent=5 // pred_check_branch
      %158 = sbr.rel (%p156) target = $region16
    $region15: #{autoencoder_forward.35} parent=5 // pred_region
      // Predicated region
      $region17: #{autoencoder_forward.35} parent=15 // pred_check
        %p159 = pneg %p30
      $region18: #{autoencoder_forward.35} parent=15 // pred_check_branch
        %161 = sbr.rel (%p159) target = $region20
      $region19: #{autoencoder_forward.35} parent=15 // pred_region
        %p162 = scmp.lt.s32.totalorder %s10, 1
        %s163 = scalar_select %p162, %s10, 1
        %s164 = smul.addr %s163, 8
        %s165 = smul.addr %s164, 4
        %s166 = scalar_lea.vmem %s0, %s165
      $region20: #{autoencoder_forward.35} parent=15 // pred_fallthru
        _
      // Predicated region
      $region21: #{autoencoder_forward.35} parent=15 // pred_check
        %p167 = pneg %p56
      $region22: #{autoencoder_forward.35} parent=15 // pred_check_branch
        %169 = sbr.rel (%p167) target = $region24
      $region23: #{autoencoder_forward.35} parent=15 // pred_region
        %p170 = scmp.lt.s32.totalorder %s10, 1
        %s171 = scalar_select %p170, %s10, 1
        %s172 = smul.addr %s171, 8
        %s173 = smul.addr %s172, 4
        %s174 = scalar_lea.vmem %s1, %s173
      $region24: #{autoencoder_forward.35} parent=15 // pred_fallthru
        _
      // Predicated region
      $region25: #{autoencoder_forward.35} parent=15 // pred_check
        %p175 = pneg %p82
      $region26: #{autoencoder_forward.35} parent=15 // pred_check_branch
        %177 = sbr.rel (%p175) target = $region28
      $region27: #{autoencoder_forward.35} parent=15 // pred_region
        %p178 = scmp.lt.s32.totalorder %s10, 1
        %s179 = scalar_select %p178, %s10, 1
        %s180 = smul.addr %s179, 8
        %s181 = smul.addr %s180, 4
        %s182 = scalar_lea.vmem %s2, %s181
      $region28: #{autoencoder_forward.35} parent=15 // pred_fallthru
        _
      // Predicated region
      $region29: #{autoencoder_forward.35} parent=15 // pred_check
        %p183 = pneg %p108
      $region30: #{autoencoder_forward.35} parent=15 // pred_check_branch
        %185 = sbr.rel (%p183) target = $region32
      $region31: #{autoencoder_forward.35} parent=15 // pred_region
        %p186 = scmp.lt.s32.totalorder %s10, 1
        %s187 = scalar_select %p186, %s10, 1
        %s188 = scalar_lea.vmem %s3, %s187
      $region32: #{autoencoder_forward.35} parent=15 // pred_fallthru
        _
    $region16: #{autoencoder_forward.35} parent=5 // pred_fallthru
      _
    %p189 = scmp.le.s32.totalorder 1, %s10
    %p190 = scmp.lt.s32.totalorder %s10, 3
    %p191 = pnand %p189, %p190
    %p192 = pneg %p191
    // Predicated region
    $region33: #{autoencoder_forward.35} parent=5 // pred_check
      _
    $region34: #{autoencoder_forward.35} parent=5 // pred_check_branch
      %194 = sbr.rel (%p191) target = $region36
    $region35: #{autoencoder_forward.35} parent=5 // pred_region
      %s195 = ssub.s32 %s10, 1
      %p196 = scmp.lt.s32.totalorder %s15, 1
      %s197 = scalar_select %p196, %s15, 1
      %s198 = smul.addr %s197, 8
      %s199 = smul.addr %s198, 4
      %s200 = scalar_lea.vmem %s0, %s199
      %p201 = pneg %p36
      %p202 = pneg %p33
      %p203 = scmp.lt.s32.totalorder %s15, 1
      %s204 = scalar_select %p203, %s15, 1
      %s205 = smul.addr %s204, 8
      %s206 = smul.addr %s205, 4
      %s207 = scalar_lea.vmem %s1, %s206
      %p208 = pneg %p62
      %p209 = pneg %p59
      %p210 = scmp.lt.s32.totalorder %s15, 1
      %s211 = scalar_select %p210, %s15, 1
      %s212 = smul.addr %s211, 8
      %s213 = smul.addr %s212, 4
      %s214 = scalar_lea.vmem %s2, %s213
      %p215 = pneg %p88
      %p216 = pneg %p85
      %p217 = scmp.lt.s32.totalorder %s15, 1
      %s218 = scalar_select %p217, %s15, 1
      %s219 = scalar_lea.vmem %s3, %s218
      %p220 = pneg %p114
      %p221 = pneg %p111
      %p222 = pneg %p140
      %p223 = pneg %p137
      %p224 = scmp.lt.s32.totalorder %s15, 1
      %s225 = scalar_select %p224, %s15, 1
      %s226 = smul.addr %s225, 2
      %s227 = smul.addr %s226, 8
      %s228 = scalar_lea.vmem %s4, %s227
      %p229 = scmp.lt.s32.totalorder %s15, 1
      %s230 = scalar_select %p229, %s15, 1
      %s231 = smul.addr %s230, 8
      %s232 = smul.addr %s231, 4
      %s233 = scalar_lea.vmem %s0, %s232
      %p234 = scmp.lt.s32.totalorder %s15, 1
      %s235 = scalar_select %p234, %s15, 1
      %s236 = smul.addr %s235, 8
      %s237 = smul.addr %s236, 4
      %s238 = scalar_lea.vmem %s1, %s237
      %p239 = scmp.lt.s32.totalorder %s15, 1
      %s240 = scalar_select %p239, %s15, 1
      %s241 = smul.addr %s240, 8
      %s242 = smul.addr %s241, 4
      %s243 = scalar_lea.vmem %s2, %s242
      %p244 = scmp.lt.s32.totalorder %s15, 1
      %s245 = scalar_select %p244, %s15, 1
      %s246 = scalar_lea.vmem %s3, %s245
      %p247 = scmp.lt.s32.totalorder %s15, 1
      %s248 = scalar_select %p247, %s15, 1
      %s249 = smul.addr %s248, 2
      %s250 = smul.addr %s249, 8
      %s251 = scalar_lea.vmem %s4, %s250
      %v253 = vld [vmem:[%s246] sm:$0x1]
      %vm254 = vcmp.gt.f32.partialorder %v253, 0.5
      %v255 = vlaneseq
      %v256 = vshrl.u32 %v255, 7
      %v257 = vadd.s32 %v256, 8
      %v258 = vlaneseq
      %v259 = vand.u32 %v258, 127
      %vm260 = vcmp.ge.s32.totalorder %v256, %v259
      %vm261 = vcmp.ge.s32.totalorder %v257, %v259
      %v262 = vsel %vm254, 1, 0
      %v263 = vlaneseq
      %v264 = vshrl.u32 %v263, 7
      %v265 = vsub.s32 0, %v264
      %v266 = vrot.slane %v262, %v265
      %vm267 = vcmp.eq.s32.totalorder %v266, 1
      %vm268 = vmand %vm260, %vm267
      %vm269 = vmand %vm261, %vm267
      %v270 = vsel %vm268, 0.0, -1e+09
      %v271 = vsel %vm269, 0.0, -1e+09
      %v272 = vld [vmem:[%s233] sm:$0xf]
      %v273 = vld [vmem:[%s233 + $0x4] sm:$0x1]
      %v274 = vld [vmem:[%s238] sm:$0xf]
      %v275 = vld [vmem:[%s238 + $0x4] sm:$0x1]
      %v276 = vld [vmem:[%s243] sm:$0xf]
      %v277 = vld [vmem:[%s243 + $0x4] sm:$0x1]
      %v280 = vunpack.c.l.b16 %v272
      %v281 = vunpack.c.l.b16 %v273
      %v282 = vpack.c.b16 %v281, %v280
      %v285 = vunpack.c.l.b16 %v274
      %v286 = vunpack.c.l.b16 %v275
      %v287 = vpack.c.b16 %v286, %v285
      %vm288 = vcmask 261120
      %v290 = vsel %vm288, %v282, 0
      %v293 = vsel %vm288, %v287, 0
      %295 = vmatprep.subr.bf16.mxu0 0
      %296 = vmatpush1.bf16.xpose.msra.mxu0 %v293
      %297 = vmatprep.subr.bf16.mxu0 0
      %298 = vmatpush1.bf16.xpose.msra.mxu0 0
      %299 = vmatprep.subr.bf16.mxu0 0
      %300 = vmatpush1.bf16.xpose.msra.mxu0 0
      %301 = vmatprep.subr.bf16.mxu0 0
      %302 = vmatpush1.bf16.xpose.msra.mxu0 0
      %303 = vmatprep.subr.bf16.mxu0 0
      %304 = vmatpush1.bf16.xpose.msra.mxu0 0
      %305 = vmatprep.subr.bf16.mxu0 0
      %306 = vmatpush1.bf16.xpose.msra.mxu0 0
      %307 = vmatprep.subr.bf16.mxu0 0
      %308 = vmatpush1.bf16.xpose.msra.mxu0 0
      %309 = vmatprep.subr.bf16.mxu0 0
      %310 = vmatpush1.bf16.xpose.msra.mxu0 0
      %311 = vmatprep.subr.bf16.mxu0 0
      %312 = vmatpush1.bf16.xpose.msra.mxu0 0
      %313 = vmatprep.subr.bf16.mxu0 0
      %314 = vmatpush1.bf16.xpose.msra.mxu0 0
      %315 = vmatprep.subr.bf16.mxu0 0
      %316 = vmatpush1.bf16.xpose.msra.mxu0 0
      %317 = vmatprep.subr.bf16.mxu0 0
      %318 = vmatpush1.bf16.xpose.msra.mxu0 0
      %319 = vmatprep.subr.bf16.mxu0 0
      %320 = vmatpush1.bf16.xpose.msra.mxu0 0
      %321 = vmatprep.subr.bf16.mxu0 0
      %322 = vmatpush1.bf16.xpose.msra.mxu0 0
      %323 = vmatprep.subr.bf16.mxu0 0
      %324 = vmatpush1.bf16.xpose.msra.mxu0 0
      %325 = vmatprep.subr.bf16.mxu0 0
      %326 = vmatpush1.bf16.xpose.msra.mxu0 0
      %327 = vmatprep.mubr.bf16.mxu0 0
      %328 = vmatmul.mubr.bf16.gmra.mrb[0].mxu0 %v290
      %v329 = vpop.f32.mrb[0].mxu0
      %v330 = vadd.f32 0.0, %v329
      %v331 = vpop.f32.mrb[0].mxu0
      %v332 = vpop.f32.mrb[0].mxu0
      %v333 = vadd.f32 0.0, %v332
      %v334 = vpop.f32.mrb[0].mxu0
      %335 = vdwg.mxu0
      %v336 = vmul.f32 %v330, 0.17677669
      %v337 = vmul.f32 %v333, 0.17677669
      %v338 = vadd.f32 %v336, %v270
      %v339 = vadd.f32 %v337, %v271
      %vm340 = vcmask 72704
      %v341 = vsel %vm340, %v338, -inf
      %342 = vmax.xlane.f32.xlu0 %v341
      %v343 = vpop.xlane.xlu0 %342
      %vm344 = vcmask 65536
      %v345 = vsel %vm344, %v339, -inf
      %346 = vmax.xlane.f32.xlu0 %v345
      %v347 = vpop.xlane.xlu0 %346
      %v348 = vsub.f32 %v338, %v343
      %v349 = vsub.f32 %v339, %v347
      %v350 = vmul.f32 %v348, 1.442695
      %v351 = vpow.pop %v350
      %v352 = vmul.f32 %v349, 1.442695
      %v353 = vpow.pop %v352
      %v354 = vsel %vm340, %v351, 0.0
      %355 = vadd.xlane.f32.xlu0 %v354
      %v356 = vpop.xlane.xlu0 %355
      %v357 = vsel %vm344, %v353, 0.0
      %358 = vadd.xlane.f32.xlu0 %v357
      %v359 = vpop.xlane.xlu0 %358
      %v360 = vrcp.pop %v356
      %v361 = vrcp.pop %v359
      %v362 = vmul.f32 %v351, %v360
      %v363 = vmul.f32 %v353, %v361
      %v364 = vpack.c.bf16 %v363, %v362
      %v367 = vunpack.c.l.b16 %v276
      %v368 = vunpack.c.l.b16 %v277
      %v369 = vpack.c.b16 %v368, %v367
      %v371 = vsel %vm340, %v364, 0
      %vm373 = vcmask 1043456
      %vm374 = vcmask 1044480
      %v375 = vsel %vm373, 4294967295, 65535
      %v376 = vsel %vm374, %v375, 0
      %v378 = vand.u32 %v369, %v376
      %380 = vmatprep.subr.bf16.mxu0 0
      %381 = vmatpush1.bf16.msra.mxu0 %v378
      %382 = vmatprep.subr.bf16.mxu0 0
      %383 = vmatpush1.bf16.msra.mxu0 0
      %384 = vmatprep.subr.bf16.mxu0 0
      %385 = vmatpush1.bf16.msra.mxu0 0
      %386 = vmatprep.subr.bf16.mxu0 0
      %387 = vmatpush1.bf16.msra.mxu0 0
      %388 = vmatprep.subr.bf16.mxu0 0
      %389 = vmatpush1.bf16.msra.mxu0 0
      %390 = vmatprep.subr.bf16.mxu0 0
      %391 = vmatpush1.bf16.msra.mxu0 0
      %392 = vmatprep.subr.bf16.mxu0 0
      %393 = vmatpush1.bf16.msra.mxu0 0
      %394 = vmatprep.subr.bf16.mxu0 0
      %395 = vmatpush1.bf16.msra.mxu0 0
      %396 = vmatprep.subr.bf16.mxu0 0
      %397 = vmatpush1.bf16.msra.mxu0 0
      %398 = vmatprep.subr.bf16.mxu0 0
      %399 = vmatpush1.bf16.msra.mxu0 0
      %400 = vmatprep.subr.bf16.mxu0 0
      %401 = vmatpush1.bf16.msra.mxu0 0
      %402 = vmatprep.subr.bf16.mxu0 0
      %403 = vmatpush1.bf16.msra.mxu0 0
      %404 = vmatprep.subr.bf16.mxu0 0
      %405 = vmatpush1.bf16.msra.mxu0 0
      %406 = vmatprep.subr.bf16.mxu0 0
      %407 = vmatpush1.bf16.msra.mxu0 0
      %408 = vmatprep.subr.bf16.mxu0 0
      %409 = vmatpush1.bf16.msra.mxu0 0
      %410 = vmatprep.subr.bf16.mxu0 0
      %411 = vmatpush1.bf16.msra.mxu0 0
      %412 = vmatprep.mubr.bf16.mxu0 0
      %413 = vmatmul.mubr.bf16.gmra.mrb[0].mxu0 %v371
      %v414 = vpop.f32.mrb[0].mxu0
      %v415 = vadd.f32 0.0, %v414
      %v416 = vpop.f32.mrb[0].mxu0
      %v417 = vpop.f32.mrb[0].mxu0
      %v418 = vadd.f32 0.0, %v417
      %v419 = vpop.f32.mrb[0].mxu0
      %420 = vdwg.mxu0
      %s421 = scalar_lea.vmem %s233, 8
      %v422 = vld [vmem:[%s421] sm:$0xf]
      %v423 = vld [vmem:[%s421 + $0x4] sm:$0x1]
      %s424 = scalar_lea.vmem %s238, 8
      %v425 = vld [vmem:[%s424] sm:$0xf]
      %v426 = vld [vmem:[%s424 + $0x4] sm:$0x1]
      %s427 = scalar_lea.vmem %s243, 8
      %v428 = vld [vmem:[%s427] sm:$0xf]
      %v429 = vld [vmem:[%s427 + $0x4] sm:$0x1]
      %v432 = vunpack.c.l.b16 %v422
      %v433 = vunpack.c.l.b16 %v423
      %v434 = vpack.c.b16 %v433, %v432
      %v437 = vunpack.c.l.b16 %v425
      %v438 = vunpack.c.l.b16 %v426
      %v439 = vpack.c.b16 %v438, %v437
      %v441 = vsel %vm288, %v434, 0
      %v444 = vsel %vm288, %v439, 0
      %446 = vmatprep.subr.bf16.mxu0 0
      %447 = vmatpush1.bf16.xpose.msra.mxu0 %v444
      %448 = vmatprep.subr.bf16.mxu0 0
      %449 = vmatpush1.bf16.xpose.msra.mxu0 0
      %450 = vmatprep.subr.bf16.mxu0 0
      %451 = vmatpush1.bf16.xpose.msra.mxu0 0
      %452 = vmatprep.subr.bf16.mxu0 0
      %453 = vmatpush1.bf16.xpose.msra.mxu0 0
      %454 = vmatprep.subr.bf16.mxu0 0
      %455 = vmatpush1.bf16.xpose.msra.mxu0 0
      %456 = vmatprep.subr.bf16.mxu0 0
      %457 = vmatpush1.bf16.xpose.msra.mxu0 0
      %458 = vmatprep.subr.bf16.mxu0 0
      %459 = vmatpush1.bf16.xpose.msra.mxu0 0
      %460 = vmatprep.subr.bf16.mxu0 0
      %461 = vmatpush1.bf16.xpose.msra.mxu0 0
      %462 = vmatprep.subr.bf16.mxu0 0
      %463 = vmatpush1.bf16.xpose.msra.mxu0 0
      %464 = vmatprep.subr.bf16.mxu0 0
      %465 = vmatpush1.bf16.xpose.msra.mxu0 0
      %466 = vmatprep.subr.bf16.mxu0 0
      %467 = vmatpush1.bf16.xpose.msra.mxu0 0
      %468 = vmatprep.subr.bf16.mxu0 0
      %469 = vmatpush1.bf16.xpose.msra.mxu0 0
      %470 = vmatprep.subr.bf16.mxu0 0
      %471 = vmatpush1.bf16.xpose.msra.mxu0 0
      %472 = vmatprep.subr.bf16.mxu0 0
      %473 = vmatpush1.bf16.xpose.msra.mxu0 0
      %474 = vmatprep.subr.bf16.mxu0 0
      %475 = vmatpush1.bf16.xpose.msra.mxu0 0
      %476 = vmatprep.subr.bf16.mxu0 0
      %477 = vmatpush1.bf16.xpose.msra.mxu0 0
      %478 = vmatprep.mubr.bf16.mxu0 0
      %479 = vmatmul.mubr.bf16.gmra.mrb[0].mxu0 %v441
      %v480 = vpop.f32.mrb[0].mxu0
      %v481 = vadd.f32 0.0, %v480
      %v482 = vpop.f32.mrb[0].mxu0
      %v483 = vpop.f32.mrb[0].mxu0
      %v484 = vadd.f32 0.0, %v483
      %v485 = vpop.f32.mrb[0].mxu0
      %486 = vdwg.mxu0
      %v487 = vmul.f32 %v481, 0.17677669
      %v488 = vmul.f32 %v484, 0.17677669
      %v489 = vadd.f32 %v487, %v270
      %v490 = vadd.f32 %v488, %v271
      %v491 = vsel %vm340, %v489, -inf
      %492 = vmax.xlane.f32.xlu0 %v491
      %v493 = vpop.xlane.xlu0 %492
      %v494 = vsel %vm344, %v490, -inf
      %495 = vmax.xlane.f32.xlu0 %v494
      %v496 = vpop.xlane.xlu0 %495
      %v497 = vsub.f32 %v489, %v493
      %v498 = vsub.f32 %v490, %v496
      %v499 = vmul.f32 %v497, 1.442695
      %v500 = vpow.pop %v499
      %v501 = vmul.f32 %v498, 1.442695
      %v502 = vpow.pop %v501
      %v503 = vsel %vm340, %v500, 0.0
      %504 = vadd.xlane.f32.xlu0 %v503
      %v505 = vpop.xlane.xlu0 %504
      %v506 = vsel %vm344, %v502, 0.0
      %507 = vadd.xlane.f32.xlu0 %v506
      %v508 = vpop.xlane.xlu0 %507
      %v509 = vrcp.pop %v505
      %v510 = vrcp.pop %v508
      %v511 = vmul.f32 %v500, %v509
      %v512 = vmul.f32 %v502, %v510
      %v513 = vpack.c.bf16 %v512, %v511
      %v516 = vunpack.c.l.b16 %v428
      %v517 = vunpack.c.l.b16 %v429
      %v518 = vpack.c.b16 %v517, %v516
      %v520 = vsel %vm340, %v513, 0
      %v523 = vand.u32 %v518, %v376
      %525 = vmatprep.subr.bf16.mxu0 0
      %526 = vmatpush1.bf16.msra.mxu0 %v523
      %527 = vmatprep.subr.bf16.mxu0 0
      %528 = vmatpush1.bf16.msra.mxu0 0
      %529 = vmatprep.subr.bf16.mxu0 0
      %530 = vmatpush1.bf16.msra.mxu0 0
      %531 = vmatprep.subr.bf16.mxu0 0
      %532 = vmatpush1.bf16.msra.mxu0 0
      %533 = vmatprep.subr.bf16.mxu0 0
      %534 = vmatpush1.bf16.msra.mxu0 0
      %535 = vmatprep.subr.bf16.mxu0 0
      %536 = vmatpush1.bf16.msra.mxu0 0
      %537 = vmatprep.subr.bf16.mxu0 0
      %538 = vmatpush1.bf16.msra.mxu0 0
      %539 = vmatprep.subr.bf16.mxu0 0
      %540 = vmatpush1.bf16.msra.mxu0 0
      %541 = vmatprep.subr.bf16.mxu0 0
      %542 = vmatpush1.bf16.msra.mxu0 0
      %543 = vmatprep.subr.bf16.mxu0 0
      %544 = vmatpush1.bf16.msra.mxu0 0
      %545 = vmatprep.subr.bf16.mxu0 0
      %546 = vmatpush1.bf16.msra.mxu0 0
      %547 = vmatprep.subr.bf16.mxu0 0
      %548 = vmatpush1.bf16.msra.mxu0 0
      %549 = vmatprep.subr.bf16.mxu0 0
      %550 = vmatpush1.bf16.msra.mxu0 0
      %551 = vmatprep.subr.bf16.mxu0 0
      %552 = vmatpush1.bf16.msra.mxu0 0
      %553 = vmatprep.subr.bf16.mxu0 0
      %554 = vmatpush1.bf16.msra.mxu0 0
      %555 = vmatprep.subr.bf16.mxu0 0
      %556 = vmatpush1.bf16.msra.mxu0 0
      %557 = vmatprep.mubr.bf16.mxu0 0
      %558 = vmatmul.mubr.bf16.gmra.mrb[0].mxu0 %v520
      %v559 = vpop.f32.mrb[0].mxu0
      %v560 = vadd.f32 0.0, %v559
      %v561 = vpop.f32.mrb[0].mxu0
      %v562 = vpop.f32.mrb[0].mxu0
      %v563 = vadd.f32 0.0, %v562
      %v564 = vpop.f32.mrb[0].mxu0
      %565 = vdwg.mxu0
      %s566 = scalar_lea.vmem %s233, 16
      %v567 = vld [vmem:[%s566] sm:$0xf]
      %v568 = vld [vmem:[%s566 + $0x4] sm:$0x1]
      %s569 = scalar_lea.vmem %s238, 16
      %v570 = vld [vmem:[%s569] sm:$0xf]
      %v571 = vld [vmem:[%s569 + $0x4] sm:$0x1]
      %s572 = scalar_lea.vmem %s243, 16
      %v573 = vld [vmem:[%s572] sm:$0xf]
      %v574 = vld [vmem:[%s572 + $0x4] sm:$0x1]
      %v577 = vunpack.c.l.b16 %v567
      %v578 = vunpack.c.l.b16 %v568
      %v579 = vpack.c.b16 %v578, %v577
      %v582 = vunpack.c.l.b16 %v570
      %v583 = vunpack.c.l.b16 %v571
      %v584 = vpack.c.b16 %v583, %v582
      %v586 = vsel %vm288, %v579, 0
      %v589 = vsel %vm288, %v584, 0
      %591 = vmatprep.subr.bf16.mxu0 0
      %592 = vmatpush1.bf16.xpose.msra.mxu0 %v589
      %593 = vmatprep.subr.bf16.mxu0 0
      %594 = vmatpush1.bf16.xpose.msra.mxu0 0
      %595 = vmatprep.subr.bf16.mxu0 0
      %596 = vmatpush1.bf16.xpose.msra.mxu0 0
      %597 = vmatprep.subr.bf16.mxu0 0
      %598 = vmatpush1.bf16.xpose.msra.mxu0 0
      %599 = vmatprep.subr.bf16.mxu0 0
      %600 = vmatpush1.bf16.xpose.msra.mxu0 0
      %601 = vmatprep.subr.bf16.mxu0 0
      %602 = vmatpush1.bf16.xpose.msra.mxu0 0
      %603 = vmatprep.subr.bf16.mxu0 0
      %604 = vmatpush1.bf16.xpose.msra.mxu0 0
      %605 = vmatprep.subr.bf16.mxu0 0
      %606 = vmatpush1.bf16.xpose.msra.mxu0 0
      %607 = vmatprep.subr.bf16.mxu0 0
      %608 = vmatpush1.bf16.xpose.msra.mxu0 0
      %609 = vmatprep.subr.bf16.mxu0 0
      %610 = vmatpush1.bf16.xpose.msra.mxu0 0
      %611 = vmatprep.subr.bf16.mxu0 0
      %612 = vmatpush1.bf16.xpose.msra.mxu0 0
      %613 = vmatprep.subr.bf16.mxu0 0
      %614 = vmatpush1.bf16.xpose.msra.mxu0 0
      %615 = vmatprep.subr.bf16.mxu0 0
      %616 = vmatpush1.bf16.xpose.msra.mxu0 0
      %617 = vmatprep.subr.bf16.mxu0 0
      %618 = vmatpush1.bf16.xpose.msra.mxu0 0
      %619 = vmatprep.subr.bf16.mxu0 0
      %620 = vmatpush1.bf16.xpose.msra.mxu0 0
      %621 = vmatprep.subr.bf16.mxu0 0
      %622 = vmatpush1.bf16.xpose.msra.mxu0 0
      %623 = vmatprep.mubr.bf16.mxu0 0
      %624 = vmatmul.mubr.bf16.gmra.mrb[0].mxu0 %v586
      %v625 = vpop.f32.mrb[0].mxu0
      %v626 = vadd.f32 0.0, %v625
      %v627 = vpop.f32.mrb[0].mxu0
      %v628 = vpop.f32.mrb[0].mxu0
      %v629 = vadd.f32 0.0, %v628
      %v630 = vpop.f32.mrb[0].mxu0
      %631 = vdwg.mxu0
      %v632 = vmul.f32 %v626, 0.17677669
      %v633 = vmul.f32 %v629, 0.17677669
      %v634 = vadd.f32 %v632, %v270
      %v635 = vadd.f32 %v633, %v271
      %v636 = vsel %vm340, %v634, -inf
      %637 = vmax.xlane.f32.xlu0 %v636
      %v638 = vpop.xlane.xlu0 %637
      %v639 = vsel %vm344, %v635, -inf
      %640 = vmax.xlane.f32.xlu0 %v639
      %v641 = vpop.xlane.xlu0 %640
      %v642 = vsub.f32 %v634, %v638
      %v643 = vsub.f32 %v635, %v641
      %v644 = vmul.f32 %v642, 1.442695
      %v645 = vpow.pop %v644
      %v646 = vmul.f32 %v643, 1.442695
      %v647 = vpow.pop %v646
      %v648 = vsel %vm340, %v645, 0.0
      %649 = vadd.xlane.f32.xlu0 %v648
      %v650 = vpop.xlane.xlu0 %649
      %v651 = vsel %vm344, %v647, 0.0
      %652 = vadd.xlane.f32.xlu0 %v651
      %v653 = vpop.xlane.xlu0 %652
      %v654 = vrcp.pop %v650
      %v655 = vrcp.pop %v653
      %v656 = vmul.f32 %v645, %v654
      %v657 = vmul.f32 %v647, %v655
      %v658 = vpack.c.bf16 %v657, %v656
      %v661 = vunpack.c.l.b16 %v573
      %v662 = vunpack.c.l.b16 %v574
      %v663 = vpack.c.b16 %v662, %v661
      %v665 = vsel %vm340, %v658, 0
      %v668 = vand.u32 %v663, %v376
      %670 = vmatprep.subr.bf16.mxu0 0
      %671 = vmatpush1.bf16.msra.mxu0 %v668
      %672 = vmatprep.subr.bf16.mxu0 0
      %673 = vmatpush1.bf16.msra.mxu0 0
      %674 = vmatprep.subr.bf16.mxu0 0
      %675 = vmatpush1.bf16.msra.mxu0 0
      %676 = vmatprep.subr.bf16.mxu0 0
      %677 = vmatpush1.bf16.msra.mxu0 0
      %678 = vmatprep.subr.bf16.mxu0 0
      %679 = vmatpush1.bf16.msra.mxu0 0
      %680 = vmatprep.subr.bf16.mxu0 0
      %681 = vmatpush1.bf16.msra.mxu0 0
      %682 = vmatprep.subr.bf16.mxu0 0
      %683 = vmatpush1.bf16.msra.mxu0 0
      %684 = vmatprep.subr.bf16.mxu0 0
      %685 = vmatpush1.bf16.msra.mxu0 0
      %686 = vmatprep.subr.bf16.mxu0 0
      %687 = vmatpush1.bf16.msra.mxu0 0
      %688 = vmatprep.subr.bf16.mxu0 0
      %689 = vmatpush1.bf16.msra.mxu0 0
      %690 = vmatprep.subr.bf16.mxu0 0
      %691 = vmatpush1.bf16.msra.mxu0 0
      %692 = vmatprep.subr.bf16.mxu0 0
      %693 = vmatpush1.bf16.msra.mxu0 0
      %694 = vmatprep.subr.bf16.mxu0 0
      %695 = vmatpush1.bf16.msra.mxu0 0
      %696 = vmatprep.subr.bf16.mxu0 0
      %697 = vmatpush1.bf16.msra.mxu0 0
      %698 = vmatprep.subr.bf16.mxu0 0
      %699 = vmatpush1.bf16.msra.mxu0 0
      %700 = vmatprep.subr.bf16.mxu0 0
      %701 = vmatpush1.bf16.msra.mxu0 0
      %702 = vmatprep.mubr.bf16.mxu0 0
      %703 = vmatmul.mubr.bf16.gmra.mrb[0].mxu0 %v665
      %v704 = vpop.f32.mrb[0].mxu0
      %v705 = vadd.f32 0.0, %v704
      %v706 = vpop.f32.mrb[0].mxu0
      %v707 = vpop.f32.mrb[0].mxu0
      %v708 = vadd.f32 0.0, %v707
      %v709 = vpop.f32.mrb[0].mxu0
      %710 = vdwg.mxu0
      %s711 = scalar_lea.vmem %s233, 24
      %v712 = vld [vmem:[%s711] sm:$0xf]
      %v713 = vld [vmem:[%s711 + $0x4] sm:$0x1]
      %s714 = scalar_lea.vmem %s238, 24
      %v715 = vld [vmem:[%s714] sm:$0xf]
      %v716 = vld [vmem:[%s714 + $0x4] sm:$0x1]
      %s717 = scalar_lea.vmem %s243, 24
      %v718 = vld [vmem:[%s717] sm:$0xf]
      %v719 = vld [vmem:[%s717 + $0x4] sm:$0x1]
      %v722 = vunpack.c.l.b16 %v712
      %v723 = vunpack.c.l.b16 %v713
      %v724 = vpack.c.b16 %v723, %v722
      %v727 = vunpack.c.l.b16 %v715
      %v728 = vunpack.c.l.b16 %v716
      %v729 = vpack.c.b16 %v728, %v727
      %v731 = vsel %vm288, %v724, 0
      %v734 = vsel %vm288, %v729, 0
      %736 = vmatprep.subr.bf16.mxu0 0
      %737 = vmatpush1.bf16.xpose.msra.mxu0 %v734
      %738 = vmatprep.subr.bf16.mxu0 0
      %739 = vmatpush1.bf16.xpose.msra.mxu0 0
      %740 = vmatprep.subr.bf16.mxu0 0
      %741 = vmatpush1.bf16.xpose.msra.mxu0 0
      %742 = vmatprep.subr.bf16.mxu0 0
      %743 = vmatpush1.bf16.xpose.msra.mxu0 0
      %744 = vmatprep.subr.bf16.mxu0 0
      %745 = vmatpush1.bf16.xpose.msra.mxu0 0
      %746 = vmatprep.subr.bf16.mxu0 0
      %747 = vmatpush1.bf16.xpose.msra.mxu0 0
      %748 = vmatprep.subr.bf16.mxu0 0
      %749 = vmatpush1.bf16.xpose.msra.mxu0 0
      %750 = vmatprep.subr.bf16.mxu0 0
      %751 = vmatpush1.bf16.xpose.msra.mxu0 0
      %752 = vmatprep.subr.bf16.mxu0 0
      %753 = vmatpush1.bf16.xpose.msra.mxu0 0
      %754 = vmatprep.subr.bf16.mxu0 0
      %755 = vmatpush1.bf16.xpose.msra.mxu0 0
      %756 = vmatprep.subr.bf16.mxu0 0
      %757 = vmatpush1.bf16.xpose.msra.mxu0 0
      %758 = vmatprep.subr.bf16.mxu0 0
      %759 = vmatpush1.bf16.xpose.msra.mxu0 0
      %760 = vmatprep.subr.bf16.mxu0 0
      %761 = vmatpush1.bf16.xpose.msra.mxu0 0
      %762 = vmatprep.subr.bf16.mxu0 0
      %763 = vmatpush1.bf16.xpose.msra.mxu0 0
      %764 = vmatprep.subr.bf16.mxu0 0
      %765 = vmatpush1.bf16.xpose.msra.mxu0 0
      %766 = vmatprep.subr.bf16.mxu0 0
      %767 = vmatpush1.bf16.xpose.msra.mxu0 0
      %768 = vmatprep.mubr.bf16.mxu0 0
      %769 = vmatmul.mubr.bf16.gmra.mrb[0].mxu0 %v731
      %v770 = vpop.f32.mrb[0].mxu0
      %v771 = vadd.f32 0.0, %v770
      %v772 = vpop.f32.mrb[0].mxu0
      %v773 = vpop.f32.mrb[0].mxu0
      %v774 = vadd.f32 0.0, %v773
      %v775 = vpop.f32.mrb[0].mxu0
      %776 = vdwg.mxu0
      %v777 = vmul.f32 %v771, 0.17677669
      %v778 = vmul.f32 %v774, 0.17677669
      %v779 = vadd.f32 %v777, %v270
      %v780 = vadd.f32 %v778, %v271
      %v781 = vsel %vm340, %v779, -inf
      %782 = vmax.xlane.f32.xlu0 %v781
      %v783 = vpop.xlane.xlu0 %782
      %v784 = vsel %vm344, %v780, -inf
      %785 = vmax.xlane.f32.xlu0 %v784
      %v786 = vpop.xlane.xlu0 %785
      %v787 = vsub.f32 %v779, %v783
      %v788 = vsub.f32 %v780, %v786
      %v789 = vmul.f32 %v787, 1.442695
      %v790 = vpow.pop %v789
      %v791 = vmul.f32 %v788, 1.442695
      %v792 = vpow.pop %v791
      %v793 = vsel %vm340, %v790, 0.0
      %794 = vadd.xlane.f32.xlu0 %v793
      %v795 = vpop.xlane.xlu0 %794
      %v796 = vsel %vm344, %v792, 0.0
      %797 = vadd.xlane.f32.xlu0 %v796
      %v798 = vpop.xlane.xlu0 %797
      %v799 = vrcp.pop %v795
      %v800 = vrcp.pop %v798
      %v801 = vmul.f32 %v790, %v799
      %v802 = vmul.f32 %v792, %v800
      %v803 = vpack.c.bf16 %v802, %v801
      %v806 = vunpack.c.l.b16 %v718
      %v807 = vunpack.c.l.b16 %v719
      %v808 = vpack.c.b16 %v807, %v806
      %v810 = vsel %vm340, %v803, 0
      %v813 = vand.u32 %v808, %v376
      %815 = vmatprep.subr.bf16.mxu0 0
      %816 = vmatpush1.bf16.msra.mxu0 %v813
      %817 = vmatprep.subr.bf16.mxu0 0
      %818 = vmatpush1.bf16.msra.mxu0 0
      %819 = vmatprep.subr.bf16.mxu0 0
      %820 = vmatpush1.bf16.msra.mxu0 0
      %821 = vmatprep.subr.bf16.mxu0 0
      %822 = vmatpush1.bf16.msra.mxu0 0
      %823 = vmatprep.subr.bf16.mxu0 0
      %824 = vmatpush1.bf16.msra.mxu0 0
      %825 = vmatprep.subr.bf16.mxu0 0
      %826 = vmatpush1.bf16.msra.mxu0 0
      %827 = vmatprep.subr.bf16.mxu0 0
      %828 = vmatpush1.bf16.msra.mxu0 0
      %829 = vmatprep.subr.bf16.mxu0 0
      %830 = vmatpush1.bf16.msra.mxu0 0
      %831 = vmatprep.subr.bf16.mxu0 0
      %832 = vmatpush1.bf16.msra.mxu0 0
      %833 = vmatprep.subr.bf16.mxu0 0
      %834 = vmatpush1.bf16.msra.mxu0 0
      %835 = vmatprep.subr.bf16.mxu0 0
      %836 = vmatpush1.bf16.msra.mxu0 0
      %837 = vmatprep.subr.bf16.mxu0 0
      %838 = vmatpush1.bf16.msra.mxu0 0
      %839 = vmatprep.subr.bf16.mxu0 0
      %840 = vmatpush1.bf16.msra.mxu0 0
      %841 = vmatprep.subr.bf16.mxu0 0
      %842 = vmatpush1.bf16.msra.mxu0 0
      %843 = vmatprep.subr.bf16.mxu0 0
      %844 = vmatpush1.bf16.msra.mxu0 0
      %845 = vmatprep.subr.bf16.mxu0 0
      %846 = vmatpush1.bf16.msra.mxu0 0
      %847 = vmatprep.mubr.bf16.mxu0 0
      %848 = vmatmul.mubr.bf16.gmra.mrb[0].mxu0 %v810
      %v849 = vpop.f32.mrb[0].mxu0
      %v850 = vadd.f32 0.0, %v849
      %v851 = vpop.f32.mrb[0].mxu0
      %v852 = vpop.f32.mrb[0].mxu0
      %v853 = vadd.f32 0.0, %v852
      %v854 = vpop.f32.mrb[0].mxu0
      %855 = vdwg.mxu0
      %858 = vrot.lane.b32.xlu0 %v560, 32
      %v859 = vpop.permute.xlu0 %858
      %860 = vrot.lane.b32.xlu0 %v563, 32
      %v861 = vpop.permute.xlu0 %860
      %866 = vrot.lane.b32.xlu0 %v705, 64
      %v867 = vpop.permute.xlu0 %866
      %868 = vrot.lane.b32.xlu0 %v708, 64
      %v869 = vpop.permute.xlu0 %868
      %874 = vrot.lane.b32.xlu0 %v850, 96
      %v875 = vpop.permute.xlu0 %874
      %876 = vrot.lane.b32.xlu0 %v853, 96
      %v877 = vpop.permute.xlu0 %876
      %v880 = vsel %vm288, %v415, %v859
      %v881 = vsel %vm288, %v418, %v861
      %vm882 = vcmask 523264
      %v883 = vsel %vm882, %v880, %v867
      %v884 = vsel %vm882, %v881, %v869
      %vm885 = vcmask 785408
      %v886 = vsel %vm885, %v883, %v875
      %v887 = vsel %vm885, %v884, %v877
      %888 = vst [vmem:[%s251] sm:$0xff] %v886
      %889 = vst [vmem:[%s251 + $0x8] sm:$0x1] %v887
      %p890 = scmp.lt.s32.totalorder %s15, 1
      %s891 = scalar_select %p890, %s15, 1
      %s892 = smul.addr %s891, 2
      %s893 = smul.addr %s892, 8
      %s894 = scalar_lea.vmem %s4, %s893
      // Predicated region
      $region37: #{autoencoder_forward.35} parent=35 // pred_check
        %p895 = pneg %p137
      $region38: #{autoencoder_forward.35} parent=35 // pred_check_branch
        %897 = sbr.rel (%p895) target = $region40
      $region39: #{autoencoder_forward.35} parent=35 // pred_region
        _
      $region40: #{autoencoder_forward.35} parent=35 // pred_fallthru
        _
    $region36: #{autoencoder_forward.35} parent=5 // pred_fallthru
      _
    %p898 = scmp.le.s32.totalorder 2, %s10
    // Predicated region
    $region41: #{autoencoder_forward.35} parent=5 // pred_check
      %p899 = pneg %p898
    $region42: #{autoencoder_forward.35} parent=5 // pred_check_branch
      %901 = sbr.rel (%p899) target = $region44
    $region43: #{autoencoder_forward.35} parent=5 // pred_region
      %s902 = ssub.s32 %s10, 2
      // Predicated region
      $region45: #{autoencoder_forward.35} parent=43 // pred_check
        %p903 = pneg %p143
      $region46: #{autoencoder_forward.35} parent=43 // pred_check_branch
        %905 = sbr.rel (%p903) target = $region48
      $region47: #{autoencoder_forward.35} parent=43 // pred_region
        %p906 = scmp.lt.s32.totalorder %s16, 1
        %s907 = scalar_select %p906, %s16, 1
        %s908 = smul.addr %s907, 2
        %s909 = smul.addr %s908, 8
        %s910 = scalar_lea.vmem %s4, %s909
      $region48: #{autoencoder_forward.35} parent=43 // pred_fallthru
        _
    $region44: #{autoencoder_forward.35} parent=5 // pred_fallthru
      _
  $region6: #{autoencoder_forward.35} parent=0 // loop_footer
    %s14 = sadd.s32 1, %s10
  $region7: #{autoencoder_forward.35} parent=0 // loop_footer_branch
    %9 = sbr.rel target = $region3
  $region8: #{autoencoder_forward.35} parent=0 // loop_exit
    _

// kernel: autoencoder_forward.38
$region0: #{autoencoder_forward.38}
  #allocation0 [shape = 'u32[]', space=smem, size = 0x4, offset = 0x4, fixed_abs, tag = 'smem constant byte address 0x4 - core index']
  #allocation1 [shape = 'u32[144,128]{1,0:T(1,128)}', space=vmem, size = 0x12000, scoped, tag = 'internal scratch']
  %s0 = inlined_call_operand.vmem [shape: f32[24,512], index: 0, kind: input, shape index: {}]
  %s1 = inlined_call_operand.vmem [shape: bf16[512,128], index: 1, kind: input, shape index: {}]
  %s2 = inlined_call_operand.vmem [shape: f32[1,128], index: 2, kind: input, shape index: {}]
  %s3 = inlined_call_operand.vmem [shape: f32[24,128], index: 3, kind: input, shape index: {}]
  %s4 = inlined_call_operand.vmem [shape: f32[24,128], index: 4, kind: output, shape index: {}]
  %s5 = sld [smem:[#allocation0]]
  $region26: #{autoencoder_forward.38} parent=0
    _
  %s7 = ssub.s32 1, %s5
  %s8 = scalar_select 0, %s7, %s5
  // Predicated region
  $region2: #{autoencoder_forward.38} parent=0 // pred_check
    _
  $region3: #{autoencoder_forward.38} parent=0 // pred_check_branch
    %10 = sbr.rel (0) target = $region5
  $region4: #{autoencoder_forward.38} parent=0 // pred_region
    _
  $region5: #{autoencoder_forward.38} parent=0 // pred_fallthru
    _
  // Predicated region
  $region6: #{autoencoder_forward.38} parent=0 // pred_check
    _
  $region7: #{autoencoder_forward.38} parent=0 // pred_check_branch
    %12 = sbr.rel (0) target = $region9
  $region8: #{autoencoder_forward.38} parent=0 // pred_region
    _
  $region9: #{autoencoder_forward.38} parent=0 // pred_fallthru
    _
  // Predicated region
  $region10: #{autoencoder_forward.38} parent=0 // pred_check
    _
  $region11: #{autoencoder_forward.38} parent=0 // pred_check_branch
    %14 = sbr.rel (0) target = $region13
  $region12: #{autoencoder_forward.38} parent=0 // pred_region
    _
  $region13: #{autoencoder_forward.38} parent=0 // pred_fallthru
    _
  // Predicated region
  $region14: #{autoencoder_forward.38} parent=0 // pred_check
    _
  $region15: #{autoencoder_forward.38} parent=0 // pred_check_branch
    %16 = sbr.rel (0) target = $region17
  $region16: #{autoencoder_forward.38} parent=0 // pred_region
    _
  $region17: #{autoencoder_forward.38} parent=0 // pred_fallthru
    _
  %v18 = vld [vmem:[%s0] sm:$0xff]
  %v19 = vld [vmem:[%s0 + $0x8] sm:$0xff]
  %v20 = vld [vmem:[%s0 + $0x10] sm:$0xff]
  %v21 = vld [vmem:[%s0 + $0x18] sm:$0xff]
  %v22 = vld [vmem:[%s0 + $0x20] sm:$0xff]
  %v23 = vld [vmem:[%s0 + $0x28] sm:$0xff]
  %v24 = vld [vmem:[%s0 + $0x30] sm:$0xff]
  %v25 = vld [vmem:[%s0 + $0x38] sm:$0xff]
  %v26 = vld [vmem:[%s0 + $0x40] sm:$0xff]
  %v27 = vld [vmem:[%s0 + $0x48] sm:$0xff]
  %v28 = vld [vmem:[%s0 + $0x50] sm:$0xff]
  %v29 = vld [vmem:[%s0 + $0x58] sm:$0xff]
  %v30 = vpack.c.bf16 %v22, %v18
  %v31 = vpack.c.bf16 %v23, %v19
  %v32 = vpack.c.bf16 %v24, %v20
  %v33 = vpack.c.bf16 %v25, %v21
  %v34 = vpack.c.bf16 %v26, %v26
  %v35 = vpack.c.bf16 %v27, %v27
  %v36 = vpack.c.bf16 %v28, %v28
  %v37 = vpack.c.bf16 %v29, %v29
  %v38 = vld [vmem:[%s1] sm:$0xf]
  %v39 = vld [vmem:[%s1 + $0x4] sm:$0xf]
  %v40 = vld [vmem:[%s1 + $0x8] sm:$0xf]
  %v41 = vld [vmem:[%s1 + $0xc] sm:$0xf]
  %v42 = vld [vmem:[%s1 + $0x10] sm:$0xf]
  %v43 = vld [vmem:[%s1 + $0x14] sm:$0xf]
  %v44 = vld [vmem:[%s1 + $0x18] sm:$0xf]
  %v45 = vld [vmem:[%s1 + $0x1c] sm:$0xf]
  %v46 = vld [vmem:[%s1 + $0x20] sm:$0xf]
  %v47 = vld [vmem:[%s1 + $0x24] sm:$0xf]
  %v48 = vld [vmem:[%s1 + $0x28] sm:$0xf]
  %v49 = vld [vmem:[%s1 + $0x2c] sm:$0xf]
  %v50 = vld [vmem:[%s1 + $0x30] sm:$0xf]
  %v51 = vld [vmem:[%s1 + $0x34] sm:$0xf]
  %v52 = vld [vmem:[%s1 + $0x38] sm:$0xf]
  %v53 = vld [vmem:[%s1 + $0x3c] sm:$0xf]
  %v54 = vld [vmem:[%s1 + $0x40] sm:$0xf]
  %v55 = vld [vmem:[%s1 + $0x44] sm:$0xf]
  %v56 = vld [vmem:[%s1 + $0x48] sm:$0xf]
  %v57 = vld [vmem:[%s1 + $0x4c] sm:$0xf]
  %v58 = vld [vmem:[%s1 + $0x50] sm:$0xf]
  %v59 = vld [vmem:[%s1 + $0x54] sm:$0xf]
  %v60 = vld [vmem:[%s1 + $0x58] sm:$0xf]
  %v61 = vld [vmem:[%s1 + $0x5c] sm:$0xf]
  %v62 = vld [vmem:[%s1 + $0x60] sm:$0xf]
  %v63 = vld [vmem:[%s1 + $0x64] sm:$0xf]
  %v64 = vld [vmem:[%s1 + $0x68] sm:$0xf]
  %v65 = vld [vmem:[%s1 + $0x6c] sm:$0xf]
  %v66 = vld [vmem:[%s1 + $0x70] sm:$0xf]
  %v67 = vld [vmem:[%s1 + $0x74] sm:$0xf]
  %v68 = vld [vmem:[%s1 + $0x78] sm:$0xf]
  %v69 = vld [vmem:[%s1 + $0x7c] sm:$0xf]
  %v70 = vld [vmem:[%s1 + $0x80] sm:$0xf]
  %v71 = vld [vmem:[%s1 + $0x84] sm:$0xf]
  %v72 = vld [vmem:[%s1 + $0x88] sm:$0xf]
  %v73 = vld [vmem:[%s1 + $0x8c] sm:$0xf]
  %v74 = vld [vmem:[%s1 + $0x90] sm:$0xf]
  %v75 = vld [vmem:[%s1 + $0x94] sm:$0xf]
  %v76 = vld [vmem:[%s1 + $0x98] sm:$0xf]
  %v77 = vld [vmem:[%s1 + $0x9c] sm:$0xf]
  %v78 = vld [vmem:[%s1 + $0xa0] sm:$0xf]
  %v79 = vld [vmem:[%s1 + $0xa4] sm:$0xf]
  %v80 = vld [vmem:[%s1 + $0xa8] sm:$0xf]
  %v81 = vld [vmem:[%s1 + $0xac] sm:$0xf]
  %v82 = vld [vmem:[%s1 + $0xb0] sm:$0xf]
  %v83 = vld [vmem:[%s1 + $0xb4] sm:$0xf]
  %v84 = vld [vmem:[%s1 + $0xb8] sm:$0xf]
  %v85 = vld [vmem:[%s1 + $0xbc] sm:$0xf]
  %v86 = vld [vmem:[%s1 + $0xc0] sm:$0xf]
  %v87 = vld [vmem:[%s1 + $0xc4] sm:$0xf]
  %v88 = vld [vmem:[%s1 + $0xc8] sm:$0xf]
  %v89 = vld [vmem:[%s1 + $0xcc] sm:$0xf]
  %v90 = vld [vmem:[%s1 + $0xd0] sm:$0xf]
  %v91 = vld [vmem:[%s1 + $0xd4] sm:$0xf]
  %v92 = vld [vmem:[%s1 + $0xd8] sm:$0xf]
  %v93 = vld [vmem:[%s1 + $0xdc] sm:$0xf]
  %v94 = vld [vmem:[%s1 + $0xe0] sm:$0xf]
  %v95 = vld [vmem:[%s1 + $0xe4] sm:$0xf]
  %v96 = vld [vmem:[%s1 + $0xe8] sm:$0xf]
  %v97 = vld [vmem:[%s1 + $0xec] sm:$0xf]
  %v98 = vld [vmem:[%s1 + $0xf0] sm:$0xf]
  %v99 = vld [vmem:[%s1 + $0xf4] sm:$0xf]
  %v100 = vld [vmem:[%s1 + $0xf8] sm:$0xf]
  %v101 = vld [vmem:[%s1 + $0xfc] sm:$0xf]
  %v102 = vld [vmem:[%s2] sm:$0x1]
  %v104 = vlaneseq
  %v105 = vshrl.u32 %v104, 7
  %v106 = vsub.s32 0, %v105
  %v107 = vrot.slane %v102, %v106
  %v173 = vunpack.c.l.b16 %v38
  %v174 = vunpack.c.l.b16 %v39
  %v175 = vunpack.c.l.b16 %v40
  %v176 = vunpack.c.l.b16 %v41
  %v177 = vunpack.c.l.b16 %v42
  %v178 = vunpack.c.l.b16 %v43
  %v179 = vunpack.c.l.b16 %v44
  %v180 = vunpack.c.l.b16 %v45
  %v181 = vunpack.c.l.b16 %v46
  %v182 = vunpack.c.l.b16 %v47
  %v183 = vunpack.c.l.b16 %v48
  %v184 = vunpack.c.l.b16 %v49
  %v185 = vunpack.c.l.b16 %v50
  %v186 = vunpack.c.l.b16 %v51
  %v187 = vunpack.c.l.b16 %v52
  %v188 = vunpack.c.l.b16 %v53
  %v189 = vunpack.c.l.b16 %v54
  %v190 = vunpack.c.l.b16 %v55
  %v191 = vunpack.c.l.b16 %v56
  %v192 = vunpack.c.l.b16 %v57
  %v193 = vunpack.c.l.b16 %v58
  %v194 = vunpack.c.l.b16 %v59
  %v195 = vunpack.c.l.b16 %v60
  %v196 = vunpack.c.l.b16 %v61
  %v197 = vunpack.c.l.b16 %v62
  %v198 = vunpack.c.l.b16 %v63
  %v199 = vunpack.c.l.b16 %v64
  %v200 = vunpack.c.l.b16 %v65
  %v201 = vunpack.c.l.b16 %v66
  %v202 = vunpack.c.l.b16 %v67
  %v203 = vunpack.c.l.b16 %v68
  %v204 = vunpack.c.l.b16 %v69
  %v205 = vunpack.c.l.b16 %v70
  %v206 = vunpack.c.l.b16 %v71
  %v207 = vunpack.c.l.b16 %v72
  %v208 = vunpack.c.l.b16 %v73
  %v209 = vunpack.c.l.b16 %v74
  %v210 = vunpack.c.l.b16 %v75
  %v211 = vunpack.c.l.b16 %v76
  %v212 = vunpack.c.l.b16 %v77
  %v213 = vunpack.c.l.b16 %v78
  %v214 = vunpack.c.l.b16 %v79
  %v215 = vunpack.c.l.b16 %v80
  %v216 = vunpack.c.l.b16 %v81
  %v217 = vunpack.c.l.b16 %v82
  %v218 = vunpack.c.l.b16 %v83
  %v219 = vunpack.c.l.b16 %v84
  %v220 = vunpack.c.l.b16 %v85
  %v221 = vunpack.c.l.b16 %v86
  %v222 = vunpack.c.l.b16 %v87
  %v223 = vunpack.c.l.b16 %v88
  %v224 = vunpack.c.l.b16 %v89
  %v225 = vunpack.c.l.b16 %v90
  %v226 = vunpack.c.l.b16 %v91
  %v227 = vunpack.c.l.b16 %v92
  %v228 = vunpack.c.l.b16 %v93
  %v229 = vunpack.c.l.b16 %v94
  %v230 = vunpack.c.l.b16 %v95
  %v231 = vunpack.c.l.b16 %v96
  %v232 = vunpack.c.l.b16 %v97
  %v233 = vunpack.c.l.b16 %v98
  %v234 = vunpack.c.l.b16 %v99
  %v235 = vunpack.c.l.b16 %v100
  %v236 = vunpack.c.l.b16 %v101
  %v237 = vpack.c.b16 %v174, %v173
  %v238 = vpack.c.b16 %v176, %v175
  %v239 = vpack.c.b16 %v178, %v177
  %v240 = vpack.c.b16 %v180, %v179
  %v241 = vpack.c.b16 %v182, %v181
  %v242 = vpack.c.b16 %v184, %v183
  %v243 = vpack.c.b16 %v186, %v185
  %v244 = vpack.c.b16 %v188, %v187
  %v245 = vpack.c.b16 %v190, %v189
  %v246 = vpack.c.b16 %v192, %v191
  %v247 = vpack.c.b16 %v194, %v193
  %v248 = vpack.c.b16 %v196, %v195
  %v249 = vpack.c.b16 %v198, %v197
  %v250 = vpack.c.b16 %v200, %v199
  %v251 = vpack.c.b16 %v202, %v201
  %v252 = vpack.c.b16 %v204, %v203
  %v253 = vpack.c.b16 %v206, %v205
  %v254 = vpack.c.b16 %v208, %v207
  %v255 = vpack.c.b16 %v210, %v209
  %v256 = vpack.c.b16 %v212, %v211
  %v257 = vpack.c.b16 %v214, %v213
  %v258 = vpack.c.b16 %v216, %v215
  %v259 = vpack.c.b16 %v218, %v217
  %v260 = vpack.c.b16 %v220, %v219
  %v261 = vpack.c.b16 %v222, %v221
  %v262 = vpack.c.b16 %v224, %v223
  %v263 = vpack.c.b16 %v226, %v225
  %v264 = vpack.c.b16 %v228, %v227
  %v265 = vpack.c.b16 %v230, %v229
  %v266 = vpack.c.b16 %v232, %v231
  %v267 = vpack.c.b16 %v234, %v233
  %v268 = vpack.c.b16 %v236, %v235
  %301 = vmatprep.subr.bf16.mxu0 0
  %302 = vmatpush1.bf16.msra.mxu0 %v237
  %303 = vmatprep.subr.bf16.mxu0 0
  %304 = vmatpush1.bf16.msra.mxu0 %v238
  %305 = vmatprep.subr.bf16.mxu0 0
  %306 = vmatpush1.bf16.msra.mxu0 %v239
  %307 = vmatprep.subr.bf16.mxu0 0
  %308 = vmatpush1.bf16.msra.mxu0 %v240
  %309 = vmatprep.subr.bf16.mxu0 0
  %310 = vmatpush1.bf16.msra.mxu0 %v241
  %311 = vmatprep.subr.bf16.mxu0 0
  %312 = vmatpush1.bf16.msra.mxu0 %v242
  %313 = vmatprep.subr.bf16.mxu0 0
  %314 = vmatpush1.bf16.msra.mxu0 %v243
  %315 = vmatprep.subr.bf16.mxu0 0
  %316 = vmatpush1.bf16.msra.mxu0 %v244
  %317 = vmatprep.subr.bf16.mxu0 0
  %318 = vmatpush1.bf16.msra.mxu0 %v245
  %319 = vmatprep.subr.bf16.mxu0 0
  %320 = vmatpush1.bf16.msra.mxu0 %v246
  %321 = vmatprep.subr.bf16.mxu0 0
  %322 = vmatpush1.bf16.msra.mxu0 %v247
  %323 = vmatprep.subr.bf16.mxu0 0
  %324 = vmatpush1.bf16.msra.mxu0 %v248
  %325 = vmatprep.subr.bf16.mxu0 0
  %326 = vmatpush1.bf16.msra.mxu0 %v249
  %327 = vmatprep.subr.bf16.mxu0 0
  %328 = vmatpush1.bf16.msra.mxu0 %v250
  %329 = vmatprep.subr.bf16.mxu0 0
  %330 = vmatpush1.bf16.msra.mxu0 %v251
  %331 = vmatprep.subr.bf16.mxu0 0
  %332 = vmatpush1.bf16.msra.mxu0 %v252
  %333 = vmatprep.mubr.bf16.mxu0 %v31
  %334 = vmatmul.mubr.bf16.gmra.mrb[0].mxu0 %v30
  %v335 = vpop.f32.mrb[0].mxu0
  %v336 = vadd.f32 %v107, %v335
  %v337 = vpop.f32.mrb[0].mxu0
  %v338 = vpop.f32.mrb[0].mxu0
  %v339 = vadd.f32 %v107, %v338
  %v340 = vpop.f32.mrb[0].mxu0
  %341 = vmatprep.mubr.bf16.mxu0 %v35
  %342 = vmatmul.mubr.bf16.gmra.mrb[0].mxu0 %v34
  %v343 = vpop.f32.mrb[0].mxu0
  %v344 = vadd.f32 %v107, %v343
  %v345 = vpop.f32.mrb[0].mxu0
  %v346 = vpop.f32.mrb[0].mxu0
  %v347 = vpop.f32.mrb[0].mxu0
  %348 = vdwg.mxu0
  %349 = vmatprep.subr.bf16.mxu0 0
  %350 = vmatpush1.bf16.msra.mxu0 %v253
  %351 = vmatprep.subr.bf16.mxu0 0
  %352 = vmatpush1.bf16.msra.mxu0 %v254
  %353 = vmatprep.subr.bf16.mxu0 0
  %354 = vmatpush1.bf16.msra.mxu0 %v255
  %355 = vmatprep.subr.bf16.mxu0 0
  %356 = vmatpush1.bf16.msra.mxu0 %v256
  %357 = vmatprep.subr.bf16.mxu0 0
  %358 = vmatpush1.bf16.msra.mxu0 %v257
  %359 = vmatprep.subr.bf16.mxu0 0
  %360 = vmatpush1.bf16.msra.mxu0 %v258
  %361 = vmatprep.subr.bf16.mxu0 0
  %362 = vmatpush1.bf16.msra.mxu0 %v259
  %363 = vmatprep.subr.bf16.mxu0 0
  %364 = vmatpush1.bf16.msra.mxu0 %v260
  %365 = vmatprep.subr.bf16.mxu0 0
  %366 = vmatpush1.bf16.msra.mxu0 %v261
  %367 = vmatprep.subr.bf16.mxu0 0
  %368 = vmatpush1.bf16.msra.mxu0 %v262
  %369 = vmatprep.subr.bf16.mxu0 0
  %370 = vmatpush1.bf16.msra.mxu0 %v263
  %371 = vmatprep.subr.bf16.mxu0 0
  %372 = vmatpush1.bf16.msra.mxu0 %v264
  %373 = vmatprep.subr.bf16.mxu0 0
  %374 = vmatpush1.bf16.msra.mxu0 %v265
  %375 = vmatprep.subr.bf16.mxu0 0
  %376 = vmatpush1.bf16.msra.mxu0 %v266
  %377 = vmatprep.subr.bf16.mxu0 0
  %378 = vmatpush1.bf16.msra.mxu0 %v267
  %379 = vmatprep.subr.bf16.mxu0 0
  %380 = vmatpush1.bf16.msra.mxu0 %v268
  %381 = vmatprep.mubr.bf16.mxu0 %v33
  %382 = vmatmul.mubr.bf16.gmra.mrb[0].mxu0 %v32
  %v383 = vpop.f32.mrb[0].mxu0
  %v384 = vadd.f32 %v336, %v383
  %v385 = vpop.f32.mrb[0].mxu0
  %v386 = vpop.f32.mrb[0].mxu0
  %v387 = vadd.f32 %v339, %v386
  %v388 = vpop.f32.mrb[0].mxu0
  %389 = vmatprep.mubr.bf16.mxu0 %v37
  %390 = vmatmul.mubr.bf16.gmra.mrb[0].mxu0 %v36
  %v391 = vpop.f32.mrb[0].mxu0
  %v392 = vadd.f32 %v344, %v391
  %v393 = vpop.f32.mrb[0].mxu0
  %v394 = vpop.f32.mrb[0].mxu0
  %v395 = vpop.f32.mrb[0].mxu0
  %396 = vdwg.mxu0
  %v397 = vld [vmem:[%s3] sm:$0xff]
  %v398 = vld [vmem:[%s3 + $0x8] sm:$0xff]
  %v399 = vld [vmem:[%s3 + $0x10] sm:$0xff]
  %v400 = vadd.f32 %v384, %v397
  %v401 = vadd.f32 %v387, %v398
  %v402 = vadd.f32 %v392, %v399
  %403 = vst [vmem:[%s4] sm:$0xff] %v400
  %404 = vst [vmem:[%s4 + $0x8] sm:$0xff] %v401
  %405 = vst [vmem:[%s4 + $0x10] sm:$0xff] %v402
  // Predicated region
  $region18: #{autoencoder_forward.38} parent=0 // pred_check
    _
  $region19: #{autoencoder_forward.38} parent=0 // pred_check_branch
    %407 = sbr.rel (0) target = $region21
  $region20: #{autoencoder_forward.38} parent=0 // pred_region
    _
  $region21: #{autoencoder_forward.38} parent=0 // pred_fallthru
    _
  // Predicated region
  $region22: #{autoencoder_forward.38} parent=0 // pred_check
    _
  $region23: #{autoencoder_forward.38} parent=0 // pred_check_branch
    %409 = sbr.rel (0) target = $region25
  $region24: #{autoencoder_forward.38} parent=0 // pred_region
    _
  $region25: #{autoencoder_forward.38} parent=0 // pred_fallthru
    _

// kernel: autoencoder_forward.44
$region0: #{autoencoder_forward.44}
  #allocation0 [shape = 'u32[]', space=smem, size = 0x4, offset = 0x4, fixed_abs, tag = 'smem constant byte address 0x4 - core index']
  #allocation1 [shape = 'u32[144,128]{1,0:T(1,128)}', space=vmem, size = 0x12000, scoped, tag = 'internal scratch']
  %s0 = inlined_call_operand.vmem [shape: f32[24,128], index: 0, kind: input, shape index: {}]
  %s1 = inlined_call_operand.vmem [shape: f32[1,128], index: 1, kind: input, shape index: {}]
  %s2 = inlined_call_operand.vmem [shape: f32[1,128], index: 2, kind: input, shape index: {}]
  %s3 = inlined_call_operand.vmem [shape: bf16[256,128], index: 3, kind: input, shape index: {}]
  %s4 = inlined_call_operand.vmem [shape: f32[24,256], index: 4, kind: output, shape index: {}]
  %s5 = sld [smem:[#allocation0]]
  $region26: #{autoencoder_forward.44} parent=0
    _
  %s7 = ssub.s32 1, %s5
  %s8 = scalar_select 0, %s7, %s5
  // Predicated region
  $region2: #{autoencoder_forward.44} parent=0 // pred_check
    _
  $region3: #{autoencoder_forward.44} parent=0 // pred_check_branch
    %10 = sbr.rel (0) target = $region5
  $region4: #{autoencoder_forward.44} parent=0 // pred_region
    _
  $region5: #{autoencoder_forward.44} parent=0 // pred_fallthru
    _
  // Predicated region
  $region6: #{autoencoder_forward.44} parent=0 // pred_check
    _
  $region7: #{autoencoder_forward.44} parent=0 // pred_check_branch
    %12 = sbr.rel (0) target = $region9
  $region8: #{autoencoder_forward.44} parent=0 // pred_region
    _
  $region9: #{autoencoder_forward.44} parent=0 // pred_fallthru
    _
  // Predicated region
  $region10: #{autoencoder_forward.44} parent=0 // pred_check
    _
  $region11: #{autoencoder_forward.44} parent=0 // pred_check_branch
    %14 = sbr.rel (0) target = $region13
  $region12: #{autoencoder_forward.44} parent=0 // pred_region
    _
  $region13: #{autoencoder_forward.44} parent=0 // pred_fallthru
    _
  // Predicated region
  $region14: #{autoencoder_forward.44} parent=0 // pred_check
    _
  $region15: #{autoencoder_forward.44} parent=0 // pred_check_branch
    %16 = sbr.rel (0) target = $region17
  $region16: #{autoencoder_forward.44} parent=0 // pred_region
    _
  $region17: #{autoencoder_forward.44} parent=0 // pred_fallthru
    _
  %v18 = vld [vmem:[%s0] sm:$0xff]
  %v19 = vld [vmem:[%s0 + $0x8] sm:$0xff]
  %v20 = vld [vmem:[%s0 + $0x10] sm:$0xff]
  %21 = vadd.xlane.f32.xlu0 %v18
  %v22 = vpop.xlane.xlu0 %21
  %23 = vadd.xlane.f32.xlu0 %v19
  %v24 = vpop.xlane.xlu0 %23
  %25 = vadd.xlane.f32.xlu0 %v20
  %v26 = vpop.xlane.xlu0 %25
  %v27 = vrcp.pop 128.0
  %v28 = vmul.f32 %v22, %v27
  %v29 = vmul.f32 %v24, %v27
  %v30 = vmul.f32 %v26, %v27
  %v31 = vsub.f32 %v18, %v28
  %v32 = vsub.f32 %v19, %v29
  %v33 = vsub.f32 %v20, %v30
  %v34 = vmul.f32 %v31, %v31
  %v35 = vmul.f32 %v32, %v32
  %v36 = vmul.f32 %v33, %v33
  %37 = vadd.xlane.f32.xlu0 %v34
  %v38 = vpop.xlane.xlu0 %37
  %39 = vadd.xlane.f32.xlu0 %v35
  %v40 = vpop.xlane.xlu0 %39
  %41 = vadd.xlane.f32.xlu0 %v36
  %v42 = vpop.xlane.xlu0 %41
  %v43 = vmul.f32 %v38, %v27
  %v44 = vmul.f32 %v40, %v27
  %v45 = vmul.f32 %v42, %v27
  %v46 = vadd.f32 %v43, 1e-05
  %v47 = vadd.f32 %v44, 1e-05
  %v48 = vadd.f32 %v45, 1e-05
  %v49 = vrsqrt.pop %v46
  %v50 = vrsqrt.pop %v47
  %v51 = vrsqrt.pop %v48
  %v52 = vmul.f32 %v31, %v49
  %v53 = vmul.f32 %v32, %v50
  %v54 = vmul.f32 %v33, %v51
  %v55 = vld [vmem:[%s1] sm:$0x1]
  %v57 = vlaneseq
  %v58 = vshrl.u32 %v57, 7
  %v59 = vsub.s32 0, %v58
  %v60 = vrot.slane %v55, %v59
  %v62 = vmul.f32 %v52, %v60
  %v63 = vmul.f32 %v53, %v60
  %v64 = vmul.f32 %v54, %v60
  %v65 = vld [vmem:[%s2] sm:$0x1]
  %v67 = vlaneseq
  %v68 = vshrl.u32 %v67, 7
  %v69 = vsub.s32 0, %v68
  %v70 = vrot.slane %v65, %v69
  %v72 = vadd.f32 %v62, %v70
  %v73 = vadd.f32 %v63, %v70
  %v74 = vadd.f32 %v64, %v70
  %v75 = vpack.c.bf16 %v73, %v72
  %v76 = vpack.c.bf16 %v74, %v74
  %v77 = vld [vmem:[%s3] sm:$0xf]
  %v78 = vld [vmem:[%s3 + $0x4] sm:$0xf]
  %v79 = vld [vmem:[%s3 + $0x8] sm:$0xf]
  %v80 = vld [vmem:[%s3 + $0xc] sm:$0xf]
  %v81 = vld [vmem:[%s3 + $0x10] sm:$0xf]
  %v82 = vld [vmem:[%s3 + $0x14] sm:$0xf]
  %v83 = vld [vmem:[%s3 + $0x18] sm:$0xf]
  %v84 = vld [vmem:[%s3 + $0x1c] sm:$0xf]
  %v85 = vld [vmem:[%s3 + $0x20] sm:$0xf]
  %v86 = vld [vmem:[%s3 + $0x24] sm:$0xf]
  %v87 = vld [vmem:[%s3 + $0x28] sm:$0xf]
  %v88 = vld [vmem:[%s3 + $0x2c] sm:$0xf]
  %v89 = vld [vmem:[%s3 + $0x30] sm:$0xf]
  %v90 = vld [vmem:[%s3 + $0x34] sm:$0xf]
  %v91 = vld [vmem:[%s3 + $0x38] sm:$0xf]
  %v92 = vld [vmem:[%s3 + $0x3c] sm:$0xf]
  %v93 = vld [vmem:[%s3 + $0x40] sm:$0xf]
  %v94 = vld [vmem:[%s3 + $0x44] sm:$0xf]
  %v95 = vld [vmem:[%s3 + $0x48] sm:$0xf]
  %v96 = vld [vmem:[%s3 + $0x4c] sm:$0xf]
  %v97 = vld [vmem:[%s3 + $0x50] sm:$0xf]
  %v98 = vld [vmem:[%s3 + $0x54] sm:$0xf]
  %v99 = vld [vmem:[%s3 + $0x58] sm:$0xf]
  %v100 = vld [vmem:[%s3 + $0x5c] sm:$0xf]
  %v101 = vld [vmem:[%s3 + $0x60] sm:$0xf]
  %v102 = vld [vmem:[%s3 + $0x64] sm:$0xf]
  %v103 = vld [vmem:[%s3 + $0x68] sm:$0xf]
  %v104 = vld [vmem:[%s3 + $0x6c] sm:$0xf]
  %v105 = vld [vmem:[%s3 + $0x70] sm:$0xf]
  %v106 = vld [vmem:[%s3 + $0x74] sm:$0xf]
  %v107 = vld [vmem:[%s3 + $0x78] sm:$0xf]
  %v108 = vld [vmem:[%s3 + $0x7c] sm:$0xf]
  %v141 = vunpack.c.l.b16 %v77
  %v142 = vunpack.c.l.b16 %v78
  %v143 = vunpack.c.l.b16 %v79
  %v144 = vunpack.c.l.b16 %v80
  %v145 = vunpack.c.l.b16 %v81
  %v146 = vunpack.c.l.b16 %v82
  %v147 = vunpack.c.l.b16 %v83
  %v148 = vunpack.c.l.b16 %v84
  %v149 = vunpack.c.l.b16 %v85
  %v150 = vunpack.c.l.b16 %v86
  %v151 = vunpack.c.l.b16 %v87
  %v152 = vunpack.c.l.b16 %v88
  %v153 = vunpack.c.l.b16 %v89
  %v154 = vunpack.c.l.b16 %v90
  %v155 = vunpack.c.l.b16 %v91
  %v156 = vunpack.c.l.b16 %v92
  %v157 = vunpack.c.l.b16 %v93
  %v158 = vunpack.c.l.b16 %v94
  %v159 = vunpack.c.l.b16 %v95
  %v160 = vunpack.c.l.b16 %v96
  %v161 = vunpack.c.l.b16 %v97
  %v162 = vunpack.c.l.b16 %v98
  %v163 = vunpack.c.l.b16 %v99
  %v164 = vunpack.c.l.b16 %v100
  %v165 = vunpack.c.l.b16 %v101
  %v166 = vunpack.c.l.b16 %v102
  %v167 = vunpack.c.l.b16 %v103
  %v168 = vunpack.c.l.b16 %v104
  %v169 = vunpack.c.l.b16 %v105
  %v170 = vunpack.c.l.b16 %v106
  %v171 = vunpack.c.l.b16 %v107
  %v172 = vunpack.c.l.b16 %v108
  %v173 = vpack.c.b16 %v142, %v141
  %v174 = vpack.c.b16 %v144, %v143
  %v175 = vpack.c.b16 %v146, %v145
  %v176 = vpack.c.b16 %v148, %v147
  %v177 = vpack.c.b16 %v150, %v149
  %v178 = vpack.c.b16 %v152, %v151
  %v179 = vpack.c.b16 %v154, %v153
  %v180 = vpack.c.b16 %v156, %v155
  %v181 = vpack.c.b16 %v158, %v157
  %v182 = vpack.c.b16 %v160, %v159
  %v183 = vpack.c.b16 %v162, %v161
  %v184 = vpack.c.b16 %v164, %v163
  %v185 = vpack.c.b16 %v166, %v165
  %v186 = vpack.c.b16 %v168, %v167
  %v187 = vpack.c.b16 %v170, %v169
  %v188 = vpack.c.b16 %v172, %v171
  %205 = vmatprep.subr.bf16.mxu0 0
  %206 = vmatpush1.bf16.xpose.msra.mxu0 %v173
  %207 = vmatprep.subr.bf16.mxu0 0
  %208 = vmatpush1.bf16.xpose.msra.mxu0 %v174
  %209 = vmatprep.subr.bf16.mxu0 0
  %210 = vmatpush1.bf16.xpose.msra.mxu0 %v175
  %211 = vmatprep.subr.bf16.mxu0 0
  %212 = vmatpush1.bf16.xpose.msra.mxu0 %v176
  %213 = vmatprep.subr.bf16.mxu0 0
  %214 = vmatpush1.bf16.xpose.msra.mxu0 %v177
  %215 = vmatprep.subr.bf16.mxu0 0
  %216 = vmatpush1.bf16.xpose.msra.mxu0 %v178
  %217 = vmatprep.subr.bf16.mxu0 0
  %218 = vmatpush1.bf16.xpose.msra.mxu0 %v179
  %219 = vmatprep.subr.bf16.mxu0 0
  %220 = vmatpush1.bf16.xpose.msra.mxu0 %v180
  %221 = vmatprep.subr.bf16.mxu0 0
  %222 = vmatpush1.bf16.xpose.msra.mxu0 %v181
  %223 = vmatprep.subr.bf16.mxu0 0
  %224 = vmatpush1.bf16.xpose.msra.mxu0 %v182
  %225 = vmatprep.subr.bf16.mxu0 0
  %226 = vmatpush1.bf16.xpose.msra.mxu0 %v183
  %227 = vmatprep.subr.bf16.mxu0 0
  %228 = vmatpush1.bf16.xpose.msra.mxu0 %v184
  %229 = vmatprep.subr.bf16.mxu0 0
  %230 = vmatpush1.bf16.xpose.msra.mxu0 %v185
  %231 = vmatprep.subr.bf16.mxu0 0
  %232 = vmatpush1.bf16.xpose.msra.mxu0 %v186
  %233 = vmatprep.subr.bf16.mxu0 0
  %234 = vmatpush1.bf16.xpose.msra.mxu0 %v187
  %235 = vmatprep.subr.bf16.mxu0 0
  %236 = vmatpush1.bf16.xpose.msra.mxu0 %v188
  %237 = vmatprep.mubr.bf16.mxu0 0
  %238 = vmatmul.mubr.bf16.gmra.mrb[0].mxu0 %v75
  %v239 = vpop.f32.mrb[0].mxu0
  %v240 = vadd.f32 0.0, %v239
  %v241 = vpop.f32.mrb[0].mxu0
  %v242 = vadd.f32 0.0, %v241
  %v243 = vpop.f32.mrb[0].mxu0
  %v244 = vadd.f32 0.0, %v243
  %v245 = vpop.f32.mrb[0].mxu0
  %v246 = vadd.f32 0.0, %v245
  %247 = vmatprep.mubr.bf16.mxu0 0
  %248 = vmatmul.mubr.bf16.gmra.mrb[0].mxu0 %v76
  %v249 = vpop.f32.mrb[0].mxu0
  %v250 = vadd.f32 0.0, %v249
  %v251 = vpop.f32.mrb[0].mxu0
  %v252 = vadd.f32 0.0, %v251
  %v253 = vpop.f32.mrb[0].mxu0
  %v254 = vpop.f32.mrb[0].mxu0
  %255 = vdwg.mxu0
  %256 = vst [vmem:[%s4] sm:$0xff] %v240
  %257 = vst [vmem:[%s4 + $0x8] sm:$0xff] %v242
  %258 = vst [vmem:[%s4 + $0x10] sm:$0xff] %v244
  %259 = vst [vmem:[%s4 + $0x18] sm:$0xff] %v246
  %260 = vst [vmem:[%s4 + $0x20] sm:$0xff] %v250
  %261 = vst [vmem:[%s4 + $0x28] sm:$0xff] %v252
  // Predicated region
  $region18: #{autoencoder_forward.44} parent=0 // pred_check
    _
  $region19: #{autoencoder_forward.44} parent=0 // pred_check_branch
    %263 = sbr.rel (0) target = $region21
  $region20: #{autoencoder_forward.44} parent=0 // pred_region
    _
  $region21: #{autoencoder_forward.44} parent=0 // pred_fallthru
    _
  // Predicated region
  $region22: #{autoencoder_forward.44} parent=0 // pred_check
    _
  $region23: #{autoencoder_forward.44} parent=0 // pred_check_branch
    %265 = sbr.rel (0) target = $region25
  $region24: #{autoencoder_forward.44} parent=0 // pred_region
    _
  $region25: #{autoencoder_forward.44} parent=0 // pred_fallthru
    _

// kernel: autoencoder_forward.45
$region0: #{autoencoder_forward.45}
  #allocation0 [shape = 'u32[]', space=smem, size = 0x4, offset = 0x4, fixed_abs, tag = 'smem constant byte address 0x4 - core index']
  #allocation1 [shape = 'u32[144,128]{1,0:T(1,128)}', space=vmem, size = 0x12000, scoped, tag = 'internal scratch']
  #allocation2 [shape = 'f32[1,1]{1,0:T(1,128)}', space=vmem, size = 0x200, scoped, tag = 'scratch operand']
  #allocation3 [shape = 'f32[1,1]{1,0:T(1,128)}', space=vmem, size = 0x200, scoped, tag = 'scratch operand']
  %s0 = inlined_call_operand.vmem [shape: f32[16,256], index: 0, kind: input, shape index: {}]
  %s1 = inlined_call_operand.vmem [shape: s32[16,1], index: 1, kind: input, shape index: {}]
  %s2 = inlined_call_operand.vmem [shape: f32[16,1], index: 2, kind: input, shape index: {}]
  %s3 = inlined_call_operand.hbm [shape: f32[1,1], index: 3, kind: output, shape index: {}]
  %s4 = sld [smem:[#allocation0]]
  $region53: #{autoencoder_forward.45} parent=0
    _
  %s6 = ssub.s32 1, %s4
  %s7 = scalar_select 0, %s6, %s4
  $region1: #{autoencoder_forward.45} parent=0
    #allocation4 [shape = 'u8[512]{0}', space=vmem, size = 0x400, scoped, tag = 'output window, operand 0, single buffered']
    #allocation5 [shape = 's32[2]{0}', space=sflag, size = 0x8, scoped, tag = 'scoped memory for autoencoder_forward.45']
    %8 = vsyncpa [#allocation5], 0
    loop: start=0, step=1, limit=4
    $region2: #{autoencoder_forward.45} parent=1 // loop_pre_header
      _
    $region3: #{autoencoder_forward.45} parent=1 // loop_header
      %s10 = sphi 0, %s14
      %p11 = scmp.ge.s32.totalorder %s10, 4
      %s20 = sphi 0, %s22
      %s23 = sphi 0, %s20
      %s24 = sphi 0, %s23
      %s40 = sphi 0, %s24
      %s46 = sphi 0, %s48
      %s49 = sphi 0, %s46
      %s50 = sphi 0, %s49
      %s66 = sphi 0, %s50
      %s72 = sphi 0, %s74
      %s75 = sphi 0, %s72
      %s76 = sphi 0, %s75
      %s92 = sphi 0, %s76
      %s96 = sphi 0, %s96
      %s98 = sphi 0, %s96
      %s99 = sphi 0, %s98
      %s113 = sphi 0, %s99
    $region4: #{autoencoder_forward.45} parent=1 // loop_header_branch
      %13 = sbr.rel (%p11) target = $region8
    $region5: #{autoencoder_forward.45} parent=1 // loop_body
      %s15 = ssub.s32 %s10, 1
      %s16 = ssub.s32 %s10, 2
      %s17 = sadd.s32 %s10, 1
      %s18 = ssub.s32 %s10, %s17
      %p19 = scmp.eq.s32.totalorder %s18, 0
      %s21 = sadd.s32 %s20, 1
      %s22 = scalar_select %p19, %s20, %s21
      %p25 = pneg %p19
      %p26 = scmp.eq.s32.totalorder %s10, 1
      %p27 = por %p25, %p26
      %p28 = scmp.ne.s32.totalorder %s20, %s23
      %p29 = scmp.eq.s32.totalorder %s10, 0
      %p30 = por %p28, %p29
      %p31 = scmp.ne.s32.totalorder %s20, %s23
      %p32 = scmp.eq.s32.totalorder %s15, 1
      %p33 = por %p31, %p32
      %p34 = scmp.ne.s32.totalorder %s23, %s24
      %p35 = scmp.eq.s32.totalorder %s15, 0
      %p36 = por %p34, %p35
      %p37 = scmp.ne.s32.totalorder %s23, %s24
      %p38 = scmp.eq.s32.totalorder %s16, 1
      %p39 = por %p37, %p38
      %p41 = scmp.ne.s32.totalorder %s24, %s40
      %p42 = scmp.eq.s32.totalorder %s16, 0
      %p43 = por %p41, %p42
      %s44 = ssub.s32 %s10, %s17
      %p45 = scmp.eq.s32.totalorder %s44, 0
      %s47 = sadd.s32 %s46, 1
      %s48 = scalar_select %p45, %s46, %s47
      %p51 = pneg %p45
      %p52 = scmp.eq.s32.totalorder %s10, 1
      %p53 = por %p51, %p52
      %p54 = scmp.ne.s32.totalorder %s46, %s49
      %p55 = scmp.eq.s32.totalorder %s10, 0
      %p56 = por %p54, %p55
      %p57 = scmp.ne.s32.totalorder %s46, %s49
      %p58 = scmp.eq.s32.totalorder %s15, 1
      %p59 = por %p57, %p58
      %p60 = scmp.ne.s32.totalorder %s49, %s50
      %p61 = scmp.eq.s32.totalorder %s15, 0
      %p62 = por %p60, %p61
      %p63 = scmp.ne.s32.totalorder %s49, %s50
      %p64 = scmp.eq.s32.totalorder %s16, 1
      %p65 = por %p63, %p64
      %p67 = scmp.ne.s32.totalorder %s50, %s66
      %p68 = scmp.eq.s32.totalorder %s16, 0
      %p69 = por %p67, %p68
      %s70 = ssub.s32 %s10, %s17
      %p71 = scmp.eq.s32.totalorder %s70, 0
      %s73 = sadd.s32 %s72, 1
      %s74 = scalar_select %p71, %s72, %s73
      %p77 = pneg %p71
      %p78 = scmp.eq.s32.totalorder %s10, 1
      %p79 = por %p77, %p78
      %p80 = scmp.ne.s32.totalorder %s72, %s75
      %p81 = scmp.eq.s32.totalorder %s10, 0
      %p82 = por %p80, %p81
      %p83 = scmp.ne.s32.totalorder %s72, %s75
      %p84 = scmp.eq.s32.totalorder %s15, 1
      %p85 = por %p83, %p84
      %p86 = scmp.ne.s32.totalorder %s75, %s76
      %p87 = scmp.eq.s32.totalorder %s15, 0
      %p88 = por %p86, %p87
      %p89 = scmp.ne.s32.totalorder %s75, %s76
      %p90 = scmp.eq.s32.totalorder %s16, 1
      %p91 = por %p89, %p90
      %p93 = scmp.ne.s32.totalorder %s76, %s92
      %p94 = scmp.eq.s32.totalorder %s16, 0
      %p95 = por %p93, %p94
      %s97 = sadd.s32 %s96, 1
      %p100 = scmp.eq.s32.totalorder %s10, 1
      %p101 = scmp.ne.s32.totalorder %s96, %s98
      %p102 = scmp.eq.s32.totalorder %s10, 0
      %p103 = por %p101, %p102
      %p104 = scmp.ne.s32.totalorder %s96, %s98
      %p105 = scmp.eq.s32.totalorder %s15, 1
      %p106 = por %p104, %p105
      %p107 = scmp.ne.s32.totalorder %s98, %s99
      %p108 = scmp.eq.s32.totalorder %s15, 0
      %p109 = por %p107, %p108
      %p110 = scmp.ne.s32.totalorder %s98, %s99
      %p111 = scmp.eq.s32.totalorder %s16, 1
      %p112 = por %p110, %p111
      %p114 = scmp.ne.s32.totalorder %s99, %s113
      %p115 = scmp.eq.s32.totalorder %s16, 0
      %p116 = por %p114, %p115
      %p117 = scmp.le.s32.totalorder 1, %s10
      %p118 = scmp.lt.s32.totalorder %s10, 3
      %p119 = pnand %p117, %p118
      %p120 = pneg %p119
      // Predicated region
      $region9: #{autoencoder_forward.45} parent=5 // pred_check
        _
      $region10: #{autoencoder_forward.45} parent=5 // pred_check_branch
        %122 = sbr.rel (%p119) target = $region12
      $region11: #{autoencoder_forward.45} parent=5 // pred_region
        %s123 = ssub.s32 %s10, 1
      $region12: #{autoencoder_forward.45} parent=5 // pred_fallthru
        _
      %p124 = scmp.lt.s32.totalorder %s10, 2
      // Predicated region
      $region13: #{autoencoder_forward.45} parent=5 // pred_check
        %p125 = pneg %p124
      $region14: #{autoencoder_forward.45} parent=5 // pred_check_branch
        %127 = sbr.rel (%p125) target = $region16
      $region15: #{autoencoder_forward.45} parent=5 // pred_region
        // Predicated region
        $region17: #{autoencoder_forward.45} parent=15 // pred_check
          %p128 = pneg %p30
        $region18: #{autoencoder_forward.45} parent=15 // pred_check_branch
          %130 = sbr.rel (%p128) target = $region20
        $region19: #{autoencoder_forward.45} parent=15 // pred_region
          %p131 = scmp.lt.s32.totalorder %s10, 1
          %s132 = scalar_select %p131, %s10, 1
          %s133 = smul.addr %s132, 2
          %s134 = smul.addr %s133, 8
          %s135 = scalar_lea.vmem %s0, %s134
        $region20: #{autoencoder_forward.45} parent=15 // pred_fallthru
          _
        // Predicated region
        $region21: #{autoencoder_forward.45} parent=15 // pred_check
          %p136 = pneg %p56
        $region22: #{autoencoder_forward.45} parent=15 // pred_check_branch
          %138 = sbr.rel (%p136) target = $region24
        $region23: #{autoencoder_forward.45} parent=15 // pred_region
          %p139 = scmp.lt.s32.totalorder %s10, 1
          %s140 = scalar_select %p139, %s10, 1
          %s141 = smul.addr %s140, 8
          %s142 = scalar_lea.vmem %s1, %s141
        $region24: #{autoencoder_forward.45} parent=15 // pred_fallthru
          _
        // Predicated region
        $region25: #{autoencoder_forward.45} parent=15 // pred_check
          %p143 = pneg %p82
        $region26: #{autoencoder_forward.45} parent=15 // pred_check_branch
          %145 = sbr.rel (%p143) target = $region28
        $region27: #{autoencoder_forward.45} parent=15 // pred_region
          %p146 = scmp.lt.s32.totalorder %s10, 1
          %s147 = scalar_select %p146, %s10, 1
          %s148 = smul.addr %s147, 8
          %s149 = scalar_lea.vmem %s2, %s148
        $region28: #{autoencoder_forward.45} parent=15 // pred_fallthru
          _
      $region16: #{autoencoder_forward.45} parent=5 // pred_fallthru
        _
      %p150 = scmp.le.s32.totalorder 1, %s10
      %p151 = scmp.lt.s32.totalorder %s10, 3
      %p152 = pnand %p150, %p151
      %p153 = pneg %p152
      // Predicated region
      $region29: #{autoencoder_forward.45} parent=5 // pred_check
        _
      $region30: #{autoencoder_forward.45} parent=5 // pred_check_branch
        %155 = sbr.rel (%p152) target = $region32
      $region31: #{autoencoder_forward.45} parent=5 // pred_region
        %s156 = ssub.s32 %s10, 1
        %p157 = scmp.lt.s32.totalorder %s15, 1
        %s158 = scalar_select %p157, %s15, 1
        %s159 = smul.addr %s158, 2
        %s160 = smul.addr %s159, 8
        %s161 = scalar_lea.vmem %s0, %s160
        %p162 = pneg %p36
        %p163 = pneg %p33
        %p164 = scmp.lt.s32.totalorder %s15, 1
        %s165 = scalar_select %p164, %s15, 1
        %s166 = smul.addr %s165, 8
        %s167 = scalar_lea.vmem %s1, %s166
        %p168 = pneg %p62
        %p169 = pneg %p59
        %p170 = scmp.lt.s32.totalorder %s15, 1
        %s171 = scalar_select %p170, %s15, 1
        %s172 = smul.addr %s171, 8
        %s173 = scalar_lea.vmem %s2, %s172
        %p174 = pneg %p88
        %p175 = pneg %p85
        %p176 = pneg %p109
        %p177 = pneg %p106
        %p178 = scmp.lt.s32.totalorder %s15, 1
        %s179 = scalar_select %p178, %s15, 1
        %s180 = smul.addr %s179, 2
        %s181 = smul.addr %s180, 8
        %s182 = scalar_lea.vmem %s0, %s181
        %p183 = scmp.lt.s32.totalorder %s15, 1
        %s184 = scalar_select %p183, %s15, 1
        %s185 = smul.addr %s184, 8
        %s186 = scalar_lea.vmem %s1, %s185
        %p187 = scmp.lt.s32.totalorder %s15, 1
        %s188 = scalar_select %p187, %s15, 1
        %s189 = smul.addr %s188, 8
        %s190 = scalar_lea.vmem %s2, %s189
        %p191 = scmp.eq.s32.totalorder %s15, 0
        // Predicated region
        $region33: #{autoencoder_forward.45} parent=31 // pred_check
          %p192 = pneg %p191
        $region34: #{autoencoder_forward.45} parent=31 // pred_check_branch
          %194 = sbr.rel (%p192) target = $region36
        $region35: #{autoencoder_forward.45} parent=31 // pred_region
          %vm195 = vcmask 0
          %196 = vst.msk [vmem:[#allocation2] sm:$0x1] %vm195, 0.0
          %197 = vst.msk [vmem:[#allocation3] sm:$0x1] %vm195, 0.0
        $region36: #{autoencoder_forward.45} parent=31 // pred_fallthru
          _
        %v198 = vld [vmem:[%s182] sm:$0xff]
        %v199 = vld [vmem:[%s182 + $0x8] sm:$0xff]
        %v200 = vld [vmem:[%s186] sm:$0xff]
        %v201 = vld [vmem:[%s190] sm:$0xff]
        %v202 = vmax.f32 %v198, %v199
        %203 = vmax.xlane.f32.xlu0 %v202
        %v204 = vpop.xlane.xlu0 %203
        %v205 = vsub.f32 %v198, %v204
        %v206 = vsub.f32 %v199, %v204
        %v207 = vmul.f32 %v205, 1.442695
        %v208 = vpow.pop %v207
        %v209 = vmul.f32 %v206, 1.442695
        %v210 = vpow.pop %v209
        %v211 = vadd.f32 %v208, %v210
        %212 = vadd.xlane.f32.xlu0 %v211
        %v213 = vpop.xlane.xlu0 %212
        %v214 = vlog2.pop %v213
        %v215 = vmul.f32 %v214, 0.6931472
        %v216 = vadd.f32 %v204, %v215
        %v217 = vlaneseq
        %v218 = vand.u32 %v217, 127
        %v219 = vadd.s32 %v218, 128
        %220 = vset.pattern.permute.xlu0 0
        %221 = vperm.xlu0 %220, %v200
        %v222 = vpop.permute.xlu0 %221
        %vm223 = vcmp.eq.s32.totalorder %v218, %v222
        %vm224 = vcmp.eq.s32.totalorder %v219, %v222
        %v225 = vsel %vm223, %v198, 0.0
        %v226 = vsel %vm224, %v199, 0.0
        %v227 = vadd.f32 %v225, %v226
        %228 = vadd.xlane.f32.xlu0 %v227
        %v229 = vpop.xlane.xlu0 %228
        %v230 = vsub.f32 %v216, %v229
        %v231 = vmul.f32 %v230, %v201
        %v232 = vld [vmem:[#allocation2] sm:$0x1]
        %vm233 = vcmask 7168
        %v234 = vsel %vm233, %v231, 0.0
        %v235 = vrot.slane %v234, 4
        %v236 = vadd.f32 %v234, %v235
        %v237 = vrot.slane %v236, 2
        %v238 = vadd.f32 %v236, %v237
        %v239 = vrot.slane %v238, 1
        %v240 = vadd.f32 %v238, %v239
        %v241 = vadd.f32 %v232, %v240
        %vm242 = vcmask 0
        %243 = vst.msk [vmem:[#allocation2] sm:$0x1] %vm242, %v241
        %v244 = vld [vmem:[#allocation3] sm:$0x1]
        %v245 = vsel %vm233, %v201, 0.0
        %v246 = vrot.slane %v245, 4
        %v247 = vadd.f32 %v245, %v246
        %v248 = vrot.slane %v247, 2
        %v249 = vadd.f32 %v247, %v248
        %v250 = vrot.slane %v249, 1
        %v251 = vadd.f32 %v249, %v250
        %v252 = vadd.f32 %v244, %v251
        %253 = vst.msk [vmem:[#allocation3] sm:$0x1] %vm242, %v252
        %p254 = scmp.eq.s32.totalorder %s15, 1
        // Predicated region
        $region37: #{autoencoder_forward.45} parent=31 // pred_check
          %p255 = pneg %p254
        $region38: #{autoencoder_forward.45} parent=31 // pred_check_branch
          %257 = sbr.rel (%p255) target = $region40
        $region39: #{autoencoder_forward.45} parent=31 // pred_region
          %v258 = vld [vmem:[#allocation2] sm:$0x1]
          %v259 = vld [vmem:[#allocation3] sm:$0x1]
          %v260 = vmax.f32 %v259, 1.0
          %v261 = vrcp.pop %v260
          %v262 = vmul.f32 %v258, %v261
          %263 = vst.msk [vmem:[#allocation4] sm:$0x1] %vm242, %v262
        $region40: #{autoencoder_forward.45} parent=31 // pred_fallthru
          _
        // Predicated region
        $region41: #{autoencoder_forward.45} parent=31 // pred_check
          %p264 = pneg %p106
        $region42: #{autoencoder_forward.45} parent=31 // pred_check_branch
          %266 = sbr.rel (%p264) target = $region44
        $region43: #{autoencoder_forward.45} parent=31 // pred_region
          %s268 = ssub.s32 16, 16
          %269 = vsyncadd [#allocation5], %s268
          %s271 = sshll.u32 [#allocation4], 4
          %s272 = int_to_ptr.vmem [resolvable:$true] %s271
          %274 = dma.vmem_to_hbm [thread:$0]  %s272, 16, %s3, [#allocation5]
        $region44: #{autoencoder_forward.45} parent=31 // pred_fallthru
          _
        // Predicated region
        $region45: #{autoencoder_forward.45} parent=31 // pred_check
          %p275 = pneg %p106
        $region46: #{autoencoder_forward.45} parent=31 // pred_check_branch
          %277 = sbr.rel (%p275) target = $region48
        $region47: #{autoencoder_forward.45} parent=31 // pred_region
          %278 = dma.done [#allocation5], 16
        $region48: #{autoencoder_forward.45} parent=31 // pred_fallthru
          _
      $region32: #{autoencoder_forward.45} parent=5 // pred_fallthru
        _
      %p279 = scmp.le.s32.totalorder 2, %s10
      // Predicated region
      $region49: #{autoencoder_forward.45} parent=5 // pred_check
        %p280 = pneg %p279
      $region50: #{autoencoder_forward.45} parent=5 // pred_check_branch
        %282 = sbr.rel (%p280) target = $region52
      $region51: #{autoencoder_forward.45} parent=5 // pred_region
        %s283 = ssub.s32 %s10, 2
      $region52: #{autoencoder_forward.45} parent=5 // pred_fallthru
        _
    $region6: #{autoencoder_forward.45} parent=1 // loop_footer
      %s14 = sadd.s32 1, %s10
    $region7: #{autoencoder_forward.45} parent=1 // loop_footer_branch
      %9 = sbr.rel target = $region3
    $region8: #{autoencoder_forward.45} parent=1 // loop_exit
      _
    %284 = vsyncpa [#allocation5], 1
    %s285 = scalar_lea.sflag [#allocation5], 1
    %286 = vsyncpa %s285, 1

</llo_original>
